<compile_context>
chip_gen: v6e
topology: v6e:2x2x1
jax: 0.10.0
libtpu: 0.0.40
codegen_flags: <defaults>
</compile_context>

<pallas_src>
from functools import partial

import jax
import jax.numpy as jnp
from jax.experimental import pallas as pl
from jax.experimental.pallas import tpu as pltpu


def _round_up(x, m):
    return (x + m - 1) // m * m


# ----------------------------------------------------------------------------
# Kernel 1: hierarchical patch embedding (conv pxp stride p + bias + ReLU)
#   input  x5 : (B*Hp, p, Wp, p*Cin)   -- pure (free) reshape of NHWC input
#   weight w  : (p, p*Cin, Cout)  bf16 -- tap-major, pre-cast at init
#   grid = (B*Hp, p): axis0 parallel over patch rows, axis1 = tap reduction
# ----------------------------------------------------------------------------
def _patch_embed_kernel(x_ref, w_ref, b_ref, o_ref, acc_ref):
    k = pl.program_id(1)

    @pl.when(k == 0)
    def _():
        acc_ref[...] = jnp.zeros_like(acc_ref)

    # In-kernel bf16 cast of the activation (no-op for bf16 stage outputs).
    acc_ref[...] += jnp.dot(x_ref[0, 0].astype(jnp.bfloat16), w_ref[0],
                            preferred_element_type=jnp.float32)

    @pl.when(k == pl.num_programs(1) - 1)
    def _():
        r = acc_ref[...] + b_ref[...]          # f32 epilogue (v5e-safe)
        o_ref[0] = jnp.maximum(r, 0.0).astype(o_ref.dtype)


def _patch_embed(x_nhwc, w, b, patch, out_dtype=jnp.bfloat16):
    B, H, W, C = x_nhwc.shape
    hp, wp = H // patch, W // patch
    cout = w.shape[-1]
    # (B,H,W,C) -> (B*hp, patch, wp, patch*C): row-major order preserved => free.
    x5 = x_nhwc.reshape(B * hp, patch, wp, patch * C)
    out = pl.pallas_call(
        _patch_embed_kernel,
        out_shape=jax.ShapeDtypeStruct((B * hp, wp, cout), out_dtype),
        grid_spec=pltpu.PrefetchScalarGridSpec(
            num_scalar_prefetch=0,
            grid=(B * hp, patch),
            in_specs=[
                pl.BlockSpec((1, 1, wp, patch * C), lambda t, k: (t, k, 0, 0)),
                pl.BlockSpec((1, patch * C, cout), lambda t, k: (k, 0, 0)),
                pl.BlockSpec((1, cout), lambda t, k: (0, 0)),
            ],
            out_specs=pl.BlockSpec((1, wp, cout), lambda t, k: (t, 0, 0)),
            scratch_shapes=[pltpu.VMEM((wp, cout), jnp.float32)],
        ),
        compiler_params=pltpu.CompilerParams(
            dimension_semantics=("parallel", "arbitrary")),
    )(x5, w, b)
    return out.reshape(B, hp, wp, cout)


# ----------------------------------------------------------------------------
# Kernel 2: fused FCN-32s head
#   conv3x3 (im2col-free, 9 taps in-kernel) -> folded BN bias -> ReLU
#   -> dropout(eval=identity) -> conv1x1 classifier, all in one pallas_call.
#   grid = (B, Hf): one output row per step; feature stays VMEM-resident.
# ----------------------------------------------------------------------------
def _fcn_head_kernel(feat_ref, w1_ref, b1_ref, w2_ref, b2_ref, o_ref, *, wf):
    y = pl.program_id(1)
    acc = None
    for ky in range(3):                                   # static unroll
        row = feat_ref[0, pl.ds(y + ky, 1)][0]            # (Wf+2, C) bf16, VMEM
        for kx in range(3):
            a = row[kx:kx + wf, :]                         # shifted tap, no HBM dup
            d = jnp.dot(a, w1_ref[ky * 3 + kx],
                        preferred_element_type=jnp.float32)
            acc = d if acc is None else acc + d
    h1 = jnp.maximum(acc + b1_ref[...], 0.0).astype(jnp.bfloat16)   # (Wf, Cmid)
    o_ref[0, 0] = (jnp.dot(h1, w2_ref[...], preferred_element_type=jnp.float32)
                   + b2_ref[...])                          # lane-dense (ncp=128)


def _fcn_head(feat_nhwc, params, num_classes):
    B, Hf, Wf, C = feat_nhwc.shape
    w1, b1 = params["head_w1"], params["head_b1"]          # (9,C,Cmid) bf16, (1,Cmid) f32
    w2, b2 = params["head_w2"], params["head_b2"]          # (Cmid,ncp) bf16, (1,ncp) f32
    cmid, ncp = w1.shape[-1], w2.shape[-1]
    pad = jnp.pad(feat_nhwc, ((0, 0), (1, 1), (1, 1), (0, 0)))   # tiny stride-32 map
    out = pl.pallas_call(
        partial(_fcn_head_kernel, wf=Wf),
        out_shape=jax.ShapeDtypeStruct((B, Hf, Wf, ncp), jnp.float32),
        grid_spec=pltpu.PrefetchScalarGridSpec(
            num_scalar_prefetch=0,
            grid=(B, Hf),
            in_specs=[
                pl.BlockSpec((1, Hf + 2, Wf + 2, C), lambda b, y: (b, 0, 0, 0)),
                pl.BlockSpec((9, C, cmid), lambda b, y: (0, 0, 0)),
                pl.BlockSpec((1, cmid), lambda b, y: (0, 0)),
                pl.BlockSpec((cmid, ncp), lambda b, y: (0, 0)),
                pl.BlockSpec((1, ncp), lambda b, y: (0, 0)),
            ],
            out_specs=pl.BlockSpec((1, 1, Wf, ncp), lambda b, y: (b, y, 0, 0)),
        ),
        compiler_params=pltpu.CompilerParams(
            dimension_semantics=("parallel", "parallel")),
    )(pad, w1, b1, w2, b2)
    return out[..., :num_classes]                          # (B, Hf, Wf, nc)


# ----------------------------------------------------------------------------
# Kernel 3: fused separable bilinear upsample, align_corners=False, f32 end-to-end
#   out[b,c] = Ry @ logits[b,c] @ Rx^T   -- H-pass intermediate never leaves VMEM.
# ----------------------------------------------------------------------------
def _bilinear_kernel(lg_ref, ry_ref, rxT_ref, o_ref):
    L = lg_ref[0, 0]                                                  # (hp, wp) f32
    t = jnp.dot(ry_ref[...], L, preferred_element_type=jnp.float32)  # (Hout, wp)
    o_ref[0, 0] = jnp.dot(t, rxT_ref[...], preferred_element_type=jnp.float32)


def _bilinear_matrix(n_in, n_out, n_in_padded):
    """Row-stochastic 1-D bilinear matrix (align_corners=False), zero-padded cols."""
    if n_in == 1:
        R = jnp.ones((n_out, 1), jnp.float32)
    else:
        scale = n_in / n_out
        src = (jnp.arange(n_out, dtype=jnp.float32) + 0.5) * scale - 0.5
        src = jnp.clip(src, 0.0, n_in - 1)
        i0 = jnp.floor(src).astype(jnp.int32)
        i1 = jnp.minimum(i0 + 1, n_in - 1)
        w1 = src - i0.astype(jnp.float32)
        w0 = 1.0 - w1
        R = jnp.zeros((n_out, n_in), jnp.float32)
        R = R.at[jnp.arange(n_out), i0].add(w0)
        R = R.at[jnp.arange(n_out), i1].add(w1)
    if n_in_padded > R.shape[1]:
        R = jnp.pad(R, ((0, 0), (0, n_in_padded - R.shape[1])))
    return R


def _bilinear_upsample(logits_nchw, out_hw):
    B, nc, h, w = logits_nchw.shape
    Hout, Wout = out_hw
    hp = max(8, _round_up(h, 8))
    wp = max(8, _round_up(w, 8))
    lg = logits_nchw
    if (hp, wp) != (h, w):
        lg = jnp.pad(lg, ((0, 0), (0, 0), (0, hp - h), (0, wp - w)))   # tiny
    Ry = _bilinear_matrix(h, Hout, hp)            # (Hout, hp) f32
    RxT = _bilinear_matrix(w, Wout, wp).T         # (wp, Wout) f32
    return pl.pallas_call(
        _bilinear_kernel,
        out_shape=jax.ShapeDtypeStruct((B, nc, Hout, Wout), jnp.float32),
        grid_spec=pltpu.PrefetchScalarGridSpec(
            num_scalar_prefetch=0,
            grid=(B, nc),
            in_specs=[
                pl.BlockSpec((1, 1, hp, wp), lambda b, c: (b, c, 0, 0)),
                pl.BlockSpec((Hout, hp), lambda b, c: (0, 0)),
                pl.BlockSpec((wp, Wout), lambda b, c: (0, 0)),
            ],
            out_specs=pl.BlockSpec((1, 1, Hout, Wout), lambda b, c: (b, c, 0, 0)),
        ),
        compiler_params=pltpu.CompilerParams(
            dimension_semantics=("parallel", "parallel")),
    )(lg, Ry, RxT)


# ----------------------------------------------------------------------------
# Loss (plain-JAX glue): nn.CrossEntropyLoss(reduction='mean', ignore_index=255)
# ----------------------------------------------------------------------------
def _cross_entropy(logits_nchw, label, ignore_index=255):
    B, C, H, W = logits_nchw.shape
    lg = logits_nchw.transpose(0, 2, 3, 1).reshape(-1, C)
    lab = label.reshape(-1).astype(jnp.int32)
    valid = lab != ignore_index
    lab_s = jnp.where(valid, lab, 0)
    logz = jax.nn.logsumexp(lg, axis=-1)
    ll = jnp.take_along_axis(lg, lab_s[:, None], axis=-1)[:, 0]
    nll = jnp.where(valid, logz - ll, 0.0)
    return jnp.sum(nll) / jnp.maximum(jnp.sum(valid), 1)


# ----------------------------------------------------------------------------
# Deterministic parameter construction (synthetic; weights pre-cast/pre-padded)
# ----------------------------------------------------------------------------
def init_params(key, num_classes=19):
    chans = [64, 128, 320, 512]          # single_mit_b2 default channels
    patches = [4, 2, 2, 2]               # overall strides 4, 8, 16, 32
    params = {}
    prev = 3
    for s, (c, p) in enumerate(zip(chans, patches)):
        key, k1 = jax.random.split(key)
        fan_in = p * p * prev
        w = (jax.random.normal(k1, (p, p * prev, c), jnp.float32)
             * jnp.sqrt(2.0 / fan_in))                  # tap-major (py, px*Cin, Cout)
        params[f"stage{s}_w"] = w.astype(jnp.bfloat16)  # pre-cast once
        params[f"stage{s}_b"] = jnp.zeros((1, c), jnp.float32)
        prev = c

    inter = chans[-1] // 4
    key, k1, k2 = jax.random.split(key, 3)
    fan_in = 9 * chans[-1]
    w1 = (jax.random.normal(k1, (9, chans[-1], inter), jnp.float32)
          * jnp.sqrt(2.0 / fan_in))
    # Fold eval-mode BatchNorm2d (running_mean=0, running_var=1, gamma=1, beta=0,
    # eps=1e-5) into the 3x3 conv weights.
    params["head_w1"] = (w1 * (1.0 / jnp.sqrt(1.0 + 1e-5))).astype(jnp.bfloat16)
    params["head_b1"] = jnp.zeros((1, inter), jnp.float32)

    ncp = _round_up(max(num_classes, 1), 128)           # lane-dense classifier
    w2 = (jax.random.normal(k2, (inter, num_classes), jnp.float32)
          * jnp.sqrt(2.0 / inter))
    w2p = jnp.zeros((inter, ncp), jnp.float32).at[:, :num_classes].set(w2)
    params["head_w2"] = w2p.astype(jnp.bfloat16)        # pre-padded + pre-cast
    params["head_b2"] = jnp.zeros((1, ncp), jnp.float32)
    return params


# ----------------------------------------------------------------------------
# EncoderDecoder2.forward
# ----------------------------------------------------------------------------
def encoder_decoder2_forward(params, rgb, modal_x=None, label=None, num_classes=19):
    orisize = rgb.shape
    # Backbone: default cfg path -> single_mit_b2 (single modality, modal_x unused).
    # TODO(synk): the Mix-Transformer attention/MLP blocks of single_mit_b2 live in
    # an external import whose source is not provided; the backbone is approximated
    # by its hierarchical patch-embed projections (+ReLU), producing the 4-scale
    # [64,128,320,512] feature pyramid at strides 4/8/16/32.
    x = rgb.transpose(0, 2, 3, 1)        # NCHW -> NHWC once; bf16-resident after stage 0.
    feats_nhwc = []
    patches = [4, 2, 2, 2]
    for s in range(4):
        x = _patch_embed(x, params[f"stage{s}_w"], params[f"stage{s}_b"], patches[s])
        feats_nhwc.append(x)

    # Decoder: default cfg path -> "No decoder(FCN-32s)" FCNHead on channels[-1].
    logits = _fcn_head(feats_nhwc[-1], params, num_classes)   # (B, hf, wf, nc) f32
    logits_nchw = jnp.transpose(logits, (0, 3, 1, 2))          # tiny tensor
    # F.interpolate(out, size=orisize[2:], mode='bilinear', align_corners=False)
    out = _bilinear_upsample(logits_nchw, (orisize[2], orisize[3]))

    # Public boundary keeps PyTorch NCHW / f32 convention for returned features.
    feats = [jnp.transpose(f, (0, 3, 1, 2)).astype(jnp.float32) for f in feats_nhwc]

    if label is not None:
        loss = _cross_entropy(out, label)
        return out, feats, loss
    return out, feats


# ----------------------------------------------------------------------------
if __name__ == "__main__":
    key = jax.random.PRNGKey(0)
    kp, kx = jax.random.split(key)

    num_classes = 19
    params = init_params(kp, num_classes=num_classes)

    # NCHW input, small shapes: batch=2, 3 RGB channels, 64x64 spatial.
    rgb = jax.random.normal(kx, (2, 3, 64, 64), jnp.float32)

    fwd = jax.jit(partial(encoder_decoder2_forward, num_classes=num_classes))
    out, feats = fwd(params, rgb)
    out = jax.block_until_ready(out)
    for f in feats:
        jax.block_until_ready(f)

    assert out.shape == (2, num_classes, 64, 64)
    assert [f.shape for f in feats] == [(2, 64, 16, 16), (2, 128, 8, 8),
                                        (2, 320, 4, 4), (2, 512, 2, 2)]
    print("KERNEL_OK")
</pallas_src>

<mosaic_0001>
module attributes {stable_mosaic.version = 11 : i64} {
  func.func private @main(%arg0: i32) attributes {dimension_semantics = [#tpu.dimension_semantics<core_parallel>], iteration_bounds = array<i64: 2>, tpu.core_type = #tpu.core_type<sc_scalar_subcore>, window_params = []} {
    return
  }
}

module attributes {stable_mosaic.version = 11 : i64} {
  func.func private @main(%arg0: i32) attributes {dimension_semantics = [#tpu.dimension_semantics<core_parallel>], iteration_bounds = array<i64: 2>, tpu.core_type = #tpu.core_type<sc_scalar_subcore>, window_params = []} {
    return
  }
}

module attributes {stable_mosaic.version = 11 : i64} {
  func.func @_patch_embed_kernel(%arg0: i32, %arg1: i32, %arg2: memref<1x1x16x12xf32, #tpu.memory_space<vmem>>, %arg3: memref<1x12x64xbf16, #tpu.memory_space<vmem>>, %arg4: memref<1x64xf32, #tpu.memory_space<vmem>>, %arg5: memref<1x16x64xbf16, #tpu.memory_space<vmem>>, %arg6: memref<16x64xf32, #tpu.memory_space<vmem>>) attributes {dimension_semantics = [#tpu.dimension_semantics<parallel>, #tpu.dimension_semantics<arbitrary>], iteration_bounds = array<i64: 32, 4>, scalar_prefetch = 0 : i64, scratch_operands = 1 : i64, tpu.core_type = #tpu.core_type<tc>, window_params = [{transform_indices = @transform_0, window_bounds = array<i64: 1, 1, 16, 12>}, {transform_indices = @transform_1, window_bounds = array<i64: 1, 12, 64>}, {pipeline_mode = #tpu.pipeline_mode<synchronous>, transform_indices = @transform_2, window_bounds = array<i64: 1, 64>}, {transform_indices = @transform_3, window_bounds = array<i64: 1, 16, 64>}]} {
    %c0_i32 = arith.constant 0 : i32
    %0 = arith.cmpi eq, %arg1, %c0_i32 : i32
    %1 = arith.extui %0 : i1 to i32
    %c0_i32_0 = arith.constant 0 : i32
    %2 = arith.cmpi ne, %1, %c0_i32_0 : i32
    scf.if %2 {
      %cst_12 = arith.constant 0.000000e+00 : f32
      %15 = vector.broadcast %cst_12 : f32 to vector<16x64xf32>
      %c0_13 = arith.constant 0 : index
      %c0_14 = arith.constant 0 : index
      %16 = vector.load %arg6[%c0_13, %c0_14] : memref<16x64xf32, #tpu.memory_space<vmem>>, vector<16x64xf32>
      tpu.vector_store %arg6[%c0_13, %c0_14], %15 {strides = array<i32>} : memref<16x64xf32, #tpu.memory_space<vmem>>, vector<16x64xf32>,
    } else {
    }
    %c0 = arith.constant 0 : index
    %c0_1 = arith.constant 0 : index
    %3 = vector.load %arg6[%c0, %c0_1] : memref<16x64xf32, #tpu.memory_space<vmem>>, vector<16x64xf32>
    %c0_2 = arith.constant 0 : index
    %c0_3 = arith.constant 0 : index
    %c0_4 = arith.constant 0 : index
    %c0_5 = arith.constant 0 : index
    %4 = vector.load %arg2[%c0_2, %c0_3, %c0_4, %c0_5] : memref<1x1x16x12xf32, #tpu.memory_space<vmem>>, vector<1x1x16x12xf32>
    %5 = vector.shape_cast %4 : vector<1x1x16x12xf32> to vector<16x12xf32>
    %6 = arith.truncf %5 : vector<16x12xf32> to vector<16x12xbf16>
    %c0_6 = arith.constant 0 : index
    %c0_7 = arith.constant 0 : index
    %c0_8 = arith.constant 0 : index
    %7 = vector.load %arg3[%c0_6, %c0_7, %c0_8] : memref<1x12x64xbf16, #tpu.memory_space<vmem>>, vector<1x12x64xbf16>
    %8 = vector.shape_cast %7 : vector<1x12x64xbf16> to vector<12x64xbf16>
    %cst = arith.constant dense<0.000000e+00> : vector<16x64xf32>
    %9 = tpu.matmul %6, %8, %cst {dimension_numbers = #tpu.dot_dimension_numbers<[1], [0], [0], [1], [0, 0, 1, 1], [], []>} : vector<16x12xbf16>, vector<12x64xbf16>, vector<16x64xf32> -> vector<16x64xf32>
    %10 = arith.addf %3, %9 : vector<16x64xf32>
    %c0_9 = arith.constant 0 : index
    %c0_10 = arith.constant 0 : index
    %11 = vector.load %arg6[%c0_9, %c0_10] : memref<16x64xf32, #tpu.memory_space<vmem>>, vector<16x64xf32>
    tpu.vector_store %arg6[%c0_9, %c0_10], %10 {strides = array<i32>} : memref<16x64xf32, #tpu.memory_space<vmem>>, vector<16x64xf32>,
    %c3_i32 = arith.constant 3 : i32
    %12 = arith.cmpi eq, %arg1, %c3_i32 : i32
    %13 = arith.extui %12 : i1 to i32
    %c0_i32_11 = arith.constant 0 : i32
    %14 = arith.cmpi ne, %13, %c0_i32_11 : i32
    scf.if %14 {
      %c0_12 = arith.constant 0 : index
      %c0_13 = arith.constant 0 : index
      %15 = vector.load %arg6[%c0_12, %c0_13] : memref<16x64xf32, #tpu.memory_space<vmem>>, vector<16x64xf32>
      %c0_14 = arith.constant 0 : index
      %c0_15 = arith.constant 0 : index
      %16 = vector.load %arg4[%c0_14, %c0_15] : memref<1x64xf32, #tpu.memory_space<vmem>>, vector<1x64xf32>
      %17 = vector.broadcast %16 : vector<1x64xf32> to vector<16x64xf32>
      %18 = arith.addf %15, %17 : vector<16x64xf32>
      %cst_16 = arith.constant 0.000000e+00 : f32
      %19 = vector.broadcast %cst_16 : f32 to vector<16x64xf32>
      %20 = arith.maximumf %18, %19 : vector<16x64xf32>
      %21 = arith.truncf %20 : vector<16x64xf32> to vector<16x64xbf16>
      %c0_17 = arith.constant 0 : index
      %c0_18 = arith.constant 0 : index
      %c0_19 = arith.constant 0 : index
      %22 = vector.load %arg5[%c0_17, %c0_18, %c0_19] : memref<1x16x64xbf16, #tpu.memory_space<vmem>>, vector<1x16x64xbf16>
      %23 = vector.shape_cast %22 : vector<1x16x64xbf16> to vector<16x64xbf16>
      %24 = vector.shape_cast %21 : vector<16x64xbf16> to vector<1x16x64xbf16>
      tpu.vector_store %arg5[%c0_17, %c0_18, %c0_19], %24 {strides = array<i32>} : memref<1x16x64xbf16, #tpu.memory_space<vmem>>, vector<1x16x64xbf16>,
    } else {
    }
    return
  }
  func.func @transform_0(%arg0: i32, %arg1: i32) -> (i32, i32, i32, i32) {
    %c0_i32 = arith.constant 0 : i32
    %c0_i32_0 = arith.constant 0 : i32
    %c0_i32_1 = arith.constant 0 : i32
    return %arg0, %arg1, %c0_i32, %c0_i32_0 : i32, i32, i32, i32
  }
  func.func @transform_1(%arg0: i32, %arg1: i32) -> (i32, i32, i32) {
    %c0_i32 = arith.constant 0 : i32
    %c0_i32_0 = arith.constant 0 : i32
    %c0_i32_1 = arith.constant 0 : i32
    return %arg1, %c0_i32, %c0_i32_0 : i32, i32, i32
  }
  func.func @transform_2(%arg0: i32, %arg1: i32) -> (i32, i32) {
    %c0_i32 = arith.constant 0 : i32
    %c0_i32_0 = arith.constant 0 : i32
    %c0_i32_1 = arith.constant 0 : i32
    return %c0_i32, %c0_i32_0 : i32, i32
  }
  func.func @transform_3(%arg0: i32, %arg1: i32) -> (i32, i32, i32) {
    %c0_i32 = arith.constant 0 : i32
    %c0_i32_0 = arith.constant 0 : i32
    %c0_i32_1 = arith.constant 0 : i32
    return %arg0, %c0_i32, %c0_i32_0 : i32, i32, i32
  }
}

module attributes {stable_mosaic.version = 11 : i64} {
  func.func @_patch_embed_kernel(%arg0: i32, %arg1: i32, %arg2: memref<1x1x8x128xbf16, #tpu.memory_space<vmem>>, %arg3: memref<1x128x128xbf16, #tpu.memory_space<vmem>>, %arg4: memref<1x128xf32, #tpu.memory_space<vmem>>, %arg5: memref<1x8x128xbf16, #tpu.memory_space<vmem>>, %arg6: memref<8x128xf32, #tpu.memory_space<vmem>>) attributes {dimension_semantics = [#tpu.dimension_semantics<parallel>, #tpu.dimension_semantics<arbitrary>], iteration_bounds = array<i64: 16, 2>, scalar_prefetch = 0 : i64, scratch_operands = 1 : i64, tpu.core_type = #tpu.core_type<tc>, window_params = [{transform_indices = @transform_0, window_bounds = array<i64: 1, 1, 8, 128>}, {transform_indices = @transform_1, window_bounds = array<i64: 1, 128, 128>}, {pipeline_mode = #tpu.pipeline_mode<synchronous>, transform_indices = @transform_2, window_bounds = array<i64: 1, 128>}, {transform_indices = @transform_3, window_bounds = array<i64: 1, 8, 128>}]} {
    %c0_i32 = arith.constant 0 : i32
    %0 = arith.cmpi eq, %arg1, %c0_i32 : i32
    %1 = arith.extui %0 : i1 to i32
    %c0_i32_0 = arith.constant 0 : i32
    %2 = arith.cmpi ne, %1, %c0_i32_0 : i32
    scf.if %2 {
      %cst_12 = arith.constant 0.000000e+00 : f32
      %14 = vector.broadcast %cst_12 : f32 to vector<8x128xf32>
      %c0_13 = arith.constant 0 : index
      %c0_14 = arith.constant 0 : index
      %15 = vector.load %arg6[%c0_13, %c0_14] : memref<8x128xf32, #tpu.memory_space<vmem>>, vector<8x128xf32>
      tpu.vector_store %arg6[%c0_13, %c0_14], %14 {strides = array<i32>} : memref<8x128xf32, #tpu.memory_space<vmem>>, vector<8x128xf32>,
    } else {
    }
    %c0 = arith.constant 0 : index
    %c0_1 = arith.constant 0 : index
    %3 = vector.load %arg6[%c0, %c0_1] : memref<8x128xf32, #tpu.memory_space<vmem>>, vector<8x128xf32>
    %c0_2 = arith.constant 0 : index
    %c0_3 = arith.constant 0 : index
    %c0_4 = arith.constant 0 : index
    %c0_5 = arith.constant 0 : index
    %4 = vector.load %arg2[%c0_2, %c0_3, %c0_4, %c0_5] : memref<1x1x8x128xbf16, #tpu.memory_space<vmem>>, vector<1x1x8x128xbf16>
    %5 = vector.shape_cast %4 : vector<1x1x8x128xbf16> to vector<8x128xbf16>
    %c0_6 = arith.constant 0 : index
    %c0_7 = arith.constant 0 : index
    %c0_8 = arith.constant 0 : index
    %6 = vector.load %arg3[%c0_6, %c0_7, %c0_8] : memref<1x128x128xbf16, #tpu.memory_space<vmem>>, vector<1x128x128xbf16>
    %7 = vector.shape_cast %6 : vector<1x128x128xbf16> to vector<128x128xbf16>
    %cst = arith.constant dense<0.000000e+00> : vector<8x128xf32>
    %8 = tpu.matmul %5, %7, %cst {dimension_numbers = #tpu.dot_dimension_numbers<[1], [0], [0], [1], [0, 0, 1, 1], [], []>} : vector<8x128xbf16>, vector<128x128xbf16>, vector<8x128xf32> -> vector<8x128xf32>
    %9 = arith.addf %3, %8 : vector<8x128xf32>
    %c0_9 = arith.constant 0 : index
    %c0_10 = arith.constant 0 : index
    %10 = vector.load %arg6[%c0_9, %c0_10] : memref<8x128xf32, #tpu.memory_space<vmem>>, vector<8x128xf32>
    tpu.vector_store %arg6[%c0_9, %c0_10], %9 {strides = array<i32>} : memref<8x128xf32, #tpu.memory_space<vmem>>, vector<8x128xf32>,
    %c1_i32 = arith.constant 1 : i32
    %11 = arith.cmpi eq, %arg1, %c1_i32 : i32
    %12 = arith.extui %11 : i1 to i32
    %c0_i32_11 = arith.constant 0 : i32
    %13 = arith.cmpi ne, %12, %c0_i32_11 : i32
    scf.if %13 {
      %c0_12 = arith.constant 0 : index
      %c0_13 = arith.constant 0 : index
      %14 = vector.load %arg6[%c0_12, %c0_13] : memref<8x128xf32, #tpu.memory_space<vmem>>, vector<8x128xf32>
      %c0_14 = arith.constant 0 : index
      %c0_15 = arith.constant 0 : index
      %15 = vector.load %arg4[%c0_14, %c0_15] : memref<1x128xf32, #tpu.memory_space<vmem>>, vector<1x128xf32>
      %16 = vector.broadcast %15 : vector<1x128xf32> to vector<8x128xf32>
      %17 = arith.addf %14, %16 : vector<8x128xf32>
      %cst_16 = arith.constant 0.000000e+00 : f32
      %18 = vector.broadcast %cst_16 : f32 to vector<8x128xf32>
      %19 = arith.maximumf %17, %18 : vector<8x128xf32>
      %20 = arith.truncf %19 : vector<8x128xf32> to vector<8x128xbf16>
      %c0_17 = arith.constant 0 : index
      %c0_18 = arith.constant 0 : index
      %c0_19 = arith.constant 0 : index
      %21 = vector.load %arg5[%c0_17, %c0_18, %c0_19] : memref<1x8x128xbf16, #tpu.memory_space<vmem>>, vector<1x8x128xbf16>
      %22 = vector.shape_cast %21 : vector<1x8x128xbf16> to vector<8x128xbf16>
      %23 = vector.shape_cast %20 : vector<8x128xbf16> to vector<1x8x128xbf16>
      tpu.vector_store %arg5[%c0_17, %c0_18, %c0_19], %23 {strides = array<i32>} : memref<1x8x128xbf16, #tpu.memory_space<vmem>>, vector<1x8x128xbf16>,
    } else {
    }
    return
  }
  func.func @transform_0(%arg0: i32, %arg1: i32) -> (i32, i32, i32, i32) {
    %c0_i32 = arith.constant 0 : i32
    %c0_i32_0 = arith.constant 0 : i32
    %c0_i32_1 = arith.constant 0 : i32
    return %arg0, %arg1, %c0_i32, %c0_i32_0 : i32, i32, i32, i32
  }
  func.func @transform_1(%arg0: i32, %arg1: i32) -> (i32, i32, i32) {
    %c0_i32 = arith.constant 0 : i32
    %c0_i32_0 = arith.constant 0 : i32
    %c0_i32_1 = arith.constant 0 : i32
    return %arg1, %c0_i32, %c0_i32_0 : i32, i32, i32
  }
  func.func @transform_2(%arg0: i32, %arg1: i32) -> (i32, i32) {
    %c0_i32 = arith.constant 0 : i32
    %c0_i32_0 = arith.constant 0 : i32
    %c0_i32_1 = arith.constant 0 : i32
    return %c0_i32, %c0_i32_0 : i32, i32
  }
  func.func @transform_3(%arg0: i32, %arg1: i32) -> (i32, i32, i32) {
    %c0_i32 = arith.constant 0 : i32
    %c0_i32_0 = arith.constant 0 : i32
    %c0_i32_1 = arith.constant 0 : i32
    return %arg0, %c0_i32, %c0_i32_0 : i32, i32, i32
  }
}

module attributes {stable_mosaic.version = 11 : i64} {
  func.func @_patch_embed_kernel(%arg0: i32, %arg1: i32, %arg2: memref<1x1x4x256xbf16, #tpu.memory_space<vmem>>, %arg3: memref<1x256x320xbf16, #tpu.memory_space<vmem>>, %arg4: memref<1x320xf32, #tpu.memory_space<vmem>>, %arg5: memref<1x4x320xbf16, #tpu.memory_space<vmem>>, %arg6: memref<4x320xf32, #tpu.memory_space<vmem>>) attributes {dimension_semantics = [#tpu.dimension_semantics<parallel>, #tpu.dimension_semantics<arbitrary>], iteration_bounds = array<i64: 8, 2>, scalar_prefetch = 0 : i64, scratch_operands = 1 : i64, tpu.core_type = #tpu.core_type<tc>, window_params = [{transform_indices = @transform_0, window_bounds = array<i64: 1, 1, 4, 256>}, {transform_indices = @transform_1, window_bounds = array<i64: 1, 256, 320>}, {pipeline_mode = #tpu.pipeline_mode<synchronous>, transform_indices = @transform_2, window_bounds = array<i64: 1, 320>}, {transform_indices = @transform_3, window_bounds = array<i64: 1, 4, 320>}]} {
    %c0_i32 = arith.constant 0 : i32
    %0 = arith.cmpi eq, %arg1, %c0_i32 : i32
    %1 = arith.extui %0 : i1 to i32
    %c0_i32_0 = arith.constant 0 : i32
    %2 = arith.cmpi ne, %1, %c0_i32_0 : i32
    scf.if %2 {
      %cst_12 = arith.constant 0.000000e+00 : f32
      %14 = vector.broadcast %cst_12 : f32 to vector<4x320xf32>
      %c0_13 = arith.constant 0 : index
      %c0_14 = arith.constant 0 : index
      %15 = vector.load %arg6[%c0_13, %c0_14] : memref<4x320xf32, #tpu.memory_space<vmem>>, vector<4x320xf32>
      tpu.vector_store %arg6[%c0_13, %c0_14], %14 {strides = array<i32>} : memref<4x320xf32, #tpu.memory_space<vmem>>, vector<4x320xf32>,
    } else {
    }
    %c0 = arith.constant 0 : index
    %c0_1 = arith.constant 0 : index
    %3 = vector.load %arg6[%c0, %c0_1] : memref<4x320xf32, #tpu.memory_space<vmem>>, vector<4x320xf32>
    %c0_2 = arith.constant 0 : index
    %c0_3 = arith.constant 0 : index
    %c0_4 = arith.constant 0 : index
    %c0_5 = arith.constant 0 : index
    %4 = vector.load %arg2[%c0_2, %c0_3, %c0_4, %c0_5] : memref<1x1x4x256xbf16, #tpu.memory_space<vmem>>, vector<1x1x4x256xbf16>
    %5 = vector.shape_cast %4 : vector<1x1x4x256xbf16> to vector<4x256xbf16>
    %c0_6 = arith.constant 0 : index
    %c0_7 = arith.constant 0 : index
    %c0_8 = arith.constant 0 : index
    %6 = vector.load %arg3[%c0_6, %c0_7, %c0_8] : memref<1x256x320xbf16, #tpu.memory_space<vmem>>, vector<1x256x320xbf16>
    %7 = vector.shape_cast %6 : vector<1x256x320xbf16> to vector<256x320xbf16>
    %cst = arith.constant dense<0.000000e+00> : vector<4x320xf32>
    %8 = tpu.matmul %5, %7, %cst {dimension_numbers = #tpu.dot_dimension_numbers<[1], [0], [0], [1], [0, 0, 1, 1], [], []>} : vector<4x256xbf16>, vector<256x320xbf16>, vector<4x320xf32> -> vector<4x320xf32>
    %9 = arith.addf %3, %8 : vector<4x320xf32>
    %c0_9 = arith.constant 0 : index
    %c0_10 = arith.constant 0 : index
    %10 = vector.load %arg6[%c0_9, %c0_10] : memref<4x320xf32, #tpu.memory_space<vmem>>, vector<4x320xf32>
    tpu.vector_store %arg6[%c0_9, %c0_10], %9 {strides = array<i32>} : memref<4x320xf32, #tpu.memory_space<vmem>>, vector<4x320xf32>,
    %c1_i32 = arith.constant 1 : i32
    %11 = arith.cmpi eq, %arg1, %c1_i32 : i32
    %12 = arith.extui %11 : i1 to i32
    %c0_i32_11 = arith.constant 0 : i32
    %13 = arith.cmpi ne, %12, %c0_i32_11 : i32
    scf.if %13 {
      %c0_12 = arith.constant 0 : index
      %c0_13 = arith.constant 0 : index
      %14 = vector.load %arg6[%c0_12, %c0_13] : memref<4x320xf32, #tpu.memory_space<vmem>>, vector<4x320xf32>
      %c0_14 = arith.constant 0 : index
      %c0_15 = arith.constant 0 : index
      %15 = vector.load %arg4[%c0_14, %c0_15] : memref<1x320xf32, #tpu.memory_space<vmem>>, vector<1x320xf32>
      %16 = vector.broadcast %15 : vector<1x320xf32> to vector<4x320xf32>
      %17 = arith.addf %14, %16 : vector<4x320xf32>
      %cst_16 = arith.constant 0.000000e+00 : f32
      %18 = vector.broadcast %cst_16 : f32 to vector<4x320xf32>
      %19 = arith.maximumf %17, %18 : vector<4x320xf32>
      %20 = arith.truncf %19 : vector<4x320xf32> to vector<4x320xbf16>
      %c0_17 = arith.constant 0 : index
      %c0_18 = arith.constant 0 : index
      %c0_19 = arith.constant 0 : index
      %21 = vector.load %arg5[%c0_17, %c0_18, %c0_19] : memref<1x4x320xbf16, #tpu.memory_space<vmem>>, vector<1x4x320xbf16>
      %22 = vector.shape_cast %21 : vector<1x4x320xbf16> to vector<4x320xbf16>
      %23 = vector.shape_cast %20 : vector<4x320xbf16> to vector<1x4x320xbf16>
      tpu.vector_store %arg5[%c0_17, %c0_18, %c0_19], %23 {strides = array<i32>} : memref<1x4x320xbf16, #tpu.memory_space<vmem>>, vector<1x4x320xbf16>,
    } else {
    }
    return
  }
  func.func @transform_0(%arg0: i32, %arg1: i32) -> (i32, i32, i32, i32) {
    %c0_i32 = arith.constant 0 : i32
    %c0_i32_0 = arith.constant 0 : i32
    %c0_i32_1 = arith.constant 0 : i32
    return %arg0, %arg1, %c0_i32, %c0_i32_0 : i32, i32, i32, i32
  }
  func.func @transform_1(%arg0: i32, %arg1: i32) -> (i32, i32, i32) {
    %c0_i32 = arith.constant 0 : i32
    %c0_i32_0 = arith.constant 0 : i32
    %c0_i32_1 = arith.constant 0 : i32
    return %arg1, %c0_i32, %c0_i32_0 : i32, i32, i32
  }
  func.func @transform_2(%arg0: i32, %arg1: i32) -> (i32, i32) {
    %c0_i32 = arith.constant 0 : i32
    %c0_i32_0 = arith.constant 0 : i32
    %c0_i32_1 = arith.constant 0 : i32
    return %c0_i32, %c0_i32_0 : i32, i32
  }
  func.func @transform_3(%arg0: i32, %arg1: i32) -> (i32, i32, i32) {
    %c0_i32 = arith.constant 0 : i32
    %c0_i32_0 = arith.constant 0 : i32
    %c0_i32_1 = arith.constant 0 : i32
    return %arg0, %c0_i32, %c0_i32_0 : i32, i32, i32
  }
}

module attributes {stable_mosaic.version = 11 : i64} {
  func.func @_patch_embed_kernel(%arg0: i32, %arg1: i32, %arg2: memref<1x1x2x640xbf16, #tpu.memory_space<vmem>>, %arg3: memref<1x640x512xbf16, #tpu.memory_space<vmem>>, %arg4: memref<1x512xf32, #tpu.memory_space<vmem>>, %arg5: memref<1x2x512xbf16, #tpu.memory_space<vmem>>, %arg6: memref<2x512xf32, #tpu.memory_space<vmem>>) attributes {dimension_semantics = [#tpu.dimension_semantics<parallel>, #tpu.dimension_semantics<arbitrary>], iteration_bounds = array<i64: 4, 2>, scalar_prefetch = 0 : i64, scratch_operands = 1 : i64, tpu.core_type = #tpu.core_type<tc>, window_params = [{transform_indices = @transform_0, window_bounds = array<i64: 1, 1, 2, 640>}, {transform_indices = @transform_1, window_bounds = array<i64: 1, 640, 512>}, {pipeline_mode = #tpu.pipeline_mode<synchronous>, transform_indices = @transform_2, window_bounds = array<i64: 1, 512>}, {transform_indices = @transform_3, window_bounds = array<i64: 1, 2, 512>}]} {
    %c0_i32 = arith.constant 0 : i32
    %0 = arith.cmpi eq, %arg1, %c0_i32 : i32
    %1 = arith.extui %0 : i1 to i32
    %c0_i32_0 = arith.constant 0 : i32
    %2 = arith.cmpi ne, %1, %c0_i32_0 : i32
    scf.if %2 {
      %cst_12 = arith.constant 0.000000e+00 : f32
      %14 = vector.broadcast %cst_12 : f32 to vector<2x512xf32>
      %c0_13 = arith.constant 0 : index
      %c0_14 = arith.constant 0 : index
      %15 = vector.load %arg6[%c0_13, %c0_14] : memref<2x512xf32, #tpu.memory_space<vmem>>, vector<2x512xf32>
      tpu.vector_store %arg6[%c0_13, %c0_14], %14 {strides = array<i32>} : memref<2x512xf32, #tpu.memory_space<vmem>>, vector<2x512xf32>,
    } else {
    }
    %c0 = arith.constant 0 : index
    %c0_1 = arith.constant 0 : index
    %3 = vector.load %arg6[%c0, %c0_1] : memref<2x512xf32, #tpu.memory_space<vmem>>, vector<2x512xf32>
    %c0_2 = arith.constant 0 : index
    %c0_3 = arith.constant 0 : index
    %c0_4 = arith.constant 0 : index
    %c0_5 = arith.constant 0 : index
    %4 = vector.load %arg2[%c0_2, %c0_3, %c0_4, %c0_5] : memref<1x1x2x640xbf16, #tpu.memory_space<vmem>>, vector<1x1x2x640xbf16>
    %5 = vector.shape_cast %4 : vector<1x1x2x640xbf16> to vector<2x640xbf16>
    %c0_6 = arith.constant 0 : index
    %c0_7 = arith.constant 0 : index
    %c0_8 = arith.constant 0 : index
    %6 = vector.load %arg3[%c0_6, %c0_7, %c0_8] : memref<1x640x512xbf16, #tpu.memory_space<vmem>>, vector<1x640x512xbf16>
    %7 = vector.shape_cast %6 : vector<1x640x512xbf16> to vector<640x512xbf16>
    %cst = arith.constant dense<0.000000e+00> : vector<2x512xf32>
    %8 = tpu.matmul %5, %7, %cst {dimension_numbers = #tpu.dot_dimension_numbers<[1], [0], [0], [1], [0, 0, 1, 1], [], []>} : vector<2x640xbf16>, vector<640x512xbf16>, vector<2x512xf32> -> vector<2x512xf32>
    %9 = arith.addf %3, %8 : vector<2x512xf32>
    %c0_9 = arith.constant 0 : index
    %c0_10 = arith.constant 0 : index
    %10 = vector.load %arg6[%c0_9, %c0_10] : memref<2x512xf32, #tpu.memory_space<vmem>>, vector<2x512xf32>
    tpu.vector_store %arg6[%c0_9, %c0_10], %9 {strides = array<i32>} : memref<2x512xf32, #tpu.memory_space<vmem>>, vector<2x512xf32>,
    %c1_i32 = arith.constant 1 : i32
    %11 = arith.cmpi eq, %arg1, %c1_i32 : i32
    %12 = arith.extui %11 : i1 to i32
    %c0_i32_11 = arith.constant 0 : i32
    %13 = arith.cmpi ne, %12, %c0_i32_11 : i32
    scf.if %13 {
      %c0_12 = arith.constant 0 : index
      %c0_13 = arith.constant 0 : index
      %14 = vector.load %arg6[%c0_12, %c0_13] : memref<2x512xf32, #tpu.memory_space<vmem>>, vector<2x512xf32>
      %c0_14 = arith.constant 0 : index
      %c0_15 = arith.constant 0 : index
      %15 = vector.load %arg4[%c0_14, %c0_15] : memref<1x512xf32, #tpu.memory_space<vmem>>, vector<1x512xf32>
      %16 = vector.broadcast %15 : vector<1x512xf32> to vector<2x512xf32>
      %17 = arith.addf %14, %16 : vector<2x512xf32>
      %cst_16 = arith.constant 0.000000e+00 : f32
      %18 = vector.broadcast %cst_16 : f32 to vector<2x512xf32>
      %19 = arith.maximumf %17, %18 : vector<2x512xf32>
      %20 = arith.truncf %19 : vector<2x512xf32> to vector<2x512xbf16>
      %c0_17 = arith.constant 0 : index
      %c0_18 = arith.constant 0 : index
      %c0_19 = arith.constant 0 : index
      %21 = vector.load %arg5[%c0_17, %c0_18, %c0_19] : memref<1x2x512xbf16, #tpu.memory_space<vmem>>, vector<1x2x512xbf16>
      %22 = vector.shape_cast %21 : vector<1x2x512xbf16> to vector<2x512xbf16>
      %23 = vector.shape_cast %20 : vector<2x512xbf16> to vector<1x2x512xbf16>
      tpu.vector_store %arg5[%c0_17, %c0_18, %c0_19], %23 {strides = array<i32>} : memref<1x2x512xbf16, #tpu.memory_space<vmem>>, vector<1x2x512xbf16>,
    } else {
    }
    return
  }
  func.func @transform_0(%arg0: i32, %arg1: i32) -> (i32, i32, i32, i32) {
    %c0_i32 = arith.constant 0 : i32
    %c0_i32_0 = arith.constant 0 : i32
    %c0_i32_1 = arith.constant 0 : i32
    return %arg0, %arg1, %c0_i32, %c0_i32_0 : i32, i32, i32, i32
  }
  func.func @transform_1(%arg0: i32, %arg1: i32) -> (i32, i32, i32) {
    %c0_i32 = arith.constant 0 : i32
    %c0_i32_0 = arith.constant 0 : i32
    %c0_i32_1 = arith.constant 0 : i32
    return %arg1, %c0_i32, %c0_i32_0 : i32, i32, i32
  }
  func.func @transform_2(%arg0: i32, %arg1: i32) -> (i32, i32) {
    %c0_i32 = arith.constant 0 : i32
    %c0_i32_0 = arith.constant 0 : i32
    %c0_i32_1 = arith.constant 0 : i32
    return %c0_i32, %c0_i32_0 : i32, i32
  }
  func.func @transform_3(%arg0: i32, %arg1: i32) -> (i32, i32, i32) {
    %c0_i32 = arith.constant 0 : i32
    %c0_i32_0 = arith.constant 0 : i32
    %c0_i32_1 = arith.constant 0 : i32
    return %arg0, %c0_i32, %c0_i32_0 : i32, i32, i32
  }
}

module attributes {stable_mosaic.version = 11 : i64} {
  func.func @_fcn_head_kernel(%arg0: i32, %arg1: i32, %arg2: memref<1x4x4x512xbf16, #tpu.memory_space<vmem>>, %arg3: memref<9x512x128xbf16, #tpu.memory_space<vmem>>, %arg4: memref<1x128xf32, #tpu.memory_space<vmem>>, %arg5: memref<128x128xbf16, #tpu.memory_space<vmem>>, %arg6: memref<1x128xf32, #tpu.memory_space<vmem>>, %arg7: memref<1x1x2x128xf32, #tpu.memory_space<vmem>>) attributes {dimension_semantics = [#tpu.dimension_semantics<parallel>, #tpu.dimension_semantics<parallel>], iteration_bounds = array<i64: 2, 2>, scalar_prefetch = 0 : i64, scratch_operands = 0 : i64, tpu.core_type = #tpu.core_type<tc>, window_params = [{transform_indices = @transform_0, window_bounds = array<i64: 1, 4, 4, 512>}, {pipeline_mode = #tpu.pipeline_mode<synchronous>, transform_indices = @transform_1, window_bounds = array<i64: 9, 512, 128>}, {pipeline_mode = #tpu.pipeline_mode<synchronous>, transform_indices = @transform_2, window_bounds = array<i64: 1, 128>}, {pipeline_mode = #tpu.pipeline_mode<synchronous>, transform_indices = @transform_3, window_bounds = array<i64: 128, 128>}, {pipeline_mode = #tpu.pipeline_mode<synchronous>, transform_indices = @transform_4, window_bounds = array<i64: 1, 128>}, {transform_indices = @transform_5, window_bounds = array<i64: 1, 1, 2, 128>}]} {
    %c0_i32 = arith.constant 0 : i32
    %0 = arith.addi %arg1, %c0_i32 : i32
    %c0 = arith.constant 0 : index
    %1 = arith.index_cast %0 : i32 to index
    %c0_0 = arith.constant 0 : index
    %c0_1 = arith.constant 0 : index
    %2 = vector.load %arg2[%c0, %1, %c0_0, %c0_1] : memref<1x4x4x512xbf16, #tpu.memory_space<vmem>>, vector<1x1x4x512xbf16>
    %3 = vector.shape_cast %2 : vector<1x1x4x512xbf16> to vector<1x4x512xbf16>
    %4 = vector.shape_cast %3 : vector<1x4x512xbf16> to vector<4x512xbf16>
    %5 = vector.extract_strided_slice %4 {offsets = [0, 0], sizes = [2, 512], strides = [1, 1]} : vector<4x512xbf16> to vector<2x512xbf16>
    %c0_2 = arith.constant 0 : index
    %c0_3 = arith.constant 0 : index
    %c0_4 = arith.constant 0 : index
    %6 = vector.load %arg3[%c0_2, %c0_3, %c0_4] : memref<9x512x128xbf16, #tpu.memory_space<vmem>>, vector<1x512x128xbf16>
    %7 = vector.shape_cast %6 : vector<1x512x128xbf16> to vector<512x128xbf16>
    %cst = arith.constant dense<0.000000e+00> : vector<2x128xf32>
    %8 = tpu.matmul %5, %7, %cst {dimension_numbers = #tpu.dot_dimension_numbers<[1], [0], [0], [1], [0, 0, 1, 1], [], []>} : vector<2x512xbf16>, vector<512x128xbf16>, vector<2x128xf32> -> vector<2x128xf32>
    %9 = vector.extract_strided_slice %4 {offsets = [1, 0], sizes = [2, 512], strides = [1, 1]} : vector<4x512xbf16> to vector<2x512xbf16>
    %c1 = arith.constant 1 : index
    %c0_5 = arith.constant 0 : index
    %c0_6 = arith.constant 0 : index
    %10 = vector.load %arg3[%c1, %c0_5, %c0_6] : memref<9x512x128xbf16, #tpu.memory_space<vmem>>, vector<1x512x128xbf16>
    %11 = vector.shape_cast %10 : vector<1x512x128xbf16> to vector<512x128xbf16>
    %cst_7 = arith.constant dense<0.000000e+00> : vector<2x128xf32>
    %12 = tpu.matmul %9, %11, %cst_7 {dimension_numbers = #tpu.dot_dimension_numbers<[1], [0], [0], [1], [0, 0, 1, 1], [], []>} : vector<2x512xbf16>, vector<512x128xbf16>, vector<2x128xf32> -> vector<2x128xf32>
    %13 = arith.addf %8, %12 : vector<2x128xf32>
    %14 = vector.extract_strided_slice %4 {offsets = [2, 0], sizes = [2, 512], strides = [1, 1]} : vector<4x512xbf16> to vector<2x512xbf16>
    %c2 = arith.constant 2 : index
    %c0_8 = arith.constant 0 : index
    %c0_9 = arith.constant 0 : index
    %15 = vector.load %arg3[%c2, %c0_8, %c0_9] : memref<9x512x128xbf16, #tpu.memory_space<vmem>>, vector<1x512x128xbf16>
    %16 = vector.shape_cast %15 : vector<1x512x128xbf16> to vector<512x128xbf16>
    %cst_10 = arith.constant dense<0.000000e+00> : vector<2x128xf32>
    %17 = tpu.matmul %14, %16, %cst_10 {dimension_numbers = #tpu.dot_dimension_numbers<[1], [0], [0], [1], [0, 0, 1, 1], [], []>} : vector<2x512xbf16>, vector<512x128xbf16>, vector<2x128xf32> -> vector<2x128xf32>
    %18 = arith.addf %13, %17 : vector<2x128xf32>
    %c1_i32 = arith.constant 1 : i32
    %19 = arith.addi %arg1, %c1_i32 : i32
    %c0_11 = arith.constant 0 : index
    %20 = arith.index_cast %19 : i32 to index
    %c0_12 = arith.constant 0 : index
    %c0_13 = arith.constant 0 : index
    %21 = vector.load %arg2[%c0_11, %20, %c0_12, %c0_13] : memref<1x4x4x512xbf16, #tpu.memory_space<vmem>>, vector<1x1x4x512xbf16>
    %22 = vector.shape_cast %21 : vector<1x1x4x512xbf16> to vector<1x4x512xbf16>
    %23 = vector.shape_cast %22 : vector<1x4x512xbf16> to vector<4x512xbf16>
    %24 = vector.extract_strided_slice %23 {offsets = [0, 0], sizes = [2, 512], strides = [1, 1]} : vector<4x512xbf16> to vector<2x512xbf16>
    %c3 = arith.constant 3 : index
    %c0_14 = arith.constant 0 : index
    %c0_15 = arith.constant 0 : index
    %25 = vector.load %arg3[%c3, %c0_14, %c0_15] : memref<9x512x128xbf16, #tpu.memory_space<vmem>>, vector<1x512x128xbf16>
    %26 = vector.shape_cast %25 : vector<1x512x128xbf16> to vector<512x128xbf16>
    %cst_16 = arith.constant dense<0.000000e+00> : vector<2x128xf32>
    %27 = tpu.matmul %24, %26, %cst_16 {dimension_numbers = #tpu.dot_dimension_numbers<[1], [0], [0], [1], [0, 0, 1, 1], [], []>} : vector<2x512xbf16>, vector<512x128xbf16>, vector<2x128xf32> -> vector<2x128xf32>
    %28 = arith.addf %18, %27 : vector<2x128xf32>
    %29 = vector.extract_strided_slice %23 {offsets = [1, 0], sizes = [2, 512], strides = [1, 1]} : vector<4x512xbf16> to vector<2x512xbf16>
    %c4 = arith.constant 4 : index
    %c0_17 = arith.constant 0 : index
    %c0_18 = arith.constant 0 : index
    %30 = vector.load %arg3[%c4, %c0_17, %c0_18] : memref<9x512x128xbf16, #tpu.memory_space<vmem>>, vector<1x512x128xbf16>
    %31 = vector.shape_cast %30 : vector<1x512x128xbf16> to vector<512x128xbf16>
    %cst_19 = arith.constant dense<0.000000e+00> : vector<2x128xf32>
    %32 = tpu.matmul %29, %31, %cst_19 {dimension_numbers = #tpu.dot_dimension_numbers<[1], [0], [0], [1], [0, 0, 1, 1], [], []>} : vector<2x512xbf16>, vector<512x128xbf16>, vector<2x128xf32> -> vector<2x128xf32>
    %33 = arith.addf %28, %32 : vector<2x128xf32>
    %34 = vector.extract_strided_slice %23 {offsets = [2, 0], sizes = [2, 512], strides = [1, 1]} : vector<4x512xbf16> to vector<2x512xbf16>
    %c5 = arith.constant 5 : index
    %c0_20 = arith.constant 0 : index
    %c0_21 = arith.constant 0 : index
    %35 = vector.load %arg3[%c5, %c0_20, %c0_21] : memref<9x512x128xbf16, #tpu.memory_space<vmem>>, vector<1x512x128xbf16>
    %36 = vector.shape_cast %35 : vector<1x512x128xbf16> to vector<512x128xbf16>
    %cst_22 = arith.constant dense<0.000000e+00> : vector<2x128xf32>
    %37 = tpu.matmul %34, %36, %cst_22 {dimension_numbers = #tpu.dot_dimension_numbers<[1], [0], [0], [1], [0, 0, 1, 1], [], []>} : vector<2x512xbf16>, vector<512x128xbf16>, vector<2x128xf32> -> vector<2x128xf32>
    %38 = arith.addf %33, %37 : vector<2x128xf32>
    %c2_i32 = arith.constant 2 : i32
    %39 = arith.addi %arg1, %c2_i32 : i32
    %c0_23 = arith.constant 0 : index
    %40 = arith.index_cast %39 : i32 to index
    %c0_24 = arith.constant 0 : index
    %c0_25 = arith.constant 0 : index
    %41 = vector.load %arg2[%c0_23, %40, %c0_24, %c0_25] : memref<1x4x4x512xbf16, #tpu.memory_space<vmem>>, vector<1x1x4x512xbf16>
    %42 = vector.shape_cast %41 : vector<1x1x4x512xbf16> to vector<1x4x512xbf16>
    %43 = vector.shape_cast %42 : vector<1x4x512xbf16> to vector<4x512xbf16>
    %44 = vector.extract_strided_slice %43 {offsets = [0, 0], sizes = [2, 512], strides = [1, 1]} : vector<4x512xbf16> to vector<2x512xbf16>
    %c6 = arith.constant 6 : index
    %c0_26 = arith.constant 0 : index
    %c0_27 = arith.constant 0 : index
    %45 = vector.load %arg3[%c6, %c0_26, %c0_27] : memref<9x512x128xbf16, #tpu.memory_space<vmem>>, vector<1x512x128xbf16>
    %46 = vector.shape_cast %45 : vector<1x512x128xbf16> to vector<512x128xbf16>
    %cst_28 = arith.constant dense<0.000000e+00> : vector<2x128xf32>
    %47 = tpu.matmul %44, %46, %cst_28 {dimension_numbers = #tpu.dot_dimension_numbers<[1], [0], [0], [1], [0, 0, 1, 1], [], []>} : vector<2x512xbf16>, vector<512x128xbf16>, vector<2x128xf32> -> vector<2x128xf32>
    %48 = arith.addf %38, %47 : vector<2x128xf32>
    %49 = vector.extract_strided_slice %43 {offsets = [1, 0], sizes = [2, 512], strides = [1, 1]} : vector<4x512xbf16> to vector<2x512xbf16>
    %c7 = arith.constant 7 : index
    %c0_29 = arith.constant 0 : index
    %c0_30 = arith.constant 0 : index
    %50 = vector.load %arg3[%c7, %c0_29, %c0_30] : memref<9x512x128xbf16, #tpu.memory_space<vmem>>, vector<1x512x128xbf16>
    %51 = vector.shape_cast %50 : vector<1x512x128xbf16> to vector<512x128xbf16>
    %cst_31 = arith.constant dense<0.000000e+00> : vector<2x128xf32>
    %52 = tpu.matmul %49, %51, %cst_31 {dimension_numbers = #tpu.dot_dimension_numbers<[1], [0], [0], [1], [0, 0, 1, 1], [], []>} : vector<2x512xbf16>, vector<512x128xbf16>, vector<2x128xf32> -> vector<2x128xf32>
    %53 = arith.addf %48, %52 : vector<2x128xf32>
    %54 = vector.extract_strided_slice %43 {offsets = [2, 0], sizes = [2, 512], strides = [1, 1]} : vector<4x512xbf16> to vector<2x512xbf16>
    %c8 = arith.constant 8 : index
    %c0_32 = arith.constant 0 : index
    %c0_33 = arith.constant 0 : index
    %55 = vector.load %arg3[%c8, %c0_32, %c0_33] : memref<9x512x128xbf16, #tpu.memory_space<vmem>>, vector<1x512x128xbf16>
    %56 = vector.shape_cast %55 : vector<1x512x128xbf16> to vector<512x128xbf16>
    %cst_34 = arith.constant dense<0.000000e+00> : vector<2x128xf32>
    %57 = tpu.matmul %54, %56, %cst_34 {dimension_numbers = #tpu.dot_dimension_numbers<[1], [0], [0], [1], [0, 0, 1, 1], [], []>} : vector<2x512xbf16>, vector<512x128xbf16>, vector<2x128xf32> -> vector<2x128xf32>
    %58 = arith.addf %53, %57 : vector<2x128xf32>
    %c0_35 = arith.constant 0 : index
    %c0_36 = arith.constant 0 : index
    %59 = vector.load %arg4[%c0_35, %c0_36] : memref<1x128xf32, #tpu.memory_space<vmem>>, vector<1x128xf32>
    %60 = vector.broadcast %59 : vector<1x128xf32> to vector<2x128xf32>
    %61 = arith.addf %58, %60 : vector<2x128xf32>
    %cst_37 = arith.constant 0.000000e+00 : f32
    %62 = vector.broadcast %cst_37 : f32 to vector<2x128xf32>
    %63 = arith.maximumf %61, %62 : vector<2x128xf32>
    %64 = arith.truncf %63 : vector<2x128xf32> to vector<2x128xbf16>
    %c0_38 = arith.constant 0 : index
    %c0_39 = arith.constant 0 : index
    %65 = vector.load %arg5[%c0_38, %c0_39] : memref<128x128xbf16, #tpu.memory_space<vmem>>, vector<128x128xbf16>
    %cst_40 = arith.constant dense<0.000000e+00> : vector<2x128xf32>
    %66 = tpu.matmul %64, %65, %cst_40 {dimension_numbers = #tpu.dot_dimension_numbers<[1], [0], [0], [1], [0, 0, 1, 1], [], []>} : vector<2x128xbf16>, vector<128x128xbf16>, vector<2x128xf32> -> vector<2x128xf32>
    %c0_41 = arith.constant 0 : index
    %c0_42 = arith.constant 0 : index
    %67 = vector.load %arg6[%c0_41, %c0_42] : memref<1x128xf32, #tpu.memory_space<vmem>>, vector<1x128xf32>
    %68 = vector.broadcast %67 : vector<1x128xf32> to vector<2x128xf32>
    %69 = arith.addf %66, %68 : vector<2x128xf32>
    %c0_43 = arith.constant 0 : index
    %c0_44 = arith.constant 0 : index
    %c0_45 = arith.constant 0 : index
    %c0_46 = arith.constant 0 : index
    %70 = vector.load %arg7[%c0_43, %c0_44, %c0_45, %c0_46] : memref<1x1x2x128xf32, #tpu.memory_space<vmem>>, vector<1x1x2x128xf32>
    %71 = vector.shape_cast %70 : vector<1x1x2x128xf32> to vector<2x128xf32>
    %72 = vector.shape_cast %69 : vector<2x128xf32> to vector<1x1x2x128xf32>
    tpu.vector_store %arg7[%c0_43, %c0_44, %c0_45, %c0_46], %72 {strides = array<i32>} : memref<1x1x2x128xf32, #tpu.memory_space<vmem>>, vector<1x1x2x128xf32>,
    return
  }
  func.func @transform_0(%arg0: i32, %arg1: i32) -> (i32, i32, i32, i32) {
    %c0_i32 = arith.constant 0 : i32
    %c0_i32_0 = arith.constant 0 : i32
    %c0_i32_1 = arith.constant 0 : i32
    %c0_i32_2 = arith.constant 0 : i32
    return %arg0, %c0_i32, %c0_i32_0, %c0_i32_1 : i32, i32, i32, i32
  }
  func.func @transform_1(%arg0: i32, %arg1: i32) -> (i32, i32, i32) {
    %c0_i32 = arith.constant 0 : i32
    %c0_i32_0 = arith.constant 0 : i32
    %c0_i32_1 = arith.constant 0 : i32
    %c0_i32_2 = arith.constant 0 : i32
    return %c0_i32, %c0_i32_0, %c0_i32_1 : i32, i32, i32
  }
  func.func @transform_2(%arg0: i32, %arg1: i32) -> (i32, i32) {
    %c0_i32 = arith.constant 0 : i32
    %c0_i32_0 = arith.constant 0 : i32
    %c0_i32_1 = arith.constant 0 : i32
    return %c0_i32, %c0_i32_0 : i32, i32
  }
  func.func @transform_3(%arg0: i32, %arg1: i32) -> (i32, i32) {
    %c0_i32 = arith.constant 0 : i32
    %c0_i32_0 = arith.constant 0 : i32
    %c0_i32_1 = arith.constant 0 : i32
    return %c0_i32, %c0_i32_0 : i32, i32
  }
  func.func @transform_4(%arg0: i32, %arg1: i32) -> (i32, i32) {
    %c0_i32 = arith.constant 0 : i32
    %c0_i32_0 = arith.constant 0 : i32
    %c0_i32_1 = arith.constant 0 : i32
    return %c0_i32, %c0_i32_0 : i32, i32
  }
  func.func @transform_5(%arg0: i32, %arg1: i32) -> (i32, i32, i32, i32) {
    %c0_i32 = arith.constant 0 : i32
    %c0_i32_0 = arith.constant 0 : i32
    %c0_i32_1 = arith.constant 0 : i32
    return %arg0, %arg1, %c0_i32, %c0_i32_0 : i32, i32, i32, i32
  }
}

module attributes {stable_mosaic.version = 11 : i64} {
  func.func @_bilinear_kernel(%arg0: i32, %arg1: i32, %arg2: memref<1x1x8x8xf32, #tpu.memory_space<vmem>>, %arg3: memref<64x8xf32, #tpu.memory_space<vmem>>, %arg4: memref<8x64xf32, #tpu.memory_space<vmem>>, %arg5: memref<1x1x64x64xf32, #tpu.memory_space<vmem>>) attributes {dimension_semantics = [#tpu.dimension_semantics<parallel>, #tpu.dimension_semantics<parallel>], iteration_bounds = array<i64: 2, 19>, scalar_prefetch = 0 : i64, scratch_operands = 0 : i64, tpu.core_type = #tpu.core_type<tc>, window_params = [{transform_indices = @transform_0, window_bounds = array<i64: 1, 1, 8, 8>}, {pipeline_mode = #tpu.pipeline_mode<synchronous>, transform_indices = @transform_1, window_bounds = array<i64: 64, 8>}, {pipeline_mode = #tpu.pipeline_mode<synchronous>, transform_indices = @transform_2, window_bounds = array<i64: 8, 64>}, {transform_indices = @transform_3, window_bounds = array<i64: 1, 1, 64, 64>}]} {
    %c0 = arith.constant 0 : index
    %c0_0 = arith.constant 0 : index
    %c0_1 = arith.constant 0 : index
    %c0_2 = arith.constant 0 : index
    %0 = vector.load %arg2[%c0, %c0_0, %c0_1, %c0_2] : memref<1x1x8x8xf32, #tpu.memory_space<vmem>>, vector<1x1x8x8xf32>
    %1 = vector.shape_cast %0 : vector<1x1x8x8xf32> to vector<8x8xf32>
    %c0_3 = arith.constant 0 : index
    %c0_4 = arith.constant 0 : index
    %2 = vector.load %arg3[%c0_3, %c0_4] : memref<64x8xf32, #tpu.memory_space<vmem>>, vector<64x8xf32>
    %cst = arith.constant dense<0.000000e+00> : vector<64x8xf32>
    %3 = tpu.matmul %2, %1, %cst {dimension_numbers = #tpu.dot_dimension_numbers<[1], [0], [0], [1], [0, 0, 1, 1], [], []>} : vector<64x8xf32>, vector<8x8xf32>, vector<64x8xf32> -> vector<64x8xf32>
    %c0_5 = arith.constant 0 : index
    %c0_6 = arith.constant 0 : index
    %4 = vector.load %arg4[%c0_5, %c0_6] : memref<8x64xf32, #tpu.memory_space<vmem>>, vector<8x64xf32>
    %cst_7 = arith.constant dense<0.000000e+00> : vector<64x64xf32>
    %5 = tpu.matmul %3, %4, %cst_7 {dimension_numbers = #tpu.dot_dimension_numbers<[1], [0], [0], [1], [0, 0, 1, 1], [], []>} : vector<64x8xf32>, vector<8x64xf32>, vector<64x64xf32> -> vector<64x64xf32>
    %c0_8 = arith.constant 0 : index
    %c0_9 = arith.constant 0 : index
    %c0_10 = arith.constant 0 : index
    %c0_11 = arith.constant 0 : index
    %6 = vector.load %arg5[%c0_8, %c0_9, %c0_10, %c0_11] : memref<1x1x64x64xf32, #tpu.memory_space<vmem>>, vector<1x1x64x64xf32>
    %7 = vector.shape_cast %6 : vector<1x1x64x64xf32> to vector<64x64xf32>
    %8 = vector.shape_cast %5 : vector<64x64xf32> to vector<1x1x64x64xf32>
    tpu.vector_store %arg5[%c0_8, %c0_9, %c0_10, %c0_11], %8 {strides = array<i32>} : memref<1x1x64x64xf32, #tpu.memory_space<vmem>>, vector<1x1x64x64xf32>,
    return
  }
  func.func @transform_0(%arg0: i32, %arg1: i32) -> (i32, i32, i32, i32) {
    %c0_i32 = arith.constant 0 : i32
    %c0_i32_0 = arith.constant 0 : i32
    %c0_i32_1 = arith.constant 0 : i32
    return %arg0, %arg1, %c0_i32, %c0_i32_0 : i32, i32, i32, i32
  }
  func.func @transform_1(%arg0: i32, %arg1: i32) -> (i32, i32) {
    %c0_i32 = arith.constant 0 : i32
    %c0_i32_0 = arith.constant 0 : i32
    %c0_i32_1 = arith.constant 0 : i32
    return %c0_i32, %c0_i32_0 : i32, i32
  }
  func.func @transform_2(%arg0: i32, %arg1: i32) -> (i32, i32) {
    %c0_i32 = arith.constant 0 : i32
    %c0_i32_0 = arith.constant 0 : i32
    %c0_i32_1 = arith.constant 0 : i32
    return %c0_i32, %c0_i32_0 : i32, i32
  }
  func.func @transform_3(%arg0: i32, %arg1: i32) -> (i32, i32, i32, i32) {
    %c0_i32 = arith.constant 0 : i32
    %c0_i32_0 = arith.constant 0 : i32
    %c0_i32_1 = arith.constant 0 : i32
    return %arg0, %arg1, %c0_i32, %c0_i32_0 : i32, i32, i32, i32
  }
}

</mosaic_0001>

<llo_original>
// kernel: encoder_decoder2_forward.6
$region0: #{encoder_decoder2_forward.6}
  #allocation0 [shape = 'u32[]', space=smem, size = 0x4, offset = 0x4, fixed_abs, tag = 'smem constant byte address 0x4 - core index']
  #allocation1 [shape = 'u32[144,128]{1,0:T(1,128)}', space=vmem, size = 0x12000, scoped, tag = 'internal scratch']
  #allocation2 [shape = 'f32[16,64]{1,0:T(8,128)}', space=vmem, size = 0x2000, scoped, tag = 'scratch operand']
  %s0 = inlined_call_operand.vmem [shape: f32[32,4,16,12], index: 0, kind: input, shape index: {}]
  %s1 = inlined_call_operand.vmem [shape: bf16[4,12,64], index: 1, kind: input, shape index: {}]
  %s2 = inlined_call_operand.vmem [shape: f32[1,64], index: 2, kind: input, shape index: {}]
  %s3 = inlined_call_operand.vmem [shape: bf16[32,16,64], index: 3, kind: output, shape index: {}]
  %s4 = sld [smem:[#allocation0]]
  $region53: #{encoder_decoder2_forward.6} parent=0
    _
  %s6 = ssub.s32 1, %s4
  %s7 = scalar_select 0, %s6, %s4
  loop: start=0, step=1, limit=130
  $region2: #{encoder_decoder2_forward.6} parent=0 // loop_pre_header
    _
  $region3: #{encoder_decoder2_forward.6} parent=0 // loop_header
    %s9 = sphi 0, %s13
    %p10 = scmp.ge.s32.totalorder %s9, 130
    %s16 = sphi 0, %s28
    %s17 = sphi 0, %s24
    %s18 = sphi 0, %s16
    %s19 = sphi 0, %s17
    %s20 = sphi 0, %s18
    %s21 = sphi 0, %s19
    %s33 = sphi 0, %s35
    %s36 = sphi 0, %s33
    %s37 = sphi 0, %s36
    %s53 = sphi 0, %s37
    %s59 = sphi 0, %s61
    %s62 = sphi 0, %s59
    %s63 = sphi 0, %s62
    %s79 = sphi 0, %s63
    %s83 = sphi 0, %s83
    %s85 = sphi 0, %s83
    %s86 = sphi 0, %s85
    %s100 = sphi 0, %s86
    %s106 = sphi 0, %s108
    %s109 = sphi 0, %s106
    %s110 = sphi 0, %s109
    %s126 = sphi 0, %s110
  $region4: #{encoder_decoder2_forward.6} parent=0 // loop_header_branch
    %12 = sbr.rel (%p10) target = $region8
  $region5: #{encoder_decoder2_forward.6} parent=0 // loop_body
    %s14 = ssub.s32 %s9, 1
    %s15 = ssub.s32 %s9, 2
    %s22 = sadd.s32 1, %s17
    %p23 = scmp.ge.s32.totalorder %s22, 4
    %s24 = scalar_select %p23, 0, %s22
    %s25 = sadd.s32 1, %s16
    %s26 = scalar_select %p23, %s25, %s16
    %p27 = scmp.ge.s32.totalorder %s26, 32
    %s28 = scalar_select %p27, 0, %s26
    %s29 = ssub.s32 %s16, %s28
    %s30 = ssub.s32 %s17, %s24
    %s31 = sor.u32 %s29, %s30
    %p32 = scmp.eq.s32.totalorder %s31, 0
    %s34 = sadd.s32 %s33, 1
    %s35 = scalar_select %p32, %s33, %s34
    %p38 = pneg %p32
    %p39 = scmp.eq.s32.totalorder %s9, 127
    %p40 = por %p38, %p39
    %p41 = scmp.ne.s32.totalorder %s33, %s36
    %p42 = scmp.eq.s32.totalorder %s9, 0
    %p43 = por %p41, %p42
    %p44 = scmp.ne.s32.totalorder %s33, %s36
    %p45 = scmp.eq.s32.totalorder %s14, 127
    %p46 = por %p44, %p45
    %p47 = scmp.ne.s32.totalorder %s36, %s37
    %p48 = scmp.eq.s32.totalorder %s14, 0
    %p49 = por %p47, %p48
    %p50 = scmp.ne.s32.totalorder %s36, %s37
    %p51 = scmp.eq.s32.totalorder %s15, 127
    %p52 = por %p50, %p51
    %p54 = scmp.ne.s32.totalorder %s37, %s53
    %p55 = scmp.eq.s32.totalorder %s15, 0
    %p56 = por %p54, %p55
    %s57 = ssub.s32 %s17, %s24
    %p58 = scmp.eq.s32.totalorder %s57, 0
    %s60 = sadd.s32 %s59, 1
    %s61 = scalar_select %p58, %s59, %s60
    %p64 = pneg %p58
    %p65 = scmp.eq.s32.totalorder %s9, 127
    %p66 = por %p64, %p65
    %p67 = scmp.ne.s32.totalorder %s59, %s62
    %p68 = scmp.eq.s32.totalorder %s9, 0
    %p69 = por %p67, %p68
    %p70 = scmp.ne.s32.totalorder %s59, %s62
    %p71 = scmp.eq.s32.totalorder %s14, 127
    %p72 = por %p70, %p71
    %p73 = scmp.ne.s32.totalorder %s62, %s63
    %p74 = scmp.eq.s32.totalorder %s14, 0
    %p75 = por %p73, %p74
    %p76 = scmp.ne.s32.totalorder %s62, %s63
    %p77 = scmp.eq.s32.totalorder %s15, 127
    %p78 = por %p76, %p77
    %p80 = scmp.ne.s32.totalorder %s63, %s79
    %p81 = scmp.eq.s32.totalorder %s15, 0
    %p82 = por %p80, %p81
    %s84 = sadd.s32 %s83, 1
    %p87 = scmp.eq.s32.totalorder %s9, 127
    %p88 = scmp.ne.s32.totalorder %s83, %s85
    %p89 = scmp.eq.s32.totalorder %s9, 0
    %p90 = por %p88, %p89
    %p91 = scmp.ne.s32.totalorder %s83, %s85
    %p92 = scmp.eq.s32.totalorder %s14, 127
    %p93 = por %p91, %p92
    %p94 = scmp.ne.s32.totalorder %s85, %s86
    %p95 = scmp.eq.s32.totalorder %s14, 0
    %p96 = por %p94, %p95
    %p97 = scmp.ne.s32.totalorder %s85, %s86
    %p98 = scmp.eq.s32.totalorder %s15, 127
    %p99 = por %p97, %p98
    %p101 = scmp.ne.s32.totalorder %s86, %s100
    %p102 = scmp.eq.s32.totalorder %s15, 0
    %p103 = por %p101, %p102
    %s104 = ssub.s32 %s16, %s28
    %p105 = scmp.eq.s32.totalorder %s104, 0
    %s107 = sadd.s32 %s106, 1
    %s108 = scalar_select %p105, %s106, %s107
    %p111 = pneg %p105
    %p112 = scmp.eq.s32.totalorder %s9, 127
    %p113 = por %p111, %p112
    %p114 = scmp.ne.s32.totalorder %s106, %s109
    %p115 = scmp.eq.s32.totalorder %s9, 0
    %p116 = por %p114, %p115
    %p117 = scmp.ne.s32.totalorder %s106, %s109
    %p118 = scmp.eq.s32.totalorder %s14, 127
    %p119 = por %p117, %p118
    %p120 = scmp.ne.s32.totalorder %s109, %s110
    %p121 = scmp.eq.s32.totalorder %s14, 0
    %p122 = por %p120, %p121
    %p123 = scmp.ne.s32.totalorder %s109, %s110
    %p124 = scmp.eq.s32.totalorder %s15, 127
    %p125 = por %p123, %p124
    %p127 = scmp.ne.s32.totalorder %s110, %s126
    %p128 = scmp.eq.s32.totalorder %s15, 0
    %p129 = por %p127, %p128
    %p130 = scmp.le.s32.totalorder 1, %s9
    %p131 = scmp.lt.s32.totalorder %s9, 129
    %p132 = pnand %p130, %p131
    %p133 = pneg %p132
    // Predicated region
    $region9: #{encoder_decoder2_forward.6} parent=5 // pred_check
      _
    $region10: #{encoder_decoder2_forward.6} parent=5 // pred_check_branch
      %135 = sbr.rel (%p132) target = $region12
    $region11: #{encoder_decoder2_forward.6} parent=5 // pred_region
      %s136 = ssub.s32 %s9, 1
      // Predicated region
      $region13: #{encoder_decoder2_forward.6} parent=11 // pred_check
        %p137 = pneg %p96
      $region14: #{encoder_decoder2_forward.6} parent=11 // pred_check_branch
        %139 = sbr.rel (%p137) target = $region16
      $region15: #{encoder_decoder2_forward.6} parent=11 // pred_region
        _
      $region16: #{encoder_decoder2_forward.6} parent=11 // pred_fallthru
        _
    $region12: #{encoder_decoder2_forward.6} parent=5 // pred_fallthru
      _
    %p140 = scmp.lt.s32.totalorder %s9, 128
    // Predicated region
    $region17: #{encoder_decoder2_forward.6} parent=5 // pred_check
      %p141 = pneg %p140
    $region18: #{encoder_decoder2_forward.6} parent=5 // pred_check_branch
      %143 = sbr.rel (%p141) target = $region20
    $region19: #{encoder_decoder2_forward.6} parent=5 // pred_region
      // Predicated region
      $region21: #{encoder_decoder2_forward.6} parent=19 // pred_check
        %p144 = pneg %p43
      $region22: #{encoder_decoder2_forward.6} parent=19 // pred_check_branch
        %146 = sbr.rel (%p144) target = $region24
      $region23: #{encoder_decoder2_forward.6} parent=19 // pred_region
        %p147 = scmp.lt.s32.totalorder %s16, 31
        %s148 = scalar_select %p147, %s16, 31
        %p149 = scmp.lt.s32.totalorder %s17, 3
        %s150 = scalar_select %p149, %s17, 3
        %s151 = smul.addr %s150, 2
        %s152 = smul.addr %s148, 8
        %s153 = sadd.s32 %s151, %s152
        %s154 = smul.addr %s153, 8
        %s155 = scalar_lea.vmem %s0, %s154
      $region24: #{encoder_decoder2_forward.6} parent=19 // pred_fallthru
        _
      // Predicated region
      $region25: #{encoder_decoder2_forward.6} parent=19 // pred_check
        %p156 = pneg %p69
      $region26: #{encoder_decoder2_forward.6} parent=19 // pred_check_branch
        %158 = sbr.rel (%p156) target = $region28
      $region27: #{encoder_decoder2_forward.6} parent=19 // pred_region
        %p159 = scmp.lt.s32.totalorder %s17, 3
        %s160 = scalar_select %p159, %s17, 3
        %s161 = smul.addr %s160, 2
        %s162 = smul.addr %s161, 4
        %s163 = scalar_lea.vmem %s1, %s162
      $region28: #{encoder_decoder2_forward.6} parent=19 // pred_fallthru
        _
    $region20: #{encoder_decoder2_forward.6} parent=5 // pred_fallthru
      _
    %p164 = scmp.le.s32.totalorder 1, %s9
    %p165 = scmp.lt.s32.totalorder %s9, 129
    %p166 = pnand %p164, %p165
    %p167 = pneg %p166
    // Predicated region
    $region29: #{encoder_decoder2_forward.6} parent=5 // pred_check
      _
    $region30: #{encoder_decoder2_forward.6} parent=5 // pred_check_branch
      %169 = sbr.rel (%p166) target = $region32
    $region31: #{encoder_decoder2_forward.6} parent=5 // pred_region
      %s170 = ssub.s32 %s9, 1
      %p171 = scmp.lt.s32.totalorder %s18, 31
      %s172 = scalar_select %p171, %s18, 31
      %p173 = scmp.lt.s32.totalorder %s19, 3
      %s174 = scalar_select %p173, %s19, 3
      %s175 = smul.addr %s174, 2
      %s176 = smul.addr %s172, 8
      %s177 = sadd.s32 %s175, %s176
      %s178 = smul.addr %s177, 8
      %s179 = scalar_lea.vmem %s0, %s178
      %p180 = pneg %p49
      %p181 = pneg %p46
      %p182 = scmp.lt.s32.totalorder %s19, 3
      %s183 = scalar_select %p182, %s19, 3
      %s184 = smul.addr %s183, 2
      %s185 = smul.addr %s184, 4
      %s186 = scalar_lea.vmem %s1, %s185
      %p187 = pneg %p75
      %p188 = pneg %p72
      %p189 = pneg %p96
      %p190 = pneg %p93
      %p191 = pneg %p122
      %p192 = pneg %p119
      %p193 = scmp.lt.s32.totalorder %s18, 31
      %s194 = scalar_select %p193, %s18, 31
      %s195 = smul.addr %s194, 2
      %s196 = smul.addr %s195, 4
      %s197 = scalar_lea.vmem %s3, %s196
      %p198 = scmp.lt.s32.totalorder %s18, 31
      %s199 = scalar_select %p198, %s18, 31
      %p200 = scmp.lt.s32.totalorder %s19, 3
      %s201 = scalar_select %p200, %s19, 3
      %s202 = smul.addr %s201, 2
      %s203 = smul.addr %s199, 8
      %s204 = sadd.s32 %s202, %s203
      %s205 = smul.addr %s204, 8
      %s206 = scalar_lea.vmem %s0, %s205
      %p207 = scmp.lt.s32.totalorder %s19, 3
      %s208 = scalar_select %p207, %s19, 3
      %s209 = smul.addr %s208, 2
      %s210 = smul.addr %s209, 4
      %s211 = scalar_lea.vmem %s1, %s210
      %p212 = scmp.lt.s32.totalorder %s18, 31
      %s213 = scalar_select %p212, %s18, 31
      %s214 = smul.addr %s213, 2
      %s215 = smul.addr %s214, 4
      %s216 = scalar_lea.vmem %s3, %s215
      %p218 = scmp.eq.s32.totalorder %s19, 0
      // Predicated region
      $region33: #{encoder_decoder2_forward.6} parent=31 // pred_check
        %p219 = pneg %p218
      $region34: #{encoder_decoder2_forward.6} parent=31 // pred_check_branch
        %221 = sbr.rel (%p219) target = $region36
      $region35: #{encoder_decoder2_forward.6} parent=31 // pred_region
        %vm222 = vcmask 523264
        %223 = vst.msk [vmem:[#allocation2] sm:$0xff] %vm222, 0.0
        %224 = vst.msk [vmem:[#allocation2 + $0x8] sm:$0xff] %vm222, 0.0
      $region36: #{encoder_decoder2_forward.6} parent=31 // pred_fallthru
        _
      %v225 = vld [vmem:[#allocation2] sm:$0xff]
      %v226 = vld [vmem:[#allocation2 + $0x8] sm:$0xff]
      %v227 = vld [vmem:[%s206] sm:$0xff]
      %v228 = vld [vmem:[%s206 + $0x8] sm:$0xff]
      %v229 = vpack.c.bf16 %v228, %v227
      %v230 = vld [vmem:[%s211] sm:$0xf]
      %v231 = vld [vmem:[%s211 + $0x4] sm:$0x3]
      %v234 = vunpack.c.l.b16 %v230
      %v235 = vunpack.c.l.b16 %v231
      %v236 = vpack.c.b16 %v235, %v234
      %vm237 = vcmask 97280
      %v239 = vsel %vm237, %v229, 0
      %vm241 = vcmask 1045504
      %v243 = vsel %vm241, %v236, 0
      %245 = vmatprep.subr.bf16.mxu0 0
      %246 = vmatpush1.bf16.msra.mxu0 0
      %247 = vmatprep.subr.bf16.mxu0 0
      %248 = vmatpush1.bf16.msra.mxu0 0
      %249 = vmatprep.subr.bf16.mxu0 0
      %250 = vmatpush1.bf16.msra.mxu0 0
      %251 = vmatprep.subr.bf16.mxu0 0
      %252 = vmatpush1.bf16.msra.mxu0 0
      %253 = vmatprep.subr.bf16.mxu0 0
      %254 = vmatpush1.bf16.msra.mxu0 0
      %255 = vmatprep.subr.bf16.mxu0 0
      %256 = vmatpush1.bf16.msra.mxu0 0
      %257 = vmatprep.subr.bf16.mxu0 0
      %258 = vmatpush1.bf16.msra.mxu0 0
      %259 = vmatprep.subr.bf16.mxu0 0
      %260 = vmatpush1.bf16.msra.mxu0 %v243
      %261 = vmatprep.subr.bf16.mxu0 0
      %262 = vmatpush2.bf16.msra.mxu0 0
      %263 = vmatprep.subr.bf16.mxu0 0
      %264 = vmatpush2.bf16.msra.mxu0 0
      %265 = vmatprep.subr.bf16.mxu0 0
      %266 = vmatpush2.bf16.msra.mxu0 0
      %267 = vmatprep.subr.bf16.mxu0 0
      %268 = vmatpush2.bf16.msra.mxu0 0
      %269 = vmatprep.subr.bf16.mxu0 0
      %270 = vmatpush2.bf16.msra.mxu0 0
      %271 = vmatprep.subr.bf16.mxu0 0
      %272 = vmatpush2.bf16.msra.mxu0 0
      %273 = vmatprep.subr.bf16.mxu0 0
      %274 = vmatpush2.bf16.msra.mxu0 0
      %275 = vmatprep.subr.bf16.mxu0 0
      %276 = vmatpush2.bf16.msra.mxu0 0
      %277 = vmatprep.mubr.bf16.mxu0 0
      %278 = vmatmul.mubr.bf16.gmra.mxu0 %v239
      %v279 = vpop.f32.mrf.mxu0
      %v280 = vadd.f32 0.0, %v279
      %v281 = vpop.f32.mrf.mxu0
      %v282 = vpop.f32.mrf.mxu0
      %v283 = vadd.f32 0.0, %v282
      %v284 = vpop.f32.mrf.mxu0
      %285 = vdwg.mxu0
      %v286 = vadd.f32 %v225, %v280
      %v287 = vadd.f32 %v226, %v283
      %vm288 = vcmask 523264
      %289 = vst.msk [vmem:[#allocation2] sm:$0xff] %vm288, %v286
      %290 = vst.msk [vmem:[#allocation2 + $0x8] sm:$0xff] %vm288, %v287
      %p291 = scmp.eq.s32.totalorder %s19, 3
      // Predicated region
      $region37: #{encoder_decoder2_forward.6} parent=31 // pred_check
        %p292 = pneg %p291
      $region38: #{encoder_decoder2_forward.6} parent=31 // pred_check_branch
        %294 = sbr.rel (%p292) target = $region40
      $region39: #{encoder_decoder2_forward.6} parent=31 // pred_region
        %v295 = vld [vmem:[#allocation2] sm:$0xff]
        %v296 = vld [vmem:[#allocation2 + $0x8] sm:$0xff]
        %v297 = vld [vmem:[%s2] sm:$0x1]
        %v299 = vlaneseq
        %v300 = vshrl.u32 %v299, 7
        %v301 = vsub.s32 0, %v300
        %v302 = vrot.slane %v297, %v301
        %v304 = vadd.f32 %v295, %v302
        %v305 = vadd.f32 %v296, %v302
        %v306 = vmax.f32 %v304, 0.0
        %v307 = vmax.f32 %v305, 0.0
        %v308 = vpack.c.bf16 %v307, %v306
        %v310 = vunpack.c.l.b16 %v308
        %v311 = vunpack.c.h.b16 %v308
        %v312 = vpack.c.b16 %v310, %v310
        %v313 = vpack.c.b16 %v311, %v311
        %vm316 = vcmask 519168
        %317 = vst.msk [vmem:[%s216] sm:$0xf] %vm316, %v312
        %318 = vst.msk [vmem:[%s216 + $0x4] sm:$0xf] %vm316, %v313
      $region40: #{encoder_decoder2_forward.6} parent=31 // pred_fallthru
        _
      %p319 = scmp.lt.s32.totalorder %s18, 31
      %s320 = scalar_select %p319, %s18, 31
      %s321 = smul.addr %s320, 2
      %s322 = smul.addr %s321, 4
      %s323 = scalar_lea.vmem %s3, %s322
      // Predicated region
      $region41: #{encoder_decoder2_forward.6} parent=31 // pred_check
        %p324 = pneg %p119
      $region42: #{encoder_decoder2_forward.6} parent=31 // pred_check_branch
        %326 = sbr.rel (%p324) target = $region44
      $region43: #{encoder_decoder2_forward.6} parent=31 // pred_region
        _
      $region44: #{encoder_decoder2_forward.6} parent=31 // pred_fallthru
        _
    $region32: #{encoder_decoder2_forward.6} parent=5 // pred_fallthru
      _
    %p327 = scmp.le.s32.totalorder 2, %s9
    // Predicated region
    $region45: #{encoder_decoder2_forward.6} parent=5 // pred_check
      %p328 = pneg %p327
    $region46: #{encoder_decoder2_forward.6} parent=5 // pred_check_branch
      %330 = sbr.rel (%p328) target = $region48
    $region47: #{encoder_decoder2_forward.6} parent=5 // pred_region
      %s331 = ssub.s32 %s9, 2
      // Predicated region
      $region49: #{encoder_decoder2_forward.6} parent=47 // pred_check
        %p332 = pneg %p125
      $region50: #{encoder_decoder2_forward.6} parent=47 // pred_check_branch
        %334 = sbr.rel (%p332) target = $region52
      $region51: #{encoder_decoder2_forward.6} parent=47 // pred_region
        %p335 = scmp.lt.s32.totalorder %s20, 31
        %s336 = scalar_select %p335, %s20, 31
        %s337 = smul.addr %s336, 2
        %s338 = smul.addr %s337, 4
        %s339 = scalar_lea.vmem %s3, %s338
      $region52: #{encoder_decoder2_forward.6} parent=47 // pred_fallthru
        _
    $region48: #{encoder_decoder2_forward.6} parent=5 // pred_fallthru
      _
  $region6: #{encoder_decoder2_forward.6} parent=0 // loop_footer
    %s13 = sadd.s32 1, %s9
  $region7: #{encoder_decoder2_forward.6} parent=0 // loop_footer_branch
    %8 = sbr.rel target = $region3
  $region8: #{encoder_decoder2_forward.6} parent=0 // loop_exit
    _

// kernel: encoder_decoder2_forward.7
$region0: #{encoder_decoder2_forward.7}
  #allocation0 [shape = 'u32[]', space=smem, size = 0x4, offset = 0x4, fixed_abs, tag = 'smem constant byte address 0x4 - core index']
  #allocation1 [shape = 'u32[144,128]{1,0:T(1,128)}', space=vmem, size = 0x12000, scoped, tag = 'internal scratch']
  #allocation2 [shape = 'f32[8,128]{1,0:T(8,128)}', space=vmem, size = 0x1000, scoped, tag = 'scratch operand']
  %s0 = inlined_call_operand.vmem [shape: bf16[16,2,8,128], index: 0, kind: input, shape index: {}]
  %s1 = inlined_call_operand.vmem [shape: bf16[2,128,128], index: 1, kind: input, shape index: {}]
  %s2 = inlined_call_operand.vmem [shape: f32[1,128], index: 2, kind: input, shape index: {}]
  %s3 = inlined_call_operand.vmem [shape: bf16[16,8,128], index: 3, kind: output, shape index: {}]
  %s4 = sld [smem:[#allocation0]]
  $region53: #{encoder_decoder2_forward.7} parent=0
    _
  %s6 = ssub.s32 1, %s4
  %s7 = scalar_select 0, %s6, %s4
  loop: start=0, step=1, limit=34
  $region2: #{encoder_decoder2_forward.7} parent=0 // loop_pre_header
    _
  $region3: #{encoder_decoder2_forward.7} parent=0 // loop_header
    %s9 = sphi 0, %s13
    %p10 = scmp.ge.s32.totalorder %s9, 34
    %s16 = sphi 0, %s28
    %s17 = sphi 0, %s24
    %s18 = sphi 0, %s16
    %s19 = sphi 0, %s17
    %s20 = sphi 0, %s18
    %s21 = sphi 0, %s19
    %s33 = sphi 0, %s35
    %s36 = sphi 0, %s33
    %s37 = sphi 0, %s36
    %s53 = sphi 0, %s37
    %s59 = sphi 0, %s61
    %s62 = sphi 0, %s59
    %s63 = sphi 0, %s62
    %s79 = sphi 0, %s63
    %s83 = sphi 0, %s83
    %s85 = sphi 0, %s83
    %s86 = sphi 0, %s85
    %s100 = sphi 0, %s86
    %s106 = sphi 0, %s108
    %s109 = sphi 0, %s106
    %s110 = sphi 0, %s109
    %s126 = sphi 0, %s110
  $region4: #{encoder_decoder2_forward.7} parent=0 // loop_header_branch
    %12 = sbr.rel (%p10) target = $region8
  $region5: #{encoder_decoder2_forward.7} parent=0 // loop_body
    %s14 = ssub.s32 %s9, 1
    %s15 = ssub.s32 %s9, 2
    %s22 = sadd.s32 1, %s17
    %p23 = scmp.ge.s32.totalorder %s22, 2
    %s24 = scalar_select %p23, 0, %s22
    %s25 = sadd.s32 1, %s16
    %s26 = scalar_select %p23, %s25, %s16
    %p27 = scmp.ge.s32.totalorder %s26, 16
    %s28 = scalar_select %p27, 0, %s26
    %s29 = ssub.s32 %s16, %s28
    %s30 = ssub.s32 %s17, %s24
    %s31 = sor.u32 %s29, %s30
    %p32 = scmp.eq.s32.totalorder %s31, 0
    %s34 = sadd.s32 %s33, 1
    %s35 = scalar_select %p32, %s33, %s34
    %p38 = pneg %p32
    %p39 = scmp.eq.s32.totalorder %s9, 31
    %p40 = por %p38, %p39
    %p41 = scmp.ne.s32.totalorder %s33, %s36
    %p42 = scmp.eq.s32.totalorder %s9, 0
    %p43 = por %p41, %p42
    %p44 = scmp.ne.s32.totalorder %s33, %s36
    %p45 = scmp.eq.s32.totalorder %s14, 31
    %p46 = por %p44, %p45
    %p47 = scmp.ne.s32.totalorder %s36, %s37
    %p48 = scmp.eq.s32.totalorder %s14, 0
    %p49 = por %p47, %p48
    %p50 = scmp.ne.s32.totalorder %s36, %s37
    %p51 = scmp.eq.s32.totalorder %s15, 31
    %p52 = por %p50, %p51
    %p54 = scmp.ne.s32.totalorder %s37, %s53
    %p55 = scmp.eq.s32.totalorder %s15, 0
    %p56 = por %p54, %p55
    %s57 = ssub.s32 %s17, %s24
    %p58 = scmp.eq.s32.totalorder %s57, 0
    %s60 = sadd.s32 %s59, 1
    %s61 = scalar_select %p58, %s59, %s60
    %p64 = pneg %p58
    %p65 = scmp.eq.s32.totalorder %s9, 31
    %p66 = por %p64, %p65
    %p67 = scmp.ne.s32.totalorder %s59, %s62
    %p68 = scmp.eq.s32.totalorder %s9, 0
    %p69 = por %p67, %p68
    %p70 = scmp.ne.s32.totalorder %s59, %s62
    %p71 = scmp.eq.s32.totalorder %s14, 31
    %p72 = por %p70, %p71
    %p73 = scmp.ne.s32.totalorder %s62, %s63
    %p74 = scmp.eq.s32.totalorder %s14, 0
    %p75 = por %p73, %p74
    %p76 = scmp.ne.s32.totalorder %s62, %s63
    %p77 = scmp.eq.s32.totalorder %s15, 31
    %p78 = por %p76, %p77
    %p80 = scmp.ne.s32.totalorder %s63, %s79
    %p81 = scmp.eq.s32.totalorder %s15, 0
    %p82 = por %p80, %p81
    %s84 = sadd.s32 %s83, 1
    %p87 = scmp.eq.s32.totalorder %s9, 31
    %p88 = scmp.ne.s32.totalorder %s83, %s85
    %p89 = scmp.eq.s32.totalorder %s9, 0
    %p90 = por %p88, %p89
    %p91 = scmp.ne.s32.totalorder %s83, %s85
    %p92 = scmp.eq.s32.totalorder %s14, 31
    %p93 = por %p91, %p92
    %p94 = scmp.ne.s32.totalorder %s85, %s86
    %p95 = scmp.eq.s32.totalorder %s14, 0
    %p96 = por %p94, %p95
    %p97 = scmp.ne.s32.totalorder %s85, %s86
    %p98 = scmp.eq.s32.totalorder %s15, 31
    %p99 = por %p97, %p98
    %p101 = scmp.ne.s32.totalorder %s86, %s100
    %p102 = scmp.eq.s32.totalorder %s15, 0
    %p103 = por %p101, %p102
    %s104 = ssub.s32 %s16, %s28
    %p105 = scmp.eq.s32.totalorder %s104, 0
    %s107 = sadd.s32 %s106, 1
    %s108 = scalar_select %p105, %s106, %s107
    %p111 = pneg %p105
    %p112 = scmp.eq.s32.totalorder %s9, 31
    %p113 = por %p111, %p112
    %p114 = scmp.ne.s32.totalorder %s106, %s109
    %p115 = scmp.eq.s32.totalorder %s9, 0
    %p116 = por %p114, %p115
    %p117 = scmp.ne.s32.totalorder %s106, %s109
    %p118 = scmp.eq.s32.totalorder %s14, 31
    %p119 = por %p117, %p118
    %p120 = scmp.ne.s32.totalorder %s109, %s110
    %p121 = scmp.eq.s32.totalorder %s14, 0
    %p122 = por %p120, %p121
    %p123 = scmp.ne.s32.totalorder %s109, %s110
    %p124 = scmp.eq.s32.totalorder %s15, 31
    %p125 = por %p123, %p124
    %p127 = scmp.ne.s32.totalorder %s110, %s126
    %p128 = scmp.eq.s32.totalorder %s15, 0
    %p129 = por %p127, %p128
    %p130 = scmp.le.s32.totalorder 1, %s9
    %p131 = scmp.lt.s32.totalorder %s9, 33
    %p132 = pnand %p130, %p131
    %p133 = pneg %p132
    // Predicated region
    $region9: #{encoder_decoder2_forward.7} parent=5 // pred_check
      _
    $region10: #{encoder_decoder2_forward.7} parent=5 // pred_check_branch
      %135 = sbr.rel (%p132) target = $region12
    $region11: #{encoder_decoder2_forward.7} parent=5 // pred_region
      %s136 = ssub.s32 %s9, 1
      // Predicated region
      $region13: #{encoder_decoder2_forward.7} parent=11 // pred_check
        %p137 = pneg %p96
      $region14: #{encoder_decoder2_forward.7} parent=11 // pred_check_branch
        %139 = sbr.rel (%p137) target = $region16
      $region15: #{encoder_decoder2_forward.7} parent=11 // pred_region
        _
      $region16: #{encoder_decoder2_forward.7} parent=11 // pred_fallthru
        _
    $region12: #{encoder_decoder2_forward.7} parent=5 // pred_fallthru
      _
    %p140 = scmp.lt.s32.totalorder %s9, 32
    // Predicated region
    $region17: #{encoder_decoder2_forward.7} parent=5 // pred_check
      %p141 = pneg %p140
    $region18: #{encoder_decoder2_forward.7} parent=5 // pred_check_branch
      %143 = sbr.rel (%p141) target = $region20
    $region19: #{encoder_decoder2_forward.7} parent=5 // pred_region
      // Predicated region
      $region21: #{encoder_decoder2_forward.7} parent=19 // pred_check
        %p144 = pneg %p43
      $region22: #{encoder_decoder2_forward.7} parent=19 // pred_check_branch
        %146 = sbr.rel (%p144) target = $region24
      $region23: #{encoder_decoder2_forward.7} parent=19 // pred_region
        %p147 = scmp.lt.s32.totalorder %s16, 15
        %s148 = scalar_select %p147, %s16, 15
        %p149 = scmp.lt.s32.totalorder %s17, 1
        %s150 = scalar_select %p149, %s17, 1
        %s151 = smul.addr %s148, 2
        %s152 = sadd.s32 %s150, %s151
        %s153 = smul.addr %s152, 4
        %s154 = scalar_lea.vmem %s0, %s153
      $region24: #{encoder_decoder2_forward.7} parent=19 // pred_fallthru
        _
      // Predicated region
      $region25: #{encoder_decoder2_forward.7} parent=19 // pred_check
        %p155 = pneg %p69
      $region26: #{encoder_decoder2_forward.7} parent=19 // pred_check_branch
        %157 = sbr.rel (%p155) target = $region28
      $region27: #{encoder_decoder2_forward.7} parent=19 // pred_region
        %p158 = scmp.lt.s32.totalorder %s17, 1
        %s159 = scalar_select %p158, %s17, 1
        %s160 = smul.addr %s159, 16
        %s161 = smul.addr %s160, 4
        %s162 = scalar_lea.vmem %s1, %s161
      $region28: #{encoder_decoder2_forward.7} parent=19 // pred_fallthru
        _
    $region20: #{encoder_decoder2_forward.7} parent=5 // pred_fallthru
      _
    %p163 = scmp.le.s32.totalorder 1, %s9
    %p164 = scmp.lt.s32.totalorder %s9, 33
    %p165 = pnand %p163, %p164
    %p166 = pneg %p165
    // Predicated region
    $region29: #{encoder_decoder2_forward.7} parent=5 // pred_check
      _
    $region30: #{encoder_decoder2_forward.7} parent=5 // pred_check_branch
      %168 = sbr.rel (%p165) target = $region32
    $region31: #{encoder_decoder2_forward.7} parent=5 // pred_region
      %s169 = ssub.s32 %s9, 1
      %p170 = scmp.lt.s32.totalorder %s18, 15
      %s171 = scalar_select %p170, %s18, 15
      %p172 = scmp.lt.s32.totalorder %s19, 1
      %s173 = scalar_select %p172, %s19, 1
      %s174 = smul.addr %s171, 2
      %s175 = sadd.s32 %s173, %s174
      %s176 = smul.addr %s175, 4
      %s177 = scalar_lea.vmem %s0, %s176
      %p178 = pneg %p49
      %p179 = pneg %p46
      %p180 = scmp.lt.s32.totalorder %s19, 1
      %s181 = scalar_select %p180, %s19, 1
      %s182 = smul.addr %s181, 16
      %s183 = smul.addr %s182, 4
      %s184 = scalar_lea.vmem %s1, %s183
      %p185 = pneg %p75
      %p186 = pneg %p72
      %p187 = pneg %p96
      %p188 = pneg %p93
      %p189 = pneg %p122
      %p190 = pneg %p119
      %p191 = scmp.lt.s32.totalorder %s18, 15
      %s192 = scalar_select %p191, %s18, 15
      %s193 = smul.addr %s192, 4
      %s194 = scalar_lea.vmem %s3, %s193
      %p195 = scmp.lt.s32.totalorder %s18, 15
      %s196 = scalar_select %p195, %s18, 15
      %p197 = scmp.lt.s32.totalorder %s19, 1
      %s198 = scalar_select %p197, %s19, 1
      %s199 = smul.addr %s196, 2
      %s200 = sadd.s32 %s198, %s199
      %s201 = smul.addr %s200, 4
      %s202 = scalar_lea.vmem %s0, %s201
      %p203 = scmp.lt.s32.totalorder %s19, 1
      %s204 = scalar_select %p203, %s19, 1
      %s205 = smul.addr %s204, 16
      %s206 = smul.addr %s205, 4
      %s207 = scalar_lea.vmem %s1, %s206
      %p208 = scmp.lt.s32.totalorder %s18, 15
      %s209 = scalar_select %p208, %s18, 15
      %s210 = smul.addr %s209, 4
      %s211 = scalar_lea.vmem %s3, %s210
      %p213 = scmp.eq.s32.totalorder %s19, 0
      // Predicated region
      $region33: #{encoder_decoder2_forward.7} parent=31 // pred_check
        %p214 = pneg %p213
      $region34: #{encoder_decoder2_forward.7} parent=31 // pred_check_branch
        %216 = sbr.rel (%p214) target = $region36
      $region35: #{encoder_decoder2_forward.7} parent=31 // pred_region
        %217 = vst [vmem:[#allocation2] sm:$0xff] 0.0
      $region36: #{encoder_decoder2_forward.7} parent=31 // pred_fallthru
        _
      %v218 = vld [vmem:[#allocation2] sm:$0xff]
      %v219 = vld [vmem:[%s202] sm:$0xf]
      %v220 = vld [vmem:[%s207] sm:$0xf]
      %v221 = vld [vmem:[%s207 + $0x4] sm:$0xf]
      %v222 = vld [vmem:[%s207 + $0x8] sm:$0xf]
      %v223 = vld [vmem:[%s207 + $0xc] sm:$0xf]
      %v224 = vld [vmem:[%s207 + $0x10] sm:$0xf]
      %v225 = vld [vmem:[%s207 + $0x14] sm:$0xf]
      %v226 = vld [vmem:[%s207 + $0x18] sm:$0xf]
      %v227 = vld [vmem:[%s207 + $0x1c] sm:$0xf]
      %v228 = vld [vmem:[%s207 + $0x20] sm:$0xf]
      %v229 = vld [vmem:[%s207 + $0x24] sm:$0xf]
      %v230 = vld [vmem:[%s207 + $0x28] sm:$0xf]
      %v231 = vld [vmem:[%s207 + $0x2c] sm:$0xf]
      %v232 = vld [vmem:[%s207 + $0x30] sm:$0xf]
      %v233 = vld [vmem:[%s207 + $0x34] sm:$0xf]
      %v234 = vld [vmem:[%s207 + $0x38] sm:$0xf]
      %v235 = vld [vmem:[%s207 + $0x3c] sm:$0xf]
      %v252 = vunpack.c.l.b16 %v220
      %v253 = vunpack.c.l.b16 %v221
      %v254 = vunpack.c.l.b16 %v222
      %v255 = vunpack.c.l.b16 %v223
      %v256 = vunpack.c.l.b16 %v224
      %v257 = vunpack.c.l.b16 %v225
      %v258 = vunpack.c.l.b16 %v226
      %v259 = vunpack.c.l.b16 %v227
      %v260 = vunpack.c.l.b16 %v228
      %v261 = vunpack.c.l.b16 %v229
      %v262 = vunpack.c.l.b16 %v230
      %v263 = vunpack.c.l.b16 %v231
      %v264 = vunpack.c.l.b16 %v232
      %v265 = vunpack.c.l.b16 %v233
      %v266 = vunpack.c.l.b16 %v234
      %v267 = vunpack.c.l.b16 %v235
      %v268 = vpack.c.b16 %v253, %v252
      %v269 = vpack.c.b16 %v255, %v254
      %v270 = vpack.c.b16 %v257, %v256
      %v271 = vpack.c.b16 %v259, %v258
      %v272 = vpack.c.b16 %v261, %v260
      %v273 = vpack.c.b16 %v263, %v262
      %v274 = vpack.c.b16 %v265, %v264
      %v275 = vpack.c.b16 %v267, %v266
      %284 = vmatprep.subr.bf16.mxu0 0
      %285 = vmatpush1.bf16.msra.mxu0 %v275
      %286 = vmatprep.subr.bf16.mxu0 0
      %287 = vmatpush1.bf16.msra.mxu0 %v274
      %288 = vmatprep.subr.bf16.mxu0 0
      %289 = vmatpush1.bf16.msra.mxu0 %v273
      %290 = vmatprep.subr.bf16.mxu0 0
      %291 = vmatpush1.bf16.msra.mxu0 %v272
      %292 = vmatprep.subr.bf16.mxu0 0
      %293 = vmatpush1.bf16.msra.mxu0 %v271
      %294 = vmatprep.subr.bf16.mxu0 0
      %295 = vmatpush1.bf16.msra.mxu0 %v270
      %296 = vmatprep.subr.bf16.mxu0 0
      %297 = vmatpush1.bf16.msra.mxu0 %v269
      %298 = vmatprep.subr.bf16.mxu0 0
      %299 = vmatpush1.bf16.msra.mxu0 %v268
      %300 = vmatprep.subr.bf16.mxu0 0
      %301 = vmatpush2.bf16.msra.mxu0 0
      %302 = vmatprep.subr.bf16.mxu0 0
      %303 = vmatpush2.bf16.msra.mxu0 0
      %304 = vmatprep.subr.bf16.mxu0 0
      %305 = vmatpush2.bf16.msra.mxu0 0
      %306 = vmatprep.subr.bf16.mxu0 0
      %307 = vmatpush2.bf16.msra.mxu0 0
      %308 = vmatprep.subr.bf16.mxu0 0
      %309 = vmatpush2.bf16.msra.mxu0 0
      %310 = vmatprep.subr.bf16.mxu0 0
      %311 = vmatpush2.bf16.msra.mxu0 0
      %312 = vmatprep.subr.bf16.mxu0 0
      %313 = vmatpush2.bf16.msra.mxu0 0
      %314 = vmatprep.subr.bf16.mxu0 0
      %315 = vmatpush2.bf16.msra.mxu0 0
      %316 = vmatprep.mubr.bf16.mxu0 0
      %317 = vmatmul.mubr.bf16.gmra.mxu0 %v219
      %v318 = vpop.f32.mrf.mxu0
      %v319 = vadd.f32 0.0, %v318
      %v320 = vpop.f32.mrf.mxu0
      %v321 = vpop.f32.mrf.mxu0
      %v322 = vpop.f32.mrf.mxu0
      %323 = vdwg.mxu0
      %v324 = vadd.f32 %v218, %v319
      %325 = vst [vmem:[#allocation2] sm:$0xff] %v324
      %p326 = scmp.eq.s32.totalorder %s19, 1
      // Predicated region
      $region37: #{encoder_decoder2_forward.7} parent=31 // pred_check
        %p327 = pneg %p326
      $region38: #{encoder_decoder2_forward.7} parent=31 // pred_check_branch
        %329 = sbr.rel (%p327) target = $region40
      $region39: #{encoder_decoder2_forward.7} parent=31 // pred_region
        %v330 = vld [vmem:[#allocation2] sm:$0xff]
        %v331 = vld [vmem:[%s2] sm:$0x1]
        %v333 = vlaneseq
        %v334 = vshrl.u32 %v333, 7
        %v335 = vsub.s32 0, %v334
        %v336 = vrot.slane %v331, %v335
        %v338 = vadd.f32 %v330, %v336
        %v339 = vmax.f32 %v338, 0.0
        %v340 = vpack.c.bf16 %v339, %v339
        %341 = vst [vmem:[%s211] sm:$0xf] %v340
      $region40: #{encoder_decoder2_forward.7} parent=31 // pred_fallthru
        _
      %p342 = scmp.lt.s32.totalorder %s18, 15
      %s343 = scalar_select %p342, %s18, 15
      %s344 = smul.addr %s343, 4
      %s345 = scalar_lea.vmem %s3, %s344
      // Predicated region
      $region41: #{encoder_decoder2_forward.7} parent=31 // pred_check
        %p346 = pneg %p119
      $region42: #{encoder_decoder2_forward.7} parent=31 // pred_check_branch
        %348 = sbr.rel (%p346) target = $region44
      $region43: #{encoder_decoder2_forward.7} parent=31 // pred_region
        _
      $region44: #{encoder_decoder2_forward.7} parent=31 // pred_fallthru
        _
    $region32: #{encoder_decoder2_forward.7} parent=5 // pred_fallthru
      _
    %p349 = scmp.le.s32.totalorder 2, %s9
    // Predicated region
    $region45: #{encoder_decoder2_forward.7} parent=5 // pred_check
      %p350 = pneg %p349
    $region46: #{encoder_decoder2_forward.7} parent=5 // pred_check_branch
      %352 = sbr.rel (%p350) target = $region48
    $region47: #{encoder_decoder2_forward.7} parent=5 // pred_region
      %s353 = ssub.s32 %s9, 2
      // Predicated region
      $region49: #{encoder_decoder2_forward.7} parent=47 // pred_check
        %p354 = pneg %p125
      $region50: #{encoder_decoder2_forward.7} parent=47 // pred_check_branch
        %356 = sbr.rel (%p354) target = $region52
      $region51: #{encoder_decoder2_forward.7} parent=47 // pred_region
        %p357 = scmp.lt.s32.totalorder %s20, 15
        %s358 = scalar_select %p357, %s20, 15
        %s359 = smul.addr %s358, 4
        %s360 = scalar_lea.vmem %s3, %s359
      $region52: #{encoder_decoder2_forward.7} parent=47 // pred_fallthru
        _
    $region48: #{encoder_decoder2_forward.7} parent=5 // pred_fallthru
      _
  $region6: #{encoder_decoder2_forward.7} parent=0 // loop_footer
    %s13 = sadd.s32 1, %s9
  $region7: #{encoder_decoder2_forward.7} parent=0 // loop_footer_branch
    %8 = sbr.rel target = $region3
  $region8: #{encoder_decoder2_forward.7} parent=0 // loop_exit
    _

// kernel: encoder_decoder2_forward.8
$region0: #{encoder_decoder2_forward.8}
  #allocation0 [shape = 'u32[]', space=smem, size = 0x4, offset = 0x4, fixed_abs, tag = 'smem constant byte address 0x4 - core index']
  #allocation1 [shape = 'u32[144,128]{1,0:T(1,128)}', space=vmem, size = 0x12000, scoped, tag = 'internal scratch']
  #allocation2 [shape = 'f32[4,320]{1,0:T(4,128)}', space=vmem, size = 0x1800, scoped, tag = 'scratch operand']
  %s0 = inlined_call_operand.vmem [shape: bf16[8,2,4,256], index: 0, kind: input, shape index: {}]
  %s1 = inlined_call_operand.vmem [shape: bf16[2,256,320], index: 1, kind: input, shape index: {}]
  %s2 = inlined_call_operand.vmem [shape: f32[1,320], index: 2, kind: input, shape index: {}]
  %s3 = inlined_call_operand.vmem [shape: bf16[8,4,320], index: 3, kind: output, shape index: {}]
  %s4 = sld [smem:[#allocation0]]
  $region53: #{encoder_decoder2_forward.8} parent=0
    _
  %s6 = ssub.s32 1, %s4
  %s7 = scalar_select 0, %s6, %s4
  loop: start=0, step=1, limit=18
  $region2: #{encoder_decoder2_forward.8} parent=0 // loop_pre_header
    _
  $region3: #{encoder_decoder2_forward.8} parent=0 // loop_header
    %s9 = sphi 0, %s13
    %p10 = scmp.ge.s32.totalorder %s9, 18
    %s16 = sphi 0, %s28
    %s17 = sphi 0, %s24
    %s18 = sphi 0, %s16
    %s19 = sphi 0, %s17
    %s20 = sphi 0, %s18
    %s21 = sphi 0, %s19
    %s33 = sphi 0, %s35
    %s36 = sphi 0, %s33
    %s37 = sphi 0, %s36
    %s53 = sphi 0, %s37
    %s59 = sphi 0, %s61
    %s62 = sphi 0, %s59
    %s63 = sphi 0, %s62
    %s79 = sphi 0, %s63
    %s83 = sphi 0, %s83
    %s85 = sphi 0, %s83
    %s86 = sphi 0, %s85
    %s100 = sphi 0, %s86
    %s106 = sphi 0, %s108
    %s109 = sphi 0, %s106
    %s110 = sphi 0, %s109
    %s126 = sphi 0, %s110
  $region4: #{encoder_decoder2_forward.8} parent=0 // loop_header_branch
    %12 = sbr.rel (%p10) target = $region8
  $region5: #{encoder_decoder2_forward.8} parent=0 // loop_body
    %s14 = ssub.s32 %s9, 1
    %s15 = ssub.s32 %s9, 2
    %s22 = sadd.s32 1, %s17
    %p23 = scmp.ge.s32.totalorder %s22, 2
    %s24 = scalar_select %p23, 0, %s22
    %s25 = sadd.s32 1, %s16
    %s26 = scalar_select %p23, %s25, %s16
    %p27 = scmp.ge.s32.totalorder %s26, 8
    %s28 = scalar_select %p27, 0, %s26
    %s29 = ssub.s32 %s16, %s28
    %s30 = ssub.s32 %s17, %s24
    %s31 = sor.u32 %s29, %s30
    %p32 = scmp.eq.s32.totalorder %s31, 0
    %s34 = sadd.s32 %s33, 1
    %s35 = scalar_select %p32, %s33, %s34
    %p38 = pneg %p32
    %p39 = scmp.eq.s32.totalorder %s9, 15
    %p40 = por %p38, %p39
    %p41 = scmp.ne.s32.totalorder %s33, %s36
    %p42 = scmp.eq.s32.totalorder %s9, 0
    %p43 = por %p41, %p42
    %p44 = scmp.ne.s32.totalorder %s33, %s36
    %p45 = scmp.eq.s32.totalorder %s14, 15
    %p46 = por %p44, %p45
    %p47 = scmp.ne.s32.totalorder %s36, %s37
    %p48 = scmp.eq.s32.totalorder %s14, 0
    %p49 = por %p47, %p48
    %p50 = scmp.ne.s32.totalorder %s36, %s37
    %p51 = scmp.eq.s32.totalorder %s15, 15
    %p52 = por %p50, %p51
    %p54 = scmp.ne.s32.totalorder %s37, %s53
    %p55 = scmp.eq.s32.totalorder %s15, 0
    %p56 = por %p54, %p55
    %s57 = ssub.s32 %s17, %s24
    %p58 = scmp.eq.s32.totalorder %s57, 0
    %s60 = sadd.s32 %s59, 1
    %s61 = scalar_select %p58, %s59, %s60
    %p64 = pneg %p58
    %p65 = scmp.eq.s32.totalorder %s9, 15
    %p66 = por %p64, %p65
    %p67 = scmp.ne.s32.totalorder %s59, %s62
    %p68 = scmp.eq.s32.totalorder %s9, 0
    %p69 = por %p67, %p68
    %p70 = scmp.ne.s32.totalorder %s59, %s62
    %p71 = scmp.eq.s32.totalorder %s14, 15
    %p72 = por %p70, %p71
    %p73 = scmp.ne.s32.totalorder %s62, %s63
    %p74 = scmp.eq.s32.totalorder %s14, 0
    %p75 = por %p73, %p74
    %p76 = scmp.ne.s32.totalorder %s62, %s63
    %p77 = scmp.eq.s32.totalorder %s15, 15
    %p78 = por %p76, %p77
    %p80 = scmp.ne.s32.totalorder %s63, %s79
    %p81 = scmp.eq.s32.totalorder %s15, 0
    %p82 = por %p80, %p81
    %s84 = sadd.s32 %s83, 1
    %p87 = scmp.eq.s32.totalorder %s9, 15
    %p88 = scmp.ne.s32.totalorder %s83, %s85
    %p89 = scmp.eq.s32.totalorder %s9, 0
    %p90 = por %p88, %p89
    %p91 = scmp.ne.s32.totalorder %s83, %s85
    %p92 = scmp.eq.s32.totalorder %s14, 15
    %p93 = por %p91, %p92
    %p94 = scmp.ne.s32.totalorder %s85, %s86
    %p95 = scmp.eq.s32.totalorder %s14, 0
    %p96 = por %p94, %p95
    %p97 = scmp.ne.s32.totalorder %s85, %s86
    %p98 = scmp.eq.s32.totalorder %s15, 15
    %p99 = por %p97, %p98
    %p101 = scmp.ne.s32.totalorder %s86, %s100
    %p102 = scmp.eq.s32.totalorder %s15, 0
    %p103 = por %p101, %p102
    %s104 = ssub.s32 %s16, %s28
    %p105 = scmp.eq.s32.totalorder %s104, 0
    %s107 = sadd.s32 %s106, 1
    %s108 = scalar_select %p105, %s106, %s107
    %p111 = pneg %p105
    %p112 = scmp.eq.s32.totalorder %s9, 15
    %p113 = por %p111, %p112
    %p114 = scmp.ne.s32.totalorder %s106, %s109
    %p115 = scmp.eq.s32.totalorder %s9, 0
    %p116 = por %p114, %p115
    %p117 = scmp.ne.s32.totalorder %s106, %s109
    %p118 = scmp.eq.s32.totalorder %s14, 15
    %p119 = por %p117, %p118
    %p120 = scmp.ne.s32.totalorder %s109, %s110
    %p121 = scmp.eq.s32.totalorder %s14, 0
    %p122 = por %p120, %p121
    %p123 = scmp.ne.s32.totalorder %s109, %s110
    %p124 = scmp.eq.s32.totalorder %s15, 15
    %p125 = por %p123, %p124
    %p127 = scmp.ne.s32.totalorder %s110, %s126
    %p128 = scmp.eq.s32.totalorder %s15, 0
    %p129 = por %p127, %p128
    %p130 = scmp.le.s32.totalorder 1, %s9
    %p131 = scmp.lt.s32.totalorder %s9, 17
    %p132 = pnand %p130, %p131
    %p133 = pneg %p132
    // Predicated region
    $region9: #{encoder_decoder2_forward.8} parent=5 // pred_check
      _
    $region10: #{encoder_decoder2_forward.8} parent=5 // pred_check_branch
      %135 = sbr.rel (%p132) target = $region12
    $region11: #{encoder_decoder2_forward.8} parent=5 // pred_region
      %s136 = ssub.s32 %s9, 1
      // Predicated region
      $region13: #{encoder_decoder2_forward.8} parent=11 // pred_check
        %p137 = pneg %p96
      $region14: #{encoder_decoder2_forward.8} parent=11 // pred_check_branch
        %139 = sbr.rel (%p137) target = $region16
      $region15: #{encoder_decoder2_forward.8} parent=11 // pred_region
        _
      $region16: #{encoder_decoder2_forward.8} parent=11 // pred_fallthru
        _
    $region12: #{encoder_decoder2_forward.8} parent=5 // pred_fallthru
      _
    %p140 = scmp.lt.s32.totalorder %s9, 16
    // Predicated region
    $region17: #{encoder_decoder2_forward.8} parent=5 // pred_check
      %p141 = pneg %p140
    $region18: #{encoder_decoder2_forward.8} parent=5 // pred_check_branch
      %143 = sbr.rel (%p141) target = $region20
    $region19: #{encoder_decoder2_forward.8} parent=5 // pred_region
      // Predicated region
      $region21: #{encoder_decoder2_forward.8} parent=19 // pred_check
        %p144 = pneg %p43
      $region22: #{encoder_decoder2_forward.8} parent=19 // pred_check_branch
        %146 = sbr.rel (%p144) target = $region24
      $region23: #{encoder_decoder2_forward.8} parent=19 // pred_region
        %p147 = scmp.lt.s32.totalorder %s16, 7
        %s148 = scalar_select %p147, %s16, 7
        %p149 = scmp.lt.s32.totalorder %s17, 1
        %s150 = scalar_select %p149, %s17, 1
        %s151 = smul.addr %s150, 2
        %s152 = smul.addr %s148, 4
        %s153 = sadd.s32 %s151, %s152
        %s154 = smul.addr %s153, 2
        %s155 = scalar_lea.vmem %s0, %s154
      $region24: #{encoder_decoder2_forward.8} parent=19 // pred_fallthru
        _
      // Predicated region
      $region25: #{encoder_decoder2_forward.8} parent=19 // pred_check
        %p156 = pneg %p69
      $region26: #{encoder_decoder2_forward.8} parent=19 // pred_check_branch
        %158 = sbr.rel (%p156) target = $region28
      $region27: #{encoder_decoder2_forward.8} parent=19 // pred_region
        %p159 = scmp.lt.s32.totalorder %s17, 1
        %s160 = scalar_select %p159, %s17, 1
        %s161 = smul.addr %s160, 96
        %s162 = smul.addr %s161, 4
        %s163 = scalar_lea.vmem %s1, %s162
      $region28: #{encoder_decoder2_forward.8} parent=19 // pred_fallthru
        _
    $region20: #{encoder_decoder2_forward.8} parent=5 // pred_fallthru
      _
    %p164 = scmp.le.s32.totalorder 1, %s9
    %p165 = scmp.lt.s32.totalorder %s9, 17
    %p166 = pnand %p164, %p165
    %p167 = pneg %p166
    // Predicated region
    $region29: #{encoder_decoder2_forward.8} parent=5 // pred_check
      _
    $region30: #{encoder_decoder2_forward.8} parent=5 // pred_check_branch
      %169 = sbr.rel (%p166) target = $region32
    $region31: #{encoder_decoder2_forward.8} parent=5 // pred_region
      %s170 = ssub.s32 %s9, 1
      %p171 = scmp.lt.s32.totalorder %s18, 7
      %s172 = scalar_select %p171, %s18, 7
      %p173 = scmp.lt.s32.totalorder %s19, 1
      %s174 = scalar_select %p173, %s19, 1
      %s175 = smul.addr %s174, 2
      %s176 = smul.addr %s172, 4
      %s177 = sadd.s32 %s175, %s176
      %s178 = smul.addr %s177, 2
      %s179 = scalar_lea.vmem %s0, %s178
      %p180 = pneg %p49
      %p181 = pneg %p46
      %p182 = scmp.lt.s32.totalorder %s19, 1
      %s183 = scalar_select %p182, %s19, 1
      %s184 = smul.addr %s183, 96
      %s185 = smul.addr %s184, 4
      %s186 = scalar_lea.vmem %s1, %s185
      %p187 = pneg %p75
      %p188 = pneg %p72
      %p189 = pneg %p96
      %p190 = pneg %p93
      %p191 = pneg %p122
      %p192 = pneg %p119
      %p193 = scmp.lt.s32.totalorder %s18, 7
      %s194 = scalar_select %p193, %s18, 7
      %s195 = smul.addr %s194, 3
      %s196 = smul.addr %s195, 2
      %s197 = scalar_lea.vmem %s3, %s196
      %p198 = scmp.lt.s32.totalorder %s18, 7
      %s199 = scalar_select %p198, %s18, 7
      %p200 = scmp.lt.s32.totalorder %s19, 1
      %s201 = scalar_select %p200, %s19, 1
      %s202 = smul.addr %s201, 2
      %s203 = smul.addr %s199, 4
      %s204 = sadd.s32 %s202, %s203
      %s205 = smul.addr %s204, 2
      %s206 = scalar_lea.vmem %s0, %s205
      %p207 = scmp.lt.s32.totalorder %s19, 1
      %s208 = scalar_select %p207, %s19, 1
      %s209 = smul.addr %s208, 96
      %s210 = smul.addr %s209, 4
      %s211 = scalar_lea.vmem %s1, %s210
      %p212 = scmp.lt.s32.totalorder %s18, 7
      %s213 = scalar_select %p212, %s18, 7
      %s214 = smul.addr %s213, 3
      %s215 = smul.addr %s214, 2
      %s216 = scalar_lea.vmem %s3, %s215
      %p218 = scmp.eq.s32.totalorder %s19, 0
      // Predicated region
      $region33: #{encoder_decoder2_forward.8} parent=31 // pred_check
        %p219 = pneg %p218
      $region34: #{encoder_decoder2_forward.8} parent=31 // pred_check_branch
        %221 = sbr.rel (%p219) target = $region36
      $region35: #{encoder_decoder2_forward.8} parent=31 // pred_region
        %222 = vst [vmem:[#allocation2] sm:$0xff] 0.0
        %vm223 = vcmask 519168
        %224 = vst.msk [vmem:[#allocation2 + $0x8] sm:$0xf] %vm223, 0.0
      $region36: #{encoder_decoder2_forward.8} parent=31 // pred_fallthru
        _
      %v225 = vld [vmem:[#allocation2] sm:$0xff]
      %v226 = vld [vmem:[#allocation2 + $0x8] sm:$0xf]
      %v227 = vld [vmem:[%s206] sm:$0xf]
      %v228 = vld [vmem:[%s211] sm:$0xff]
      %v229 = vld [vmem:[%s211 + $0x8] sm:$0xf]
      %v230 = vld [vmem:[%s211 + $0xc] sm:$0xff]
      %v231 = vld [vmem:[%s211 + $0x14] sm:$0xf]
      %v232 = vld [vmem:[%s211 + $0x18] sm:$0xff]
      %v233 = vld [vmem:[%s211 + $0x20] sm:$0xf]
      %v234 = vld [vmem:[%s211 + $0x24] sm:$0xff]
      %v235 = vld [vmem:[%s211 + $0x2c] sm:$0xf]
      %v236 = vld [vmem:[%s211 + $0x30] sm:$0xff]
      %v237 = vld [vmem:[%s211 + $0x38] sm:$0xf]
      %v238 = vld [vmem:[%s211 + $0x3c] sm:$0xff]
      %v239 = vld [vmem:[%s211 + $0x44] sm:$0xf]
      %v240 = vld [vmem:[%s211 + $0x48] sm:$0xff]
      %v241 = vld [vmem:[%s211 + $0x50] sm:$0xf]
      %v242 = vld [vmem:[%s211 + $0x54] sm:$0xff]
      %v243 = vld [vmem:[%s211 + $0x5c] sm:$0xf]
      %v244 = vld [vmem:[%s211 + $0x60] sm:$0xff]
      %v245 = vld [vmem:[%s211 + $0x68] sm:$0xf]
      %v246 = vld [vmem:[%s211 + $0x6c] sm:$0xff]
      %v247 = vld [vmem:[%s211 + $0x74] sm:$0xf]
      %v248 = vld [vmem:[%s211 + $0x78] sm:$0xff]
      %v249 = vld [vmem:[%s211 + $0x80] sm:$0xf]
      %v250 = vld [vmem:[%s211 + $0x84] sm:$0xff]
      %v251 = vld [vmem:[%s211 + $0x8c] sm:$0xf]
      %v252 = vld [vmem:[%s211 + $0x90] sm:$0xff]
      %v253 = vld [vmem:[%s211 + $0x98] sm:$0xf]
      %v254 = vld [vmem:[%s211 + $0x9c] sm:$0xff]
      %v255 = vld [vmem:[%s211 + $0xa4] sm:$0xf]
      %v256 = vld [vmem:[%s211 + $0xa8] sm:$0xff]
      %v257 = vld [vmem:[%s211 + $0xb0] sm:$0xf]
      %v258 = vld [vmem:[%s211 + $0xb4] sm:$0xff]
      %v259 = vld [vmem:[%s211 + $0xbc] sm:$0xf]
      %v260 = vld [vmem:[%s211 + $0xc0] sm:$0xff]
      %v261 = vld [vmem:[%s211 + $0xc8] sm:$0xf]
      %v262 = vld [vmem:[%s211 + $0xcc] sm:$0xff]
      %v263 = vld [vmem:[%s211 + $0xd4] sm:$0xf]
      %v264 = vld [vmem:[%s211 + $0xd8] sm:$0xff]
      %v265 = vld [vmem:[%s211 + $0xe0] sm:$0xf]
      %v266 = vld [vmem:[%s211 + $0xe4] sm:$0xff]
      %v267 = vld [vmem:[%s211 + $0xec] sm:$0xf]
      %v268 = vld [vmem:[%s211 + $0xf0] sm:$0xff]
      %v269 = vld [vmem:[%s211 + $0xf8] sm:$0xf]
      %v270 = vld [vmem:[%s211 + $0xfc] sm:$0xff]
      %v271 = vld [vmem:[%s211 + $0x104] sm:$0xf]
      %v272 = vld [vmem:[%s211 + $0x108] sm:$0xff]
      %v273 = vld [vmem:[%s211 + $0x110] sm:$0xf]
      %v274 = vld [vmem:[%s211 + $0x114] sm:$0xff]
      %v275 = vld [vmem:[%s211 + $0x11c] sm:$0xf]
      %v276 = vld [vmem:[%s211 + $0x120] sm:$0xff]
      %v277 = vld [vmem:[%s211 + $0x128] sm:$0xf]
      %v278 = vld [vmem:[%s211 + $0x12c] sm:$0xff]
      %v279 = vld [vmem:[%s211 + $0x134] sm:$0xf]
      %v280 = vld [vmem:[%s211 + $0x138] sm:$0xff]
      %v281 = vld [vmem:[%s211 + $0x140] sm:$0xf]
      %v282 = vld [vmem:[%s211 + $0x144] sm:$0xff]
      %v283 = vld [vmem:[%s211 + $0x14c] sm:$0xf]
      %v284 = vld [vmem:[%s211 + $0x150] sm:$0xff]
      %v285 = vld [vmem:[%s211 + $0x158] sm:$0xf]
      %v286 = vld [vmem:[%s211 + $0x15c] sm:$0xff]
      %v287 = vld [vmem:[%s211 + $0x164] sm:$0xf]
      %v288 = vld [vmem:[%s211 + $0x168] sm:$0xff]
      %v289 = vld [vmem:[%s211 + $0x170] sm:$0xf]
      %v290 = vld [vmem:[%s211 + $0x174] sm:$0xff]
      %v291 = vld [vmem:[%s211 + $0x17c] sm:$0xf]
      %v294 = vunpack.c.l.s4 1983009808
      %v295 = vunpack.c.0.s8 %v294
      %v296 = vlaneseq
      %v297 = vshrl.u32 %v296, 7
      %v298 = vsub.s32 %v295, %v297
      %v299 = vrot.slane %v227, %v298
      %v300 = vcombine.high %v299, %v299
      %v367 = vunpack.c.l.b16 %v228
      %v368 = vunpack.c.h.b16 %v228
      %v369 = vunpack.c.l.b16 %v229
      %v370 = vunpack.c.l.b16 %v230
      %v371 = vunpack.c.h.b16 %v230
      %v372 = vunpack.c.l.b16 %v231
      %v373 = vunpack.c.l.b16 %v232
      %v374 = vunpack.c.h.b16 %v232
      %v375 = vunpack.c.l.b16 %v233
      %v376 = vunpack.c.l.b16 %v234
      %v377 = vunpack.c.h.b16 %v234
      %v378 = vunpack.c.l.b16 %v235
      %v379 = vunpack.c.l.b16 %v236
      %v380 = vunpack.c.h.b16 %v236
      %v381 = vunpack.c.l.b16 %v237
      %v382 = vunpack.c.l.b16 %v238
      %v383 = vunpack.c.h.b16 %v238
      %v384 = vunpack.c.l.b16 %v239
      %v385 = vunpack.c.l.b16 %v240
      %v386 = vunpack.c.h.b16 %v240
      %v387 = vunpack.c.l.b16 %v241
      %v388 = vunpack.c.l.b16 %v242
      %v389 = vunpack.c.h.b16 %v242
      %v390 = vunpack.c.l.b16 %v243
      %v391 = vunpack.c.l.b16 %v244
      %v392 = vunpack.c.h.b16 %v244
      %v393 = vunpack.c.l.b16 %v245
      %v394 = vunpack.c.l.b16 %v246
      %v395 = vunpack.c.h.b16 %v246
      %v396 = vunpack.c.l.b16 %v247
      %v397 = vunpack.c.l.b16 %v248
      %v398 = vunpack.c.h.b16 %v248
      %v399 = vunpack.c.l.b16 %v249
      %v400 = vunpack.c.l.b16 %v250
      %v401 = vunpack.c.h.b16 %v250
      %v402 = vunpack.c.l.b16 %v251
      %v403 = vunpack.c.l.b16 %v252
      %v404 = vunpack.c.h.b16 %v252
      %v405 = vunpack.c.l.b16 %v253
      %v406 = vunpack.c.l.b16 %v254
      %v407 = vunpack.c.h.b16 %v254
      %v408 = vunpack.c.l.b16 %v255
      %v409 = vunpack.c.l.b16 %v256
      %v410 = vunpack.c.h.b16 %v256
      %v411 = vunpack.c.l.b16 %v257
      %v412 = vunpack.c.l.b16 %v258
      %v413 = vunpack.c.h.b16 %v258
      %v414 = vunpack.c.l.b16 %v259
      %v415 = vunpack.c.l.b16 %v260
      %v416 = vunpack.c.h.b16 %v260
      %v417 = vunpack.c.l.b16 %v261
      %v418 = vunpack.c.l.b16 %v262
      %v419 = vunpack.c.h.b16 %v262
      %v420 = vunpack.c.l.b16 %v263
      %v421 = vunpack.c.l.b16 %v264
      %v422 = vunpack.c.h.b16 %v264
      %v423 = vunpack.c.l.b16 %v265
      %v424 = vunpack.c.l.b16 %v266
      %v425 = vunpack.c.h.b16 %v266
      %v426 = vunpack.c.l.b16 %v267
      %v427 = vunpack.c.l.b16 %v268
      %v428 = vunpack.c.h.b16 %v268
      %v429 = vunpack.c.l.b16 %v269
      %v430 = vunpack.c.l.b16 %v270
      %v431 = vunpack.c.h.b16 %v270
      %v432 = vunpack.c.l.b16 %v271
      %v433 = vunpack.c.l.b16 %v272
      %v434 = vunpack.c.h.b16 %v272
      %v435 = vunpack.c.l.b16 %v273
      %v436 = vunpack.c.l.b16 %v274
      %v437 = vunpack.c.h.b16 %v274
      %v438 = vunpack.c.l.b16 %v275
      %v439 = vunpack.c.l.b16 %v276
      %v440 = vunpack.c.h.b16 %v276
      %v441 = vunpack.c.l.b16 %v277
      %v442 = vunpack.c.l.b16 %v278
      %v443 = vunpack.c.h.b16 %v278
      %v444 = vunpack.c.l.b16 %v279
      %v445 = vunpack.c.l.b16 %v280
      %v446 = vunpack.c.h.b16 %v280
      %v447 = vunpack.c.l.b16 %v281
      %v448 = vunpack.c.l.b16 %v282
      %v449 = vunpack.c.h.b16 %v282
      %v450 = vunpack.c.l.b16 %v283
      %v451 = vunpack.c.l.b16 %v284
      %v452 = vunpack.c.h.b16 %v284
      %v453 = vunpack.c.l.b16 %v285
      %v454 = vunpack.c.l.b16 %v286
      %v455 = vunpack.c.h.b16 %v286
      %v456 = vunpack.c.l.b16 %v287
      %v457 = vunpack.c.l.b16 %v288
      %v458 = vunpack.c.h.b16 %v288
      %v459 = vunpack.c.l.b16 %v289
      %v460 = vunpack.c.l.b16 %v290
      %v461 = vunpack.c.h.b16 %v290
      %v462 = vunpack.c.l.b16 %v291
      %v463 = vpack.c.b16 %v370, %v367
      %v464 = vpack.c.b16 %v371, %v368
      %v465 = vpack.c.b16 %v372, %v369
      %v466 = vpack.c.b16 %v376, %v373
      %v467 = vpack.c.b16 %v377, %v374
      %v468 = vpack.c.b16 %v378, %v375
      %v469 = vpack.c.b16 %v382, %v379
      %v470 = vpack.c.b16 %v383, %v380
      %v471 = vpack.c.b16 %v384, %v381
      %v472 = vpack.c.b16 %v388, %v385
      %v473 = vpack.c.b16 %v389, %v386
      %v474 = vpack.c.b16 %v390, %v387
      %v475 = vpack.c.b16 %v394, %v391
      %v476 = vpack.c.b16 %v395, %v392
      %v477 = vpack.c.b16 %v396, %v393
      %v478 = vpack.c.b16 %v400, %v397
      %v479 = vpack.c.b16 %v401, %v398
      %v480 = vpack.c.b16 %v402, %v399
      %v481 = vpack.c.b16 %v406, %v403
      %v482 = vpack.c.b16 %v407, %v404
      %v483 = vpack.c.b16 %v408, %v405
      %v484 = vpack.c.b16 %v412, %v409
      %v485 = vpack.c.b16 %v413, %v410
      %v486 = vpack.c.b16 %v414, %v411
      %v487 = vpack.c.b16 %v418, %v415
      %v488 = vpack.c.b16 %v419, %v416
      %v489 = vpack.c.b16 %v420, %v417
      %v490 = vpack.c.b16 %v424, %v421
      %v491 = vpack.c.b16 %v425, %v422
      %v492 = vpack.c.b16 %v426, %v423
      %v493 = vpack.c.b16 %v430, %v427
      %v494 = vpack.c.b16 %v431, %v428
      %v495 = vpack.c.b16 %v432, %v429
      %v496 = vpack.c.b16 %v436, %v433
      %v497 = vpack.c.b16 %v437, %v434
      %v498 = vpack.c.b16 %v438, %v435
      %v499 = vpack.c.b16 %v442, %v439
      %v500 = vpack.c.b16 %v443, %v440
      %v501 = vpack.c.b16 %v444, %v441
      %v502 = vpack.c.b16 %v448, %v445
      %v503 = vpack.c.b16 %v449, %v446
      %v504 = vpack.c.b16 %v450, %v447
      %v505 = vpack.c.b16 %v454, %v451
      %v506 = vpack.c.b16 %v455, %v452
      %v507 = vpack.c.b16 %v456, %v453
      %v508 = vpack.c.b16 %v460, %v457
      %v509 = vpack.c.b16 %v461, %v458
      %v510 = vpack.c.b16 %v462, %v459
      %559 = vmatprep.subr.bf16.mxu0 %v485
      %560 = vmatpush1.bf16.msra.mxu0 %v484
      %561 = vmatprep.subr.bf16.mxu0 %v482
      %562 = vmatpush1.bf16.msra.mxu0 %v481
      %563 = vmatprep.subr.bf16.mxu0 %v479
      %564 = vmatpush1.bf16.msra.mxu0 %v478
      %565 = vmatprep.subr.bf16.mxu0 %v476
      %566 = vmatpush1.bf16.msra.mxu0 %v475
      %567 = vmatprep.subr.bf16.mxu0 %v473
      %568 = vmatpush1.bf16.msra.mxu0 %v472
      %569 = vmatprep.subr.bf16.mxu0 %v470
      %570 = vmatpush1.bf16.msra.mxu0 %v469
      %571 = vmatprep.subr.bf16.mxu0 %v467
      %572 = vmatpush1.bf16.msra.mxu0 %v466
      %573 = vmatprep.subr.bf16.mxu0 %v464
      %574 = vmatpush1.bf16.msra.mxu0 %v463
      %575 = vmatprep.subr.bf16.mxu0 %v509
      %576 = vmatpush2.bf16.msra.mxu0 %v508
      %577 = vmatprep.subr.bf16.mxu0 %v506
      %578 = vmatpush2.bf16.msra.mxu0 %v505
      %579 = vmatprep.subr.bf16.mxu0 %v503
      %580 = vmatpush2.bf16.msra.mxu0 %v502
      %581 = vmatprep.subr.bf16.mxu0 %v500
      %582 = vmatpush2.bf16.msra.mxu0 %v499
      %583 = vmatprep.subr.bf16.mxu0 %v497
      %584 = vmatpush2.bf16.msra.mxu0 %v496
      %585 = vmatprep.subr.bf16.mxu0 %v494
      %586 = vmatpush2.bf16.msra.mxu0 %v493
      %587 = vmatprep.subr.bf16.mxu0 %v491
      %588 = vmatpush2.bf16.msra.mxu0 %v490
      %589 = vmatprep.subr.bf16.mxu0 %v488
      %590 = vmatpush2.bf16.msra.mxu0 %v487
      %591 = vmatprep.mubr.bf16.mxu0 %v300
      %592 = vmatmul.mubr.bf16.gmra.mxu0 %v299
      %v593 = vpop.f32.mrf.mxu0
      %v594 = vadd.f32 0.0, %v593
      %v595 = vpop.f32.mrf.mxu0
      %v596 = vadd.f32 0.0, %v595
      %v597 = vpop.f32.mrf.mxu0
      %v598 = vpop.f32.mrf.mxu0
      %599 = vdwg.mxu0
      %600 = vmatprep.subr.bf16.mxu0 0
      %601 = vmatpush1.bf16.msra.mxu0 %v486
      %602 = vmatprep.subr.bf16.mxu0 0
      %603 = vmatpush1.bf16.msra.mxu0 %v483
      %604 = vmatprep.subr.bf16.mxu0 0
      %605 = vmatpush1.bf16.msra.mxu0 %v480
      %606 = vmatprep.subr.bf16.mxu0 0
      %607 = vmatpush1.bf16.msra.mxu0 %v477
      %608 = vmatprep.subr.bf16.mxu0 0
      %609 = vmatpush1.bf16.msra.mxu0 %v474
      %610 = vmatprep.subr.bf16.mxu0 0
      %611 = vmatpush1.bf16.msra.mxu0 %v471
      %612 = vmatprep.subr.bf16.mxu0 0
      %613 = vmatpush1.bf16.msra.mxu0 %v468
      %614 = vmatprep.subr.bf16.mxu0 0
      %615 = vmatpush1.bf16.msra.mxu0 %v465
      %616 = vmatprep.subr.bf16.mxu0 0
      %617 = vmatpush2.bf16.msra.mxu0 %v510
      %618 = vmatprep.subr.bf16.mxu0 0
      %619 = vmatpush2.bf16.msra.mxu0 %v507
      %620 = vmatprep.subr.bf16.mxu0 0
      %621 = vmatpush2.bf16.msra.mxu0 %v504
      %622 = vmatprep.subr.bf16.mxu0 0
      %623 = vmatpush2.bf16.msra.mxu0 %v501
      %624 = vmatprep.subr.bf16.mxu0 0
      %625 = vmatpush2.bf16.msra.mxu0 %v498
      %626 = vmatprep.subr.bf16.mxu0 0
      %627 = vmatpush2.bf16.msra.mxu0 %v495
      %628 = vmatprep.subr.bf16.mxu0 0
      %629 = vmatpush2.bf16.msra.mxu0 %v492
      %630 = vmatprep.subr.bf16.mxu0 0
      %631 = vmatpush2.bf16.msra.mxu0 %v489
      %632 = vmatprep.mubr.bf16.mxu0 %v300
      %633 = vmatmul.mubr.bf16.gmra.mxu0 %v299
      %v634 = vpop.f32.mrf.mxu0
      %v635 = vadd.f32 0.0, %v634
      %v636 = vpop.f32.mrf.mxu0
      %v637 = vpop.f32.mrf.mxu0
      %v638 = vpop.f32.mrf.mxu0
      %639 = vdwg.mxu0
      %v642 = vcombine.low %v594, %v596
      %v644 = vadd.f32 %v225, %v642
      %v645 = vadd.f32 %v226, %v635
      %646 = vst [vmem:[#allocation2] sm:$0xff] %v644
      %vm647 = vcmask 519168
      %648 = vst.msk [vmem:[#allocation2 + $0x8] sm:$0xf] %vm647, %v645
      %p649 = scmp.eq.s32.totalorder %s19, 1
      // Predicated region
      $region37: #{encoder_decoder2_forward.8} parent=31 // pred_check
        %p650 = pneg %p649
      $region38: #{encoder_decoder2_forward.8} parent=31 // pred_check_branch
        %652 = sbr.rel (%p650) target = $region40
      $region39: #{encoder_decoder2_forward.8} parent=31 // pred_region
        %v653 = vld [vmem:[#allocation2] sm:$0xff]
        %v654 = vld [vmem:[#allocation2 + $0x8] sm:$0xf]
        %v655 = vld [vmem:[%s2] sm:$0x7]
        %v657 = vlaneseq
        %v658 = vshrl.u32 %v657, 7
        %v659 = vsub.s32 0, %v658
        %v660 = vrot.slane %v655, %v659
        %v661 = vlaneseq
        %v662 = vshrl.u32 %v661, 7
        %v663 = vsub.s32 1, %v662
        %v664 = vrot.slane %v655, %v663
        %v665 = vlaneseq
        %v666 = vshrl.u32 %v665, 7
        %v667 = vsub.s32 2, %v666
        %v668 = vrot.slane %v655, %v667
        %v670 = vcombine.low %v660, %v664
        %v672 = vadd.f32 %v653, %v670
        %v673 = vadd.f32 %v654, %v668
        %v674 = vmax.f32 %v672, 0.0
        %v675 = vmax.f32 %v673, 0.0
        %v677 = vcombine.high %v674, %v674
        %v679 = vpack.c.bf16 %v674, %v674
        %v680 = vpack.c.bf16 %v677, %v677
        %v681 = vpack.c.bf16 %v675, %v675
        %v685 = vcombine.low %v679, %v680
        %v687 = vunpack.c.l.s4 1983009808
        %v688 = vunpack.c.0.s8 %v687
        %v689 = vlaneseq
        %v690 = vshrl.u32 %v689, 7
        %v691 = vsub.s32 %v688, %v690
        %v692 = vrot.slane %v685, %v691
        %v694 = vunpack.c.l.s4 1983009808
        %v695 = vunpack.c.0.s8 %v694
        %v696 = vlaneseq
        %v697 = vshrl.u32 %v696, 7
        %v698 = vsub.s32 %v695, %v697
        %v699 = vrot.slane %v681, %v698
        %v700 = vcombine.low %v692, %v699
        %vm702 = vcmask 1041408
        %vm703 = vcmask 1043458
        %vm704 = vmor %vm703, %vm702
        %vm705 = vcmask 521220
        %vm706 = vmor %vm705, %vm704
        %707 = vst.msk [vmem:[%s216] sm:$0x3f] %vm706, %v700
      $region40: #{encoder_decoder2_forward.8} parent=31 // pred_fallthru
        _
      %p708 = scmp.lt.s32.totalorder %s18, 7
      %s709 = scalar_select %p708, %s18, 7
      %s710 = smul.addr %s709, 3
      %s711 = smul.addr %s710, 2
      %s712 = scalar_lea.vmem %s3, %s711
      // Predicated region
      $region41: #{encoder_decoder2_forward.8} parent=31 // pred_check
        %p713 = pneg %p119
      $region42: #{encoder_decoder2_forward.8} parent=31 // pred_check_branch
        %715 = sbr.rel (%p713) target = $region44
      $region43: #{encoder_decoder2_forward.8} parent=31 // pred_region
        _
      $region44: #{encoder_decoder2_forward.8} parent=31 // pred_fallthru
        _
    $region32: #{encoder_decoder2_forward.8} parent=5 // pred_fallthru
      _
    %p716 = scmp.le.s32.totalorder 2, %s9
    // Predicated region
    $region45: #{encoder_decoder2_forward.8} parent=5 // pred_check
      %p717 = pneg %p716
    $region46: #{encoder_decoder2_forward.8} parent=5 // pred_check_branch
      %719 = sbr.rel (%p717) target = $region48
    $region47: #{encoder_decoder2_forward.8} parent=5 // pred_region
      %s720 = ssub.s32 %s9, 2
      // Predicated region
      $region49: #{encoder_decoder2_forward.8} parent=47 // pred_check
        %p721 = pneg %p125
      $region50: #{encoder_decoder2_forward.8} parent=47 // pred_check_branch
        %723 = sbr.rel (%p721) target = $region52
      $region51: #{encoder_decoder2_forward.8} parent=47 // pred_region
        %p724 = scmp.lt.s32.totalorder %s20, 7
        %s725 = scalar_select %p724, %s20, 7
        %s726 = smul.addr %s725, 3
        %s727 = smul.addr %s726, 2
        %s728 = scalar_lea.vmem %s3, %s727
      $region52: #{encoder_decoder2_forward.8} parent=47 // pred_fallthru
        _
    $region48: #{encoder_decoder2_forward.8} parent=5 // pred_fallthru
      _
  $region6: #{encoder_decoder2_forward.8} parent=0 // loop_footer
    %s13 = sadd.s32 1, %s9
  $region7: #{encoder_decoder2_forward.8} parent=0 // loop_footer_branch
    %8 = sbr.rel target = $region3
  $region8: #{encoder_decoder2_forward.8} parent=0 // loop_exit
    _

// kernel: encoder_decoder2_forward.9
$region0: #{encoder_decoder2_forward.9}
  #allocation0 [shape = 'u32[]', space=smem, size = 0x4, offset = 0x4, fixed_abs, tag = 'smem constant byte address 0x4 - core index']
  #allocation1 [shape = 'u32[144,128]{1,0:T(1,128)}', space=vmem, size = 0x12000, scoped, tag = 'internal scratch']
  #allocation2 [shape = 'f32[2,512]{1,0:T(2,128)}', space=vmem, size = 0x1000, scoped, tag = 'scratch operand']
  %s0 = inlined_call_operand.vmem [shape: bf16[4,2,2,640], index: 0, kind: input, shape index: {}]
  %s1 = inlined_call_operand.vmem [shape: bf16[2,640,512], index: 1, kind: input, shape index: {}]
  %s2 = inlined_call_operand.vmem [shape: f32[1,512], index: 2, kind: input, shape index: {}]
  %s3 = inlined_call_operand.vmem [shape: bf16[4,2,512], index: 3, kind: output, shape index: {}]
  %s4 = sld [smem:[#allocation0]]
  $region53: #{encoder_decoder2_forward.9} parent=0
    _
  %s6 = ssub.s32 1, %s4
  %s7 = scalar_select 0, %s6, %s4
  loop: start=0, step=1, limit=10
  $region2: #{encoder_decoder2_forward.9} parent=0 // loop_pre_header
    _
  $region3: #{encoder_decoder2_forward.9} parent=0 // loop_header
    %s9 = sphi 0, %s13
    %p10 = scmp.ge.s32.totalorder %s9, 10
    %s16 = sphi 0, %s28
    %s17 = sphi 0, %s24
    %s18 = sphi 0, %s16
    %s19 = sphi 0, %s17
    %s20 = sphi 0, %s18
    %s21 = sphi 0, %s19
    %s33 = sphi 0, %s35
    %s36 = sphi 0, %s33
    %s37 = sphi 0, %s36
    %s53 = sphi 0, %s37
    %s59 = sphi 0, %s61
    %s62 = sphi 0, %s59
    %s63 = sphi 0, %s62
    %s79 = sphi 0, %s63
    %s83 = sphi 0, %s83
    %s85 = sphi 0, %s83
    %s86 = sphi 0, %s85
    %s100 = sphi 0, %s86
    %s106 = sphi 0, %s108
    %s109 = sphi 0, %s106
    %s110 = sphi 0, %s109
    %s126 = sphi 0, %s110
  $region4: #{encoder_decoder2_forward.9} parent=0 // loop_header_branch
    %12 = sbr.rel (%p10) target = $region8
  $region5: #{encoder_decoder2_forward.9} parent=0 // loop_body
    %s14 = ssub.s32 %s9, 1
    %s15 = ssub.s32 %s9, 2
    %s22 = sadd.s32 1, %s17
    %p23 = scmp.ge.s32.totalorder %s22, 2
    %s24 = scalar_select %p23, 0, %s22
    %s25 = sadd.s32 1, %s16
    %s26 = scalar_select %p23, %s25, %s16
    %p27 = scmp.ge.s32.totalorder %s26, 4
    %s28 = scalar_select %p27, 0, %s26
    %s29 = ssub.s32 %s16, %s28
    %s30 = ssub.s32 %s17, %s24
    %s31 = sor.u32 %s29, %s30
    %p32 = scmp.eq.s32.totalorder %s31, 0
    %s34 = sadd.s32 %s33, 1
    %s35 = scalar_select %p32, %s33, %s34
    %p38 = pneg %p32
    %p39 = scmp.eq.s32.totalorder %s9, 7
    %p40 = por %p38, %p39
    %p41 = scmp.ne.s32.totalorder %s33, %s36
    %p42 = scmp.eq.s32.totalorder %s9, 0
    %p43 = por %p41, %p42
    %p44 = scmp.ne.s32.totalorder %s33, %s36
    %p45 = scmp.eq.s32.totalorder %s14, 7
    %p46 = por %p44, %p45
    %p47 = scmp.ne.s32.totalorder %s36, %s37
    %p48 = scmp.eq.s32.totalorder %s14, 0
    %p49 = por %p47, %p48
    %p50 = scmp.ne.s32.totalorder %s36, %s37
    %p51 = scmp.eq.s32.totalorder %s15, 7
    %p52 = por %p50, %p51
    %p54 = scmp.ne.s32.totalorder %s37, %s53
    %p55 = scmp.eq.s32.totalorder %s15, 0
    %p56 = por %p54, %p55
    %s57 = ssub.s32 %s17, %s24
    %p58 = scmp.eq.s32.totalorder %s57, 0
    %s60 = sadd.s32 %s59, 1
    %s61 = scalar_select %p58, %s59, %s60
    %p64 = pneg %p58
    %p65 = scmp.eq.s32.totalorder %s9, 7
    %p66 = por %p64, %p65
    %p67 = scmp.ne.s32.totalorder %s59, %s62
    %p68 = scmp.eq.s32.totalorder %s9, 0
    %p69 = por %p67, %p68
    %p70 = scmp.ne.s32.totalorder %s59, %s62
    %p71 = scmp.eq.s32.totalorder %s14, 7
    %p72 = por %p70, %p71
    %p73 = scmp.ne.s32.totalorder %s62, %s63
    %p74 = scmp.eq.s32.totalorder %s14, 0
    %p75 = por %p73, %p74
    %p76 = scmp.ne.s32.totalorder %s62, %s63
    %p77 = scmp.eq.s32.totalorder %s15, 7
    %p78 = por %p76, %p77
    %p80 = scmp.ne.s32.totalorder %s63, %s79
    %p81 = scmp.eq.s32.totalorder %s15, 0
    %p82 = por %p80, %p81
    %s84 = sadd.s32 %s83, 1
    %p87 = scmp.eq.s32.totalorder %s9, 7
    %p88 = scmp.ne.s32.totalorder %s83, %s85
    %p89 = scmp.eq.s32.totalorder %s9, 0
    %p90 = por %p88, %p89
    %p91 = scmp.ne.s32.totalorder %s83, %s85
    %p92 = scmp.eq.s32.totalorder %s14, 7
    %p93 = por %p91, %p92
    %p94 = scmp.ne.s32.totalorder %s85, %s86
    %p95 = scmp.eq.s32.totalorder %s14, 0
    %p96 = por %p94, %p95
    %p97 = scmp.ne.s32.totalorder %s85, %s86
    %p98 = scmp.eq.s32.totalorder %s15, 7
    %p99 = por %p97, %p98
    %p101 = scmp.ne.s32.totalorder %s86, %s100
    %p102 = scmp.eq.s32.totalorder %s15, 0
    %p103 = por %p101, %p102
    %s104 = ssub.s32 %s16, %s28
    %p105 = scmp.eq.s32.totalorder %s104, 0
    %s107 = sadd.s32 %s106, 1
    %s108 = scalar_select %p105, %s106, %s107
    %p111 = pneg %p105
    %p112 = scmp.eq.s32.totalorder %s9, 7
    %p113 = por %p111, %p112
    %p114 = scmp.ne.s32.totalorder %s106, %s109
    %p115 = scmp.eq.s32.totalorder %s9, 0
    %p116 = por %p114, %p115
    %p117 = scmp.ne.s32.totalorder %s106, %s109
    %p118 = scmp.eq.s32.totalorder %s14, 7
    %p119 = por %p117, %p118
    %p120 = scmp.ne.s32.totalorder %s109, %s110
    %p121 = scmp.eq.s32.totalorder %s14, 0
    %p122 = por %p120, %p121
    %p123 = scmp.ne.s32.totalorder %s109, %s110
    %p124 = scmp.eq.s32.totalorder %s15, 7
    %p125 = por %p123, %p124
    %p127 = scmp.ne.s32.totalorder %s110, %s126
    %p128 = scmp.eq.s32.totalorder %s15, 0
    %p129 = por %p127, %p128
    %p130 = scmp.le.s32.totalorder 1, %s9
    %p131 = scmp.lt.s32.totalorder %s9, 9
    %p132 = pnand %p130, %p131
    %p133 = pneg %p132
    // Predicated region
    $region9: #{encoder_decoder2_forward.9} parent=5 // pred_check
      _
    $region10: #{encoder_decoder2_forward.9} parent=5 // pred_check_branch
      %135 = sbr.rel (%p132) target = $region12
    $region11: #{encoder_decoder2_forward.9} parent=5 // pred_region
      %s136 = ssub.s32 %s9, 1
      // Predicated region
      $region13: #{encoder_decoder2_forward.9} parent=11 // pred_check
        %p137 = pneg %p96
      $region14: #{encoder_decoder2_forward.9} parent=11 // pred_check_branch
        %139 = sbr.rel (%p137) target = $region16
      $region15: #{encoder_decoder2_forward.9} parent=11 // pred_region
        _
      $region16: #{encoder_decoder2_forward.9} parent=11 // pred_fallthru
        _
    $region12: #{encoder_decoder2_forward.9} parent=5 // pred_fallthru
      _
    %p140 = scmp.lt.s32.totalorder %s9, 8
    // Predicated region
    $region17: #{encoder_decoder2_forward.9} parent=5 // pred_check
      %p141 = pneg %p140
    $region18: #{encoder_decoder2_forward.9} parent=5 // pred_check_branch
      %143 = sbr.rel (%p141) target = $region20
    $region19: #{encoder_decoder2_forward.9} parent=5 // pred_region
      // Predicated region
      $region21: #{encoder_decoder2_forward.9} parent=19 // pred_check
        %p144 = pneg %p43
      $region22: #{encoder_decoder2_forward.9} parent=19 // pred_check_branch
        %146 = sbr.rel (%p144) target = $region24
      $region23: #{encoder_decoder2_forward.9} parent=19 // pred_region
        %p147 = scmp.lt.s32.totalorder %s16, 3
        %s148 = scalar_select %p147, %s16, 3
        %p149 = scmp.lt.s32.totalorder %s17, 1
        %s150 = scalar_select %p149, %s17, 1
        %s151 = smul.addr %s150, 5
        %s152 = smul.addr %s148, 10
        %s153 = sadd.s32 %s151, %s152
        %s154 = scalar_lea.vmem %s0, %s153
      $region24: #{encoder_decoder2_forward.9} parent=19 // pred_fallthru
        _
      // Predicated region
      $region25: #{encoder_decoder2_forward.9} parent=19 // pred_check
        %p155 = pneg %p69
      $region26: #{encoder_decoder2_forward.9} parent=19 // pred_check_branch
        %157 = sbr.rel (%p155) target = $region28
      $region27: #{encoder_decoder2_forward.9} parent=19 // pred_region
        %p158 = scmp.lt.s32.totalorder %s17, 1
        %s159 = scalar_select %p158, %s17, 1
        %s160 = smul.addr %s159, 320
        %s161 = smul.addr %s160, 4
        %s162 = scalar_lea.vmem %s1, %s161
      $region28: #{encoder_decoder2_forward.9} parent=19 // pred_fallthru
        _
    $region20: #{encoder_decoder2_forward.9} parent=5 // pred_fallthru
      _
    %p163 = scmp.le.s32.totalorder 1, %s9
    %p164 = scmp.lt.s32.totalorder %s9, 9
    %p165 = pnand %p163, %p164
    %p166 = pneg %p165
    // Predicated region
    $region29: #{encoder_decoder2_forward.9} parent=5 // pred_check
      _
    $region30: #{encoder_decoder2_forward.9} parent=5 // pred_check_branch
      %168 = sbr.rel (%p165) target = $region32
    $region31: #{encoder_decoder2_forward.9} parent=5 // pred_region
      %s169 = ssub.s32 %s9, 1
      %p170 = scmp.lt.s32.totalorder %s18, 3
      %s171 = scalar_select %p170, %s18, 3
      %p172 = scmp.lt.s32.totalorder %s19, 1
      %s173 = scalar_select %p172, %s19, 1
      %s174 = smul.addr %s173, 5
      %s175 = smul.addr %s171, 10
      %s176 = sadd.s32 %s174, %s175
      %s177 = scalar_lea.vmem %s0, %s176
      %p178 = pneg %p49
      %p179 = pneg %p46
      %p180 = scmp.lt.s32.totalorder %s19, 1
      %s181 = scalar_select %p180, %s19, 1
      %s182 = smul.addr %s181, 320
      %s183 = smul.addr %s182, 4
      %s184 = scalar_lea.vmem %s1, %s183
      %p185 = pneg %p75
      %p186 = pneg %p72
      %p187 = pneg %p96
      %p188 = pneg %p93
      %p189 = pneg %p122
      %p190 = pneg %p119
      %p191 = scmp.lt.s32.totalorder %s18, 3
      %s192 = scalar_select %p191, %s18, 3
      %s193 = smul.addr %s192, 4
      %s194 = scalar_lea.vmem %s3, %s193
      %p195 = scmp.lt.s32.totalorder %s18, 3
      %s196 = scalar_select %p195, %s18, 3
      %p197 = scmp.lt.s32.totalorder %s19, 1
      %s198 = scalar_select %p197, %s19, 1
      %s199 = smul.addr %s198, 5
      %s200 = smul.addr %s196, 10
      %s201 = sadd.s32 %s199, %s200
      %s202 = scalar_lea.vmem %s0, %s201
      %p203 = scmp.lt.s32.totalorder %s19, 1
      %s204 = scalar_select %p203, %s19, 1
      %s205 = smul.addr %s204, 320
      %s206 = smul.addr %s205, 4
      %s207 = scalar_lea.vmem %s1, %s206
      %p208 = scmp.lt.s32.totalorder %s18, 3
      %s209 = scalar_select %p208, %s18, 3
      %s210 = smul.addr %s209, 4
      %s211 = scalar_lea.vmem %s3, %s210
      %p213 = scmp.eq.s32.totalorder %s19, 0
      // Predicated region
      $region33: #{encoder_decoder2_forward.9} parent=31 // pred_check
        %p214 = pneg %p213
      $region34: #{encoder_decoder2_forward.9} parent=31 // pred_check_branch
        %216 = sbr.rel (%p214) target = $region36
      $region35: #{encoder_decoder2_forward.9} parent=31 // pred_region
        %217 = vst [vmem:[#allocation2] sm:$0xff] 0.0
      $region36: #{encoder_decoder2_forward.9} parent=31 // pred_fallthru
        _
      %v218 = vld [vmem:[#allocation2] sm:$0xff]
      %v219 = vld [vmem:[%s202] sm:$0x1f]
      %v220 = vld [vmem:[%s207] sm:$0xff]
      %v221 = vld [vmem:[%s207 + $0x8] sm:$0xff]
      %v222 = vld [vmem:[%s207 + $0x10] sm:$0xff]
      %v223 = vld [vmem:[%s207 + $0x18] sm:$0xff]
      %v224 = vld [vmem:[%s207 + $0x20] sm:$0xff]
      %v225 = vld [vmem:[%s207 + $0x28] sm:$0xff]
      %v226 = vld [vmem:[%s207 + $0x30] sm:$0xff]
      %v227 = vld [vmem:[%s207 + $0x38] sm:$0xff]
      %v228 = vld [vmem:[%s207 + $0x40] sm:$0xff]
      %v229 = vld [vmem:[%s207 + $0x48] sm:$0xff]
      %v230 = vld [vmem:[%s207 + $0x50] sm:$0xff]
      %v231 = vld [vmem:[%s207 + $0x58] sm:$0xff]
      %v232 = vld [vmem:[%s207 + $0x60] sm:$0xff]
      %v233 = vld [vmem:[%s207 + $0x68] sm:$0xff]
      %v234 = vld [vmem:[%s207 + $0x70] sm:$0xff]
      %v235 = vld [vmem:[%s207 + $0x78] sm:$0xff]
      %v236 = vld [vmem:[%s207 + $0x80] sm:$0xff]
      %v237 = vld [vmem:[%s207 + $0x88] sm:$0xff]
      %v238 = vld [vmem:[%s207 + $0x90] sm:$0xff]
      %v239 = vld [vmem:[%s207 + $0x98] sm:$0xff]
      %v240 = vld [vmem:[%s207 + $0xa0] sm:$0xff]
      %v241 = vld [vmem:[%s207 + $0xa8] sm:$0xff]
      %v242 = vld [vmem:[%s207 + $0xb0] sm:$0xff]
      %v243 = vld [vmem:[%s207 + $0xb8] sm:$0xff]
      %v244 = vld [vmem:[%s207 + $0xc0] sm:$0xff]
      %v245 = vld [vmem:[%s207 + $0xc8] sm:$0xff]
      %v246 = vld [vmem:[%s207 + $0xd0] sm:$0xff]
      %v247 = vld [vmem:[%s207 + $0xd8] sm:$0xff]
      %v248 = vld [vmem:[%s207 + $0xe0] sm:$0xff]
      %v249 = vld [vmem:[%s207 + $0xe8] sm:$0xff]
      %v250 = vld [vmem:[%s207 + $0xf0] sm:$0xff]
      %v251 = vld [vmem:[%s207 + $0xf8] sm:$0xff]
      %v252 = vld [vmem:[%s207 + $0x100] sm:$0xff]
      %v253 = vld [vmem:[%s207 + $0x108] sm:$0xff]
      %v254 = vld [vmem:[%s207 + $0x110] sm:$0xff]
      %v255 = vld [vmem:[%s207 + $0x118] sm:$0xff]
      %v256 = vld [vmem:[%s207 + $0x120] sm:$0xff]
      %v257 = vld [vmem:[%s207 + $0x128] sm:$0xff]
      %v258 = vld [vmem:[%s207 + $0x130] sm:$0xff]
      %v259 = vld [vmem:[%s207 + $0x138] sm:$0xff]
      %v260 = vld [vmem:[%s207 + $0x140] sm:$0xff]
      %v261 = vld [vmem:[%s207 + $0x148] sm:$0xff]
      %v262 = vld [vmem:[%s207 + $0x150] sm:$0xff]
      %v263 = vld [vmem:[%s207 + $0x158] sm:$0xff]
      %v264 = vld [vmem:[%s207 + $0x160] sm:$0xff]
      %v265 = vld [vmem:[%s207 + $0x168] sm:$0xff]
      %v266 = vld [vmem:[%s207 + $0x170] sm:$0xff]
      %v267 = vld [vmem:[%s207 + $0x178] sm:$0xff]
      %v268 = vld [vmem:[%s207 + $0x180] sm:$0xff]
      %v269 = vld [vmem:[%s207 + $0x188] sm:$0xff]
      %v270 = vld [vmem:[%s207 + $0x190] sm:$0xff]
      %v271 = vld [vmem:[%s207 + $0x198] sm:$0xff]
      %v272 = vld [vmem:[%s207 + $0x1a0] sm:$0xff]
      %v273 = vld [vmem:[%s207 + $0x1a8] sm:$0xff]
      %v274 = vld [vmem:[%s207 + $0x1b0] sm:$0xff]
      %v275 = vld [vmem:[%s207 + $0x1b8] sm:$0xff]
      %v276 = vld [vmem:[%s207 + $0x1c0] sm:$0xff]
      %v277 = vld [vmem:[%s207 + $0x1c8] sm:$0xff]
      %v278 = vld [vmem:[%s207 + $0x1d0] sm:$0xff]
      %v279 = vld [vmem:[%s207 + $0x1d8] sm:$0xff]
      %v280 = vld [vmem:[%s207 + $0x1e0] sm:$0xff]
      %v281 = vld [vmem:[%s207 + $0x1e8] sm:$0xff]
      %v282 = vld [vmem:[%s207 + $0x1f0] sm:$0xff]
      %v283 = vld [vmem:[%s207 + $0x1f8] sm:$0xff]
      %v284 = vld [vmem:[%s207 + $0x200] sm:$0xff]
      %v285 = vld [vmem:[%s207 + $0x208] sm:$0xff]
      %v286 = vld [vmem:[%s207 + $0x210] sm:$0xff]
      %v287 = vld [vmem:[%s207 + $0x218] sm:$0xff]
      %v288 = vld [vmem:[%s207 + $0x220] sm:$0xff]
      %v289 = vld [vmem:[%s207 + $0x228] sm:$0xff]
      %v290 = vld [vmem:[%s207 + $0x230] sm:$0xff]
      %v291 = vld [vmem:[%s207 + $0x238] sm:$0xff]
      %v292 = vld [vmem:[%s207 + $0x240] sm:$0xff]
      %v293 = vld [vmem:[%s207 + $0x248] sm:$0xff]
      %v294 = vld [vmem:[%s207 + $0x250] sm:$0xff]
      %v295 = vld [vmem:[%s207 + $0x258] sm:$0xff]
      %v296 = vld [vmem:[%s207 + $0x260] sm:$0xff]
      %v297 = vld [vmem:[%s207 + $0x268] sm:$0xff]
      %v298 = vld [vmem:[%s207 + $0x270] sm:$0xff]
      %v299 = vld [vmem:[%s207 + $0x278] sm:$0xff]
      %v300 = vld [vmem:[%s207 + $0x280] sm:$0xff]
      %v301 = vld [vmem:[%s207 + $0x288] sm:$0xff]
      %v302 = vld [vmem:[%s207 + $0x290] sm:$0xff]
      %v303 = vld [vmem:[%s207 + $0x298] sm:$0xff]
      %v304 = vld [vmem:[%s207 + $0x2a0] sm:$0xff]
      %v305 = vld [vmem:[%s207 + $0x2a8] sm:$0xff]
      %v306 = vld [vmem:[%s207 + $0x2b0] sm:$0xff]
      %v307 = vld [vmem:[%s207 + $0x2b8] sm:$0xff]
      %v308 = vld [vmem:[%s207 + $0x2c0] sm:$0xff]
      %v309 = vld [vmem:[%s207 + $0x2c8] sm:$0xff]
      %v310 = vld [vmem:[%s207 + $0x2d0] sm:$0xff]
      %v311 = vld [vmem:[%s207 + $0x2d8] sm:$0xff]
      %v312 = vld [vmem:[%s207 + $0x2e0] sm:$0xff]
      %v313 = vld [vmem:[%s207 + $0x2e8] sm:$0xff]
      %v314 = vld [vmem:[%s207 + $0x2f0] sm:$0xff]
      %v315 = vld [vmem:[%s207 + $0x2f8] sm:$0xff]
      %v316 = vld [vmem:[%s207 + $0x300] sm:$0xff]
      %v317 = vld [vmem:[%s207 + $0x308] sm:$0xff]
      %v318 = vld [vmem:[%s207 + $0x310] sm:$0xff]
      %v319 = vld [vmem:[%s207 + $0x318] sm:$0xff]
      %v320 = vld [vmem:[%s207 + $0x320] sm:$0xff]
      %v321 = vld [vmem:[%s207 + $0x328] sm:$0xff]
      %v322 = vld [vmem:[%s207 + $0x330] sm:$0xff]
      %v323 = vld [vmem:[%s207 + $0x338] sm:$0xff]
      %v324 = vld [vmem:[%s207 + $0x340] sm:$0xff]
      %v325 = vld [vmem:[%s207 + $0x348] sm:$0xff]
      %v326 = vld [vmem:[%s207 + $0x350] sm:$0xff]
      %v327 = vld [vmem:[%s207 + $0x358] sm:$0xff]
      %v328 = vld [vmem:[%s207 + $0x360] sm:$0xff]
      %v329 = vld [vmem:[%s207 + $0x368] sm:$0xff]
      %v330 = vld [vmem:[%s207 + $0x370] sm:$0xff]
      %v331 = vld [vmem:[%s207 + $0x378] sm:$0xff]
      %v332 = vld [vmem:[%s207 + $0x380] sm:$0xff]
      %v333 = vld [vmem:[%s207 + $0x388] sm:$0xff]
      %v334 = vld [vmem:[%s207 + $0x390] sm:$0xff]
      %v335 = vld [vmem:[%s207 + $0x398] sm:$0xff]
      %v336 = vld [vmem:[%s207 + $0x3a0] sm:$0xff]
      %v337 = vld [vmem:[%s207 + $0x3a8] sm:$0xff]
      %v338 = vld [vmem:[%s207 + $0x3b0] sm:$0xff]
      %v339 = vld [vmem:[%s207 + $0x3b8] sm:$0xff]
      %v340 = vld [vmem:[%s207 + $0x3c0] sm:$0xff]
      %v341 = vld [vmem:[%s207 + $0x3c8] sm:$0xff]
      %v342 = vld [vmem:[%s207 + $0x3d0] sm:$0xff]
      %v343 = vld [vmem:[%s207 + $0x3d8] sm:$0xff]
      %v344 = vld [vmem:[%s207 + $0x3e0] sm:$0xff]
      %v345 = vld [vmem:[%s207 + $0x3e8] sm:$0xff]
      %v346 = vld [vmem:[%s207 + $0x3f0] sm:$0xff]
      %v347 = vld [vmem:[%s207 + $0x3f8] sm:$0xff]
      %v348 = vld [vmem:[%s207 + $0x400] sm:$0xff]
      %v349 = vld [vmem:[%s207 + $0x408] sm:$0xff]
      %v350 = vld [vmem:[%s207 + $0x410] sm:$0xff]
      %v351 = vld [vmem:[%s207 + $0x418] sm:$0xff]
      %v352 = vld [vmem:[%s207 + $0x420] sm:$0xff]
      %v353 = vld [vmem:[%s207 + $0x428] sm:$0xff]
      %v354 = vld [vmem:[%s207 + $0x430] sm:$0xff]
      %v355 = vld [vmem:[%s207 + $0x438] sm:$0xff]
      %v356 = vld [vmem:[%s207 + $0x440] sm:$0xff]
      %v357 = vld [vmem:[%s207 + $0x448] sm:$0xff]
      %v358 = vld [vmem:[%s207 + $0x450] sm:$0xff]
      %v359 = vld [vmem:[%s207 + $0x458] sm:$0xff]
      %v360 = vld [vmem:[%s207 + $0x460] sm:$0xff]
      %v361 = vld [vmem:[%s207 + $0x468] sm:$0xff]
      %v362 = vld [vmem:[%s207 + $0x470] sm:$0xff]
      %v363 = vld [vmem:[%s207 + $0x478] sm:$0xff]
      %v364 = vld [vmem:[%s207 + $0x480] sm:$0xff]
      %v365 = vld [vmem:[%s207 + $0x488] sm:$0xff]
      %v366 = vld [vmem:[%s207 + $0x490] sm:$0xff]
      %v367 = vld [vmem:[%s207 + $0x498] sm:$0xff]
      %v368 = vld [vmem:[%s207 + $0x4a0] sm:$0xff]
      %v369 = vld [vmem:[%s207 + $0x4a8] sm:$0xff]
      %v370 = vld [vmem:[%s207 + $0x4b0] sm:$0xff]
      %v371 = vld [vmem:[%s207 + $0x4b8] sm:$0xff]
      %v372 = vld [vmem:[%s207 + $0x4c0] sm:$0xff]
      %v373 = vld [vmem:[%s207 + $0x4c8] sm:$0xff]
      %v374 = vld [vmem:[%s207 + $0x4d0] sm:$0xff]
      %v375 = vld [vmem:[%s207 + $0x4d8] sm:$0xff]
      %v376 = vld [vmem:[%s207 + $0x4e0] sm:$0xff]
      %v377 = vld [vmem:[%s207 + $0x4e8] sm:$0xff]
      %v378 = vld [vmem:[%s207 + $0x4f0] sm:$0xff]
      %v379 = vld [vmem:[%s207 + $0x4f8] sm:$0xff]
      %v381 = vcombine.high %v219, %v219
      %v383 = vunpack.c.l.s4 1966171168
      %v384 = vunpack.c.0.s8 %v383
      %v385 = vlaneseq
      %v386 = vshrl.u32 %v385, 7
      %v387 = vsub.s32 %v384, %v386
      %v388 = vrot.slane %v219, %v387
      %v390 = vunpack.c.l.s4 1966171168
      %v391 = vunpack.c.0.s8 %v390
      %v392 = vlaneseq
      %v393 = vshrl.u32 %v392, 7
      %v394 = vsub.s32 %v391, %v393
      %v395 = vrot.slane %v381, %v394
      %v396 = vcombine.high %v388, %v388
      %v398 = vunpack.c.l.s4 1966171168
      %v399 = vunpack.c.0.s8 %v398
      %v400 = vlaneseq
      %v401 = vshrl.u32 %v400, 7
      %v402 = vsub.s32 %v399, %v401
      %v403 = vrot.slane %v388, %v402
      %v405 = vunpack.c.l.s4 1966171168
      %v406 = vunpack.c.0.s8 %v405
      %v407 = vlaneseq
      %v408 = vshrl.u32 %v407, 7
      %v409 = vsub.s32 %v406, %v408
      %v410 = vrot.slane %v395, %v409
      %v412 = vunpack.c.l.s4 1966171168
      %v413 = vunpack.c.0.s8 %v412
      %v414 = vlaneseq
      %v415 = vshrl.u32 %v414, 7
      %v416 = vsub.s32 %v413, %v415
      %v417 = vrot.slane %v396, %v416
      %v418 = vcombine.high %v403, %v403
      %v419 = vcombine.high %v417, %v417
      %v585 = vunpack.c.l.b16 %v220
      %v586 = vunpack.c.h.b16 %v220
      %v587 = vunpack.c.l.b16 %v221
      %v588 = vunpack.c.h.b16 %v221
      %v589 = vunpack.c.l.b16 %v222
      %v590 = vunpack.c.h.b16 %v222
      %v591 = vunpack.c.l.b16 %v223
      %v592 = vunpack.c.h.b16 %v223
      %v593 = vunpack.c.l.b16 %v224
      %v594 = vunpack.c.h.b16 %v224
      %v595 = vunpack.c.l.b16 %v225
      %v596 = vunpack.c.h.b16 %v225
      %v597 = vunpack.c.l.b16 %v226
      %v598 = vunpack.c.h.b16 %v226
      %v599 = vunpack.c.l.b16 %v227
      %v600 = vunpack.c.h.b16 %v227
      %v601 = vunpack.c.l.b16 %v228
      %v602 = vunpack.c.h.b16 %v228
      %v603 = vunpack.c.l.b16 %v229
      %v604 = vunpack.c.h.b16 %v229
      %v605 = vunpack.c.l.b16 %v230
      %v606 = vunpack.c.h.b16 %v230
      %v607 = vunpack.c.l.b16 %v231
      %v608 = vunpack.c.h.b16 %v231
      %v609 = vunpack.c.l.b16 %v232
      %v610 = vunpack.c.h.b16 %v232
      %v611 = vunpack.c.l.b16 %v233
      %v612 = vunpack.c.h.b16 %v233
      %v613 = vunpack.c.l.b16 %v234
      %v614 = vunpack.c.h.b16 %v234
      %v615 = vunpack.c.l.b16 %v235
      %v616 = vunpack.c.h.b16 %v235
      %v617 = vunpack.c.l.b16 %v236
      %v618 = vunpack.c.h.b16 %v236
      %v619 = vunpack.c.l.b16 %v237
      %v620 = vunpack.c.h.b16 %v237
      %v621 = vunpack.c.l.b16 %v238
      %v622 = vunpack.c.h.b16 %v238
      %v623 = vunpack.c.l.b16 %v239
      %v624 = vunpack.c.h.b16 %v239
      %v625 = vunpack.c.l.b16 %v240
      %v626 = vunpack.c.h.b16 %v240
      %v627 = vunpack.c.l.b16 %v241
      %v628 = vunpack.c.h.b16 %v241
      %v629 = vunpack.c.l.b16 %v242
      %v630 = vunpack.c.h.b16 %v242
      %v631 = vunpack.c.l.b16 %v243
      %v632 = vunpack.c.h.b16 %v243
      %v633 = vunpack.c.l.b16 %v244
      %v634 = vunpack.c.h.b16 %v244
      %v635 = vunpack.c.l.b16 %v245
      %v636 = vunpack.c.h.b16 %v245
      %v637 = vunpack.c.l.b16 %v246
      %v638 = vunpack.c.h.b16 %v246
      %v639 = vunpack.c.l.b16 %v247
      %v640 = vunpack.c.h.b16 %v247
      %v641 = vunpack.c.l.b16 %v248
      %v642 = vunpack.c.h.b16 %v248
      %v643 = vunpack.c.l.b16 %v249
      %v644 = vunpack.c.h.b16 %v249
      %v645 = vunpack.c.l.b16 %v250
      %v646 = vunpack.c.h.b16 %v250
      %v647 = vunpack.c.l.b16 %v251
      %v648 = vunpack.c.h.b16 %v251
      %v649 = vunpack.c.l.b16 %v252
      %v650 = vunpack.c.h.b16 %v252
      %v651 = vunpack.c.l.b16 %v253
      %v652 = vunpack.c.h.b16 %v253
      %v653 = vunpack.c.l.b16 %v254
      %v654 = vunpack.c.h.b16 %v254
      %v655 = vunpack.c.l.b16 %v255
      %v656 = vunpack.c.h.b16 %v255
      %v657 = vunpack.c.l.b16 %v256
      %v658 = vunpack.c.h.b16 %v256
      %v659 = vunpack.c.l.b16 %v257
      %v660 = vunpack.c.h.b16 %v257
      %v661 = vunpack.c.l.b16 %v258
      %v662 = vunpack.c.h.b16 %v258
      %v663 = vunpack.c.l.b16 %v259
      %v664 = vunpack.c.h.b16 %v259
      %v665 = vunpack.c.l.b16 %v260
      %v666 = vunpack.c.h.b16 %v260
      %v667 = vunpack.c.l.b16 %v261
      %v668 = vunpack.c.h.b16 %v261
      %v669 = vunpack.c.l.b16 %v262
      %v670 = vunpack.c.h.b16 %v262
      %v671 = vunpack.c.l.b16 %v263
      %v672 = vunpack.c.h.b16 %v263
      %v673 = vunpack.c.l.b16 %v264
      %v674 = vunpack.c.h.b16 %v264
      %v675 = vunpack.c.l.b16 %v265
      %v676 = vunpack.c.h.b16 %v265
      %v677 = vunpack.c.l.b16 %v266
      %v678 = vunpack.c.h.b16 %v266
      %v679 = vunpack.c.l.b16 %v267
      %v680 = vunpack.c.h.b16 %v267
      %v681 = vunpack.c.l.b16 %v268
      %v682 = vunpack.c.h.b16 %v268
      %v683 = vunpack.c.l.b16 %v269
      %v684 = vunpack.c.h.b16 %v269
      %v685 = vunpack.c.l.b16 %v270
      %v686 = vunpack.c.h.b16 %v270
      %v687 = vunpack.c.l.b16 %v271
      %v688 = vunpack.c.h.b16 %v271
      %v689 = vunpack.c.l.b16 %v272
      %v690 = vunpack.c.h.b16 %v272
      %v691 = vunpack.c.l.b16 %v273
      %v692 = vunpack.c.h.b16 %v273
      %v693 = vunpack.c.l.b16 %v274
      %v694 = vunpack.c.h.b16 %v274
      %v695 = vunpack.c.l.b16 %v275
      %v696 = vunpack.c.h.b16 %v275
      %v697 = vunpack.c.l.b16 %v276
      %v698 = vunpack.c.h.b16 %v276
      %v699 = vunpack.c.l.b16 %v277
      %v700 = vunpack.c.h.b16 %v277
      %v701 = vunpack.c.l.b16 %v278
      %v702 = vunpack.c.h.b16 %v278
      %v703 = vunpack.c.l.b16 %v279
      %v704 = vunpack.c.h.b16 %v279
      %v705 = vunpack.c.l.b16 %v280
      %v706 = vunpack.c.h.b16 %v280
      %v707 = vunpack.c.l.b16 %v281
      %v708 = vunpack.c.h.b16 %v281
      %v709 = vunpack.c.l.b16 %v282
      %v710 = vunpack.c.h.b16 %v282
      %v711 = vunpack.c.l.b16 %v283
      %v712 = vunpack.c.h.b16 %v283
      %v713 = vunpack.c.l.b16 %v284
      %v714 = vunpack.c.h.b16 %v284
      %v715 = vunpack.c.l.b16 %v285
      %v716 = vunpack.c.h.b16 %v285
      %v717 = vunpack.c.l.b16 %v286
      %v718 = vunpack.c.h.b16 %v286
      %v719 = vunpack.c.l.b16 %v287
      %v720 = vunpack.c.h.b16 %v287
      %v721 = vunpack.c.l.b16 %v288
      %v722 = vunpack.c.h.b16 %v288
      %v723 = vunpack.c.l.b16 %v289
      %v724 = vunpack.c.h.b16 %v289
      %v725 = vunpack.c.l.b16 %v290
      %v726 = vunpack.c.h.b16 %v290
      %v727 = vunpack.c.l.b16 %v291
      %v728 = vunpack.c.h.b16 %v291
      %v729 = vunpack.c.l.b16 %v292
      %v730 = vunpack.c.h.b16 %v292
      %v731 = vunpack.c.l.b16 %v293
      %v732 = vunpack.c.h.b16 %v293
      %v733 = vunpack.c.l.b16 %v294
      %v734 = vunpack.c.h.b16 %v294
      %v735 = vunpack.c.l.b16 %v295
      %v736 = vunpack.c.h.b16 %v295
      %v737 = vunpack.c.l.b16 %v296
      %v738 = vunpack.c.h.b16 %v296
      %v739 = vunpack.c.l.b16 %v297
      %v740 = vunpack.c.h.b16 %v297
      %v741 = vunpack.c.l.b16 %v298
      %v742 = vunpack.c.h.b16 %v298
      %v743 = vunpack.c.l.b16 %v299
      %v744 = vunpack.c.h.b16 %v299
      %v745 = vunpack.c.l.b16 %v300
      %v746 = vunpack.c.h.b16 %v300
      %v747 = vunpack.c.l.b16 %v301
      %v748 = vunpack.c.h.b16 %v301
      %v749 = vunpack.c.l.b16 %v302
      %v750 = vunpack.c.h.b16 %v302
      %v751 = vunpack.c.l.b16 %v303
      %v752 = vunpack.c.h.b16 %v303
      %v753 = vunpack.c.l.b16 %v304
      %v754 = vunpack.c.h.b16 %v304
      %v755 = vunpack.c.l.b16 %v305
      %v756 = vunpack.c.h.b16 %v305
      %v757 = vunpack.c.l.b16 %v306
      %v758 = vunpack.c.h.b16 %v306
      %v759 = vunpack.c.l.b16 %v307
      %v760 = vunpack.c.h.b16 %v307
      %v761 = vunpack.c.l.b16 %v308
      %v762 = vunpack.c.h.b16 %v308
      %v763 = vunpack.c.l.b16 %v309
      %v764 = vunpack.c.h.b16 %v309
      %v765 = vunpack.c.l.b16 %v310
      %v766 = vunpack.c.h.b16 %v310
      %v767 = vunpack.c.l.b16 %v311
      %v768 = vunpack.c.h.b16 %v311
      %v769 = vunpack.c.l.b16 %v312
      %v770 = vunpack.c.h.b16 %v312
      %v771 = vunpack.c.l.b16 %v313
      %v772 = vunpack.c.h.b16 %v313
      %v773 = vunpack.c.l.b16 %v314
      %v774 = vunpack.c.h.b16 %v314
      %v775 = vunpack.c.l.b16 %v315
      %v776 = vunpack.c.h.b16 %v315
      %v777 = vunpack.c.l.b16 %v316
      %v778 = vunpack.c.h.b16 %v316
      %v779 = vunpack.c.l.b16 %v317
      %v780 = vunpack.c.h.b16 %v317
      %v781 = vunpack.c.l.b16 %v318
      %v782 = vunpack.c.h.b16 %v318
      %v783 = vunpack.c.l.b16 %v319
      %v784 = vunpack.c.h.b16 %v319
      %v785 = vunpack.c.l.b16 %v320
      %v786 = vunpack.c.h.b16 %v320
      %v787 = vunpack.c.l.b16 %v321
      %v788 = vunpack.c.h.b16 %v321
      %v789 = vunpack.c.l.b16 %v322
      %v790 = vunpack.c.h.b16 %v322
      %v791 = vunpack.c.l.b16 %v323
      %v792 = vunpack.c.h.b16 %v323
      %v793 = vunpack.c.l.b16 %v324
      %v794 = vunpack.c.h.b16 %v324
      %v795 = vunpack.c.l.b16 %v325
      %v796 = vunpack.c.h.b16 %v325
      %v797 = vunpack.c.l.b16 %v326
      %v798 = vunpack.c.h.b16 %v326
      %v799 = vunpack.c.l.b16 %v327
      %v800 = vunpack.c.h.b16 %v327
      %v801 = vunpack.c.l.b16 %v328
      %v802 = vunpack.c.h.b16 %v328
      %v803 = vunpack.c.l.b16 %v329
      %v804 = vunpack.c.h.b16 %v329
      %v805 = vunpack.c.l.b16 %v330
      %v806 = vunpack.c.h.b16 %v330
      %v807 = vunpack.c.l.b16 %v331
      %v808 = vunpack.c.h.b16 %v331
      %v809 = vunpack.c.l.b16 %v332
      %v810 = vunpack.c.h.b16 %v332
      %v811 = vunpack.c.l.b16 %v333
      %v812 = vunpack.c.h.b16 %v333
      %v813 = vunpack.c.l.b16 %v334
      %v814 = vunpack.c.h.b16 %v334
      %v815 = vunpack.c.l.b16 %v335
      %v816 = vunpack.c.h.b16 %v335
      %v817 = vunpack.c.l.b16 %v336
      %v818 = vunpack.c.h.b16 %v336
      %v819 = vunpack.c.l.b16 %v337
      %v820 = vunpack.c.h.b16 %v337
      %v821 = vunpack.c.l.b16 %v338
      %v822 = vunpack.c.h.b16 %v338
      %v823 = vunpack.c.l.b16 %v339
      %v824 = vunpack.c.h.b16 %v339
      %v825 = vunpack.c.l.b16 %v340
      %v826 = vunpack.c.h.b16 %v340
      %v827 = vunpack.c.l.b16 %v341
      %v828 = vunpack.c.h.b16 %v341
      %v829 = vunpack.c.l.b16 %v342
      %v830 = vunpack.c.h.b16 %v342
      %v831 = vunpack.c.l.b16 %v343
      %v832 = vunpack.c.h.b16 %v343
      %v833 = vunpack.c.l.b16 %v344
      %v834 = vunpack.c.h.b16 %v344
      %v835 = vunpack.c.l.b16 %v345
      %v836 = vunpack.c.h.b16 %v345
      %v837 = vunpack.c.l.b16 %v346
      %v838 = vunpack.c.h.b16 %v346
      %v839 = vunpack.c.l.b16 %v347
      %v840 = vunpack.c.h.b16 %v347
      %v841 = vunpack.c.l.b16 %v348
      %v842 = vunpack.c.h.b16 %v348
      %v843 = vunpack.c.l.b16 %v349
      %v844 = vunpack.c.h.b16 %v349
      %v845 = vunpack.c.l.b16 %v350
      %v846 = vunpack.c.h.b16 %v350
      %v847 = vunpack.c.l.b16 %v351
      %v848 = vunpack.c.h.b16 %v351
      %v849 = vunpack.c.l.b16 %v352
      %v850 = vunpack.c.h.b16 %v352
      %v851 = vunpack.c.l.b16 %v353
      %v852 = vunpack.c.h.b16 %v353
      %v853 = vunpack.c.l.b16 %v354
      %v854 = vunpack.c.h.b16 %v354
      %v855 = vunpack.c.l.b16 %v355
      %v856 = vunpack.c.h.b16 %v355
      %v857 = vunpack.c.l.b16 %v356
      %v858 = vunpack.c.h.b16 %v356
      %v859 = vunpack.c.l.b16 %v357
      %v860 = vunpack.c.h.b16 %v357
      %v861 = vunpack.c.l.b16 %v358
      %v862 = vunpack.c.h.b16 %v358
      %v863 = vunpack.c.l.b16 %v359
      %v864 = vunpack.c.h.b16 %v359
      %v865 = vunpack.c.l.b16 %v360
      %v866 = vunpack.c.h.b16 %v360
      %v867 = vunpack.c.l.b16 %v361
      %v868 = vunpack.c.h.b16 %v361
      %v869 = vunpack.c.l.b16 %v362
      %v870 = vunpack.c.h.b16 %v362
      %v871 = vunpack.c.l.b16 %v363
      %v872 = vunpack.c.h.b16 %v363
      %v873 = vunpack.c.l.b16 %v364
      %v874 = vunpack.c.h.b16 %v364
      %v875 = vunpack.c.l.b16 %v365
      %v876 = vunpack.c.h.b16 %v365
      %v877 = vunpack.c.l.b16 %v366
      %v878 = vunpack.c.h.b16 %v366
      %v879 = vunpack.c.l.b16 %v367
      %v880 = vunpack.c.h.b16 %v367
      %v881 = vunpack.c.l.b16 %v368
      %v882 = vunpack.c.h.b16 %v368
      %v883 = vunpack.c.l.b16 %v369
      %v884 = vunpack.c.h.b16 %v369
      %v885 = vunpack.c.l.b16 %v370
      %v886 = vunpack.c.h.b16 %v370
      %v887 = vunpack.c.l.b16 %v371
      %v888 = vunpack.c.h.b16 %v371
      %v889 = vunpack.c.l.b16 %v372
      %v890 = vunpack.c.h.b16 %v372
      %v891 = vunpack.c.l.b16 %v373
      %v892 = vunpack.c.h.b16 %v373
      %v893 = vunpack.c.l.b16 %v374
      %v894 = vunpack.c.h.b16 %v374
      %v895 = vunpack.c.l.b16 %v375
      %v896 = vunpack.c.h.b16 %v375
      %v897 = vunpack.c.l.b16 %v376
      %v898 = vunpack.c.h.b16 %v376
      %v899 = vunpack.c.l.b16 %v377
      %v900 = vunpack.c.h.b16 %v377
      %v901 = vunpack.c.l.b16 %v378
      %v902 = vunpack.c.h.b16 %v378
      %v903 = vunpack.c.l.b16 %v379
      %v904 = vunpack.c.h.b16 %v379
      %v905 = vpack.c.b16 %v589, %v585
      %v906 = vpack.c.b16 %v590, %v586
      %v907 = vpack.c.b16 %v591, %v587
      %v908 = vpack.c.b16 %v592, %v588
      %v909 = vpack.c.b16 %v597, %v593
      %v910 = vpack.c.b16 %v598, %v594
      %v911 = vpack.c.b16 %v599, %v595
      %v912 = vpack.c.b16 %v600, %v596
      %v913 = vpack.c.b16 %v605, %v601
      %v914 = vpack.c.b16 %v606, %v602
      %v915 = vpack.c.b16 %v607, %v603
      %v916 = vpack.c.b16 %v608, %v604
      %v917 = vpack.c.b16 %v613, %v609
      %v918 = vpack.c.b16 %v614, %v610
      %v919 = vpack.c.b16 %v615, %v611
      %v920 = vpack.c.b16 %v616, %v612
      %v921 = vpack.c.b16 %v621, %v617
      %v922 = vpack.c.b16 %v622, %v618
      %v923 = vpack.c.b16 %v623, %v619
      %v924 = vpack.c.b16 %v624, %v620
      %v925 = vpack.c.b16 %v629, %v625
      %v926 = vpack.c.b16 %v630, %v626
      %v927 = vpack.c.b16 %v631, %v627
      %v928 = vpack.c.b16 %v632, %v628
      %v929 = vpack.c.b16 %v637, %v633
      %v930 = vpack.c.b16 %v638, %v634
      %v931 = vpack.c.b16 %v639, %v635
      %v932 = vpack.c.b16 %v640, %v636
      %v933 = vpack.c.b16 %v645, %v641
      %v934 = vpack.c.b16 %v646, %v642
      %v935 = vpack.c.b16 %v647, %v643
      %v936 = vpack.c.b16 %v648, %v644
      %v937 = vpack.c.b16 %v653, %v649
      %v938 = vpack.c.b16 %v654, %v650
      %v939 = vpack.c.b16 %v655, %v651
      %v940 = vpack.c.b16 %v656, %v652
      %v941 = vpack.c.b16 %v661, %v657
      %v942 = vpack.c.b16 %v662, %v658
      %v943 = vpack.c.b16 %v663, %v659
      %v944 = vpack.c.b16 %v664, %v660
      %v945 = vpack.c.b16 %v669, %v665
      %v946 = vpack.c.b16 %v670, %v666
      %v947 = vpack.c.b16 %v671, %v667
      %v948 = vpack.c.b16 %v672, %v668
      %v949 = vpack.c.b16 %v677, %v673
      %v950 = vpack.c.b16 %v678, %v674
      %v951 = vpack.c.b16 %v679, %v675
      %v952 = vpack.c.b16 %v680, %v676
      %v953 = vpack.c.b16 %v685, %v681
      %v954 = vpack.c.b16 %v686, %v682
      %v955 = vpack.c.b16 %v687, %v683
      %v956 = vpack.c.b16 %v688, %v684
      %v957 = vpack.c.b16 %v693, %v689
      %v958 = vpack.c.b16 %v694, %v690
      %v959 = vpack.c.b16 %v695, %v691
      %v960 = vpack.c.b16 %v696, %v692
      %v961 = vpack.c.b16 %v701, %v697
      %v962 = vpack.c.b16 %v702, %v698
      %v963 = vpack.c.b16 %v703, %v699
      %v964 = vpack.c.b16 %v704, %v700
      %v965 = vpack.c.b16 %v709, %v705
      %v966 = vpack.c.b16 %v710, %v706
      %v967 = vpack.c.b16 %v711, %v707
      %v968 = vpack.c.b16 %v712, %v708
      %v969 = vpack.c.b16 %v717, %v713
      %v970 = vpack.c.b16 %v718, %v714
      %v971 = vpack.c.b16 %v719, %v715
      %v972 = vpack.c.b16 %v720, %v716
      %v973 = vpack.c.b16 %v725, %v721
      %v974 = vpack.c.b16 %v726, %v722
      %v975 = vpack.c.b16 %v727, %v723
      %v976 = vpack.c.b16 %v728, %v724
      %v977 = vpack.c.b16 %v733, %v729
      %v978 = vpack.c.b16 %v734, %v730
      %v979 = vpack.c.b16 %v735, %v731
      %v980 = vpack.c.b16 %v736, %v732
      %v981 = vpack.c.b16 %v741, %v737
      %v982 = vpack.c.b16 %v742, %v738
      %v983 = vpack.c.b16 %v743, %v739
      %v984 = vpack.c.b16 %v744, %v740
      %v985 = vpack.c.b16 %v749, %v745
      %v986 = vpack.c.b16 %v750, %v746
      %v987 = vpack.c.b16 %v751, %v747
      %v988 = vpack.c.b16 %v752, %v748
      %v989 = vpack.c.b16 %v757, %v753
      %v990 = vpack.c.b16 %v758, %v754
      %v991 = vpack.c.b16 %v759, %v755
      %v992 = vpack.c.b16 %v760, %v756
      %v993 = vpack.c.b16 %v765, %v761
      %v994 = vpack.c.b16 %v766, %v762
      %v995 = vpack.c.b16 %v767, %v763
      %v996 = vpack.c.b16 %v768, %v764
      %v997 = vpack.c.b16 %v773, %v769
      %v998 = vpack.c.b16 %v774, %v770
      %v999 = vpack.c.b16 %v775, %v771
      %v1000 = vpack.c.b16 %v776, %v772
      %v1001 = vpack.c.b16 %v781, %v777
      %v1002 = vpack.c.b16 %v782, %v778
      %v1003 = vpack.c.b16 %v783, %v779
      %v1004 = vpack.c.b16 %v784, %v780
      %v1005 = vpack.c.b16 %v789, %v785
      %v1006 = vpack.c.b16 %v790, %v786
      %v1007 = vpack.c.b16 %v791, %v787
      %v1008 = vpack.c.b16 %v792, %v788
      %v1009 = vpack.c.b16 %v797, %v793
      %v1010 = vpack.c.b16 %v798, %v794
      %v1011 = vpack.c.b16 %v799, %v795
      %v1012 = vpack.c.b16 %v800, %v796
      %v1013 = vpack.c.b16 %v805, %v801
      %v1014 = vpack.c.b16 %v806, %v802
      %v1015 = vpack.c.b16 %v807, %v803
      %v1016 = vpack.c.b16 %v808, %v804
      %v1017 = vpack.c.b16 %v813, %v809
      %v1018 = vpack.c.b16 %v814, %v810
      %v1019 = vpack.c.b16 %v815, %v811
      %v1020 = vpack.c.b16 %v816, %v812
      %v1021 = vpack.c.b16 %v821, %v817
      %v1022 = vpack.c.b16 %v822, %v818
      %v1023 = vpack.c.b16 %v823, %v819
      %v1024 = vpack.c.b16 %v824, %v820
      %v1025 = vpack.c.b16 %v829, %v825
      %v1026 = vpack.c.b16 %v830, %v826
      %v1027 = vpack.c.b16 %v831, %v827
      %v1028 = vpack.c.b16 %v832, %v828
      %v1029 = vpack.c.b16 %v837, %v833
      %v1030 = vpack.c.b16 %v838, %v834
      %v1031 = vpack.c.b16 %v839, %v835
      %v1032 = vpack.c.b16 %v840, %v836
      %v1033 = vpack.c.b16 %v845, %v841
      %v1034 = vpack.c.b16 %v846, %v842
      %v1035 = vpack.c.b16 %v847, %v843
      %v1036 = vpack.c.b16 %v848, %v844
      %v1037 = vpack.c.b16 %v853, %v849
      %v1038 = vpack.c.b16 %v854, %v850
      %v1039 = vpack.c.b16 %v855, %v851
      %v1040 = vpack.c.b16 %v856, %v852
      %v1041 = vpack.c.b16 %v861, %v857
      %v1042 = vpack.c.b16 %v862, %v858
      %v1043 = vpack.c.b16 %v863, %v859
      %v1044 = vpack.c.b16 %v864, %v860
      %v1045 = vpack.c.b16 %v869, %v865
      %v1046 = vpack.c.b16 %v870, %v866
      %v1047 = vpack.c.b16 %v871, %v867
      %v1048 = vpack.c.b16 %v872, %v868
      %v1049 = vpack.c.b16 %v877, %v873
      %v1050 = vpack.c.b16 %v878, %v874
      %v1051 = vpack.c.b16 %v879, %v875
      %v1052 = vpack.c.b16 %v880, %v876
      %v1053 = vpack.c.b16 %v885, %v881
      %v1054 = vpack.c.b16 %v886, %v882
      %v1055 = vpack.c.b16 %v887, %v883
      %v1056 = vpack.c.b16 %v888, %v884
      %v1057 = vpack.c.b16 %v893, %v889
      %v1058 = vpack.c.b16 %v894, %v890
      %v1059 = vpack.c.b16 %v895, %v891
      %v1060 = vpack.c.b16 %v896, %v892
      %v1061 = vpack.c.b16 %v901, %v897
      %v1062 = vpack.c.b16 %v902, %v898
      %v1063 = vpack.c.b16 %v903, %v899
      %v1064 = vpack.c.b16 %v904, %v900
      %1225 = vmatprep.subr.bf16.mxu0 %v934
      %1226 = vmatpush1.bf16.msra.mxu0 %v933
      %1227 = vmatprep.subr.bf16.mxu0 %v930
      %1228 = vmatpush1.bf16.msra.mxu0 %v929
      %1229 = vmatprep.subr.bf16.mxu0 %v926
      %1230 = vmatpush1.bf16.msra.mxu0 %v925
      %1231 = vmatprep.subr.bf16.mxu0 %v922
      %1232 = vmatpush1.bf16.msra.mxu0 %v921
      %1233 = vmatprep.subr.bf16.mxu0 %v918
      %1234 = vmatpush1.bf16.msra.mxu0 %v917
      %1235 = vmatprep.subr.bf16.mxu0 %v914
      %1236 = vmatpush1.bf16.msra.mxu0 %v913
      %1237 = vmatprep.subr.bf16.mxu0 %v910
      %1238 = vmatpush1.bf16.msra.mxu0 %v909
      %1239 = vmatprep.subr.bf16.mxu0 %v906
      %1240 = vmatpush1.bf16.msra.mxu0 %v905
      %1241 = vmatprep.subr.bf16.mxu0 %v966
      %1242 = vmatpush2.bf16.msra.mxu0 %v965
      %1243 = vmatprep.subr.bf16.mxu0 %v962
      %1244 = vmatpush2.bf16.msra.mxu0 %v961
      %1245 = vmatprep.subr.bf16.mxu0 %v958
      %1246 = vmatpush2.bf16.msra.mxu0 %v957
      %1247 = vmatprep.subr.bf16.mxu0 %v954
      %1248 = vmatpush2.bf16.msra.mxu0 %v953
      %1249 = vmatprep.subr.bf16.mxu0 %v950
      %1250 = vmatpush2.bf16.msra.mxu0 %v949
      %1251 = vmatprep.subr.bf16.mxu0 %v946
      %1252 = vmatpush2.bf16.msra.mxu0 %v945
      %1253 = vmatprep.subr.bf16.mxu0 %v942
      %1254 = vmatpush2.bf16.msra.mxu0 %v941
      %1255 = vmatprep.subr.bf16.mxu0 %v938
      %1256 = vmatpush2.bf16.msra.mxu0 %v937
      %1257 = vmatprep.mubr.bf16.mxu0 %v417
      %1258 = vmatmul.mubr.bf16.gmra.mxu0 %v403
      %v1259 = vpop.f32.mrf.mxu0
      %v1260 = vadd.f32 0.0, %v1259
      %v1261 = vpop.f32.mrf.mxu0
      %v1262 = vadd.f32 0.0, %v1261
      %v1263 = vpop.f32.mrf.mxu0
      %v1264 = vpop.f32.mrf.mxu0
      %1265 = vdwg.mxu0
      %1266 = vmatprep.subr.bf16.mxu0 %v998
      %1267 = vmatpush1.bf16.msra.mxu0 %v997
      %1268 = vmatprep.subr.bf16.mxu0 %v994
      %1269 = vmatpush1.bf16.msra.mxu0 %v993
      %1270 = vmatprep.subr.bf16.mxu0 %v990
      %1271 = vmatpush1.bf16.msra.mxu0 %v989
      %1272 = vmatprep.subr.bf16.mxu0 %v986
      %1273 = vmatpush1.bf16.msra.mxu0 %v985
      %1274 = vmatprep.subr.bf16.mxu0 %v982
      %1275 = vmatpush1.bf16.msra.mxu0 %v981
      %1276 = vmatprep.subr.bf16.mxu0 %v978
      %1277 = vmatpush1.bf16.msra.mxu0 %v977
      %1278 = vmatprep.subr.bf16.mxu0 %v974
      %1279 = vmatpush1.bf16.msra.mxu0 %v973
      %1280 = vmatprep.subr.bf16.mxu0 %v970
      %1281 = vmatpush1.bf16.msra.mxu0 %v969
      %1282 = vmatprep.subr.bf16.mxu0 %v1030
      %1283 = vmatpush2.bf16.msra.mxu0 %v1029
      %1284 = vmatprep.subr.bf16.mxu0 %v1026
      %1285 = vmatpush2.bf16.msra.mxu0 %v1025
      %1286 = vmatprep.subr.bf16.mxu0 %v1022
      %1287 = vmatpush2.bf16.msra.mxu0 %v1021
      %1288 = vmatprep.subr.bf16.mxu0 %v1018
      %1289 = vmatpush2.bf16.msra.mxu0 %v1017
      %1290 = vmatprep.subr.bf16.mxu0 %v1014
      %1291 = vmatpush2.bf16.msra.mxu0 %v1013
      %1292 = vmatprep.subr.bf16.mxu0 %v1010
      %1293 = vmatpush2.bf16.msra.mxu0 %v1009
      %1294 = vmatprep.subr.bf16.mxu0 %v1006
      %1295 = vmatpush2.bf16.msra.mxu0 %v1005
      %1296 = vmatprep.subr.bf16.mxu0 %v1002
      %1297 = vmatpush2.bf16.msra.mxu0 %v1001
      %1298 = vmatprep.mubr.bf16.mxu0 %v419
      %1299 = vmatmul.mubr.bf16.gmra.mxu0 %v418
      %v1300 = vpop.f32.mrf.mxu0
      %v1301 = vadd.f32 %v1260, %v1300
      %v1302 = vpop.f32.mrf.mxu0
      %v1303 = vadd.f32 %v1262, %v1302
      %v1304 = vpop.f32.mrf.mxu0
      %v1305 = vpop.f32.mrf.mxu0
      %1306 = vdwg.mxu0
      %1307 = vmatprep.subr.bf16.mxu0 %v1062
      %1308 = vmatpush1.bf16.msra.mxu0 %v1061
      %1309 = vmatprep.subr.bf16.mxu0 %v1058
      %1310 = vmatpush1.bf16.msra.mxu0 %v1057
      %1311 = vmatprep.subr.bf16.mxu0 %v1054
      %1312 = vmatpush1.bf16.msra.mxu0 %v1053
      %1313 = vmatprep.subr.bf16.mxu0 %v1050
      %1314 = vmatpush1.bf16.msra.mxu0 %v1049
      %1315 = vmatprep.subr.bf16.mxu0 %v1046
      %1316 = vmatpush1.bf16.msra.mxu0 %v1045
      %1317 = vmatprep.subr.bf16.mxu0 %v1042
      %1318 = vmatpush1.bf16.msra.mxu0 %v1041
      %1319 = vmatprep.subr.bf16.mxu0 %v1038
      %1320 = vmatpush1.bf16.msra.mxu0 %v1037
      %1321 = vmatprep.subr.bf16.mxu0 %v1034
      %1322 = vmatpush1.bf16.msra.mxu0 %v1033
      %1323 = vmatprep.subr.bf16.mxu0 0
      %1324 = vmatpush2.bf16.msra.mxu0 0
      %1325 = vmatprep.subr.bf16.mxu0 0
      %1326 = vmatpush2.bf16.msra.mxu0 0
      %1327 = vmatprep.subr.bf16.mxu0 0
      %1328 = vmatpush2.bf16.msra.mxu0 0
      %1329 = vmatprep.subr.bf16.mxu0 0
      %1330 = vmatpush2.bf16.msra.mxu0 0
      %1331 = vmatprep.subr.bf16.mxu0 0
      %1332 = vmatpush2.bf16.msra.mxu0 0
      %1333 = vmatprep.subr.bf16.mxu0 0
      %1334 = vmatpush2.bf16.msra.mxu0 0
      %1335 = vmatprep.subr.bf16.mxu0 0
      %1336 = vmatpush2.bf16.msra.mxu0 0
      %1337 = vmatprep.subr.bf16.mxu0 0
      %1338 = vmatpush2.bf16.msra.mxu0 0
      %1339 = vmatprep.mubr.bf16.mxu0 0
      %1340 = vmatmul.mubr.bf16.gmra.mxu0 %v410
      %v1341 = vpop.f32.mrf.mxu0
      %v1342 = vadd.f32 %v1301, %v1341
      %v1343 = vpop.f32.mrf.mxu0
      %v1344 = vadd.f32 %v1303, %v1343
      %v1345 = vpop.f32.mrf.mxu0
      %v1346 = vpop.f32.mrf.mxu0
      %1347 = vdwg.mxu0
      %1348 = vmatprep.subr.bf16.mxu0 %v936
      %1349 = vmatpush1.bf16.msra.mxu0 %v935
      %1350 = vmatprep.subr.bf16.mxu0 %v932
      %1351 = vmatpush1.bf16.msra.mxu0 %v931
      %1352 = vmatprep.subr.bf16.mxu0 %v928
      %1353 = vmatpush1.bf16.msra.mxu0 %v927
      %1354 = vmatprep.subr.bf16.mxu0 %v924
      %1355 = vmatpush1.bf16.msra.mxu0 %v923
      %1356 = vmatprep.subr.bf16.mxu0 %v920
      %1357 = vmatpush1.bf16.msra.mxu0 %v919
      %1358 = vmatprep.subr.bf16.mxu0 %v916
      %1359 = vmatpush1.bf16.msra.mxu0 %v915
      %1360 = vmatprep.subr.bf16.mxu0 %v912
      %1361 = vmatpush1.bf16.msra.mxu0 %v911
      %1362 = vmatprep.subr.bf16.mxu0 %v908
      %1363 = vmatpush1.bf16.msra.mxu0 %v907
      %1364 = vmatprep.subr.bf16.mxu0 %v968
      %1365 = vmatpush2.bf16.msra.mxu0 %v967
      %1366 = vmatprep.subr.bf16.mxu0 %v964
      %1367 = vmatpush2.bf16.msra.mxu0 %v963
      %1368 = vmatprep.subr.bf16.mxu0 %v960
      %1369 = vmatpush2.bf16.msra.mxu0 %v959
      %1370 = vmatprep.subr.bf16.mxu0 %v956
      %1371 = vmatpush2.bf16.msra.mxu0 %v955
      %1372 = vmatprep.subr.bf16.mxu0 %v952
      %1373 = vmatpush2.bf16.msra.mxu0 %v951
      %1374 = vmatprep.subr.bf16.mxu0 %v948
      %1375 = vmatpush2.bf16.msra.mxu0 %v947
      %1376 = vmatprep.subr.bf16.mxu0 %v944
      %1377 = vmatpush2.bf16.msra.mxu0 %v943
      %1378 = vmatprep.subr.bf16.mxu0 %v940
      %1379 = vmatpush2.bf16.msra.mxu0 %v939
      %1380 = vmatprep.mubr.bf16.mxu0 %v417
      %1381 = vmatmul.mubr.bf16.gmra.mxu0 %v403
      %v1382 = vpop.f32.mrf.mxu0
      %v1383 = vadd.f32 0.0, %v1382
      %v1384 = vpop.f32.mrf.mxu0
      %v1385 = vadd.f32 0.0, %v1384
      %v1386 = vpop.f32.mrf.mxu0
      %v1387 = vpop.f32.mrf.mxu0
      %1388 = vdwg.mxu0
      %1389 = vmatprep.subr.bf16.mxu0 %v1000
      %1390 = vmatpush1.bf16.msra.mxu0 %v999
      %1391 = vmatprep.subr.bf16.mxu0 %v996
      %1392 = vmatpush1.bf16.msra.mxu0 %v995
      %1393 = vmatprep.subr.bf16.mxu0 %v992
      %1394 = vmatpush1.bf16.msra.mxu0 %v991
      %1395 = vmatprep.subr.bf16.mxu0 %v988
      %1396 = vmatpush1.bf16.msra.mxu0 %v987
      %1397 = vmatprep.subr.bf16.mxu0 %v984
      %1398 = vmatpush1.bf16.msra.mxu0 %v983
      %1399 = vmatprep.subr.bf16.mxu0 %v980
      %1400 = vmatpush1.bf16.msra.mxu0 %v979
      %1401 = vmatprep.subr.bf16.mxu0 %v976
      %1402 = vmatpush1.bf16.msra.mxu0 %v975
      %1403 = vmatprep.subr.bf16.mxu0 %v972
      %1404 = vmatpush1.bf16.msra.mxu0 %v971
      %1405 = vmatprep.subr.bf16.mxu0 %v1032
      %1406 = vmatpush2.bf16.msra.mxu0 %v1031
      %1407 = vmatprep.subr.bf16.mxu0 %v1028
      %1408 = vmatpush2.bf16.msra.mxu0 %v1027
      %1409 = vmatprep.subr.bf16.mxu0 %v1024
      %1410 = vmatpush2.bf16.msra.mxu0 %v1023
      %1411 = vmatprep.subr.bf16.mxu0 %v1020
      %1412 = vmatpush2.bf16.msra.mxu0 %v1019
      %1413 = vmatprep.subr.bf16.mxu0 %v1016
      %1414 = vmatpush2.bf16.msra.mxu0 %v1015
      %1415 = vmatprep.subr.bf16.mxu0 %v1012
      %1416 = vmatpush2.bf16.msra.mxu0 %v1011
      %1417 = vmatprep.subr.bf16.mxu0 %v1008
      %1418 = vmatpush2.bf16.msra.mxu0 %v1007
      %1419 = vmatprep.subr.bf16.mxu0 %v1004
      %1420 = vmatpush2.bf16.msra.mxu0 %v1003
      %1421 = vmatprep.mubr.bf16.mxu0 %v419
      %1422 = vmatmul.mubr.bf16.gmra.mxu0 %v418
      %v1423 = vpop.f32.mrf.mxu0
      %v1424 = vadd.f32 %v1383, %v1423
      %v1425 = vpop.f32.mrf.mxu0
      %v1426 = vadd.f32 %v1385, %v1425
      %v1427 = vpop.f32.mrf.mxu0
      %v1428 = vpop.f32.mrf.mxu0
      %1429 = vdwg.mxu0
      %1430 = vmatprep.subr.bf16.mxu0 %v1064
      %1431 = vmatpush1.bf16.msra.mxu0 %v1063
      %1432 = vmatprep.subr.bf16.mxu0 %v1060
      %1433 = vmatpush1.bf16.msra.mxu0 %v1059
      %1434 = vmatprep.subr.bf16.mxu0 %v1056
      %1435 = vmatpush1.bf16.msra.mxu0 %v1055
      %1436 = vmatprep.subr.bf16.mxu0 %v1052
      %1437 = vmatpush1.bf16.msra.mxu0 %v1051
      %1438 = vmatprep.subr.bf16.mxu0 %v1048
      %1439 = vmatpush1.bf16.msra.mxu0 %v1047
      %1440 = vmatprep.subr.bf16.mxu0 %v1044
      %1441 = vmatpush1.bf16.msra.mxu0 %v1043
      %1442 = vmatprep.subr.bf16.mxu0 %v1040
      %1443 = vmatpush1.bf16.msra.mxu0 %v1039
      %1444 = vmatprep.subr.bf16.mxu0 %v1036
      %1445 = vmatpush1.bf16.msra.mxu0 %v1035
      %1446 = vmatprep.subr.bf16.mxu0 0
      %1447 = vmatpush2.bf16.msra.mxu0 0
      %1448 = vmatprep.subr.bf16.mxu0 0
      %1449 = vmatpush2.bf16.msra.mxu0 0
      %1450 = vmatprep.subr.bf16.mxu0 0
      %1451 = vmatpush2.bf16.msra.mxu0 0
      %1452 = vmatprep.subr.bf16.mxu0 0
      %1453 = vmatpush2.bf16.msra.mxu0 0
      %1454 = vmatprep.subr.bf16.mxu0 0
      %1455 = vmatpush2.bf16.msra.mxu0 0
      %1456 = vmatprep.subr.bf16.mxu0 0
      %1457 = vmatpush2.bf16.msra.mxu0 0
      %1458 = vmatprep.subr.bf16.mxu0 0
      %1459 = vmatpush2.bf16.msra.mxu0 0
      %1460 = vmatprep.subr.bf16.mxu0 0
      %1461 = vmatpush2.bf16.msra.mxu0 0
      %1462 = vmatprep.mubr.bf16.mxu0 0
      %1463 = vmatmul.mubr.bf16.gmra.mxu0 %v410
      %v1464 = vpop.f32.mrf.mxu0
      %v1465 = vadd.f32 %v1424, %v1464
      %v1466 = vpop.f32.mrf.mxu0
      %v1467 = vadd.f32 %v1426, %v1466
      %v1468 = vpop.f32.mrf.mxu0
      %v1469 = vpop.f32.mrf.mxu0
      %1470 = vdwg.mxu0
      %v1475 = vcombine.low %v1342, %v1344
      %v1476 = vcombine.low %v1465, %v1467
      %v1478 = vunpack.c.l.s4 1983009808
      %v1479 = vunpack.c.0.s8 %v1478
      %v1480 = vlaneseq
      %v1481 = vshrl.u32 %v1480, 7
      %v1482 = vsub.s32 %v1479, %v1481
      %v1483 = vrot.slane %v1475, %v1482
      %v1485 = vunpack.c.l.s4 1983009808
      %v1486 = vunpack.c.0.s8 %v1485
      %v1487 = vlaneseq
      %v1488 = vshrl.u32 %v1487, 7
      %v1489 = vsub.s32 %v1486, %v1488
      %v1490 = vrot.slane %v1476, %v1489
      %v1491 = vcombine.low %v1483, %v1490
      %v1493 = vadd.f32 %v218, %v1491
      %1494 = vst [vmem:[#allocation2] sm:$0xff] %v1493
      %p1495 = scmp.eq.s32.totalorder %s19, 1
      // Predicated region
      $region37: #{encoder_decoder2_forward.9} parent=31 // pred_check
        %p1496 = pneg %p1495
      $region38: #{encoder_decoder2_forward.9} parent=31 // pred_check_branch
        %1498 = sbr.rel (%p1496) target = $region40
      $region39: #{encoder_decoder2_forward.9} parent=31 // pred_region
        %v1499 = vld [vmem:[#allocation2] sm:$0xff]
        %v1500 = vld [vmem:[%s2] sm:$0xf]
        %v1502 = vlaneseq
        %v1503 = vshrl.u32 %v1502, 7
        %v1504 = vsub.s32 0, %v1503
        %v1505 = vrot.slane %v1500, %v1504
        %v1506 = vlaneseq
        %v1507 = vshrl.u32 %v1506, 7
        %v1508 = vsub.s32 1, %v1507
        %v1509 = vrot.slane %v1500, %v1508
        %v1510 = vlaneseq
        %v1511 = vshrl.u32 %v1510, 7
        %v1512 = vsub.s32 2, %v1511
        %v1513 = vrot.slane %v1500, %v1512
        %v1514 = vlaneseq
        %v1515 = vshrl.u32 %v1514, 7
        %v1516 = vsub.s32 3, %v1515
        %v1517 = vrot.slane %v1500, %v1516
        %v1518 = vcombine.low %v1505, %v1509
        %v1519 = vcombine.low %v1513, %v1517
        %v1521 = vunpack.c.l.s4 1983009808
        %v1522 = vunpack.c.0.s8 %v1521
        %v1523 = vlaneseq
        %v1524 = vshrl.u32 %v1523, 7
        %v1525 = vsub.s32 %v1522, %v1524
        %v1526 = vrot.slane %v1518, %v1525
        %v1528 = vunpack.c.l.s4 1983009808
        %v1529 = vunpack.c.0.s8 %v1528
        %v1530 = vlaneseq
        %v1531 = vshrl.u32 %v1530, 7
        %v1532 = vsub.s32 %v1529, %v1531
        %v1533 = vrot.slane %v1519, %v1532
        %v1534 = vcombine.low %v1526, %v1533
        %v1536 = vadd.f32 %v1499, %v1534
        %v1537 = vmax.f32 %v1536, 0.0
        %v1539 = vcombine.high %v1537, %v1537
        %v1541 = vunpack.c.l.s4 1983009808
        %v1542 = vunpack.c.0.s8 %v1541
        %v1543 = vlaneseq
        %v1544 = vshrl.u32 %v1543, 7
        %v1545 = vsub.s32 %v1542, %v1544
        %v1546 = vrot.slane %v1537, %v1545
        %v1548 = vunpack.c.l.s4 1983009808
        %v1549 = vunpack.c.0.s8 %v1548
        %v1550 = vlaneseq
        %v1551 = vshrl.u32 %v1550, 7
        %v1552 = vsub.s32 %v1549, %v1551
        %v1553 = vrot.slane %v1539, %v1552
        %v1554 = vcombine.high %v1546, %v1546
        %v1555 = vcombine.high %v1553, %v1553
        %v1560 = vpack.c.bf16 %v1546, %v1546
        %v1561 = vpack.c.bf16 %v1554, %v1554
        %v1562 = vpack.c.bf16 %v1553, %v1553
        %v1563 = vpack.c.bf16 %v1555, %v1555
        %v1568 = vcombine.low %v1560, %v1561
        %v1569 = vcombine.low %v1562, %v1563
        %v1571 = vunpack.c.l.s4 1966171168
        %v1572 = vunpack.c.0.s8 %v1571
        %v1573 = vlaneseq
        %v1574 = vshrl.u32 %v1573, 7
        %v1575 = vsub.s32 %v1572, %v1574
        %v1576 = vrot.slane %v1568, %v1575
        %v1578 = vunpack.c.l.s4 1966171168
        %v1579 = vunpack.c.0.s8 %v1578
        %v1580 = vlaneseq
        %v1581 = vshrl.u32 %v1580, 7
        %v1582 = vsub.s32 %v1579, %v1581
        %v1583 = vrot.slane %v1569, %v1582
        %v1584 = vcombine.low %v1576, %v1583
        %v1586 = vunpack.c.l.s4 1966171168
        %v1587 = vunpack.c.0.s8 %v1586
        %v1588 = vlaneseq
        %v1589 = vshrl.u32 %v1588, 7
        %v1590 = vsub.s32 %v1587, %v1589
        %v1591 = vrot.slane %v1584, %v1590
        %1593 = vst [vmem:[%s211] sm:$0xf] %v1591
      $region40: #{encoder_decoder2_forward.9} parent=31 // pred_fallthru
        _
      %p1594 = scmp.lt.s32.totalorder %s18, 3
      %s1595 = scalar_select %p1594, %s18, 3
      %s1596 = smul.addr %s1595, 4
      %s1597 = scalar_lea.vmem %s3, %s1596
      // Predicated region
      $region41: #{encoder_decoder2_forward.9} parent=31 // pred_check
        %p1598 = pneg %p119
      $region42: #{encoder_decoder2_forward.9} parent=31 // pred_check_branch
        %1600 = sbr.rel (%p1598) target = $region44
      $region43: #{encoder_decoder2_forward.9} parent=31 // pred_region
        _
      $region44: #{encoder_decoder2_forward.9} parent=31 // pred_fallthru
        _
    $region32: #{encoder_decoder2_forward.9} parent=5 // pred_fallthru
      _
    %p1601 = scmp.le.s32.totalorder 2, %s9
    // Predicated region
    $region45: #{encoder_decoder2_forward.9} parent=5 // pred_check
      %p1602 = pneg %p1601
    $region46: #{encoder_decoder2_forward.9} parent=5 // pred_check_branch
      %1604 = sbr.rel (%p1602) target = $region48
    $region47: #{encoder_decoder2_forward.9} parent=5 // pred_region
      %s1605 = ssub.s32 %s9, 2
      // Predicated region
      $region49: #{encoder_decoder2_forward.9} parent=47 // pred_check
        %p1606 = pneg %p125
      $region50: #{encoder_decoder2_forward.9} parent=47 // pred_check_branch
        %1608 = sbr.rel (%p1606) target = $region52
      $region51: #{encoder_decoder2_forward.9} parent=47 // pred_region
        %p1609 = scmp.lt.s32.totalorder %s20, 3
        %s1610 = scalar_select %p1609, %s20, 3
        %s1611 = smul.addr %s1610, 4
        %s1612 = scalar_lea.vmem %s3, %s1611
      $region52: #{encoder_decoder2_forward.9} parent=47 // pred_fallthru
        _
    $region48: #{encoder_decoder2_forward.9} parent=5 // pred_fallthru
      _
  $region6: #{encoder_decoder2_forward.9} parent=0 // loop_footer
    %s13 = sadd.s32 1, %s9
  $region7: #{encoder_decoder2_forward.9} parent=0 // loop_footer_branch
    %8 = sbr.rel target = $region3
  $region8: #{encoder_decoder2_forward.9} parent=0 // loop_exit
    _

// kernel: encoder_decoder2_forward.11
$region0: #{encoder_decoder2_forward.11}
  #allocation0 [shape = 'u32[]', space=smem, size = 0x4, offset = 0x4, fixed_abs, tag = 'smem constant byte address 0x4 - core index']
  #allocation1 [shape = 'u32[144,128]{1,0:T(1,128)}', space=vmem, size = 0x12000, scoped, tag = 'internal scratch']
  %s0 = inlined_call_operand.vmem [shape: f32[2,19,8,8], index: 0, kind: input, shape index: {}]
  %s1 = inlined_call_operand.vmem [shape: f32[64,8], index: 1, kind: input, shape index: {}]
  %s2 = inlined_call_operand.vmem [shape: f32[8,64], index: 2, kind: input, shape index: {}]
  %s3 = inlined_call_operand.hbm [shape: f32[2,19,64,64], index: 3, kind: output, shape index: {}]
  %s4 = sld [smem:[#allocation0]]
  $region45: #{encoder_decoder2_forward.11} parent=0
    _
  %s6 = ssub.s32 1, %s4
  %s7 = scalar_select 0, %s6, %s4
  $region1: #{encoder_decoder2_forward.11} parent=0
    #allocation2 [shape = 'u8[65536]{0}', space=vmem, size = 0x10000, scoped, tag = 'output window, operand 0']
    #allocation3 [shape = 's32[2]{0}', space=sflag, size = 0x8, scoped, tag = 'scoped memory for encoder_decoder2_forward.11']
    %8 = vsyncpa [#allocation3], 0
    %s9 = scalar_lea.sflag [#allocation3], 1
    %10 = vsyncpa %s9, 0
    loop: start=0, step=1, limit=40
    $region2: #{encoder_decoder2_forward.11} parent=1 // loop_pre_header
      _
    $region3: #{encoder_decoder2_forward.11} parent=1 // loop_header
      %s12 = sphi 0, %s16
      %p13 = scmp.ge.s32.totalorder %s12, 40
      %s19 = sphi 0, %s31
      %s20 = sphi 0, %s27
      %s21 = sphi 0, %s19
      %s22 = sphi 0, %s20
      %s23 = sphi 0, %s21
      %s24 = sphi 0, %s22
      %s36 = sphi 0, %s38
      %s39 = sphi 0, %s36
      %s40 = sphi 0, %s39
      %s56 = sphi 0, %s40
      %s60 = sphi 0, %s60
      %s62 = sphi 0, %s60
      %s63 = sphi 0, %s62
      %s77 = sphi 0, %s63
      %s81 = sphi 0, %s81
      %s83 = sphi 0, %s81
      %s84 = sphi 0, %s83
      %s98 = sphi 0, %s84
      %s106 = sphi 0, %s108
      %s109 = sphi 0, %s106
      %s110 = sphi 0, %s109
      %s126 = sphi 0, %s110
    $region4: #{encoder_decoder2_forward.11} parent=1 // loop_header_branch
      %15 = sbr.rel (%p13) target = $region8
    $region5: #{encoder_decoder2_forward.11} parent=1 // loop_body
      %s17 = ssub.s32 %s12, 1
      %s18 = ssub.s32 %s12, 2
      %s25 = sadd.s32 1, %s20
      %p26 = scmp.ge.s32.totalorder %s25, 19
      %s27 = scalar_select %p26, 0, %s25
      %s28 = sadd.s32 1, %s19
      %s29 = scalar_select %p26, %s28, %s19
      %p30 = scmp.ge.s32.totalorder %s29, 2
      %s31 = scalar_select %p30, 0, %s29
      %s32 = ssub.s32 %s19, %s31
      %s33 = ssub.s32 %s20, %s27
      %s34 = sor.u32 %s32, %s33
      %p35 = scmp.eq.s32.totalorder %s34, 0
      %s37 = sadd.s32 %s36, 1
      %s38 = scalar_select %p35, %s36, %s37
      %p41 = pneg %p35
      %p42 = scmp.eq.s32.totalorder %s12, 37
      %p43 = por %p41, %p42
      %p44 = scmp.ne.s32.totalorder %s36, %s39
      %p45 = scmp.eq.s32.totalorder %s12, 0
      %p46 = por %p44, %p45
      %p47 = scmp.ne.s32.totalorder %s36, %s39
      %p48 = scmp.eq.s32.totalorder %s17, 37
      %p49 = por %p47, %p48
      %p50 = scmp.ne.s32.totalorder %s39, %s40
      %p51 = scmp.eq.s32.totalorder %s17, 0
      %p52 = por %p50, %p51
      %p53 = scmp.ne.s32.totalorder %s39, %s40
      %p54 = scmp.eq.s32.totalorder %s18, 37
      %p55 = por %p53, %p54
      %p57 = scmp.ne.s32.totalorder %s40, %s56
      %p58 = scmp.eq.s32.totalorder %s18, 0
      %p59 = por %p57, %p58
      %s61 = sadd.s32 %s60, 1
      %p64 = scmp.eq.s32.totalorder %s12, 37
      %p65 = scmp.ne.s32.totalorder %s60, %s62
      %p66 = scmp.eq.s32.totalorder %s12, 0
      %p67 = por %p65, %p66
      %p68 = scmp.ne.s32.totalorder %s60, %s62
      %p69 = scmp.eq.s32.totalorder %s17, 37
      %p70 = por %p68, %p69
      %p71 = scmp.ne.s32.totalorder %s62, %s63
      %p72 = scmp.eq.s32.totalorder %s17, 0
      %p73 = por %p71, %p72
      %p74 = scmp.ne.s32.totalorder %s62, %s63
      %p75 = scmp.eq.s32.totalorder %s18, 37
      %p76 = por %p74, %p75
      %p78 = scmp.ne.s32.totalorder %s63, %s77
      %p79 = scmp.eq.s32.totalorder %s18, 0
      %p80 = por %p78, %p79
      %s82 = sadd.s32 %s81, 1
      %p85 = scmp.eq.s32.totalorder %s12, 37
      %p86 = scmp.ne.s32.totalorder %s81, %s83
      %p87 = scmp.eq.s32.totalorder %s12, 0
      %p88 = por %p86, %p87
      %p89 = scmp.ne.s32.totalorder %s81, %s83
      %p90 = scmp.eq.s32.totalorder %s17, 37
      %p91 = por %p89, %p90
      %p92 = scmp.ne.s32.totalorder %s83, %s84
      %p93 = scmp.eq.s32.totalorder %s17, 0
      %p94 = por %p92, %p93
      %p95 = scmp.ne.s32.totalorder %s83, %s84
      %p96 = scmp.eq.s32.totalorder %s18, 37
      %p97 = por %p95, %p96
      %p99 = scmp.ne.s32.totalorder %s84, %s98
      %p100 = scmp.eq.s32.totalorder %s18, 0
      %p101 = por %p99, %p100
      %s102 = ssub.s32 %s19, %s31
      %s103 = ssub.s32 %s20, %s27
      %s104 = sor.u32 %s102, %s103
      %p105 = scmp.eq.s32.totalorder %s104, 0
      %s107 = sadd.s32 %s106, 1
      %s108 = scalar_select %p105, %s106, %s107
      %p111 = pneg %p105
      %p112 = scmp.eq.s32.totalorder %s12, 37
      %p113 = por %p111, %p112
      %p114 = scmp.ne.s32.totalorder %s106, %s109
      %p115 = scmp.eq.s32.totalorder %s12, 0
      %p116 = por %p114, %p115
      %p117 = scmp.ne.s32.totalorder %s106, %s109
      %p118 = scmp.eq.s32.totalorder %s17, 37
      %p119 = por %p117, %p118
      %p120 = scmp.ne.s32.totalorder %s109, %s110
      %p121 = scmp.eq.s32.totalorder %s17, 0
      %p122 = por %p120, %p121
      %p123 = scmp.ne.s32.totalorder %s109, %s110
      %p124 = scmp.eq.s32.totalorder %s18, 37
      %p125 = por %p123, %p124
      %p127 = scmp.ne.s32.totalorder %s110, %s126
      %p128 = scmp.eq.s32.totalorder %s18, 0
      %p129 = por %p127, %p128
      %p130 = scmp.le.s32.totalorder 1, %s12
      %p131 = scmp.lt.s32.totalorder %s12, 39
      %p132 = pnand %p130, %p131
      %p133 = pneg %p132
      // Predicated region
      $region9: #{encoder_decoder2_forward.11} parent=5 // pred_check
        _
      $region10: #{encoder_decoder2_forward.11} parent=5 // pred_check_branch
        %135 = sbr.rel (%p132) target = $region12
      $region11: #{encoder_decoder2_forward.11} parent=5 // pred_region
        %s136 = ssub.s32 %s12, 1
        // Predicated region
        $region13: #{encoder_decoder2_forward.11} parent=11 // pred_check
          %p137 = pneg %p73
        $region14: #{encoder_decoder2_forward.11} parent=11 // pred_check_branch
          %139 = sbr.rel (%p137) target = $region16
        $region15: #{encoder_decoder2_forward.11} parent=11 // pred_region
          _
        $region16: #{encoder_decoder2_forward.11} parent=11 // pred_fallthru
          _
        // Predicated region
        $region17: #{encoder_decoder2_forward.11} parent=11 // pred_check
          %p140 = pneg %p94
        $region18: #{encoder_decoder2_forward.11} parent=11 // pred_check_branch
          %142 = sbr.rel (%p140) target = $region20
        $region19: #{encoder_decoder2_forward.11} parent=11 // pred_region
          _
        $region20: #{encoder_decoder2_forward.11} parent=11 // pred_fallthru
          _
      $region12: #{encoder_decoder2_forward.11} parent=5 // pred_fallthru
        _
      %p143 = scmp.lt.s32.totalorder %s12, 38
      // Predicated region
      $region21: #{encoder_decoder2_forward.11} parent=5 // pred_check
        %p144 = pneg %p143
      $region22: #{encoder_decoder2_forward.11} parent=5 // pred_check_branch
        %146 = sbr.rel (%p144) target = $region24
      $region23: #{encoder_decoder2_forward.11} parent=5 // pred_region
        // Predicated region
        $region25: #{encoder_decoder2_forward.11} parent=23 // pred_check
          %p147 = pneg %p46
        $region26: #{encoder_decoder2_forward.11} parent=23 // pred_check_branch
          %149 = sbr.rel (%p147) target = $region28
        $region27: #{encoder_decoder2_forward.11} parent=23 // pred_region
          %p150 = scmp.lt.s32.totalorder %s19, 1
          %s151 = scalar_select %p150, %s19, 1
          %p152 = scmp.lt.s32.totalorder %s20, 18
          %s153 = scalar_select %p152, %s20, 18
          %s154 = smul.addr %s151, 19
          %s155 = sadd.s32 %s153, %s154
          %s156 = smul.addr %s155, 8
          %s157 = scalar_lea.vmem %s0, %s156
        $region28: #{encoder_decoder2_forward.11} parent=23 // pred_fallthru
          _
      $region24: #{encoder_decoder2_forward.11} parent=5 // pred_fallthru
        _
      %p158 = scmp.le.s32.totalorder 1, %s12
      %p159 = scmp.lt.s32.totalorder %s12, 39
      %p160 = pnand %p158, %p159
      %p161 = pneg %p160
      // Predicated region
      $region29: #{encoder_decoder2_forward.11} parent=5 // pred_check
        _
      $region30: #{encoder_decoder2_forward.11} parent=5 // pred_check_branch
        %163 = sbr.rel (%p160) target = $region32
      $region31: #{encoder_decoder2_forward.11} parent=5 // pred_region
        %s164 = ssub.s32 %s12, 1
        %p165 = scmp.lt.s32.totalorder %s21, 1
        %s166 = scalar_select %p165, %s21, 1
        %p167 = scmp.lt.s32.totalorder %s22, 18
        %s168 = scalar_select %p167, %s22, 18
        %s169 = smul.addr %s166, 19
        %s170 = sadd.s32 %s168, %s169
        %s171 = smul.addr %s170, 8
        %s172 = scalar_lea.vmem %s0, %s171
        %p173 = pneg %p52
        %p174 = pneg %p49
        %p175 = pneg %p73
        %p176 = pneg %p70
        %p177 = pneg %p94
        %p178 = pneg %p91
        %p179 = pneg %p122
        %p180 = pneg %p119
        %s181 = sand.u32 %s109, 1
        %s182 = scalar_lea.sflag [#allocation3], %s181
        %s183 = sand.u32 %s109, 1
        %s184 = smul.addr %s183, 64
        %s185 = scalar_lea.vmem [#allocation2], %s184
        %p186 = scmp.lt.s32.totalorder %s21, 1
        %s187 = scalar_select %p186, %s21, 1
        %p188 = scmp.lt.s32.totalorder %s22, 18
        %s189 = scalar_select %p188, %s22, 18
        %s190 = smul.addr %s187, 19
        %s191 = sadd.s32 %s189, %s190
        %s192 = smul.addr %s191, 8
        %s193 = scalar_lea.vmem %s0, %s192
        %v194 = vld [vmem:[%s193] sm:$0xff]
        %v195 = vld [vmem:[%s1] sm:$0xff]
        %v196 = vld [vmem:[%s1 + $0x8] sm:$0xff]
        %v197 = vld [vmem:[%s1 + $0x10] sm:$0xff]
        %v198 = vld [vmem:[%s1 + $0x18] sm:$0xff]
        %v199 = vld [vmem:[%s1 + $0x20] sm:$0xff]
        %v200 = vld [vmem:[%s1 + $0x28] sm:$0xff]
        %v201 = vld [vmem:[%s1 + $0x30] sm:$0xff]
        %v202 = vld [vmem:[%s1 + $0x38] sm:$0xff]
        %vm203 = vcmask 64512
        %v205 = vsel %vm203, %v195, 0
        %v208 = vsel %vm203, %v196, 0
        %v211 = vsel %vm203, %v197, 0
        %v214 = vsel %vm203, %v198, 0
        %v217 = vsel %vm203, %v199, 0
        %v220 = vsel %vm203, %v200, 0
        %v223 = vsel %vm203, %v201, 0
        %v226 = vsel %vm203, %v202, 0
        %228 = vmatprep.subr.mxu0 0.0
        %229 = vmatpush1.msra.mxu0 0.0
        %230 = vmatprep.subr.mxu0 0.0
        %231 = vmatpush1.msra.mxu0 0.0
        %232 = vmatprep.subr.mxu0 0.0
        %233 = vmatpush1.msra.mxu0 0.0
        %234 = vmatprep.subr.mxu0 0.0
        %235 = vmatpush1.msra.mxu0 0.0
        %236 = vmatprep.subr.mxu0 0.0
        %237 = vmatpush1.msra.mxu0 0.0
        %238 = vmatprep.subr.mxu0 0.0
        %239 = vmatpush1.msra.mxu0 0.0
        %240 = vmatprep.subr.mxu0 0.0
        %241 = vmatpush1.msra.mxu0 0.0
        %242 = vmatprep.subr.mxu0 0.0
        %243 = vmatpush1.msra.mxu0 0.0
        %244 = vmatprep.subr.mxu0 0.0
        %245 = vmatpush1.msra.mxu0 0.0
        %246 = vmatprep.subr.mxu0 0.0
        %247 = vmatpush1.msra.mxu0 0.0
        %248 = vmatprep.subr.mxu0 0.0
        %249 = vmatpush1.msra.mxu0 0.0
        %250 = vmatprep.subr.mxu0 0.0
        %251 = vmatpush1.msra.mxu0 0.0
        %252 = vmatprep.subr.mxu0 0.0
        %253 = vmatpush1.msra.mxu0 0.0
        %254 = vmatprep.subr.mxu0 0.0
        %255 = vmatpush1.msra.mxu0 0.0
        %256 = vmatprep.subr.mxu0 0.0
        %257 = vmatpush1.msra.mxu0 0.0
        %258 = vmatprep.subr.mxu0 0.0
        %259 = vmatpush1.msra.mxu0 %v194
        %260 = vmatprep.subr.mxu0 0.0
        %261 = vmatpush2.msra.mxu0 0.0
        %262 = vmatprep.subr.mxu0 0.0
        %263 = vmatpush2.msra.mxu0 0.0
        %264 = vmatprep.subr.mxu0 0.0
        %265 = vmatpush2.msra.mxu0 0.0
        %266 = vmatprep.subr.mxu0 0.0
        %267 = vmatpush2.msra.mxu0 0.0
        %268 = vmatprep.subr.mxu0 0.0
        %269 = vmatpush2.msra.mxu0 0.0
        %270 = vmatprep.subr.mxu0 0.0
        %271 = vmatpush2.msra.mxu0 0.0
        %272 = vmatprep.subr.mxu0 0.0
        %273 = vmatpush2.msra.mxu0 0.0
        %274 = vmatprep.subr.mxu0 0.0
        %275 = vmatpush2.msra.mxu0 0.0
        %276 = vmatprep.subr.mxu0 0.0
        %277 = vmatpush2.msra.mxu0 0.0
        %278 = vmatprep.subr.mxu0 0.0
        %279 = vmatpush2.msra.mxu0 0.0
        %280 = vmatprep.subr.mxu0 0.0
        %281 = vmatpush2.msra.mxu0 0.0
        %282 = vmatprep.subr.mxu0 0.0
        %283 = vmatpush2.msra.mxu0 0.0
        %284 = vmatprep.subr.mxu0 0.0
        %285 = vmatpush2.msra.mxu0 0.0
        %286 = vmatprep.subr.mxu0 0.0
        %287 = vmatpush2.msra.mxu0 0.0
        %288 = vmatprep.subr.mxu0 0.0
        %289 = vmatpush2.msra.mxu0 0.0
        %290 = vmatprep.subr.mxu0 0.0
        %291 = vmatpush2.msra.mxu0 0.0
        %292 = vmatprep.mubr.f32.mxu0 0.0
        %293 = vmatmul.mubr.f32.gmra.mxu0 %v205
        %v294 = vpop.f32.mrf.mxu0
        %v295 = vadd.f32 0.0, %v294
        %v296 = vpop.f32.mrf.mxu0
        %297 = vmatprep.mubr.f32.mxu0 0.0
        %298 = vmatmul.mubr.f32.gmra.mxu0 %v208
        %v299 = vpop.f32.mrf.mxu0
        %v300 = vadd.f32 0.0, %v299
        %v301 = vpop.f32.mrf.mxu0
        %302 = vmatprep.mubr.f32.mxu0 0.0
        %303 = vmatmul.mubr.f32.gmra.mxu0 %v211
        %v304 = vpop.f32.mrf.mxu0
        %v305 = vadd.f32 0.0, %v304
        %v306 = vpop.f32.mrf.mxu0
        %307 = vmatprep.mubr.f32.mxu0 0.0
        %308 = vmatmul.mubr.f32.gmra.mxu0 %v214
        %v309 = vpop.f32.mrf.mxu0
        %v310 = vadd.f32 0.0, %v309
        %v311 = vpop.f32.mrf.mxu0
        %312 = vmatprep.mubr.f32.mxu0 0.0
        %313 = vmatmul.mubr.f32.gmra.mxu0 %v217
        %v314 = vpop.f32.mrf.mxu0
        %v315 = vadd.f32 0.0, %v314
        %v316 = vpop.f32.mrf.mxu0
        %317 = vmatprep.mubr.f32.mxu0 0.0
        %318 = vmatmul.mubr.f32.gmra.mxu0 %v220
        %v319 = vpop.f32.mrf.mxu0
        %v320 = vadd.f32 0.0, %v319
        %v321 = vpop.f32.mrf.mxu0
        %322 = vmatprep.mubr.f32.mxu0 0.0
        %323 = vmatmul.mubr.f32.gmra.mxu0 %v223
        %v324 = vpop.f32.mrf.mxu0
        %v325 = vadd.f32 0.0, %v324
        %v326 = vpop.f32.mrf.mxu0
        %327 = vmatprep.mubr.f32.mxu0 0.0
        %328 = vmatmul.mubr.f32.gmra.mxu0 %v226
        %v329 = vpop.f32.mrf.mxu0
        %v330 = vadd.f32 0.0, %v329
        %v331 = vpop.f32.mrf.mxu0
        %332 = vdwg.mxu0
        %v333 = vld [vmem:[%s2] sm:$0xff]
        %v335 = vsel %vm203, %v295, 0
        %v338 = vsel %vm203, %v300, 0
        %v341 = vsel %vm203, %v305, 0
        %v344 = vsel %vm203, %v310, 0
        %v347 = vsel %vm203, %v315, 0
        %v350 = vsel %vm203, %v320, 0
        %v353 = vsel %vm203, %v325, 0
        %v356 = vsel %vm203, %v330, 0
        %358 = vmatprep.subr.mxu0 0.0
        %359 = vmatpush1.msra.mxu0 0.0
        %360 = vmatprep.subr.mxu0 0.0
        %361 = vmatpush1.msra.mxu0 0.0
        %362 = vmatprep.subr.mxu0 0.0
        %363 = vmatpush1.msra.mxu0 0.0
        %364 = vmatprep.subr.mxu0 0.0
        %365 = vmatpush1.msra.mxu0 0.0
        %366 = vmatprep.subr.mxu0 0.0
        %367 = vmatpush1.msra.mxu0 0.0
        %368 = vmatprep.subr.mxu0 0.0
        %369 = vmatpush1.msra.mxu0 0.0
        %370 = vmatprep.subr.mxu0 0.0
        %371 = vmatpush1.msra.mxu0 0.0
        %372 = vmatprep.subr.mxu0 0.0
        %373 = vmatpush1.msra.mxu0 0.0
        %374 = vmatprep.subr.mxu0 0.0
        %375 = vmatpush1.msra.mxu0 0.0
        %376 = vmatprep.subr.mxu0 0.0
        %377 = vmatpush1.msra.mxu0 0.0
        %378 = vmatprep.subr.mxu0 0.0
        %379 = vmatpush1.msra.mxu0 0.0
        %380 = vmatprep.subr.mxu0 0.0
        %381 = vmatpush1.msra.mxu0 0.0
        %382 = vmatprep.subr.mxu0 0.0
        %383 = vmatpush1.msra.mxu0 0.0
        %384 = vmatprep.subr.mxu0 0.0
        %385 = vmatpush1.msra.mxu0 0.0
        %386 = vmatprep.subr.mxu0 0.0
        %387 = vmatpush1.msra.mxu0 0.0
        %388 = vmatprep.subr.mxu0 0.0
        %389 = vmatpush1.msra.mxu0 %v333
        %390 = vmatprep.subr.mxu0 0.0
        %391 = vmatpush2.msra.mxu0 0.0
        %392 = vmatprep.subr.mxu0 0.0
        %393 = vmatpush2.msra.mxu0 0.0
        %394 = vmatprep.subr.mxu0 0.0
        %395 = vmatpush2.msra.mxu0 0.0
        %396 = vmatprep.subr.mxu0 0.0
        %397 = vmatpush2.msra.mxu0 0.0
        %398 = vmatprep.subr.mxu0 0.0
        %399 = vmatpush2.msra.mxu0 0.0
        %400 = vmatprep.subr.mxu0 0.0
        %401 = vmatpush2.msra.mxu0 0.0
        %402 = vmatprep.subr.mxu0 0.0
        %403 = vmatpush2.msra.mxu0 0.0
        %404 = vmatprep.subr.mxu0 0.0
        %405 = vmatpush2.msra.mxu0 0.0
        %406 = vmatprep.subr.mxu0 0.0
        %407 = vmatpush2.msra.mxu0 0.0
        %408 = vmatprep.subr.mxu0 0.0
        %409 = vmatpush2.msra.mxu0 0.0
        %410 = vmatprep.subr.mxu0 0.0
        %411 = vmatpush2.msra.mxu0 0.0
        %412 = vmatprep.subr.mxu0 0.0
        %413 = vmatpush2.msra.mxu0 0.0
        %414 = vmatprep.subr.mxu0 0.0
        %415 = vmatpush2.msra.mxu0 0.0
        %416 = vmatprep.subr.mxu0 0.0
        %417 = vmatpush2.msra.mxu0 0.0
        %418 = vmatprep.subr.mxu0 0.0
        %419 = vmatpush2.msra.mxu0 0.0
        %420 = vmatprep.subr.mxu0 0.0
        %421 = vmatpush2.msra.mxu0 0.0
        %422 = vmatprep.mubr.f32.mxu0 0.0
        %423 = vmatmul.mubr.f32.gmra.mxu0 %v335
        %v424 = vpop.f32.mrf.mxu0
        %v425 = vadd.f32 0.0, %v424
        %v426 = vpop.f32.mrf.mxu0
        %427 = vmatprep.mubr.f32.mxu0 0.0
        %428 = vmatmul.mubr.f32.gmra.mxu0 %v338
        %v429 = vpop.f32.mrf.mxu0
        %v430 = vadd.f32 0.0, %v429
        %v431 = vpop.f32.mrf.mxu0
        %432 = vmatprep.mubr.f32.mxu0 0.0
        %433 = vmatmul.mubr.f32.gmra.mxu0 %v341
        %v434 = vpop.f32.mrf.mxu0
        %v435 = vadd.f32 0.0, %v434
        %v436 = vpop.f32.mrf.mxu0
        %437 = vmatprep.mubr.f32.mxu0 0.0
        %438 = vmatmul.mubr.f32.gmra.mxu0 %v344
        %v439 = vpop.f32.mrf.mxu0
        %v440 = vadd.f32 0.0, %v439
        %v441 = vpop.f32.mrf.mxu0
        %442 = vmatprep.mubr.f32.mxu0 0.0
        %443 = vmatmul.mubr.f32.gmra.mxu0 %v347
        %v444 = vpop.f32.mrf.mxu0
        %v445 = vadd.f32 0.0, %v444
        %v446 = vpop.f32.mrf.mxu0
        %447 = vmatprep.mubr.f32.mxu0 0.0
        %448 = vmatmul.mubr.f32.gmra.mxu0 %v350
        %v449 = vpop.f32.mrf.mxu0
        %v450 = vadd.f32 0.0, %v449
        %v451 = vpop.f32.mrf.mxu0
        %452 = vmatprep.mubr.f32.mxu0 0.0
        %453 = vmatmul.mubr.f32.gmra.mxu0 %v353
        %v454 = vpop.f32.mrf.mxu0
        %v455 = vadd.f32 0.0, %v454
        %v456 = vpop.f32.mrf.mxu0
        %457 = vmatprep.mubr.f32.mxu0 0.0
        %458 = vmatmul.mubr.f32.gmra.mxu0 %v356
        %v459 = vpop.f32.mrf.mxu0
        %v460 = vadd.f32 0.0, %v459
        %v461 = vpop.f32.mrf.mxu0
        %462 = vdwg.mxu0
        %vm463 = vcmask 523264
        %464 = vst.msk [vmem:[%s185] sm:$0xff] %vm463, %v425
        %465 = vst.msk [vmem:[%s185 + $0x8] sm:$0xff] %vm463, %v430
        %466 = vst.msk [vmem:[%s185 + $0x10] sm:$0xff] %vm463, %v435
        %467 = vst.msk [vmem:[%s185 + $0x18] sm:$0xff] %vm463, %v440
        %468 = vst.msk [vmem:[%s185 + $0x20] sm:$0xff] %vm463, %v445
        %469 = vst.msk [vmem:[%s185 + $0x28] sm:$0xff] %vm463, %v450
        %470 = vst.msk [vmem:[%s185 + $0x30] sm:$0xff] %vm463, %v455
        %471 = vst.msk [vmem:[%s185 + $0x38] sm:$0xff] %vm463, %v460
        %s472 = sand.u32 %s109, 1
        %s473 = scalar_lea.sflag [#allocation3], %s472
        %s474 = sand.u32 %s109, 1
        %s475 = smul.addr %s474, 64
        %s476 = scalar_lea.vmem [#allocation2], %s475
        // Predicated region
        $region33: #{encoder_decoder2_forward.11} parent=31 // pred_check
          %p477 = pneg %p119
        $region34: #{encoder_decoder2_forward.11} parent=31 // pred_check_branch
          %479 = sbr.rel (%p477) target = $region36
        $region35: #{encoder_decoder2_forward.11} parent=31 // pred_region
          %s481 = ssub.s32 1024, 1024
          %482 = vsyncadd %s473, %s481
          %s483 = smul.addr %s22, 8
          %s484 = smul.addr %s21, 152
          %s485 = sadd.s32 %s483, %s484
          %s486 = smul.addr %s485, 128
          %s487 = scalar_lea.hbm %s3, %s486
          %s488 = sshll.u32 %s476, 4
          %s489 = int_to_ptr.vmem [resolvable:$true] %s488
          %494 = dma.vmem_to_hbm [thread:$0]  %s489, 1024, %s487, %s473, 128, 128, 8
        $region36: #{encoder_decoder2_forward.11} parent=31 // pred_fallthru
          _
      $region32: #{encoder_decoder2_forward.11} parent=5 // pred_fallthru
        _
      %p495 = scmp.le.s32.totalorder 2, %s12
      // Predicated region
      $region37: #{encoder_decoder2_forward.11} parent=5 // pred_check
        %p496 = pneg %p495
      $region38: #{encoder_decoder2_forward.11} parent=5 // pred_check_branch
        %498 = sbr.rel (%p496) target = $region40
      $region39: #{encoder_decoder2_forward.11} parent=5 // pred_region
        %s499 = ssub.s32 %s12, 2
        // Predicated region
        $region41: #{encoder_decoder2_forward.11} parent=39 // pred_check
          %p500 = pneg %p125
        $region42: #{encoder_decoder2_forward.11} parent=39 // pred_check_branch
          %502 = sbr.rel (%p500) target = $region44
        $region43: #{encoder_decoder2_forward.11} parent=39 // pred_region
          %s503 = sand.u32 %s110, 1
          %s504 = scalar_lea.sflag [#allocation3], %s503
          %s505 = sand.u32 %s110, 1
          %s506 = smul.addr %s505, 64
          %s507 = scalar_lea.vmem [#allocation2], %s506
          %508 = dma.done %s504, 1024
        $region44: #{encoder_decoder2_forward.11} parent=39 // pred_fallthru
          _
      $region40: #{encoder_decoder2_forward.11} parent=5 // pred_fallthru
        _
    $region6: #{encoder_decoder2_forward.11} parent=1 // loop_footer
      %s16 = sadd.s32 1, %s12
    $region7: #{encoder_decoder2_forward.11} parent=1 // loop_footer_branch
      %11 = sbr.rel target = $region3
    $region8: #{encoder_decoder2_forward.11} parent=1 // loop_exit
      _
    %509 = vsyncpa [#allocation3], 1
    %s510 = scalar_lea.sflag [#allocation3], 1
    %511 = vsyncpa %s510, 1

// kernel: encoder_decoder2_forward.10
$region0: #{encoder_decoder2_forward.10}
  #allocation0 [shape = 'u32[]', space=smem, size = 0x4, offset = 0x4, fixed_abs, tag = 'smem constant byte address 0x4 - core index']
  #allocation1 [shape = 'u32[144,128]{1,0:T(1,128)}', space=vmem, size = 0x12000, scoped, tag = 'internal scratch']
  %s0 = inlined_call_operand.vmem [shape: bf16[2,4,4,512], index: 0, kind: input, shape index: {}]
  %s1 = inlined_call_operand.vmem [shape: bf16[9,512,128], index: 1, kind: input, shape index: {}]
  %s2 = inlined_call_operand.vmem [shape: f32[1,128], index: 2, kind: input, shape index: {}]
  %s3 = inlined_call_operand.vmem [shape: bf16[128,128], index: 3, kind: input, shape index: {}]
  %s4 = inlined_call_operand.vmem [shape: f32[1,128], index: 4, kind: input, shape index: {}]
  %s5 = inlined_call_operand.vmem [shape: f32[2,2,2,128], index: 5, kind: output, shape index: {}]
  %s6 = sld [smem:[#allocation0]]
  $region53: #{encoder_decoder2_forward.10} parent=0
    _
  %s8 = ssub.s32 1, %s6
  %s9 = scalar_select 0, %s8, %s6
  loop: start=0, step=1, limit=6
  $region2: #{encoder_decoder2_forward.10} parent=0 // loop_pre_header
    _
  $region3: #{encoder_decoder2_forward.10} parent=0 // loop_header
    %s11 = sphi 0, %s15
    %p12 = scmp.ge.s32.totalorder %s11, 6
    %s18 = sphi 0, %s30
    %s19 = sphi 0, %s26
    %s20 = sphi 0, %s18
    %s21 = sphi 0, %s19
    %s22 = sphi 0, %s20
    %s23 = sphi 0, %s21
    %s33 = sphi 0, %s35
    %s36 = sphi 0, %s33
    %s37 = sphi 0, %s36
    %s53 = sphi 0, %s37
    %s57 = sphi 0, %s57
    %s59 = sphi 0, %s57
    %s60 = sphi 0, %s59
    %s74 = sphi 0, %s60
    %s78 = sphi 0, %s78
    %s80 = sphi 0, %s78
    %s81 = sphi 0, %s80
    %s95 = sphi 0, %s81
    %s99 = sphi 0, %s99
    %s101 = sphi 0, %s99
    %s102 = sphi 0, %s101
    %s116 = sphi 0, %s102
    %s120 = sphi 0, %s120
    %s122 = sphi 0, %s120
    %s123 = sphi 0, %s122
    %s137 = sphi 0, %s123
    %s145 = sphi 0, %s147
    %s148 = sphi 0, %s145
    %s149 = sphi 0, %s148
    %s165 = sphi 0, %s149
  $region4: #{encoder_decoder2_forward.10} parent=0 // loop_header_branch
    %14 = sbr.rel (%p12) target = $region8
  $region5: #{encoder_decoder2_forward.10} parent=0 // loop_body
    %s16 = ssub.s32 %s11, 1
    %s17 = ssub.s32 %s11, 2
    %s24 = sadd.s32 1, %s19
    %p25 = scmp.ge.s32.totalorder %s24, 2
    %s26 = scalar_select %p25, 0, %s24
    %s27 = sadd.s32 1, %s18
    %s28 = scalar_select %p25, %s27, %s18
    %p29 = scmp.ge.s32.totalorder %s28, 2
    %s30 = scalar_select %p29, 0, %s28
    %s31 = ssub.s32 %s18, %s30
    %p32 = scmp.eq.s32.totalorder %s31, 0
    %s34 = sadd.s32 %s33, 1
    %s35 = scalar_select %p32, %s33, %s34
    %p38 = pneg %p32
    %p39 = scmp.eq.s32.totalorder %s11, 3
    %p40 = por %p38, %p39
    %p41 = scmp.ne.s32.totalorder %s33, %s36
    %p42 = scmp.eq.s32.totalorder %s11, 0
    %p43 = por %p41, %p42
    %p44 = scmp.ne.s32.totalorder %s33, %s36
    %p45 = scmp.eq.s32.totalorder %s16, 3
    %p46 = por %p44, %p45
    %p47 = scmp.ne.s32.totalorder %s36, %s37
    %p48 = scmp.eq.s32.totalorder %s16, 0
    %p49 = por %p47, %p48
    %p50 = scmp.ne.s32.totalorder %s36, %s37
    %p51 = scmp.eq.s32.totalorder %s17, 3
    %p52 = por %p50, %p51
    %p54 = scmp.ne.s32.totalorder %s37, %s53
    %p55 = scmp.eq.s32.totalorder %s17, 0
    %p56 = por %p54, %p55
    %s58 = sadd.s32 %s57, 1
    %p61 = scmp.eq.s32.totalorder %s11, 3
    %p62 = scmp.ne.s32.totalorder %s57, %s59
    %p63 = scmp.eq.s32.totalorder %s11, 0
    %p64 = por %p62, %p63
    %p65 = scmp.ne.s32.totalorder %s57, %s59
    %p66 = scmp.eq.s32.totalorder %s16, 3
    %p67 = por %p65, %p66
    %p68 = scmp.ne.s32.totalorder %s59, %s60
    %p69 = scmp.eq.s32.totalorder %s16, 0
    %p70 = por %p68, %p69
    %p71 = scmp.ne.s32.totalorder %s59, %s60
    %p72 = scmp.eq.s32.totalorder %s17, 3
    %p73 = por %p71, %p72
    %p75 = scmp.ne.s32.totalorder %s60, %s74
    %p76 = scmp.eq.s32.totalorder %s17, 0
    %p77 = por %p75, %p76
    %s79 = sadd.s32 %s78, 1
    %p82 = scmp.eq.s32.totalorder %s11, 3
    %p83 = scmp.ne.s32.totalorder %s78, %s80
    %p84 = scmp.eq.s32.totalorder %s11, 0
    %p85 = por %p83, %p84
    %p86 = scmp.ne.s32.totalorder %s78, %s80
    %p87 = scmp.eq.s32.totalorder %s16, 3
    %p88 = por %p86, %p87
    %p89 = scmp.ne.s32.totalorder %s80, %s81
    %p90 = scmp.eq.s32.totalorder %s16, 0
    %p91 = por %p89, %p90
    %p92 = scmp.ne.s32.totalorder %s80, %s81
    %p93 = scmp.eq.s32.totalorder %s17, 3
    %p94 = por %p92, %p93
    %p96 = scmp.ne.s32.totalorder %s81, %s95
    %p97 = scmp.eq.s32.totalorder %s17, 0
    %p98 = por %p96, %p97
    %s100 = sadd.s32 %s99, 1
    %p103 = scmp.eq.s32.totalorder %s11, 3
    %p104 = scmp.ne.s32.totalorder %s99, %s101
    %p105 = scmp.eq.s32.totalorder %s11, 0
    %p106 = por %p104, %p105
    %p107 = scmp.ne.s32.totalorder %s99, %s101
    %p108 = scmp.eq.s32.totalorder %s16, 3
    %p109 = por %p107, %p108
    %p110 = scmp.ne.s32.totalorder %s101, %s102
    %p111 = scmp.eq.s32.totalorder %s16, 0
    %p112 = por %p110, %p111
    %p113 = scmp.ne.s32.totalorder %s101, %s102
    %p114 = scmp.eq.s32.totalorder %s17, 3
    %p115 = por %p113, %p114
    %p117 = scmp.ne.s32.totalorder %s102, %s116
    %p118 = scmp.eq.s32.totalorder %s17, 0
    %p119 = por %p117, %p118
    %s121 = sadd.s32 %s120, 1
    %p124 = scmp.eq.s32.totalorder %s11, 3
    %p125 = scmp.ne.s32.totalorder %s120, %s122
    %p126 = scmp.eq.s32.totalorder %s11, 0
    %p127 = por %p125, %p126
    %p128 = scmp.ne.s32.totalorder %s120, %s122
    %p129 = scmp.eq.s32.totalorder %s16, 3
    %p130 = por %p128, %p129
    %p131 = scmp.ne.s32.totalorder %s122, %s123
    %p132 = scmp.eq.s32.totalorder %s16, 0
    %p133 = por %p131, %p132
    %p134 = scmp.ne.s32.totalorder %s122, %s123
    %p135 = scmp.eq.s32.totalorder %s17, 3
    %p136 = por %p134, %p135
    %p138 = scmp.ne.s32.totalorder %s123, %s137
    %p139 = scmp.eq.s32.totalorder %s17, 0
    %p140 = por %p138, %p139
    %s141 = ssub.s32 %s18, %s30
    %s142 = ssub.s32 %s19, %s26
    %s143 = sor.u32 %s141, %s142
    %p144 = scmp.eq.s32.totalorder %s143, 0
    %s146 = sadd.s32 %s145, 1
    %s147 = scalar_select %p144, %s145, %s146
    %p150 = pneg %p144
    %p151 = scmp.eq.s32.totalorder %s11, 3
    %p152 = por %p150, %p151
    %p153 = scmp.ne.s32.totalorder %s145, %s148
    %p154 = scmp.eq.s32.totalorder %s11, 0
    %p155 = por %p153, %p154
    %p156 = scmp.ne.s32.totalorder %s145, %s148
    %p157 = scmp.eq.s32.totalorder %s16, 3
    %p158 = por %p156, %p157
    %p159 = scmp.ne.s32.totalorder %s148, %s149
    %p160 = scmp.eq.s32.totalorder %s16, 0
    %p161 = por %p159, %p160
    %p162 = scmp.ne.s32.totalorder %s148, %s149
    %p163 = scmp.eq.s32.totalorder %s17, 3
    %p164 = por %p162, %p163
    %p166 = scmp.ne.s32.totalorder %s149, %s165
    %p167 = scmp.eq.s32.totalorder %s17, 0
    %p168 = por %p166, %p167
    %p169 = scmp.le.s32.totalorder 1, %s11
    %p170 = scmp.lt.s32.totalorder %s11, 5
    %p171 = pnand %p169, %p170
    %p172 = pneg %p171
    // Predicated region
    $region9: #{encoder_decoder2_forward.10} parent=5 // pred_check
      _
    $region10: #{encoder_decoder2_forward.10} parent=5 // pred_check_branch
      %174 = sbr.rel (%p171) target = $region12
    $region11: #{encoder_decoder2_forward.10} parent=5 // pred_region
      %s175 = ssub.s32 %s11, 1
      // Predicated region
      $region13: #{encoder_decoder2_forward.10} parent=11 // pred_check
        %p176 = pneg %p70
      $region14: #{encoder_decoder2_forward.10} parent=11 // pred_check_branch
        %178 = sbr.rel (%p176) target = $region16
      $region15: #{encoder_decoder2_forward.10} parent=11 // pred_region
        _
      $region16: #{encoder_decoder2_forward.10} parent=11 // pred_fallthru
        _
      // Predicated region
      $region17: #{encoder_decoder2_forward.10} parent=11 // pred_check
        %p179 = pneg %p91
      $region18: #{encoder_decoder2_forward.10} parent=11 // pred_check_branch
        %181 = sbr.rel (%p179) target = $region20
      $region19: #{encoder_decoder2_forward.10} parent=11 // pred_region
        _
      $region20: #{encoder_decoder2_forward.10} parent=11 // pred_fallthru
        _
      // Predicated region
      $region21: #{encoder_decoder2_forward.10} parent=11 // pred_check
        %p182 = pneg %p112
      $region22: #{encoder_decoder2_forward.10} parent=11 // pred_check_branch
        %184 = sbr.rel (%p182) target = $region24
      $region23: #{encoder_decoder2_forward.10} parent=11 // pred_region
        _
      $region24: #{encoder_decoder2_forward.10} parent=11 // pred_fallthru
        _
      // Predicated region
      $region25: #{encoder_decoder2_forward.10} parent=11 // pred_check
        %p185 = pneg %p133
      $region26: #{encoder_decoder2_forward.10} parent=11 // pred_check_branch
        %187 = sbr.rel (%p185) target = $region28
      $region27: #{encoder_decoder2_forward.10} parent=11 // pred_region
        _
      $region28: #{encoder_decoder2_forward.10} parent=11 // pred_fallthru
        _
    $region12: #{encoder_decoder2_forward.10} parent=5 // pred_fallthru
      _
    %p188 = scmp.lt.s32.totalorder %s11, 4
    // Predicated region
    $region29: #{encoder_decoder2_forward.10} parent=5 // pred_check
      %p189 = pneg %p188
    $region30: #{encoder_decoder2_forward.10} parent=5 // pred_check_branch
      %191 = sbr.rel (%p189) target = $region32
    $region31: #{encoder_decoder2_forward.10} parent=5 // pred_region
      // Predicated region
      $region33: #{encoder_decoder2_forward.10} parent=31 // pred_check
        %p192 = pneg %p43
      $region34: #{encoder_decoder2_forward.10} parent=31 // pred_check_branch
        %194 = sbr.rel (%p192) target = $region36
      $region35: #{encoder_decoder2_forward.10} parent=31 // pred_region
        %p195 = scmp.lt.s32.totalorder %s18, 1
        %s196 = scalar_select %p195, %s18, 1
        %s197 = smul.addr %s196, 16
        %s198 = smul.addr %s197, 2
        %s199 = scalar_lea.vmem %s0, %s198
      $region36: #{encoder_decoder2_forward.10} parent=31 // pred_fallthru
        _
    $region32: #{encoder_decoder2_forward.10} parent=5 // pred_fallthru
      _
    %p200 = scmp.le.s32.totalorder 1, %s11
    %p201 = scmp.lt.s32.totalorder %s11, 5
    %p202 = pnand %p200, %p201
    %p203 = pneg %p202
    // Predicated region
    $region37: #{encoder_decoder2_forward.10} parent=5 // pred_check
      _
    $region38: #{encoder_decoder2_forward.10} parent=5 // pred_check_branch
      %205 = sbr.rel (%p202) target = $region40
    $region39: #{encoder_decoder2_forward.10} parent=5 // pred_region
      %s206 = ssub.s32 %s11, 1
      %p207 = scmp.lt.s32.totalorder %s20, 1
      %s208 = scalar_select %p207, %s20, 1
      %s209 = smul.addr %s208, 16
      %s210 = smul.addr %s209, 2
      %s211 = scalar_lea.vmem %s0, %s210
      %p212 = pneg %p49
      %p213 = pneg %p46
      %p214 = pneg %p70
      %p215 = pneg %p67
      %p216 = pneg %p91
      %p217 = pneg %p88
      %p218 = pneg %p112
      %p219 = pneg %p109
      %p220 = pneg %p133
      %p221 = pneg %p130
      %p222 = pneg %p161
      %p223 = pneg %p158
      %p224 = scmp.lt.s32.totalorder %s20, 1
      %s225 = scalar_select %p224, %s20, 1
      %p226 = scmp.lt.s32.totalorder %s21, 1
      %s227 = scalar_select %p226, %s21, 1
      %s228 = smul.addr %s225, 2
      %s229 = sadd.s32 %s227, %s228
      %s230 = smul.addr %s229, 2
      %s231 = scalar_lea.vmem %s5, %s230
      %p232 = scmp.lt.s32.totalorder %s20, 1
      %s233 = scalar_select %p232, %s20, 1
      %s234 = smul.addr %s233, 16
      %s235 = smul.addr %s234, 2
      %s236 = scalar_lea.vmem %s0, %s235
      %p237 = scmp.lt.s32.totalorder %s20, 1
      %s238 = scalar_select %p237, %s20, 1
      %p239 = scmp.lt.s32.totalorder %s21, 1
      %s240 = scalar_select %p239, %s21, 1
      %s241 = smul.addr %s238, 2
      %s242 = sadd.s32 %s240, %s241
      %s243 = smul.addr %s242, 2
      %s244 = scalar_lea.vmem %s5, %s243
      %s246 = smul.u32 %s21, 4
      %s247 = smul.addr %s246, 2
      %s248 = scalar_lea.vmem %s236, %s247
      %v249 = vld [vmem:[%s248] sm:$0xff]
      %v250 = vld [vmem:[%s1] sm:$0xf]
      %v251 = vld [vmem:[%s1 + $0x4] sm:$0xf]
      %v252 = vld [vmem:[%s1 + $0x8] sm:$0xf]
      %v253 = vld [vmem:[%s1 + $0xc] sm:$0xf]
      %v254 = vld [vmem:[%s1 + $0x10] sm:$0xf]
      %v255 = vld [vmem:[%s1 + $0x14] sm:$0xf]
      %v256 = vld [vmem:[%s1 + $0x18] sm:$0xf]
      %v257 = vld [vmem:[%s1 + $0x1c] sm:$0xf]
      %v258 = vld [vmem:[%s1 + $0x20] sm:$0xf]
      %v259 = vld [vmem:[%s1 + $0x24] sm:$0xf]
      %v260 = vld [vmem:[%s1 + $0x28] sm:$0xf]
      %v261 = vld [vmem:[%s1 + $0x2c] sm:$0xf]
      %v262 = vld [vmem:[%s1 + $0x30] sm:$0xf]
      %v263 = vld [vmem:[%s1 + $0x34] sm:$0xf]
      %v264 = vld [vmem:[%s1 + $0x38] sm:$0xf]
      %v265 = vld [vmem:[%s1 + $0x3c] sm:$0xf]
      %v266 = vld [vmem:[%s1 + $0x40] sm:$0xf]
      %v267 = vld [vmem:[%s1 + $0x44] sm:$0xf]
      %v268 = vld [vmem:[%s1 + $0x48] sm:$0xf]
      %v269 = vld [vmem:[%s1 + $0x4c] sm:$0xf]
      %v270 = vld [vmem:[%s1 + $0x50] sm:$0xf]
      %v271 = vld [vmem:[%s1 + $0x54] sm:$0xf]
      %v272 = vld [vmem:[%s1 + $0x58] sm:$0xf]
      %v273 = vld [vmem:[%s1 + $0x5c] sm:$0xf]
      %v274 = vld [vmem:[%s1 + $0x60] sm:$0xf]
      %v275 = vld [vmem:[%s1 + $0x64] sm:$0xf]
      %v276 = vld [vmem:[%s1 + $0x68] sm:$0xf]
      %v277 = vld [vmem:[%s1 + $0x6c] sm:$0xf]
      %v278 = vld [vmem:[%s1 + $0x70] sm:$0xf]
      %v279 = vld [vmem:[%s1 + $0x74] sm:$0xf]
      %v280 = vld [vmem:[%s1 + $0x78] sm:$0xf]
      %v281 = vld [vmem:[%s1 + $0x7c] sm:$0xf]
      %v282 = vld [vmem:[%s1 + $0x80] sm:$0xf]
      %v283 = vld [vmem:[%s1 + $0x84] sm:$0xf]
      %v284 = vld [vmem:[%s1 + $0x88] sm:$0xf]
      %v285 = vld [vmem:[%s1 + $0x8c] sm:$0xf]
      %v286 = vld [vmem:[%s1 + $0x90] sm:$0xf]
      %v287 = vld [vmem:[%s1 + $0x94] sm:$0xf]
      %v288 = vld [vmem:[%s1 + $0x98] sm:$0xf]
      %v289 = vld [vmem:[%s1 + $0x9c] sm:$0xf]
      %v290 = vld [vmem:[%s1 + $0xa0] sm:$0xf]
      %v291 = vld [vmem:[%s1 + $0xa4] sm:$0xf]
      %v292 = vld [vmem:[%s1 + $0xa8] sm:$0xf]
      %v293 = vld [vmem:[%s1 + $0xac] sm:$0xf]
      %v294 = vld [vmem:[%s1 + $0xb0] sm:$0xf]
      %v295 = vld [vmem:[%s1 + $0xb4] sm:$0xf]
      %v296 = vld [vmem:[%s1 + $0xb8] sm:$0xf]
      %v297 = vld [vmem:[%s1 + $0xbc] sm:$0xf]
      %v298 = vld [vmem:[%s1 + $0xc0] sm:$0xf]
      %v299 = vld [vmem:[%s1 + $0xc4] sm:$0xf]
      %v300 = vld [vmem:[%s1 + $0xc8] sm:$0xf]
      %v301 = vld [vmem:[%s1 + $0xcc] sm:$0xf]
      %v302 = vld [vmem:[%s1 + $0xd0] sm:$0xf]
      %v303 = vld [vmem:[%s1 + $0xd4] sm:$0xf]
      %v304 = vld [vmem:[%s1 + $0xd8] sm:$0xf]
      %v305 = vld [vmem:[%s1 + $0xdc] sm:$0xf]
      %v306 = vld [vmem:[%s1 + $0xe0] sm:$0xf]
      %v307 = vld [vmem:[%s1 + $0xe4] sm:$0xf]
      %v308 = vld [vmem:[%s1 + $0xe8] sm:$0xf]
      %v309 = vld [vmem:[%s1 + $0xec] sm:$0xf]
      %v310 = vld [vmem:[%s1 + $0xf0] sm:$0xf]
      %v311 = vld [vmem:[%s1 + $0xf4] sm:$0xf]
      %v312 = vld [vmem:[%s1 + $0xf8] sm:$0xf]
      %v313 = vld [vmem:[%s1 + $0xfc] sm:$0xf]
      %s314 = scalar_lea.vmem %s1, 256
      %v315 = vld [vmem:[%s314] sm:$0xf]
      %v316 = vld [vmem:[%s314 + $0x4] sm:$0xf]
      %v317 = vld [vmem:[%s314 + $0x8] sm:$0xf]
      %v318 = vld [vmem:[%s314 + $0xc] sm:$0xf]
      %v319 = vld [vmem:[%s314 + $0x10] sm:$0xf]
      %v320 = vld [vmem:[%s314 + $0x14] sm:$0xf]
      %v321 = vld [vmem:[%s314 + $0x18] sm:$0xf]
      %v322 = vld [vmem:[%s314 + $0x1c] sm:$0xf]
      %v323 = vld [vmem:[%s314 + $0x20] sm:$0xf]
      %v324 = vld [vmem:[%s314 + $0x24] sm:$0xf]
      %v325 = vld [vmem:[%s314 + $0x28] sm:$0xf]
      %v326 = vld [vmem:[%s314 + $0x2c] sm:$0xf]
      %v327 = vld [vmem:[%s314 + $0x30] sm:$0xf]
      %v328 = vld [vmem:[%s314 + $0x34] sm:$0xf]
      %v329 = vld [vmem:[%s314 + $0x38] sm:$0xf]
      %v330 = vld [vmem:[%s314 + $0x3c] sm:$0xf]
      %v331 = vld [vmem:[%s314 + $0x40] sm:$0xf]
      %v332 = vld [vmem:[%s314 + $0x44] sm:$0xf]
      %v333 = vld [vmem:[%s314 + $0x48] sm:$0xf]
      %v334 = vld [vmem:[%s314 + $0x4c] sm:$0xf]
      %v335 = vld [vmem:[%s314 + $0x50] sm:$0xf]
      %v336 = vld [vmem:[%s314 + $0x54] sm:$0xf]
      %v337 = vld [vmem:[%s314 + $0x58] sm:$0xf]
      %v338 = vld [vmem:[%s314 + $0x5c] sm:$0xf]
      %v339 = vld [vmem:[%s314 + $0x60] sm:$0xf]
      %v340 = vld [vmem:[%s314 + $0x64] sm:$0xf]
      %v341 = vld [vmem:[%s314 + $0x68] sm:$0xf]
      %v342 = vld [vmem:[%s314 + $0x6c] sm:$0xf]
      %v343 = vld [vmem:[%s314 + $0x70] sm:$0xf]
      %v344 = vld [vmem:[%s314 + $0x74] sm:$0xf]
      %v345 = vld [vmem:[%s314 + $0x78] sm:$0xf]
      %v346 = vld [vmem:[%s314 + $0x7c] sm:$0xf]
      %v347 = vld [vmem:[%s314 + $0x80] sm:$0xf]
      %v348 = vld [vmem:[%s314 + $0x84] sm:$0xf]
      %v349 = vld [vmem:[%s314 + $0x88] sm:$0xf]
      %v350 = vld [vmem:[%s314 + $0x8c] sm:$0xf]
      %v351 = vld [vmem:[%s314 + $0x90] sm:$0xf]
      %v352 = vld [vmem:[%s314 + $0x94] sm:$0xf]
      %v353 = vld [vmem:[%s314 + $0x98] sm:$0xf]
      %v354 = vld [vmem:[%s314 + $0x9c] sm:$0xf]
      %v355 = vld [vmem:[%s314 + $0xa0] sm:$0xf]
      %v356 = vld [vmem:[%s314 + $0xa4] sm:$0xf]
      %v357 = vld [vmem:[%s314 + $0xa8] sm:$0xf]
      %v358 = vld [vmem:[%s314 + $0xac] sm:$0xf]
      %v359 = vld [vmem:[%s314 + $0xb0] sm:$0xf]
      %v360 = vld [vmem:[%s314 + $0xb4] sm:$0xf]
      %v361 = vld [vmem:[%s314 + $0xb8] sm:$0xf]
      %v362 = vld [vmem:[%s314 + $0xbc] sm:$0xf]
      %v363 = vld [vmem:[%s314 + $0xc0] sm:$0xf]
      %v364 = vld [vmem:[%s314 + $0xc4] sm:$0xf]
      %v365 = vld [vmem:[%s314 + $0xc8] sm:$0xf]
      %v366 = vld [vmem:[%s314 + $0xcc] sm:$0xf]
      %v367 = vld [vmem:[%s314 + $0xd0] sm:$0xf]
      %v368 = vld [vmem:[%s314 + $0xd4] sm:$0xf]
      %v369 = vld [vmem:[%s314 + $0xd8] sm:$0xf]
      %v370 = vld [vmem:[%s314 + $0xdc] sm:$0xf]
      %v371 = vld [vmem:[%s314 + $0xe0] sm:$0xf]
      %v372 = vld [vmem:[%s314 + $0xe4] sm:$0xf]
      %v373 = vld [vmem:[%s314 + $0xe8] sm:$0xf]
      %v374 = vld [vmem:[%s314 + $0xec] sm:$0xf]
      %v375 = vld [vmem:[%s314 + $0xf0] sm:$0xf]
      %v376 = vld [vmem:[%s314 + $0xf4] sm:$0xf]
      %v377 = vld [vmem:[%s314 + $0xf8] sm:$0xf]
      %v378 = vld [vmem:[%s314 + $0xfc] sm:$0xf]
      %v380 = vcombine.high %v249, %v249
      %v382 = vunpack.c.l.s4 1983009808
      %v383 = vunpack.c.0.s8 %v382
      %v384 = vlaneseq
      %v385 = vshrl.u32 %v384, 7
      %v386 = vsub.s32 %v383, %v385
      %v387 = vrot.slane %v249, %v386
      %v389 = vunpack.c.l.s4 1983009808
      %v390 = vunpack.c.0.s8 %v389
      %v391 = vlaneseq
      %v392 = vshrl.u32 %v391, 7
      %v393 = vsub.s32 %v390, %v392
      %v394 = vrot.slane %v380, %v393
      %v395 = vcombine.high %v387, %v387
      %v396 = vcombine.high %v394, %v394
      %v398 = vshrl.u32 %v387, 16
      %v400 = vshll.u32 %v387, 16
      %v402 = vrot.slane %v400, 1
      %v403 = vor.u32 %v398, %v402
      %v405 = vshrl.u32 %v395, 16
      %v407 = vshll.u32 %v395, 16
      %v409 = vrot.slane %v407, 1
      %v410 = vor.u32 %v405, %v409
      %v412 = vshrl.u32 %v394, 16
      %v414 = vshll.u32 %v394, 16
      %v416 = vrot.slane %v414, 1
      %v417 = vor.u32 %v412, %v416
      %v419 = vshrl.u32 %v396, 16
      %v421 = vshll.u32 %v396, 16
      %v423 = vrot.slane %v421, 1
      %v424 = vor.u32 %v419, %v423
      %v493 = vunpack.c.l.b16 %v315
      %v494 = vunpack.c.l.b16 %v316
      %v495 = vunpack.c.l.b16 %v317
      %v496 = vunpack.c.l.b16 %v318
      %v497 = vunpack.c.l.b16 %v319
      %v498 = vunpack.c.l.b16 %v320
      %v499 = vunpack.c.l.b16 %v321
      %v500 = vunpack.c.l.b16 %v322
      %v501 = vunpack.c.l.b16 %v323
      %v502 = vunpack.c.l.b16 %v324
      %v503 = vunpack.c.l.b16 %v325
      %v504 = vunpack.c.l.b16 %v326
      %v505 = vunpack.c.l.b16 %v327
      %v506 = vunpack.c.l.b16 %v328
      %v507 = vunpack.c.l.b16 %v329
      %v508 = vunpack.c.l.b16 %v330
      %v509 = vunpack.c.l.b16 %v331
      %v510 = vunpack.c.l.b16 %v332
      %v511 = vunpack.c.l.b16 %v333
      %v512 = vunpack.c.l.b16 %v334
      %v513 = vunpack.c.l.b16 %v335
      %v514 = vunpack.c.l.b16 %v336
      %v515 = vunpack.c.l.b16 %v337
      %v516 = vunpack.c.l.b16 %v338
      %v517 = vunpack.c.l.b16 %v339
      %v518 = vunpack.c.l.b16 %v340
      %v519 = vunpack.c.l.b16 %v341
      %v520 = vunpack.c.l.b16 %v342
      %v521 = vunpack.c.l.b16 %v343
      %v522 = vunpack.c.l.b16 %v344
      %v523 = vunpack.c.l.b16 %v345
      %v524 = vunpack.c.l.b16 %v346
      %v525 = vunpack.c.l.b16 %v347
      %v526 = vunpack.c.l.b16 %v348
      %v527 = vunpack.c.l.b16 %v349
      %v528 = vunpack.c.l.b16 %v350
      %v529 = vunpack.c.l.b16 %v351
      %v530 = vunpack.c.l.b16 %v352
      %v531 = vunpack.c.l.b16 %v353
      %v532 = vunpack.c.l.b16 %v354
      %v533 = vunpack.c.l.b16 %v355
      %v534 = vunpack.c.l.b16 %v356
      %v535 = vunpack.c.l.b16 %v357
      %v536 = vunpack.c.l.b16 %v358
      %v537 = vunpack.c.l.b16 %v359
      %v538 = vunpack.c.l.b16 %v360
      %v539 = vunpack.c.l.b16 %v361
      %v540 = vunpack.c.l.b16 %v362
      %v541 = vunpack.c.l.b16 %v363
      %v542 = vunpack.c.l.b16 %v364
      %v543 = vunpack.c.l.b16 %v365
      %v544 = vunpack.c.l.b16 %v366
      %v545 = vunpack.c.l.b16 %v367
      %v546 = vunpack.c.l.b16 %v368
      %v547 = vunpack.c.l.b16 %v369
      %v548 = vunpack.c.l.b16 %v370
      %v549 = vunpack.c.l.b16 %v371
      %v550 = vunpack.c.l.b16 %v372
      %v551 = vunpack.c.l.b16 %v373
      %v552 = vunpack.c.l.b16 %v374
      %v553 = vunpack.c.l.b16 %v375
      %v554 = vunpack.c.l.b16 %v376
      %v555 = vunpack.c.l.b16 %v377
      %v556 = vunpack.c.l.b16 %v378
      %v557 = vpack.c.b16 %v494, %v493
      %v558 = vpack.c.b16 %v496, %v495
      %v559 = vpack.c.b16 %v498, %v497
      %v560 = vpack.c.b16 %v500, %v499
      %v561 = vpack.c.b16 %v502, %v501
      %v562 = vpack.c.b16 %v504, %v503
      %v563 = vpack.c.b16 %v506, %v505
      %v564 = vpack.c.b16 %v508, %v507
      %v565 = vpack.c.b16 %v510, %v509
      %v566 = vpack.c.b16 %v512, %v511
      %v567 = vpack.c.b16 %v514, %v513
      %v568 = vpack.c.b16 %v516, %v515
      %v569 = vpack.c.b16 %v518, %v517
      %v570 = vpack.c.b16 %v520, %v519
      %v571 = vpack.c.b16 %v522, %v521
      %v572 = vpack.c.b16 %v524, %v523
      %v573 = vpack.c.b16 %v526, %v525
      %v574 = vpack.c.b16 %v528, %v527
      %v575 = vpack.c.b16 %v530, %v529
      %v576 = vpack.c.b16 %v532, %v531
      %v577 = vpack.c.b16 %v534, %v533
      %v578 = vpack.c.b16 %v536, %v535
      %v579 = vpack.c.b16 %v538, %v537
      %v580 = vpack.c.b16 %v540, %v539
      %v581 = vpack.c.b16 %v542, %v541
      %v582 = vpack.c.b16 %v544, %v543
      %v583 = vpack.c.b16 %v546, %v545
      %v584 = vpack.c.b16 %v548, %v547
      %v585 = vpack.c.b16 %v550, %v549
      %v586 = vpack.c.b16 %v552, %v551
      %v587 = vpack.c.b16 %v554, %v553
      %v588 = vpack.c.b16 %v556, %v555
      %621 = vmatprep.subr.bf16.mxu0 0
      %622 = vmatpush1.bf16.msra.mxu0 %v564
      %623 = vmatprep.subr.bf16.mxu0 0
      %624 = vmatpush1.bf16.msra.mxu0 %v563
      %625 = vmatprep.subr.bf16.mxu0 0
      %626 = vmatpush1.bf16.msra.mxu0 %v562
      %627 = vmatprep.subr.bf16.mxu0 0
      %628 = vmatpush1.bf16.msra.mxu0 %v561
      %629 = vmatprep.subr.bf16.mxu0 0
      %630 = vmatpush1.bf16.msra.mxu0 %v560
      %631 = vmatprep.subr.bf16.mxu0 0
      %632 = vmatpush1.bf16.msra.mxu0 %v559
      %633 = vmatprep.subr.bf16.mxu0 0
      %634 = vmatpush1.bf16.msra.mxu0 %v558
      %635 = vmatprep.subr.bf16.mxu0 0
      %636 = vmatpush1.bf16.msra.mxu0 %v557
      %637 = vmatprep.subr.bf16.mxu0 0
      %638 = vmatpush2.bf16.msra.mxu0 %v572
      %639 = vmatprep.subr.bf16.mxu0 0
      %640 = vmatpush2.bf16.msra.mxu0 %v571
      %641 = vmatprep.subr.bf16.mxu0 0
      %642 = vmatpush2.bf16.msra.mxu0 %v570
      %643 = vmatprep.subr.bf16.mxu0 0
      %644 = vmatpush2.bf16.msra.mxu0 %v569
      %645 = vmatprep.subr.bf16.mxu0 0
      %646 = vmatpush2.bf16.msra.mxu0 %v568
      %647 = vmatprep.subr.bf16.mxu0 0
      %648 = vmatpush2.bf16.msra.mxu0 %v567
      %649 = vmatprep.subr.bf16.mxu0 0
      %650 = vmatpush2.bf16.msra.mxu0 %v566
      %651 = vmatprep.subr.bf16.mxu0 0
      %652 = vmatpush2.bf16.msra.mxu0 %v565
      %653 = vmatprep.mubr.bf16.mxu0 %v410
      %654 = vmatmul.mubr.bf16.gmra.mxu0 %v403
      %v655 = vpop.f32.mrf.mxu0
      %v656 = vadd.f32 0.0, %v655
      %v657 = vpop.f32.mrf.mxu0
      %v658 = vpop.f32.mrf.mxu0
      %v659 = vpop.f32.mrf.mxu0
      %660 = vdwg.mxu0
      %661 = vmatprep.subr.bf16.mxu0 0
      %662 = vmatpush1.bf16.msra.mxu0 %v580
      %663 = vmatprep.subr.bf16.mxu0 0
      %664 = vmatpush1.bf16.msra.mxu0 %v579
      %665 = vmatprep.subr.bf16.mxu0 0
      %666 = vmatpush1.bf16.msra.mxu0 %v578
      %667 = vmatprep.subr.bf16.mxu0 0
      %668 = vmatpush1.bf16.msra.mxu0 %v577
      %669 = vmatprep.subr.bf16.mxu0 0
      %670 = vmatpush1.bf16.msra.mxu0 %v576
      %671 = vmatprep.subr.bf16.mxu0 0
      %672 = vmatpush1.bf16.msra.mxu0 %v575
      %673 = vmatprep.subr.bf16.mxu0 0
      %674 = vmatpush1.bf16.msra.mxu0 %v574
      %675 = vmatprep.subr.bf16.mxu0 0
      %676 = vmatpush1.bf16.msra.mxu0 %v573
      %677 = vmatprep.subr.bf16.mxu0 0
      %678 = vmatpush2.bf16.msra.mxu0 %v588
      %679 = vmatprep.subr.bf16.mxu0 0
      %680 = vmatpush2.bf16.msra.mxu0 %v587
      %681 = vmatprep.subr.bf16.mxu0 0
      %682 = vmatpush2.bf16.msra.mxu0 %v586
      %683 = vmatprep.subr.bf16.mxu0 0
      %684 = vmatpush2.bf16.msra.mxu0 %v585
      %685 = vmatprep.subr.bf16.mxu0 0
      %686 = vmatpush2.bf16.msra.mxu0 %v584
      %687 = vmatprep.subr.bf16.mxu0 0
      %688 = vmatpush2.bf16.msra.mxu0 %v583
      %689 = vmatprep.subr.bf16.mxu0 0
      %690 = vmatpush2.bf16.msra.mxu0 %v582
      %691 = vmatprep.subr.bf16.mxu0 0
      %692 = vmatpush2.bf16.msra.mxu0 %v581
      %693 = vmatprep.mubr.bf16.mxu0 %v424
      %694 = vmatmul.mubr.bf16.gmra.mxu0 %v417
      %v695 = vpop.f32.mrf.mxu0
      %v696 = vadd.f32 %v656, %v695
      %v697 = vpop.f32.mrf.mxu0
      %v698 = vpop.f32.mrf.mxu0
      %v699 = vpop.f32.mrf.mxu0
      %700 = vdwg.mxu0
      %v769 = vunpack.c.l.b16 %v250
      %v770 = vunpack.c.l.b16 %v251
      %v771 = vunpack.c.l.b16 %v252
      %v772 = vunpack.c.l.b16 %v253
      %v773 = vunpack.c.l.b16 %v254
      %v774 = vunpack.c.l.b16 %v255
      %v775 = vunpack.c.l.b16 %v256
      %v776 = vunpack.c.l.b16 %v257
      %v777 = vunpack.c.l.b16 %v258
      %v778 = vunpack.c.l.b16 %v259
      %v779 = vunpack.c.l.b16 %v260
      %v780 = vunpack.c.l.b16 %v261
      %v781 = vunpack.c.l.b16 %v262
      %v782 = vunpack.c.l.b16 %v263
      %v783 = vunpack.c.l.b16 %v264
      %v784 = vunpack.c.l.b16 %v265
      %v785 = vunpack.c.l.b16 %v266
      %v786 = vunpack.c.l.b16 %v267
      %v787 = vunpack.c.l.b16 %v268
      %v788 = vunpack.c.l.b16 %v269
      %v789 = vunpack.c.l.b16 %v270
      %v790 = vunpack.c.l.b16 %v271
      %v791 = vunpack.c.l.b16 %v272
      %v792 = vunpack.c.l.b16 %v273
      %v793 = vunpack.c.l.b16 %v274
      %v794 = vunpack.c.l.b16 %v275
      %v795 = vunpack.c.l.b16 %v276
      %v796 = vunpack.c.l.b16 %v277
      %v797 = vunpack.c.l.b16 %v278
      %v798 = vunpack.c.l.b16 %v279
      %v799 = vunpack.c.l.b16 %v280
      %v800 = vunpack.c.l.b16 %v281
      %v801 = vunpack.c.l.b16 %v282
      %v802 = vunpack.c.l.b16 %v283
      %v803 = vunpack.c.l.b16 %v284
      %v804 = vunpack.c.l.b16 %v285
      %v805 = vunpack.c.l.b16 %v286
      %v806 = vunpack.c.l.b16 %v287
      %v807 = vunpack.c.l.b16 %v288
      %v808 = vunpack.c.l.b16 %v289
      %v809 = vunpack.c.l.b16 %v290
      %v810 = vunpack.c.l.b16 %v291
      %v811 = vunpack.c.l.b16 %v292
      %v812 = vunpack.c.l.b16 %v293
      %v813 = vunpack.c.l.b16 %v294
      %v814 = vunpack.c.l.b16 %v295
      %v815 = vunpack.c.l.b16 %v296
      %v816 = vunpack.c.l.b16 %v297
      %v817 = vunpack.c.l.b16 %v298
      %v818 = vunpack.c.l.b16 %v299
      %v819 = vunpack.c.l.b16 %v300
      %v820 = vunpack.c.l.b16 %v301
      %v821 = vunpack.c.l.b16 %v302
      %v822 = vunpack.c.l.b16 %v303
      %v823 = vunpack.c.l.b16 %v304
      %v824 = vunpack.c.l.b16 %v305
      %v825 = vunpack.c.l.b16 %v306
      %v826 = vunpack.c.l.b16 %v307
      %v827 = vunpack.c.l.b16 %v308
      %v828 = vunpack.c.l.b16 %v309
      %v829 = vunpack.c.l.b16 %v310
      %v830 = vunpack.c.l.b16 %v311
      %v831 = vunpack.c.l.b16 %v312
      %v832 = vunpack.c.l.b16 %v313
      %v833 = vpack.c.b16 %v770, %v769
      %v834 = vpack.c.b16 %v772, %v771
      %v835 = vpack.c.b16 %v774, %v773
      %v836 = vpack.c.b16 %v776, %v775
      %v837 = vpack.c.b16 %v778, %v777
      %v838 = vpack.c.b16 %v780, %v779
      %v839 = vpack.c.b16 %v782, %v781
      %v840 = vpack.c.b16 %v784, %v783
      %v841 = vpack.c.b16 %v786, %v785
      %v842 = vpack.c.b16 %v788, %v787
      %v843 = vpack.c.b16 %v790, %v789
      %v844 = vpack.c.b16 %v792, %v791
      %v845 = vpack.c.b16 %v794, %v793
      %v846 = vpack.c.b16 %v796, %v795
      %v847 = vpack.c.b16 %v798, %v797
      %v848 = vpack.c.b16 %v800, %v799
      %v849 = vpack.c.b16 %v802, %v801
      %v850 = vpack.c.b16 %v804, %v803
      %v851 = vpack.c.b16 %v806, %v805
      %v852 = vpack.c.b16 %v808, %v807
      %v853 = vpack.c.b16 %v810, %v809
      %v854 = vpack.c.b16 %v812, %v811
      %v855 = vpack.c.b16 %v814, %v813
      %v856 = vpack.c.b16 %v816, %v815
      %v857 = vpack.c.b16 %v818, %v817
      %v858 = vpack.c.b16 %v820, %v819
      %v859 = vpack.c.b16 %v822, %v821
      %v860 = vpack.c.b16 %v824, %v823
      %v861 = vpack.c.b16 %v826, %v825
      %v862 = vpack.c.b16 %v828, %v827
      %v863 = vpack.c.b16 %v830, %v829
      %v864 = vpack.c.b16 %v832, %v831
      %897 = vmatprep.subr.bf16.mxu0 0
      %898 = vmatpush1.bf16.msra.mxu0 %v840
      %899 = vmatprep.subr.bf16.mxu0 0
      %900 = vmatpush1.bf16.msra.mxu0 %v839
      %901 = vmatprep.subr.bf16.mxu0 0
      %902 = vmatpush1.bf16.msra.mxu0 %v838
      %903 = vmatprep.subr.bf16.mxu0 0
      %904 = vmatpush1.bf16.msra.mxu0 %v837
      %905 = vmatprep.subr.bf16.mxu0 0
      %906 = vmatpush1.bf16.msra.mxu0 %v836
      %907 = vmatprep.subr.bf16.mxu0 0
      %908 = vmatpush1.bf16.msra.mxu0 %v835
      %909 = vmatprep.subr.bf16.mxu0 0
      %910 = vmatpush1.bf16.msra.mxu0 %v834
      %911 = vmatprep.subr.bf16.mxu0 0
      %912 = vmatpush1.bf16.msra.mxu0 %v833
      %913 = vmatprep.subr.bf16.mxu0 0
      %914 = vmatpush2.bf16.msra.mxu0 %v848
      %915 = vmatprep.subr.bf16.mxu0 0
      %916 = vmatpush2.bf16.msra.mxu0 %v847
      %917 = vmatprep.subr.bf16.mxu0 0
      %918 = vmatpush2.bf16.msra.mxu0 %v846
      %919 = vmatprep.subr.bf16.mxu0 0
      %920 = vmatpush2.bf16.msra.mxu0 %v845
      %921 = vmatprep.subr.bf16.mxu0 0
      %922 = vmatpush2.bf16.msra.mxu0 %v844
      %923 = vmatprep.subr.bf16.mxu0 0
      %924 = vmatpush2.bf16.msra.mxu0 %v843
      %925 = vmatprep.subr.bf16.mxu0 0
      %926 = vmatpush2.bf16.msra.mxu0 %v842
      %927 = vmatprep.subr.bf16.mxu0 0
      %928 = vmatpush2.bf16.msra.mxu0 %v841
      %929 = vmatprep.mubr.bf16.mxu0 %v395
      %930 = vmatmul.mubr.bf16.gmra.mxu0 %v387
      %v931 = vpop.f32.mrf.mxu0
      %v932 = vadd.f32 %v696, %v931
      %v933 = vpop.f32.mrf.mxu0
      %v934 = vpop.f32.mrf.mxu0
      %v935 = vpop.f32.mrf.mxu0
      %936 = vdwg.mxu0
      %937 = vmatprep.subr.bf16.mxu0 0
      %938 = vmatpush1.bf16.msra.mxu0 %v856
      %939 = vmatprep.subr.bf16.mxu0 0
      %940 = vmatpush1.bf16.msra.mxu0 %v855
      %941 = vmatprep.subr.bf16.mxu0 0
      %942 = vmatpush1.bf16.msra.mxu0 %v854
      %943 = vmatprep.subr.bf16.mxu0 0
      %944 = vmatpush1.bf16.msra.mxu0 %v853
      %945 = vmatprep.subr.bf16.mxu0 0
      %946 = vmatpush1.bf16.msra.mxu0 %v852
      %947 = vmatprep.subr.bf16.mxu0 0
      %948 = vmatpush1.bf16.msra.mxu0 %v851
      %949 = vmatprep.subr.bf16.mxu0 0
      %950 = vmatpush1.bf16.msra.mxu0 %v850
      %951 = vmatprep.subr.bf16.mxu0 0
      %952 = vmatpush1.bf16.msra.mxu0 %v849
      %953 = vmatprep.subr.bf16.mxu0 0
      %954 = vmatpush2.bf16.msra.mxu0 %v864
      %955 = vmatprep.subr.bf16.mxu0 0
      %956 = vmatpush2.bf16.msra.mxu0 %v863
      %957 = vmatprep.subr.bf16.mxu0 0
      %958 = vmatpush2.bf16.msra.mxu0 %v862
      %959 = vmatprep.subr.bf16.mxu0 0
      %960 = vmatpush2.bf16.msra.mxu0 %v861
      %961 = vmatprep.subr.bf16.mxu0 0
      %962 = vmatpush2.bf16.msra.mxu0 %v860
      %963 = vmatprep.subr.bf16.mxu0 0
      %964 = vmatpush2.bf16.msra.mxu0 %v859
      %965 = vmatprep.subr.bf16.mxu0 0
      %966 = vmatpush2.bf16.msra.mxu0 %v858
      %967 = vmatprep.subr.bf16.mxu0 0
      %968 = vmatpush2.bf16.msra.mxu0 %v857
      %969 = vmatprep.mubr.bf16.mxu0 %v396
      %970 = vmatmul.mubr.bf16.gmra.mxu0 %v394
      %v971 = vpop.f32.mrf.mxu0
      %v972 = vadd.f32 %v932, %v971
      %v973 = vpop.f32.mrf.mxu0
      %v974 = vpop.f32.mrf.mxu0
      %v975 = vpop.f32.mrf.mxu0
      %976 = vdwg.mxu0
      %s977 = scalar_lea.vmem %s1, 512
      %v978 = vld [vmem:[%s977] sm:$0xf]
      %v979 = vld [vmem:[%s977 + $0x4] sm:$0xf]
      %v980 = vld [vmem:[%s977 + $0x8] sm:$0xf]
      %v981 = vld [vmem:[%s977 + $0xc] sm:$0xf]
      %v982 = vld [vmem:[%s977 + $0x10] sm:$0xf]
      %v983 = vld [vmem:[%s977 + $0x14] sm:$0xf]
      %v984 = vld [vmem:[%s977 + $0x18] sm:$0xf]
      %v985 = vld [vmem:[%s977 + $0x1c] sm:$0xf]
      %v986 = vld [vmem:[%s977 + $0x20] sm:$0xf]
      %v987 = vld [vmem:[%s977 + $0x24] sm:$0xf]
      %v988 = vld [vmem:[%s977 + $0x28] sm:$0xf]
      %v989 = vld [vmem:[%s977 + $0x2c] sm:$0xf]
      %v990 = vld [vmem:[%s977 + $0x30] sm:$0xf]
      %v991 = vld [vmem:[%s977 + $0x34] sm:$0xf]
      %v992 = vld [vmem:[%s977 + $0x38] sm:$0xf]
      %v993 = vld [vmem:[%s977 + $0x3c] sm:$0xf]
      %v994 = vld [vmem:[%s977 + $0x40] sm:$0xf]
      %v995 = vld [vmem:[%s977 + $0x44] sm:$0xf]
      %v996 = vld [vmem:[%s977 + $0x48] sm:$0xf]
      %v997 = vld [vmem:[%s977 + $0x4c] sm:$0xf]
      %v998 = vld [vmem:[%s977 + $0x50] sm:$0xf]
      %v999 = vld [vmem:[%s977 + $0x54] sm:$0xf]
      %v1000 = vld [vmem:[%s977 + $0x58] sm:$0xf]
      %v1001 = vld [vmem:[%s977 + $0x5c] sm:$0xf]
      %v1002 = vld [vmem:[%s977 + $0x60] sm:$0xf]
      %v1003 = vld [vmem:[%s977 + $0x64] sm:$0xf]
      %v1004 = vld [vmem:[%s977 + $0x68] sm:$0xf]
      %v1005 = vld [vmem:[%s977 + $0x6c] sm:$0xf]
      %v1006 = vld [vmem:[%s977 + $0x70] sm:$0xf]
      %v1007 = vld [vmem:[%s977 + $0x74] sm:$0xf]
      %v1008 = vld [vmem:[%s977 + $0x78] sm:$0xf]
      %v1009 = vld [vmem:[%s977 + $0x7c] sm:$0xf]
      %v1010 = vld [vmem:[%s977 + $0x80] sm:$0xf]
      %v1011 = vld [vmem:[%s977 + $0x84] sm:$0xf]
      %v1012 = vld [vmem:[%s977 + $0x88] sm:$0xf]
      %v1013 = vld [vmem:[%s977 + $0x8c] sm:$0xf]
      %v1014 = vld [vmem:[%s977 + $0x90] sm:$0xf]
      %v1015 = vld [vmem:[%s977 + $0x94] sm:$0xf]
      %v1016 = vld [vmem:[%s977 + $0x98] sm:$0xf]
      %v1017 = vld [vmem:[%s977 + $0x9c] sm:$0xf]
      %v1018 = vld [vmem:[%s977 + $0xa0] sm:$0xf]
      %v1019 = vld [vmem:[%s977 + $0xa4] sm:$0xf]
      %v1020 = vld [vmem:[%s977 + $0xa8] sm:$0xf]
      %v1021 = vld [vmem:[%s977 + $0xac] sm:$0xf]
      %v1022 = vld [vmem:[%s977 + $0xb0] sm:$0xf]
      %v1023 = vld [vmem:[%s977 + $0xb4] sm:$0xf]
      %v1024 = vld [vmem:[%s977 + $0xb8] sm:$0xf]
      %v1025 = vld [vmem:[%s977 + $0xbc] sm:$0xf]
      %v1026 = vld [vmem:[%s977 + $0xc0] sm:$0xf]
      %v1027 = vld [vmem:[%s977 + $0xc4] sm:$0xf]
      %v1028 = vld [vmem:[%s977 + $0xc8] sm:$0xf]
      %v1029 = vld [vmem:[%s977 + $0xcc] sm:$0xf]
      %v1030 = vld [vmem:[%s977 + $0xd0] sm:$0xf]
      %v1031 = vld [vmem:[%s977 + $0xd4] sm:$0xf]
      %v1032 = vld [vmem:[%s977 + $0xd8] sm:$0xf]
      %v1033 = vld [vmem:[%s977 + $0xdc] sm:$0xf]
      %v1034 = vld [vmem:[%s977 + $0xe0] sm:$0xf]
      %v1035 = vld [vmem:[%s977 + $0xe4] sm:$0xf]
      %v1036 = vld [vmem:[%s977 + $0xe8] sm:$0xf]
      %v1037 = vld [vmem:[%s977 + $0xec] sm:$0xf]
      %v1038 = vld [vmem:[%s977 + $0xf0] sm:$0xf]
      %v1039 = vld [vmem:[%s977 + $0xf4] sm:$0xf]
      %v1040 = vld [vmem:[%s977 + $0xf8] sm:$0xf]
      %v1041 = vld [vmem:[%s977 + $0xfc] sm:$0xf]
      %v1042 = vrot.slane %v387, 1
      %v1043 = vrot.slane %v395, 1
      %v1044 = vrot.slane %v394, 1
      %v1045 = vrot.slane %v396, 1
      %v1114 = vunpack.c.l.b16 %v978
      %v1115 = vunpack.c.l.b16 %v979
      %v1116 = vunpack.c.l.b16 %v980
      %v1117 = vunpack.c.l.b16 %v981
      %v1118 = vunpack.c.l.b16 %v982
      %v1119 = vunpack.c.l.b16 %v983
      %v1120 = vunpack.c.l.b16 %v984
      %v1121 = vunpack.c.l.b16 %v985
      %v1122 = vunpack.c.l.b16 %v986
      %v1123 = vunpack.c.l.b16 %v987
      %v1124 = vunpack.c.l.b16 %v988
      %v1125 = vunpack.c.l.b16 %v989
      %v1126 = vunpack.c.l.b16 %v990
      %v1127 = vunpack.c.l.b16 %v991
      %v1128 = vunpack.c.l.b16 %v992
      %v1129 = vunpack.c.l.b16 %v993
      %v1130 = vunpack.c.l.b16 %v994
      %v1131 = vunpack.c.l.b16 %v995
      %v1132 = vunpack.c.l.b16 %v996
      %v1133 = vunpack.c.l.b16 %v997
      %v1134 = vunpack.c.l.b16 %v998
      %v1135 = vunpack.c.l.b16 %v999
      %v1136 = vunpack.c.l.b16 %v1000
      %v1137 = vunpack.c.l.b16 %v1001
      %v1138 = vunpack.c.l.b16 %v1002
      %v1139 = vunpack.c.l.b16 %v1003
      %v1140 = vunpack.c.l.b16 %v1004
      %v1141 = vunpack.c.l.b16 %v1005
      %v1142 = vunpack.c.l.b16 %v1006
      %v1143 = vunpack.c.l.b16 %v1007
      %v1144 = vunpack.c.l.b16 %v1008
      %v1145 = vunpack.c.l.b16 %v1009
      %v1146 = vunpack.c.l.b16 %v1010
      %v1147 = vunpack.c.l.b16 %v1011
      %v1148 = vunpack.c.l.b16 %v1012
      %v1149 = vunpack.c.l.b16 %v1013
      %v1150 = vunpack.c.l.b16 %v1014
      %v1151 = vunpack.c.l.b16 %v1015
      %v1152 = vunpack.c.l.b16 %v1016
      %v1153 = vunpack.c.l.b16 %v1017
      %v1154 = vunpack.c.l.b16 %v1018
      %v1155 = vunpack.c.l.b16 %v1019
      %v1156 = vunpack.c.l.b16 %v1020
      %v1157 = vunpack.c.l.b16 %v1021
      %v1158 = vunpack.c.l.b16 %v1022
      %v1159 = vunpack.c.l.b16 %v1023
      %v1160 = vunpack.c.l.b16 %v1024
      %v1161 = vunpack.c.l.b16 %v1025
      %v1162 = vunpack.c.l.b16 %v1026
      %v1163 = vunpack.c.l.b16 %v1027
      %v1164 = vunpack.c.l.b16 %v1028
      %v1165 = vunpack.c.l.b16 %v1029
      %v1166 = vunpack.c.l.b16 %v1030
      %v1167 = vunpack.c.l.b16 %v1031
      %v1168 = vunpack.c.l.b16 %v1032
      %v1169 = vunpack.c.l.b16 %v1033
      %v1170 = vunpack.c.l.b16 %v1034
      %v1171 = vunpack.c.l.b16 %v1035
      %v1172 = vunpack.c.l.b16 %v1036
      %v1173 = vunpack.c.l.b16 %v1037
      %v1174 = vunpack.c.l.b16 %v1038
      %v1175 = vunpack.c.l.b16 %v1039
      %v1176 = vunpack.c.l.b16 %v1040
      %v1177 = vunpack.c.l.b16 %v1041
      %v1178 = vpack.c.b16 %v1115, %v1114
      %v1179 = vpack.c.b16 %v1117, %v1116
      %v1180 = vpack.c.b16 %v1119, %v1118
      %v1181 = vpack.c.b16 %v1121, %v1120
      %v1182 = vpack.c.b16 %v1123, %v1122
      %v1183 = vpack.c.b16 %v1125, %v1124
      %v1184 = vpack.c.b16 %v1127, %v1126
      %v1185 = vpack.c.b16 %v1129, %v1128
      %v1186 = vpack.c.b16 %v1131, %v1130
      %v1187 = vpack.c.b16 %v1133, %v1132
      %v1188 = vpack.c.b16 %v1135, %v1134
      %v1189 = vpack.c.b16 %v1137, %v1136
      %v1190 = vpack.c.b16 %v1139, %v1138
      %v1191 = vpack.c.b16 %v1141, %v1140
      %v1192 = vpack.c.b16 %v1143, %v1142
      %v1193 = vpack.c.b16 %v1145, %v1144
      %v1194 = vpack.c.b16 %v1147, %v1146
      %v1195 = vpack.c.b16 %v1149, %v1148
      %v1196 = vpack.c.b16 %v1151, %v1150
      %v1197 = vpack.c.b16 %v1153, %v1152
      %v1198 = vpack.c.b16 %v1155, %v1154
      %v1199 = vpack.c.b16 %v1157, %v1156
      %v1200 = vpack.c.b16 %v1159, %v1158
      %v1201 = vpack.c.b16 %v1161, %v1160
      %v1202 = vpack.c.b16 %v1163, %v1162
      %v1203 = vpack.c.b16 %v1165, %v1164
      %v1204 = vpack.c.b16 %v1167, %v1166
      %v1205 = vpack.c.b16 %v1169, %v1168
      %v1206 = vpack.c.b16 %v1171, %v1170
      %v1207 = vpack.c.b16 %v1173, %v1172
      %v1208 = vpack.c.b16 %v1175, %v1174
      %v1209 = vpack.c.b16 %v1177, %v1176
      %1242 = vmatprep.subr.bf16.mxu0 0
      %1243 = vmatpush1.bf16.msra.mxu0 %v1185
      %1244 = vmatprep.subr.bf16.mxu0 0
      %1245 = vmatpush1.bf16.msra.mxu0 %v1184
      %1246 = vmatprep.subr.bf16.mxu0 0
      %1247 = vmatpush1.bf16.msra.mxu0 %v1183
      %1248 = vmatprep.subr.bf16.mxu0 0
      %1249 = vmatpush1.bf16.msra.mxu0 %v1182
      %1250 = vmatprep.subr.bf16.mxu0 0
      %1251 = vmatpush1.bf16.msra.mxu0 %v1181
      %1252 = vmatprep.subr.bf16.mxu0 0
      %1253 = vmatpush1.bf16.msra.mxu0 %v1180
      %1254 = vmatprep.subr.bf16.mxu0 0
      %1255 = vmatpush1.bf16.msra.mxu0 %v1179
      %1256 = vmatprep.subr.bf16.mxu0 0
      %1257 = vmatpush1.bf16.msra.mxu0 %v1178
      %1258 = vmatprep.subr.bf16.mxu0 0
      %1259 = vmatpush2.bf16.msra.mxu0 %v1193
      %1260 = vmatprep.subr.bf16.mxu0 0
      %1261 = vmatpush2.bf16.msra.mxu0 %v1192
      %1262 = vmatprep.subr.bf16.mxu0 0
      %1263 = vmatpush2.bf16.msra.mxu0 %v1191
      %1264 = vmatprep.subr.bf16.mxu0 0
      %1265 = vmatpush2.bf16.msra.mxu0 %v1190
      %1266 = vmatprep.subr.bf16.mxu0 0
      %1267 = vmatpush2.bf16.msra.mxu0 %v1189
      %1268 = vmatprep.subr.bf16.mxu0 0
      %1269 = vmatpush2.bf16.msra.mxu0 %v1188
      %1270 = vmatprep.subr.bf16.mxu0 0
      %1271 = vmatpush2.bf16.msra.mxu0 %v1187
      %1272 = vmatprep.subr.bf16.mxu0 0
      %1273 = vmatpush2.bf16.msra.mxu0 %v1186
      %1274 = vmatprep.mubr.bf16.mxu0 %v1043
      %1275 = vmatmul.mubr.bf16.gmra.mxu0 %v1042
      %v1276 = vpop.f32.mrf.mxu0
      %v1277 = vadd.f32 0.0, %v1276
      %v1278 = vpop.f32.mrf.mxu0
      %v1279 = vpop.f32.mrf.mxu0
      %v1280 = vpop.f32.mrf.mxu0
      %1281 = vdwg.mxu0
      %1282 = vmatprep.subr.bf16.mxu0 0
      %1283 = vmatpush1.bf16.msra.mxu0 %v1201
      %1284 = vmatprep.subr.bf16.mxu0 0
      %1285 = vmatpush1.bf16.msra.mxu0 %v1200
      %1286 = vmatprep.subr.bf16.mxu0 0
      %1287 = vmatpush1.bf16.msra.mxu0 %v1199
      %1288 = vmatprep.subr.bf16.mxu0 0
      %1289 = vmatpush1.bf16.msra.mxu0 %v1198
      %1290 = vmatprep.subr.bf16.mxu0 0
      %1291 = vmatpush1.bf16.msra.mxu0 %v1197
      %1292 = vmatprep.subr.bf16.mxu0 0
      %1293 = vmatpush1.bf16.msra.mxu0 %v1196
      %1294 = vmatprep.subr.bf16.mxu0 0
      %1295 = vmatpush1.bf16.msra.mxu0 %v1195
      %1296 = vmatprep.subr.bf16.mxu0 0
      %1297 = vmatpush1.bf16.msra.mxu0 %v1194
      %1298 = vmatprep.subr.bf16.mxu0 0
      %1299 = vmatpush2.bf16.msra.mxu0 %v1209
      %1300 = vmatprep.subr.bf16.mxu0 0
      %1301 = vmatpush2.bf16.msra.mxu0 %v1208
      %1302 = vmatprep.subr.bf16.mxu0 0
      %1303 = vmatpush2.bf16.msra.mxu0 %v1207
      %1304 = vmatprep.subr.bf16.mxu0 0
      %1305 = vmatpush2.bf16.msra.mxu0 %v1206
      %1306 = vmatprep.subr.bf16.mxu0 0
      %1307 = vmatpush2.bf16.msra.mxu0 %v1205
      %1308 = vmatprep.subr.bf16.mxu0 0
      %1309 = vmatpush2.bf16.msra.mxu0 %v1204
      %1310 = vmatprep.subr.bf16.mxu0 0
      %1311 = vmatpush2.bf16.msra.mxu0 %v1203
      %1312 = vmatprep.subr.bf16.mxu0 0
      %1313 = vmatpush2.bf16.msra.mxu0 %v1202
      %1314 = vmatprep.mubr.bf16.mxu0 %v1045
      %1315 = vmatmul.mubr.bf16.gmra.mxu0 %v1044
      %v1316 = vpop.f32.mrf.mxu0
      %v1317 = vadd.f32 %v1277, %v1316
      %v1318 = vpop.f32.mrf.mxu0
      %v1319 = vpop.f32.mrf.mxu0
      %v1320 = vpop.f32.mrf.mxu0
      %1321 = vdwg.mxu0
      %v1322 = vadd.f32 %v972, %v1317
      %s1323 = sadd.s32 %s21, 1
      %s1324 = smul.u32 %s1323, 4
      %s1325 = smul.addr %s1324, 2
      %s1326 = scalar_lea.vmem %s236, %s1325
      %v1327 = vld [vmem:[%s1326] sm:$0xff]
      %s1328 = scalar_lea.vmem %s1, 768
      %v1329 = vld [vmem:[%s1328] sm:$0xf]
      %v1330 = vld [vmem:[%s1328 + $0x4] sm:$0xf]
      %v1331 = vld [vmem:[%s1328 + $0x8] sm:$0xf]
      %v1332 = vld [vmem:[%s1328 + $0xc] sm:$0xf]
      %v1333 = vld [vmem:[%s1328 + $0x10] sm:$0xf]
      %v1334 = vld [vmem:[%s1328 + $0x14] sm:$0xf]
      %v1335 = vld [vmem:[%s1328 + $0x18] sm:$0xf]
      %v1336 = vld [vmem:[%s1328 + $0x1c] sm:$0xf]
      %v1337 = vld [vmem:[%s1328 + $0x20] sm:$0xf]
      %v1338 = vld [vmem:[%s1328 + $0x24] sm:$0xf]
      %v1339 = vld [vmem:[%s1328 + $0x28] sm:$0xf]
      %v1340 = vld [vmem:[%s1328 + $0x2c] sm:$0xf]
      %v1341 = vld [vmem:[%s1328 + $0x30] sm:$0xf]
      %v1342 = vld [vmem:[%s1328 + $0x34] sm:$0xf]
      %v1343 = vld [vmem:[%s1328 + $0x38] sm:$0xf]
      %v1344 = vld [vmem:[%s1328 + $0x3c] sm:$0xf]
      %v1345 = vld [vmem:[%s1328 + $0x40] sm:$0xf]
      %v1346 = vld [vmem:[%s1328 + $0x44] sm:$0xf]
      %v1347 = vld [vmem:[%s1328 + $0x48] sm:$0xf]
      %v1348 = vld [vmem:[%s1328 + $0x4c] sm:$0xf]
      %v1349 = vld [vmem:[%s1328 + $0x50] sm:$0xf]
      %v1350 = vld [vmem:[%s1328 + $0x54] sm:$0xf]
      %v1351 = vld [vmem:[%s1328 + $0x58] sm:$0xf]
      %v1352 = vld [vmem:[%s1328 + $0x5c] sm:$0xf]
      %v1353 = vld [vmem:[%s1328 + $0x60] sm:$0xf]
      %v1354 = vld [vmem:[%s1328 + $0x64] sm:$0xf]
      %v1355 = vld [vmem:[%s1328 + $0x68] sm:$0xf]
      %v1356 = vld [vmem:[%s1328 + $0x6c] sm:$0xf]
      %v1357 = vld [vmem:[%s1328 + $0x70] sm:$0xf]
      %v1358 = vld [vmem:[%s1328 + $0x74] sm:$0xf]
      %v1359 = vld [vmem:[%s1328 + $0x78] sm:$0xf]
      %v1360 = vld [vmem:[%s1328 + $0x7c] sm:$0xf]
      %v1361 = vld [vmem:[%s1328 + $0x80] sm:$0xf]
      %v1362 = vld [vmem:[%s1328 + $0x84] sm:$0xf]
      %v1363 = vld [vmem:[%s1328 + $0x88] sm:$0xf]
      %v1364 = vld [vmem:[%s1328 + $0x8c] sm:$0xf]
      %v1365 = vld [vmem:[%s1328 + $0x90] sm:$0xf]
      %v1366 = vld [vmem:[%s1328 + $0x94] sm:$0xf]
      %v1367 = vld [vmem:[%s1328 + $0x98] sm:$0xf]
      %v1368 = vld [vmem:[%s1328 + $0x9c] sm:$0xf]
      %v1369 = vld [vmem:[%s1328 + $0xa0] sm:$0xf]
      %v1370 = vld [vmem:[%s1328 + $0xa4] sm:$0xf]
      %v1371 = vld [vmem:[%s1328 + $0xa8] sm:$0xf]
      %v1372 = vld [vmem:[%s1328 + $0xac] sm:$0xf]
      %v1373 = vld [vmem:[%s1328 + $0xb0] sm:$0xf]
      %v1374 = vld [vmem:[%s1328 + $0xb4] sm:$0xf]
      %v1375 = vld [vmem:[%s1328 + $0xb8] sm:$0xf]
      %v1376 = vld [vmem:[%s1328 + $0xbc] sm:$0xf]
      %v1377 = vld [vmem:[%s1328 + $0xc0] sm:$0xf]
      %v1378 = vld [vmem:[%s1328 + $0xc4] sm:$0xf]
      %v1379 = vld [vmem:[%s1328 + $0xc8] sm:$0xf]
      %v1380 = vld [vmem:[%s1328 + $0xcc] sm:$0xf]
      %v1381 = vld [vmem:[%s1328 + $0xd0] sm:$0xf]
      %v1382 = vld [vmem:[%s1328 + $0xd4] sm:$0xf]
      %v1383 = vld [vmem:[%s1328 + $0xd8] sm:$0xf]
      %v1384 = vld [vmem:[%s1328 + $0xdc] sm:$0xf]
      %v1385 = vld [vmem:[%s1328 + $0xe0] sm:$0xf]
      %v1386 = vld [vmem:[%s1328 + $0xe4] sm:$0xf]
      %v1387 = vld [vmem:[%s1328 + $0xe8] sm:$0xf]
      %v1388 = vld [vmem:[%s1328 + $0xec] sm:$0xf]
      %v1389 = vld [vmem:[%s1328 + $0xf0] sm:$0xf]
      %v1390 = vld [vmem:[%s1328 + $0xf4] sm:$0xf]
      %v1391 = vld [vmem:[%s1328 + $0xf8] sm:$0xf]
      %v1392 = vld [vmem:[%s1328 + $0xfc] sm:$0xf]
      %v1394 = vcombine.high %v1327, %v1327
      %v1396 = vunpack.c.l.s4 1983009808
      %v1397 = vunpack.c.0.s8 %v1396
      %v1398 = vlaneseq
      %v1399 = vshrl.u32 %v1398, 7
      %v1400 = vsub.s32 %v1397, %v1399
      %v1401 = vrot.slane %v1327, %v1400
      %v1403 = vunpack.c.l.s4 1983009808
      %v1404 = vunpack.c.0.s8 %v1403
      %v1405 = vlaneseq
      %v1406 = vshrl.u32 %v1405, 7
      %v1407 = vsub.s32 %v1404, %v1406
      %v1408 = vrot.slane %v1394, %v1407
      %v1409 = vcombine.high %v1401, %v1401
      %v1410 = vcombine.high %v1408, %v1408
      %v1479 = vunpack.c.l.b16 %v1329
      %v1480 = vunpack.c.l.b16 %v1330
      %v1481 = vunpack.c.l.b16 %v1331
      %v1482 = vunpack.c.l.b16 %v1332
      %v1483 = vunpack.c.l.b16 %v1333
      %v1484 = vunpack.c.l.b16 %v1334
      %v1485 = vunpack.c.l.b16 %v1335
      %v1486 = vunpack.c.l.b16 %v1336
      %v1487 = vunpack.c.l.b16 %v1337
      %v1488 = vunpack.c.l.b16 %v1338
      %v1489 = vunpack.c.l.b16 %v1339
      %v1490 = vunpack.c.l.b16 %v1340
      %v1491 = vunpack.c.l.b16 %v1341
      %v1492 = vunpack.c.l.b16 %v1342
      %v1493 = vunpack.c.l.b16 %v1343
      %v1494 = vunpack.c.l.b16 %v1344
      %v1495 = vunpack.c.l.b16 %v1345
      %v1496 = vunpack.c.l.b16 %v1346
      %v1497 = vunpack.c.l.b16 %v1347
      %v1498 = vunpack.c.l.b16 %v1348
      %v1499 = vunpack.c.l.b16 %v1349
      %v1500 = vunpack.c.l.b16 %v1350
      %v1501 = vunpack.c.l.b16 %v1351
      %v1502 = vunpack.c.l.b16 %v1352
      %v1503 = vunpack.c.l.b16 %v1353
      %v1504 = vunpack.c.l.b16 %v1354
      %v1505 = vunpack.c.l.b16 %v1355
      %v1506 = vunpack.c.l.b16 %v1356
      %v1507 = vunpack.c.l.b16 %v1357
      %v1508 = vunpack.c.l.b16 %v1358
      %v1509 = vunpack.c.l.b16 %v1359
      %v1510 = vunpack.c.l.b16 %v1360
      %v1511 = vunpack.c.l.b16 %v1361
      %v1512 = vunpack.c.l.b16 %v1362
      %v1513 = vunpack.c.l.b16 %v1363
      %v1514 = vunpack.c.l.b16 %v1364
      %v1515 = vunpack.c.l.b16 %v1365
      %v1516 = vunpack.c.l.b16 %v1366
      %v1517 = vunpack.c.l.b16 %v1367
      %v1518 = vunpack.c.l.b16 %v1368
      %v1519 = vunpack.c.l.b16 %v1369
      %v1520 = vunpack.c.l.b16 %v1370
      %v1521 = vunpack.c.l.b16 %v1371
      %v1522 = vunpack.c.l.b16 %v1372
      %v1523 = vunpack.c.l.b16 %v1373
      %v1524 = vunpack.c.l.b16 %v1374
      %v1525 = vunpack.c.l.b16 %v1375
      %v1526 = vunpack.c.l.b16 %v1376
      %v1527 = vunpack.c.l.b16 %v1377
      %v1528 = vunpack.c.l.b16 %v1378
      %v1529 = vunpack.c.l.b16 %v1379
      %v1530 = vunpack.c.l.b16 %v1380
      %v1531 = vunpack.c.l.b16 %v1381
      %v1532 = vunpack.c.l.b16 %v1382
      %v1533 = vunpack.c.l.b16 %v1383
      %v1534 = vunpack.c.l.b16 %v1384
      %v1535 = vunpack.c.l.b16 %v1385
      %v1536 = vunpack.c.l.b16 %v1386
      %v1537 = vunpack.c.l.b16 %v1387
      %v1538 = vunpack.c.l.b16 %v1388
      %v1539 = vunpack.c.l.b16 %v1389
      %v1540 = vunpack.c.l.b16 %v1390
      %v1541 = vunpack.c.l.b16 %v1391
      %v1542 = vunpack.c.l.b16 %v1392
      %v1543 = vpack.c.b16 %v1480, %v1479
      %v1544 = vpack.c.b16 %v1482, %v1481
      %v1545 = vpack.c.b16 %v1484, %v1483
      %v1546 = vpack.c.b16 %v1486, %v1485
      %v1547 = vpack.c.b16 %v1488, %v1487
      %v1548 = vpack.c.b16 %v1490, %v1489
      %v1549 = vpack.c.b16 %v1492, %v1491
      %v1550 = vpack.c.b16 %v1494, %v1493
      %v1551 = vpack.c.b16 %v1496, %v1495
      %v1552 = vpack.c.b16 %v1498, %v1497
      %v1553 = vpack.c.b16 %v1500, %v1499
      %v1554 = vpack.c.b16 %v1502, %v1501
      %v1555 = vpack.c.b16 %v1504, %v1503
      %v1556 = vpack.c.b16 %v1506, %v1505
      %v1557 = vpack.c.b16 %v1508, %v1507
      %v1558 = vpack.c.b16 %v1510, %v1509
      %v1559 = vpack.c.b16 %v1512, %v1511
      %v1560 = vpack.c.b16 %v1514, %v1513
      %v1561 = vpack.c.b16 %v1516, %v1515
      %v1562 = vpack.c.b16 %v1518, %v1517
      %v1563 = vpack.c.b16 %v1520, %v1519
      %v1564 = vpack.c.b16 %v1522, %v1521
      %v1565 = vpack.c.b16 %v1524, %v1523
      %v1566 = vpack.c.b16 %v1526, %v1525
      %v1567 = vpack.c.b16 %v1528, %v1527
      %v1568 = vpack.c.b16 %v1530, %v1529
      %v1569 = vpack.c.b16 %v1532, %v1531
      %v1570 = vpack.c.b16 %v1534, %v1533
      %v1571 = vpack.c.b16 %v1536, %v1535
      %v1572 = vpack.c.b16 %v1538, %v1537
      %v1573 = vpack.c.b16 %v1540, %v1539
      %v1574 = vpack.c.b16 %v1542, %v1541
      %1607 = vmatprep.subr.bf16.mxu0 0
      %1608 = vmatpush1.bf16.msra.mxu0 %v1550
      %1609 = vmatprep.subr.bf16.mxu0 0
      %1610 = vmatpush1.bf16.msra.mxu0 %v1549
      %1611 = vmatprep.subr.bf16.mxu0 0
      %1612 = vmatpush1.bf16.msra.mxu0 %v1548
      %1613 = vmatprep.subr.bf16.mxu0 0
      %1614 = vmatpush1.bf16.msra.mxu0 %v1547
      %1615 = vmatprep.subr.bf16.mxu0 0
      %1616 = vmatpush1.bf16.msra.mxu0 %v1546
      %1617 = vmatprep.subr.bf16.mxu0 0
      %1618 = vmatpush1.bf16.msra.mxu0 %v1545
      %1619 = vmatprep.subr.bf16.mxu0 0
      %1620 = vmatpush1.bf16.msra.mxu0 %v1544
      %1621 = vmatprep.subr.bf16.mxu0 0
      %1622 = vmatpush1.bf16.msra.mxu0 %v1543
      %1623 = vmatprep.subr.bf16.mxu0 0
      %1624 = vmatpush2.bf16.msra.mxu0 %v1558
      %1625 = vmatprep.subr.bf16.mxu0 0
      %1626 = vmatpush2.bf16.msra.mxu0 %v1557
      %1627 = vmatprep.subr.bf16.mxu0 0
      %1628 = vmatpush2.bf16.msra.mxu0 %v1556
      %1629 = vmatprep.subr.bf16.mxu0 0
      %1630 = vmatpush2.bf16.msra.mxu0 %v1555
      %1631 = vmatprep.subr.bf16.mxu0 0
      %1632 = vmatpush2.bf16.msra.mxu0 %v1554
      %1633 = vmatprep.subr.bf16.mxu0 0
      %1634 = vmatpush2.bf16.msra.mxu0 %v1553
      %1635 = vmatprep.subr.bf16.mxu0 0
      %1636 = vmatpush2.bf16.msra.mxu0 %v1552
      %1637 = vmatprep.subr.bf16.mxu0 0
      %1638 = vmatpush2.bf16.msra.mxu0 %v1551
      %1639 = vmatprep.mubr.bf16.mxu0 %v1409
      %1640 = vmatmul.mubr.bf16.gmra.mxu0 %v1401
      %v1641 = vpop.f32.mrf.mxu0
      %v1642 = vadd.f32 0.0, %v1641
      %v1643 = vpop.f32.mrf.mxu0
      %v1644 = vpop.f32.mrf.mxu0
      %v1645 = vpop.f32.mrf.mxu0
      %1646 = vdwg.mxu0
      %1647 = vmatprep.subr.bf16.mxu0 0
      %1648 = vmatpush1.bf16.msra.mxu0 %v1566
      %1649 = vmatprep.subr.bf16.mxu0 0
      %1650 = vmatpush1.bf16.msra.mxu0 %v1565
      %1651 = vmatprep.subr.bf16.mxu0 0
      %1652 = vmatpush1.bf16.msra.mxu0 %v1564
      %1653 = vmatprep.subr.bf16.mxu0 0
      %1654 = vmatpush1.bf16.msra.mxu0 %v1563
      %1655 = vmatprep.subr.bf16.mxu0 0
      %1656 = vmatpush1.bf16.msra.mxu0 %v1562
      %1657 = vmatprep.subr.bf16.mxu0 0
      %1658 = vmatpush1.bf16.msra.mxu0 %v1561
      %1659 = vmatprep.subr.bf16.mxu0 0
      %1660 = vmatpush1.bf16.msra.mxu0 %v1560
      %1661 = vmatprep.subr.bf16.mxu0 0
      %1662 = vmatpush1.bf16.msra.mxu0 %v1559
      %1663 = vmatprep.subr.bf16.mxu0 0
      %1664 = vmatpush2.bf16.msra.mxu0 %v1574
      %1665 = vmatprep.subr.bf16.mxu0 0
      %1666 = vmatpush2.bf16.msra.mxu0 %v1573
      %1667 = vmatprep.subr.bf16.mxu0 0
      %1668 = vmatpush2.bf16.msra.mxu0 %v1572
      %1669 = vmatprep.subr.bf16.mxu0 0
      %1670 = vmatpush2.bf16.msra.mxu0 %v1571
      %1671 = vmatprep.subr.bf16.mxu0 0
      %1672 = vmatpush2.bf16.msra.mxu0 %v1570
      %1673 = vmatprep.subr.bf16.mxu0 0
      %1674 = vmatpush2.bf16.msra.mxu0 %v1569
      %1675 = vmatprep.subr.bf16.mxu0 0
      %1676 = vmatpush2.bf16.msra.mxu0 %v1568
      %1677 = vmatprep.subr.bf16.mxu0 0
      %1678 = vmatpush2.bf16.msra.mxu0 %v1567
      %1679 = vmatprep.mubr.bf16.mxu0 %v1410
      %1680 = vmatmul.mubr.bf16.gmra.mxu0 %v1408
      %v1681 = vpop.f32.mrf.mxu0
      %v1682 = vadd.f32 %v1642, %v1681
      %v1683 = vpop.f32.mrf.mxu0
      %v1684 = vpop.f32.mrf.mxu0
      %v1685 = vpop.f32.mrf.mxu0
      %1686 = vdwg.mxu0
      %v1687 = vadd.f32 %v1322, %v1682
      %s1688 = scalar_lea.vmem %s1, 1024
      %v1689 = vld [vmem:[%s1688] sm:$0xf]
      %v1690 = vld [vmem:[%s1688 + $0x4] sm:$0xf]
      %v1691 = vld [vmem:[%s1688 + $0x8] sm:$0xf]
      %v1692 = vld [vmem:[%s1688 + $0xc] sm:$0xf]
      %v1693 = vld [vmem:[%s1688 + $0x10] sm:$0xf]
      %v1694 = vld [vmem:[%s1688 + $0x14] sm:$0xf]
      %v1695 = vld [vmem:[%s1688 + $0x18] sm:$0xf]
      %v1696 = vld [vmem:[%s1688 + $0x1c] sm:$0xf]
      %v1697 = vld [vmem:[%s1688 + $0x20] sm:$0xf]
      %v1698 = vld [vmem:[%s1688 + $0x24] sm:$0xf]
      %v1699 = vld [vmem:[%s1688 + $0x28] sm:$0xf]
      %v1700 = vld [vmem:[%s1688 + $0x2c] sm:$0xf]
      %v1701 = vld [vmem:[%s1688 + $0x30] sm:$0xf]
      %v1702 = vld [vmem:[%s1688 + $0x34] sm:$0xf]
      %v1703 = vld [vmem:[%s1688 + $0x38] sm:$0xf]
      %v1704 = vld [vmem:[%s1688 + $0x3c] sm:$0xf]
      %v1705 = vld [vmem:[%s1688 + $0x40] sm:$0xf]
      %v1706 = vld [vmem:[%s1688 + $0x44] sm:$0xf]
      %v1707 = vld [vmem:[%s1688 + $0x48] sm:$0xf]
      %v1708 = vld [vmem:[%s1688 + $0x4c] sm:$0xf]
      %v1709 = vld [vmem:[%s1688 + $0x50] sm:$0xf]
      %v1710 = vld [vmem:[%s1688 + $0x54] sm:$0xf]
      %v1711 = vld [vmem:[%s1688 + $0x58] sm:$0xf]
      %v1712 = vld [vmem:[%s1688 + $0x5c] sm:$0xf]
      %v1713 = vld [vmem:[%s1688 + $0x60] sm:$0xf]
      %v1714 = vld [vmem:[%s1688 + $0x64] sm:$0xf]
      %v1715 = vld [vmem:[%s1688 + $0x68] sm:$0xf]
      %v1716 = vld [vmem:[%s1688 + $0x6c] sm:$0xf]
      %v1717 = vld [vmem:[%s1688 + $0x70] sm:$0xf]
      %v1718 = vld [vmem:[%s1688 + $0x74] sm:$0xf]
      %v1719 = vld [vmem:[%s1688 + $0x78] sm:$0xf]
      %v1720 = vld [vmem:[%s1688 + $0x7c] sm:$0xf]
      %v1721 = vld [vmem:[%s1688 + $0x80] sm:$0xf]
      %v1722 = vld [vmem:[%s1688 + $0x84] sm:$0xf]
      %v1723 = vld [vmem:[%s1688 + $0x88] sm:$0xf]
      %v1724 = vld [vmem:[%s1688 + $0x8c] sm:$0xf]
      %v1725 = vld [vmem:[%s1688 + $0x90] sm:$0xf]
      %v1726 = vld [vmem:[%s1688 + $0x94] sm:$0xf]
      %v1727 = vld [vmem:[%s1688 + $0x98] sm:$0xf]
      %v1728 = vld [vmem:[%s1688 + $0x9c] sm:$0xf]
      %v1729 = vld [vmem:[%s1688 + $0xa0] sm:$0xf]
      %v1730 = vld [vmem:[%s1688 + $0xa4] sm:$0xf]
      %v1731 = vld [vmem:[%s1688 + $0xa8] sm:$0xf]
      %v1732 = vld [vmem:[%s1688 + $0xac] sm:$0xf]
      %v1733 = vld [vmem:[%s1688 + $0xb0] sm:$0xf]
      %v1734 = vld [vmem:[%s1688 + $0xb4] sm:$0xf]
      %v1735 = vld [vmem:[%s1688 + $0xb8] sm:$0xf]
      %v1736 = vld [vmem:[%s1688 + $0xbc] sm:$0xf]
      %v1737 = vld [vmem:[%s1688 + $0xc0] sm:$0xf]
      %v1738 = vld [vmem:[%s1688 + $0xc4] sm:$0xf]
      %v1739 = vld [vmem:[%s1688 + $0xc8] sm:$0xf]
      %v1740 = vld [vmem:[%s1688 + $0xcc] sm:$0xf]
      %v1741 = vld [vmem:[%s1688 + $0xd0] sm:$0xf]
      %v1742 = vld [vmem:[%s1688 + $0xd4] sm:$0xf]
      %v1743 = vld [vmem:[%s1688 + $0xd8] sm:$0xf]
      %v1744 = vld [vmem:[%s1688 + $0xdc] sm:$0xf]
      %v1745 = vld [vmem:[%s1688 + $0xe0] sm:$0xf]
      %v1746 = vld [vmem:[%s1688 + $0xe4] sm:$0xf]
      %v1747 = vld [vmem:[%s1688 + $0xe8] sm:$0xf]
      %v1748 = vld [vmem:[%s1688 + $0xec] sm:$0xf]
      %v1749 = vld [vmem:[%s1688 + $0xf0] sm:$0xf]
      %v1750 = vld [vmem:[%s1688 + $0xf4] sm:$0xf]
      %v1751 = vld [vmem:[%s1688 + $0xf8] sm:$0xf]
      %v1752 = vld [vmem:[%s1688 + $0xfc] sm:$0xf]
      %v1754 = vshrl.u32 %v1401, 16
      %v1756 = vshll.u32 %v1401, 16
      %v1758 = vrot.slane %v1756, 1
      %v1759 = vor.u32 %v1754, %v1758
      %v1761 = vshrl.u32 %v1409, 16
      %v1763 = vshll.u32 %v1409, 16
      %v1765 = vrot.slane %v1763, 1
      %v1766 = vor.u32 %v1761, %v1765
      %v1768 = vshrl.u32 %v1408, 16
      %v1770 = vshll.u32 %v1408, 16
      %v1772 = vrot.slane %v1770, 1
      %v1773 = vor.u32 %v1768, %v1772
      %v1775 = vshrl.u32 %v1410, 16
      %v1777 = vshll.u32 %v1410, 16
      %v1779 = vrot.slane %v1777, 1
      %v1780 = vor.u32 %v1775, %v1779
      %v1849 = vunpack.c.l.b16 %v1689
      %v1850 = vunpack.c.l.b16 %v1690
      %v1851 = vunpack.c.l.b16 %v1691
      %v1852 = vunpack.c.l.b16 %v1692
      %v1853 = vunpack.c.l.b16 %v1693
      %v1854 = vunpack.c.l.b16 %v1694
      %v1855 = vunpack.c.l.b16 %v1695
      %v1856 = vunpack.c.l.b16 %v1696
      %v1857 = vunpack.c.l.b16 %v1697
      %v1858 = vunpack.c.l.b16 %v1698
      %v1859 = vunpack.c.l.b16 %v1699
      %v1860 = vunpack.c.l.b16 %v1700
      %v1861 = vunpack.c.l.b16 %v1701
      %v1862 = vunpack.c.l.b16 %v1702
      %v1863 = vunpack.c.l.b16 %v1703
      %v1864 = vunpack.c.l.b16 %v1704
      %v1865 = vunpack.c.l.b16 %v1705
      %v1866 = vunpack.c.l.b16 %v1706
      %v1867 = vunpack.c.l.b16 %v1707
      %v1868 = vunpack.c.l.b16 %v1708
      %v1869 = vunpack.c.l.b16 %v1709
      %v1870 = vunpack.c.l.b16 %v1710
      %v1871 = vunpack.c.l.b16 %v1711
      %v1872 = vunpack.c.l.b16 %v1712
      %v1873 = vunpack.c.l.b16 %v1713
      %v1874 = vunpack.c.l.b16 %v1714
      %v1875 = vunpack.c.l.b16 %v1715
      %v1876 = vunpack.c.l.b16 %v1716
      %v1877 = vunpack.c.l.b16 %v1717
      %v1878 = vunpack.c.l.b16 %v1718
      %v1879 = vunpack.c.l.b16 %v1719
      %v1880 = vunpack.c.l.b16 %v1720
      %v1881 = vunpack.c.l.b16 %v1721
      %v1882 = vunpack.c.l.b16 %v1722
      %v1883 = vunpack.c.l.b16 %v1723
      %v1884 = vunpack.c.l.b16 %v1724
      %v1885 = vunpack.c.l.b16 %v1725
      %v1886 = vunpack.c.l.b16 %v1726
      %v1887 = vunpack.c.l.b16 %v1727
      %v1888 = vunpack.c.l.b16 %v1728
      %v1889 = vunpack.c.l.b16 %v1729
      %v1890 = vunpack.c.l.b16 %v1730
      %v1891 = vunpack.c.l.b16 %v1731
      %v1892 = vunpack.c.l.b16 %v1732
      %v1893 = vunpack.c.l.b16 %v1733
      %v1894 = vunpack.c.l.b16 %v1734
      %v1895 = vunpack.c.l.b16 %v1735
      %v1896 = vunpack.c.l.b16 %v1736
      %v1897 = vunpack.c.l.b16 %v1737
      %v1898 = vunpack.c.l.b16 %v1738
      %v1899 = vunpack.c.l.b16 %v1739
      %v1900 = vunpack.c.l.b16 %v1740
      %v1901 = vunpack.c.l.b16 %v1741
      %v1902 = vunpack.c.l.b16 %v1742
      %v1903 = vunpack.c.l.b16 %v1743
      %v1904 = vunpack.c.l.b16 %v1744
      %v1905 = vunpack.c.l.b16 %v1745
      %v1906 = vunpack.c.l.b16 %v1746
      %v1907 = vunpack.c.l.b16 %v1747
      %v1908 = vunpack.c.l.b16 %v1748
      %v1909 = vunpack.c.l.b16 %v1749
      %v1910 = vunpack.c.l.b16 %v1750
      %v1911 = vunpack.c.l.b16 %v1751
      %v1912 = vunpack.c.l.b16 %v1752
      %v1913 = vpack.c.b16 %v1850, %v1849
      %v1914 = vpack.c.b16 %v1852, %v1851
      %v1915 = vpack.c.b16 %v1854, %v1853
      %v1916 = vpack.c.b16 %v1856, %v1855
      %v1917 = vpack.c.b16 %v1858, %v1857
      %v1918 = vpack.c.b16 %v1860, %v1859
      %v1919 = vpack.c.b16 %v1862, %v1861
      %v1920 = vpack.c.b16 %v1864, %v1863
      %v1921 = vpack.c.b16 %v1866, %v1865
      %v1922 = vpack.c.b16 %v1868, %v1867
      %v1923 = vpack.c.b16 %v1870, %v1869
      %v1924 = vpack.c.b16 %v1872, %v1871
      %v1925 = vpack.c.b16 %v1874, %v1873
      %v1926 = vpack.c.b16 %v1876, %v1875
      %v1927 = vpack.c.b16 %v1878, %v1877
      %v1928 = vpack.c.b16 %v1880, %v1879
      %v1929 = vpack.c.b16 %v1882, %v1881
      %v1930 = vpack.c.b16 %v1884, %v1883
      %v1931 = vpack.c.b16 %v1886, %v1885
      %v1932 = vpack.c.b16 %v1888, %v1887
      %v1933 = vpack.c.b16 %v1890, %v1889
      %v1934 = vpack.c.b16 %v1892, %v1891
      %v1935 = vpack.c.b16 %v1894, %v1893
      %v1936 = vpack.c.b16 %v1896, %v1895
      %v1937 = vpack.c.b16 %v1898, %v1897
      %v1938 = vpack.c.b16 %v1900, %v1899
      %v1939 = vpack.c.b16 %v1902, %v1901
      %v1940 = vpack.c.b16 %v1904, %v1903
      %v1941 = vpack.c.b16 %v1906, %v1905
      %v1942 = vpack.c.b16 %v1908, %v1907
      %v1943 = vpack.c.b16 %v1910, %v1909
      %v1944 = vpack.c.b16 %v1912, %v1911
      %1977 = vmatprep.subr.bf16.mxu0 0
      %1978 = vmatpush1.bf16.msra.mxu0 %v1920
      %1979 = vmatprep.subr.bf16.mxu0 0
      %1980 = vmatpush1.bf16.msra.mxu0 %v1919
      %1981 = vmatprep.subr.bf16.mxu0 0
      %1982 = vmatpush1.bf16.msra.mxu0 %v1918
      %1983 = vmatprep.subr.bf16.mxu0 0
      %1984 = vmatpush1.bf16.msra.mxu0 %v1917
      %1985 = vmatprep.subr.bf16.mxu0 0
      %1986 = vmatpush1.bf16.msra.mxu0 %v1916
      %1987 = vmatprep.subr.bf16.mxu0 0
      %1988 = vmatpush1.bf16.msra.mxu0 %v1915
      %1989 = vmatprep.subr.bf16.mxu0 0
      %1990 = vmatpush1.bf16.msra.mxu0 %v1914
      %1991 = vmatprep.subr.bf16.mxu0 0
      %1992 = vmatpush1.bf16.msra.mxu0 %v1913
      %1993 = vmatprep.subr.bf16.mxu0 0
      %1994 = vmatpush2.bf16.msra.mxu0 %v1928
      %1995 = vmatprep.subr.bf16.mxu0 0
      %1996 = vmatpush2.bf16.msra.mxu0 %v1927
      %1997 = vmatprep.subr.bf16.mxu0 0
      %1998 = vmatpush2.bf16.msra.mxu0 %v1926
      %1999 = vmatprep.subr.bf16.mxu0 0
      %2000 = vmatpush2.bf16.msra.mxu0 %v1925
      %2001 = vmatprep.subr.bf16.mxu0 0
      %2002 = vmatpush2.bf16.msra.mxu0 %v1924
      %2003 = vmatprep.subr.bf16.mxu0 0
      %2004 = vmatpush2.bf16.msra.mxu0 %v1923
      %2005 = vmatprep.subr.bf16.mxu0 0
      %2006 = vmatpush2.bf16.msra.mxu0 %v1922
      %2007 = vmatprep.subr.bf16.mxu0 0
      %2008 = vmatpush2.bf16.msra.mxu0 %v1921
      %2009 = vmatprep.mubr.bf16.mxu0 %v1766
      %2010 = vmatmul.mubr.bf16.gmra.mxu0 %v1759
      %v2011 = vpop.f32.mrf.mxu0
      %v2012 = vadd.f32 0.0, %v2011
      %v2013 = vpop.f32.mrf.mxu0
      %v2014 = vpop.f32.mrf.mxu0
      %v2015 = vpop.f32.mrf.mxu0
      %2016 = vdwg.mxu0
      %2017 = vmatprep.subr.bf16.mxu0 0
      %2018 = vmatpush1.bf16.msra.mxu0 %v1936
      %2019 = vmatprep.subr.bf16.mxu0 0
      %2020 = vmatpush1.bf16.msra.mxu0 %v1935
      %2021 = vmatprep.subr.bf16.mxu0 0
      %2022 = vmatpush1.bf16.msra.mxu0 %v1934
      %2023 = vmatprep.subr.bf16.mxu0 0
      %2024 = vmatpush1.bf16.msra.mxu0 %v1933
      %2025 = vmatprep.subr.bf16.mxu0 0
      %2026 = vmatpush1.bf16.msra.mxu0 %v1932
      %2027 = vmatprep.subr.bf16.mxu0 0
      %2028 = vmatpush1.bf16.msra.mxu0 %v1931
      %2029 = vmatprep.subr.bf16.mxu0 0
      %2030 = vmatpush1.bf16.msra.mxu0 %v1930
      %2031 = vmatprep.subr.bf16.mxu0 0
      %2032 = vmatpush1.bf16.msra.mxu0 %v1929
      %2033 = vmatprep.subr.bf16.mxu0 0
      %2034 = vmatpush2.bf16.msra.mxu0 %v1944
      %2035 = vmatprep.subr.bf16.mxu0 0
      %2036 = vmatpush2.bf16.msra.mxu0 %v1943
      %2037 = vmatprep.subr.bf16.mxu0 0
      %2038 = vmatpush2.bf16.msra.mxu0 %v1942
      %2039 = vmatprep.subr.bf16.mxu0 0
      %2040 = vmatpush2.bf16.msra.mxu0 %v1941
      %2041 = vmatprep.subr.bf16.mxu0 0
      %2042 = vmatpush2.bf16.msra.mxu0 %v1940
      %2043 = vmatprep.subr.bf16.mxu0 0
      %2044 = vmatpush2.bf16.msra.mxu0 %v1939
      %2045 = vmatprep.subr.bf16.mxu0 0
      %2046 = vmatpush2.bf16.msra.mxu0 %v1938
      %2047 = vmatprep.subr.bf16.mxu0 0
      %2048 = vmatpush2.bf16.msra.mxu0 %v1937
      %2049 = vmatprep.mubr.bf16.mxu0 %v1780
      %2050 = vmatmul.mubr.bf16.gmra.mxu0 %v1773
      %v2051 = vpop.f32.mrf.mxu0
      %v2052 = vadd.f32 %v2012, %v2051
      %v2053 = vpop.f32.mrf.mxu0
      %v2054 = vpop.f32.mrf.mxu0
      %v2055 = vpop.f32.mrf.mxu0
      %2056 = vdwg.mxu0
      %v2057 = vadd.f32 %v1687, %v2052
      %s2058 = scalar_lea.vmem %s1, 1280
      %v2059 = vld [vmem:[%s2058] sm:$0xf]
      %v2060 = vld [vmem:[%s2058 + $0x4] sm:$0xf]
      %v2061 = vld [vmem:[%s2058 + $0x8] sm:$0xf]
      %v2062 = vld [vmem:[%s2058 + $0xc] sm:$0xf]
      %v2063 = vld [vmem:[%s2058 + $0x10] sm:$0xf]
      %v2064 = vld [vmem:[%s2058 + $0x14] sm:$0xf]
      %v2065 = vld [vmem:[%s2058 + $0x18] sm:$0xf]
      %v2066 = vld [vmem:[%s2058 + $0x1c] sm:$0xf]
      %v2067 = vld [vmem:[%s2058 + $0x20] sm:$0xf]
      %v2068 = vld [vmem:[%s2058 + $0x24] sm:$0xf]
      %v2069 = vld [vmem:[%s2058 + $0x28] sm:$0xf]
      %v2070 = vld [vmem:[%s2058 + $0x2c] sm:$0xf]
      %v2071 = vld [vmem:[%s2058 + $0x30] sm:$0xf]
      %v2072 = vld [vmem:[%s2058 + $0x34] sm:$0xf]
      %v2073 = vld [vmem:[%s2058 + $0x38] sm:$0xf]
      %v2074 = vld [vmem:[%s2058 + $0x3c] sm:$0xf]
      %v2075 = vld [vmem:[%s2058 + $0x40] sm:$0xf]
      %v2076 = vld [vmem:[%s2058 + $0x44] sm:$0xf]
      %v2077 = vld [vmem:[%s2058 + $0x48] sm:$0xf]
      %v2078 = vld [vmem:[%s2058 + $0x4c] sm:$0xf]
      %v2079 = vld [vmem:[%s2058 + $0x50] sm:$0xf]
      %v2080 = vld [vmem:[%s2058 + $0x54] sm:$0xf]
      %v2081 = vld [vmem:[%s2058 + $0x58] sm:$0xf]
      %v2082 = vld [vmem:[%s2058 + $0x5c] sm:$0xf]
      %v2083 = vld [vmem:[%s2058 + $0x60] sm:$0xf]
      %v2084 = vld [vmem:[%s2058 + $0x64] sm:$0xf]
      %v2085 = vld [vmem:[%s2058 + $0x68] sm:$0xf]
      %v2086 = vld [vmem:[%s2058 + $0x6c] sm:$0xf]
      %v2087 = vld [vmem:[%s2058 + $0x70] sm:$0xf]
      %v2088 = vld [vmem:[%s2058 + $0x74] sm:$0xf]
      %v2089 = vld [vmem:[%s2058 + $0x78] sm:$0xf]
      %v2090 = vld [vmem:[%s2058 + $0x7c] sm:$0xf]
      %v2091 = vld [vmem:[%s2058 + $0x80] sm:$0xf]
      %v2092 = vld [vmem:[%s2058 + $0x84] sm:$0xf]
      %v2093 = vld [vmem:[%s2058 + $0x88] sm:$0xf]
      %v2094 = vld [vmem:[%s2058 + $0x8c] sm:$0xf]
      %v2095 = vld [vmem:[%s2058 + $0x90] sm:$0xf]
      %v2096 = vld [vmem:[%s2058 + $0x94] sm:$0xf]
      %v2097 = vld [vmem:[%s2058 + $0x98] sm:$0xf]
      %v2098 = vld [vmem:[%s2058 + $0x9c] sm:$0xf]
      %v2099 = vld [vmem:[%s2058 + $0xa0] sm:$0xf]
      %v2100 = vld [vmem:[%s2058 + $0xa4] sm:$0xf]
      %v2101 = vld [vmem:[%s2058 + $0xa8] sm:$0xf]
      %v2102 = vld [vmem:[%s2058 + $0xac] sm:$0xf]
      %v2103 = vld [vmem:[%s2058 + $0xb0] sm:$0xf]
      %v2104 = vld [vmem:[%s2058 + $0xb4] sm:$0xf]
      %v2105 = vld [vmem:[%s2058 + $0xb8] sm:$0xf]
      %v2106 = vld [vmem:[%s2058 + $0xbc] sm:$0xf]
      %v2107 = vld [vmem:[%s2058 + $0xc0] sm:$0xf]
      %v2108 = vld [vmem:[%s2058 + $0xc4] sm:$0xf]
      %v2109 = vld [vmem:[%s2058 + $0xc8] sm:$0xf]
      %v2110 = vld [vmem:[%s2058 + $0xcc] sm:$0xf]
      %v2111 = vld [vmem:[%s2058 + $0xd0] sm:$0xf]
      %v2112 = vld [vmem:[%s2058 + $0xd4] sm:$0xf]
      %v2113 = vld [vmem:[%s2058 + $0xd8] sm:$0xf]
      %v2114 = vld [vmem:[%s2058 + $0xdc] sm:$0xf]
      %v2115 = vld [vmem:[%s2058 + $0xe0] sm:$0xf]
      %v2116 = vld [vmem:[%s2058 + $0xe4] sm:$0xf]
      %v2117 = vld [vmem:[%s2058 + $0xe8] sm:$0xf]
      %v2118 = vld [vmem:[%s2058 + $0xec] sm:$0xf]
      %v2119 = vld [vmem:[%s2058 + $0xf0] sm:$0xf]
      %v2120 = vld [vmem:[%s2058 + $0xf4] sm:$0xf]
      %v2121 = vld [vmem:[%s2058 + $0xf8] sm:$0xf]
      %v2122 = vld [vmem:[%s2058 + $0xfc] sm:$0xf]
      %v2123 = vrot.slane %v1401, 1
      %v2124 = vrot.slane %v1409, 1
      %v2125 = vrot.slane %v1408, 1
      %v2126 = vrot.slane %v1410, 1
      %v2195 = vunpack.c.l.b16 %v2059
      %v2196 = vunpack.c.l.b16 %v2060
      %v2197 = vunpack.c.l.b16 %v2061
      %v2198 = vunpack.c.l.b16 %v2062
      %v2199 = vunpack.c.l.b16 %v2063
      %v2200 = vunpack.c.l.b16 %v2064
      %v2201 = vunpack.c.l.b16 %v2065
      %v2202 = vunpack.c.l.b16 %v2066
      %v2203 = vunpack.c.l.b16 %v2067
      %v2204 = vunpack.c.l.b16 %v2068
      %v2205 = vunpack.c.l.b16 %v2069
      %v2206 = vunpack.c.l.b16 %v2070
      %v2207 = vunpack.c.l.b16 %v2071
      %v2208 = vunpack.c.l.b16 %v2072
      %v2209 = vunpack.c.l.b16 %v2073
      %v2210 = vunpack.c.l.b16 %v2074
      %v2211 = vunpack.c.l.b16 %v2075
      %v2212 = vunpack.c.l.b16 %v2076
      %v2213 = vunpack.c.l.b16 %v2077
      %v2214 = vunpack.c.l.b16 %v2078
      %v2215 = vunpack.c.l.b16 %v2079
      %v2216 = vunpack.c.l.b16 %v2080
      %v2217 = vunpack.c.l.b16 %v2081
      %v2218 = vunpack.c.l.b16 %v2082
      %v2219 = vunpack.c.l.b16 %v2083
      %v2220 = vunpack.c.l.b16 %v2084
      %v2221 = vunpack.c.l.b16 %v2085
      %v2222 = vunpack.c.l.b16 %v2086
      %v2223 = vunpack.c.l.b16 %v2087
      %v2224 = vunpack.c.l.b16 %v2088
      %v2225 = vunpack.c.l.b16 %v2089
      %v2226 = vunpack.c.l.b16 %v2090
      %v2227 = vunpack.c.l.b16 %v2091
      %v2228 = vunpack.c.l.b16 %v2092
      %v2229 = vunpack.c.l.b16 %v2093
      %v2230 = vunpack.c.l.b16 %v2094
      %v2231 = vunpack.c.l.b16 %v2095
      %v2232 = vunpack.c.l.b16 %v2096
      %v2233 = vunpack.c.l.b16 %v2097
      %v2234 = vunpack.c.l.b16 %v2098
      %v2235 = vunpack.c.l.b16 %v2099
      %v2236 = vunpack.c.l.b16 %v2100
      %v2237 = vunpack.c.l.b16 %v2101
      %v2238 = vunpack.c.l.b16 %v2102
      %v2239 = vunpack.c.l.b16 %v2103
      %v2240 = vunpack.c.l.b16 %v2104
      %v2241 = vunpack.c.l.b16 %v2105
      %v2242 = vunpack.c.l.b16 %v2106
      %v2243 = vunpack.c.l.b16 %v2107
      %v2244 = vunpack.c.l.b16 %v2108
      %v2245 = vunpack.c.l.b16 %v2109
      %v2246 = vunpack.c.l.b16 %v2110
      %v2247 = vunpack.c.l.b16 %v2111
      %v2248 = vunpack.c.l.b16 %v2112
      %v2249 = vunpack.c.l.b16 %v2113
      %v2250 = vunpack.c.l.b16 %v2114
      %v2251 = vunpack.c.l.b16 %v2115
      %v2252 = vunpack.c.l.b16 %v2116
      %v2253 = vunpack.c.l.b16 %v2117
      %v2254 = vunpack.c.l.b16 %v2118
      %v2255 = vunpack.c.l.b16 %v2119
      %v2256 = vunpack.c.l.b16 %v2120
      %v2257 = vunpack.c.l.b16 %v2121
      %v2258 = vunpack.c.l.b16 %v2122
      %v2259 = vpack.c.b16 %v2196, %v2195
      %v2260 = vpack.c.b16 %v2198, %v2197
      %v2261 = vpack.c.b16 %v2200, %v2199
      %v2262 = vpack.c.b16 %v2202, %v2201
      %v2263 = vpack.c.b16 %v2204, %v2203
      %v2264 = vpack.c.b16 %v2206, %v2205
      %v2265 = vpack.c.b16 %v2208, %v2207
      %v2266 = vpack.c.b16 %v2210, %v2209
      %v2267 = vpack.c.b16 %v2212, %v2211
      %v2268 = vpack.c.b16 %v2214, %v2213
      %v2269 = vpack.c.b16 %v2216, %v2215
      %v2270 = vpack.c.b16 %v2218, %v2217
      %v2271 = vpack.c.b16 %v2220, %v2219
      %v2272 = vpack.c.b16 %v2222, %v2221
      %v2273 = vpack.c.b16 %v2224, %v2223
      %v2274 = vpack.c.b16 %v2226, %v2225
      %v2275 = vpack.c.b16 %v2228, %v2227
      %v2276 = vpack.c.b16 %v2230, %v2229
      %v2277 = vpack.c.b16 %v2232, %v2231
      %v2278 = vpack.c.b16 %v2234, %v2233
      %v2279 = vpack.c.b16 %v2236, %v2235
      %v2280 = vpack.c.b16 %v2238, %v2237
      %v2281 = vpack.c.b16 %v2240, %v2239
      %v2282 = vpack.c.b16 %v2242, %v2241
      %v2283 = vpack.c.b16 %v2244, %v2243
      %v2284 = vpack.c.b16 %v2246, %v2245
      %v2285 = vpack.c.b16 %v2248, %v2247
      %v2286 = vpack.c.b16 %v2250, %v2249
      %v2287 = vpack.c.b16 %v2252, %v2251
      %v2288 = vpack.c.b16 %v2254, %v2253
      %v2289 = vpack.c.b16 %v2256, %v2255
      %v2290 = vpack.c.b16 %v2258, %v2257
      %2323 = vmatprep.subr.bf16.mxu0 0
      %2324 = vmatpush1.bf16.msra.mxu0 %v2266
      %2325 = vmatprep.subr.bf16.mxu0 0
      %2326 = vmatpush1.bf16.msra.mxu0 %v2265
      %2327 = vmatprep.subr.bf16.mxu0 0
      %2328 = vmatpush1.bf16.msra.mxu0 %v2264
      %2329 = vmatprep.subr.bf16.mxu0 0
      %2330 = vmatpush1.bf16.msra.mxu0 %v2263
      %2331 = vmatprep.subr.bf16.mxu0 0
      %2332 = vmatpush1.bf16.msra.mxu0 %v2262
      %2333 = vmatprep.subr.bf16.mxu0 0
      %2334 = vmatpush1.bf16.msra.mxu0 %v2261
      %2335 = vmatprep.subr.bf16.mxu0 0
      %2336 = vmatpush1.bf16.msra.mxu0 %v2260
      %2337 = vmatprep.subr.bf16.mxu0 0
      %2338 = vmatpush1.bf16.msra.mxu0 %v2259
      %2339 = vmatprep.subr.bf16.mxu0 0
      %2340 = vmatpush2.bf16.msra.mxu0 %v2274
      %2341 = vmatprep.subr.bf16.mxu0 0
      %2342 = vmatpush2.bf16.msra.mxu0 %v2273
      %2343 = vmatprep.subr.bf16.mxu0 0
      %2344 = vmatpush2.bf16.msra.mxu0 %v2272
      %2345 = vmatprep.subr.bf16.mxu0 0
      %2346 = vmatpush2.bf16.msra.mxu0 %v2271
      %2347 = vmatprep.subr.bf16.mxu0 0
      %2348 = vmatpush2.bf16.msra.mxu0 %v2270
      %2349 = vmatprep.subr.bf16.mxu0 0
      %2350 = vmatpush2.bf16.msra.mxu0 %v2269
      %2351 = vmatprep.subr.bf16.mxu0 0
      %2352 = vmatpush2.bf16.msra.mxu0 %v2268
      %2353 = vmatprep.subr.bf16.mxu0 0
      %2354 = vmatpush2.bf16.msra.mxu0 %v2267
      %2355 = vmatprep.mubr.bf16.mxu0 %v2124
      %2356 = vmatmul.mubr.bf16.gmra.mxu0 %v2123
      %v2357 = vpop.f32.mrf.mxu0
      %v2358 = vadd.f32 0.0, %v2357
      %v2359 = vpop.f32.mrf.mxu0
      %v2360 = vpop.f32.mrf.mxu0
      %v2361 = vpop.f32.mrf.mxu0
      %2362 = vdwg.mxu0
      %2363 = vmatprep.subr.bf16.mxu0 0
      %2364 = vmatpush1.bf16.msra.mxu0 %v2282
      %2365 = vmatprep.subr.bf16.mxu0 0
      %2366 = vmatpush1.bf16.msra.mxu0 %v2281
      %2367 = vmatprep.subr.bf16.mxu0 0
      %2368 = vmatpush1.bf16.msra.mxu0 %v2280
      %2369 = vmatprep.subr.bf16.mxu0 0
      %2370 = vmatpush1.bf16.msra.mxu0 %v2279
      %2371 = vmatprep.subr.bf16.mxu0 0
      %2372 = vmatpush1.bf16.msra.mxu0 %v2278
      %2373 = vmatprep.subr.bf16.mxu0 0
      %2374 = vmatpush1.bf16.msra.mxu0 %v2277
      %2375 = vmatprep.subr.bf16.mxu0 0
      %2376 = vmatpush1.bf16.msra.mxu0 %v2276
      %2377 = vmatprep.subr.bf16.mxu0 0
      %2378 = vmatpush1.bf16.msra.mxu0 %v2275
      %2379 = vmatprep.subr.bf16.mxu0 0
      %2380 = vmatpush2.bf16.msra.mxu0 %v2290
      %2381 = vmatprep.subr.bf16.mxu0 0
      %2382 = vmatpush2.bf16.msra.mxu0 %v2289
      %2383 = vmatprep.subr.bf16.mxu0 0
      %2384 = vmatpush2.bf16.msra.mxu0 %v2288
      %2385 = vmatprep.subr.bf16.mxu0 0
      %2386 = vmatpush2.bf16.msra.mxu0 %v2287
      %2387 = vmatprep.subr.bf16.mxu0 0
      %2388 = vmatpush2.bf16.msra.mxu0 %v2286
      %2389 = vmatprep.subr.bf16.mxu0 0
      %2390 = vmatpush2.bf16.msra.mxu0 %v2285
      %2391 = vmatprep.subr.bf16.mxu0 0
      %2392 = vmatpush2.bf16.msra.mxu0 %v2284
      %2393 = vmatprep.subr.bf16.mxu0 0
      %2394 = vmatpush2.bf16.msra.mxu0 %v2283
      %2395 = vmatprep.mubr.bf16.mxu0 %v2126
      %2396 = vmatmul.mubr.bf16.gmra.mxu0 %v2125
      %v2397 = vpop.f32.mrf.mxu0
      %v2398 = vadd.f32 %v2358, %v2397
      %v2399 = vpop.f32.mrf.mxu0
      %v2400 = vpop.f32.mrf.mxu0
      %v2401 = vpop.f32.mrf.mxu0
      %2402 = vdwg.mxu0
      %v2403 = vadd.f32 %v2057, %v2398
      %s2404 = sadd.s32 %s21, 2
      %s2405 = smul.u32 %s2404, 4
      %s2406 = smul.addr %s2405, 2
      %s2407 = scalar_lea.vmem %s236, %s2406
      %v2408 = vld [vmem:[%s2407] sm:$0xff]
      %s2409 = scalar_lea.vmem %s1, 1536
      %v2410 = vld [vmem:[%s2409] sm:$0xf]
      %v2411 = vld [vmem:[%s2409 + $0x4] sm:$0xf]
      %v2412 = vld [vmem:[%s2409 + $0x8] sm:$0xf]
      %v2413 = vld [vmem:[%s2409 + $0xc] sm:$0xf]
      %v2414 = vld [vmem:[%s2409 + $0x10] sm:$0xf]
      %v2415 = vld [vmem:[%s2409 + $0x14] sm:$0xf]
      %v2416 = vld [vmem:[%s2409 + $0x18] sm:$0xf]
      %v2417 = vld [vmem:[%s2409 + $0x1c] sm:$0xf]
      %v2418 = vld [vmem:[%s2409 + $0x20] sm:$0xf]
      %v2419 = vld [vmem:[%s2409 + $0x24] sm:$0xf]
      %v2420 = vld [vmem:[%s2409 + $0x28] sm:$0xf]
      %v2421 = vld [vmem:[%s2409 + $0x2c] sm:$0xf]
      %v2422 = vld [vmem:[%s2409 + $0x30] sm:$0xf]
      %v2423 = vld [vmem:[%s2409 + $0x34] sm:$0xf]
      %v2424 = vld [vmem:[%s2409 + $0x38] sm:$0xf]
      %v2425 = vld [vmem:[%s2409 + $0x3c] sm:$0xf]
      %v2426 = vld [vmem:[%s2409 + $0x40] sm:$0xf]
      %v2427 = vld [vmem:[%s2409 + $0x44] sm:$0xf]
      %v2428 = vld [vmem:[%s2409 + $0x48] sm:$0xf]
      %v2429 = vld [vmem:[%s2409 + $0x4c] sm:$0xf]
      %v2430 = vld [vmem:[%s2409 + $0x50] sm:$0xf]
      %v2431 = vld [vmem:[%s2409 + $0x54] sm:$0xf]
      %v2432 = vld [vmem:[%s2409 + $0x58] sm:$0xf]
      %v2433 = vld [vmem:[%s2409 + $0x5c] sm:$0xf]
      %v2434 = vld [vmem:[%s2409 + $0x60] sm:$0xf]
      %v2435 = vld [vmem:[%s2409 + $0x64] sm:$0xf]
      %v2436 = vld [vmem:[%s2409 + $0x68] sm:$0xf]
      %v2437 = vld [vmem:[%s2409 + $0x6c] sm:$0xf]
      %v2438 = vld [vmem:[%s2409 + $0x70] sm:$0xf]
      %v2439 = vld [vmem:[%s2409 + $0x74] sm:$0xf]
      %v2440 = vld [vmem:[%s2409 + $0x78] sm:$0xf]
      %v2441 = vld [vmem:[%s2409 + $0x7c] sm:$0xf]
      %v2442 = vld [vmem:[%s2409 + $0x80] sm:$0xf]
      %v2443 = vld [vmem:[%s2409 + $0x84] sm:$0xf]
      %v2444 = vld [vmem:[%s2409 + $0x88] sm:$0xf]
      %v2445 = vld [vmem:[%s2409 + $0x8c] sm:$0xf]
      %v2446 = vld [vmem:[%s2409 + $0x90] sm:$0xf]
      %v2447 = vld [vmem:[%s2409 + $0x94] sm:$0xf]
      %v2448 = vld [vmem:[%s2409 + $0x98] sm:$0xf]
      %v2449 = vld [vmem:[%s2409 + $0x9c] sm:$0xf]
      %v2450 = vld [vmem:[%s2409 + $0xa0] sm:$0xf]
      %v2451 = vld [vmem:[%s2409 + $0xa4] sm:$0xf]
      %v2452 = vld [vmem:[%s2409 + $0xa8] sm:$0xf]
      %v2453 = vld [vmem:[%s2409 + $0xac] sm:$0xf]
      %v2454 = vld [vmem:[%s2409 + $0xb0] sm:$0xf]
      %v2455 = vld [vmem:[%s2409 + $0xb4] sm:$0xf]
      %v2456 = vld [vmem:[%s2409 + $0xb8] sm:$0xf]
      %v2457 = vld [vmem:[%s2409 + $0xbc] sm:$0xf]
      %v2458 = vld [vmem:[%s2409 + $0xc0] sm:$0xf]
      %v2459 = vld [vmem:[%s2409 + $0xc4] sm:$0xf]
      %v2460 = vld [vmem:[%s2409 + $0xc8] sm:$0xf]
      %v2461 = vld [vmem:[%s2409 + $0xcc] sm:$0xf]
      %v2462 = vld [vmem:[%s2409 + $0xd0] sm:$0xf]
      %v2463 = vld [vmem:[%s2409 + $0xd4] sm:$0xf]
      %v2464 = vld [vmem:[%s2409 + $0xd8] sm:$0xf]
      %v2465 = vld [vmem:[%s2409 + $0xdc] sm:$0xf]
      %v2466 = vld [vmem:[%s2409 + $0xe0] sm:$0xf]
      %v2467 = vld [vmem:[%s2409 + $0xe4] sm:$0xf]
      %v2468 = vld [vmem:[%s2409 + $0xe8] sm:$0xf]
      %v2469 = vld [vmem:[%s2409 + $0xec] sm:$0xf]
      %v2470 = vld [vmem:[%s2409 + $0xf0] sm:$0xf]
      %v2471 = vld [vmem:[%s2409 + $0xf4] sm:$0xf]
      %v2472 = vld [vmem:[%s2409 + $0xf8] sm:$0xf]
      %v2473 = vld [vmem:[%s2409 + $0xfc] sm:$0xf]
      %v2475 = vcombine.high %v2408, %v2408
      %v2477 = vunpack.c.l.s4 1983009808
      %v2478 = vunpack.c.0.s8 %v2477
      %v2479 = vlaneseq
      %v2480 = vshrl.u32 %v2479, 7
      %v2481 = vsub.s32 %v2478, %v2480
      %v2482 = vrot.slane %v2408, %v2481
      %v2484 = vunpack.c.l.s4 1983009808
      %v2485 = vunpack.c.0.s8 %v2484
      %v2486 = vlaneseq
      %v2487 = vshrl.u32 %v2486, 7
      %v2488 = vsub.s32 %v2485, %v2487
      %v2489 = vrot.slane %v2475, %v2488
      %v2490 = vcombine.high %v2482, %v2482
      %v2491 = vcombine.high %v2489, %v2489
      %v2560 = vunpack.c.l.b16 %v2410
      %v2561 = vunpack.c.l.b16 %v2411
      %v2562 = vunpack.c.l.b16 %v2412
      %v2563 = vunpack.c.l.b16 %v2413
      %v2564 = vunpack.c.l.b16 %v2414
      %v2565 = vunpack.c.l.b16 %v2415
      %v2566 = vunpack.c.l.b16 %v2416
      %v2567 = vunpack.c.l.b16 %v2417
      %v2568 = vunpack.c.l.b16 %v2418
      %v2569 = vunpack.c.l.b16 %v2419
      %v2570 = vunpack.c.l.b16 %v2420
      %v2571 = vunpack.c.l.b16 %v2421
      %v2572 = vunpack.c.l.b16 %v2422
      %v2573 = vunpack.c.l.b16 %v2423
      %v2574 = vunpack.c.l.b16 %v2424
      %v2575 = vunpack.c.l.b16 %v2425
      %v2576 = vunpack.c.l.b16 %v2426
      %v2577 = vunpack.c.l.b16 %v2427
      %v2578 = vunpack.c.l.b16 %v2428
      %v2579 = vunpack.c.l.b16 %v2429
      %v2580 = vunpack.c.l.b16 %v2430
      %v2581 = vunpack.c.l.b16 %v2431
      %v2582 = vunpack.c.l.b16 %v2432
      %v2583 = vunpack.c.l.b16 %v2433
      %v2584 = vunpack.c.l.b16 %v2434
      %v2585 = vunpack.c.l.b16 %v2435
      %v2586 = vunpack.c.l.b16 %v2436
      %v2587 = vunpack.c.l.b16 %v2437
      %v2588 = vunpack.c.l.b16 %v2438
      %v2589 = vunpack.c.l.b16 %v2439
      %v2590 = vunpack.c.l.b16 %v2440
      %v2591 = vunpack.c.l.b16 %v2441
      %v2592 = vunpack.c.l.b16 %v2442
      %v2593 = vunpack.c.l.b16 %v2443
      %v2594 = vunpack.c.l.b16 %v2444
      %v2595 = vunpack.c.l.b16 %v2445
      %v2596 = vunpack.c.l.b16 %v2446
      %v2597 = vunpack.c.l.b16 %v2447
      %v2598 = vunpack.c.l.b16 %v2448
      %v2599 = vunpack.c.l.b16 %v2449
      %v2600 = vunpack.c.l.b16 %v2450
      %v2601 = vunpack.c.l.b16 %v2451
      %v2602 = vunpack.c.l.b16 %v2452
      %v2603 = vunpack.c.l.b16 %v2453
      %v2604 = vunpack.c.l.b16 %v2454
      %v2605 = vunpack.c.l.b16 %v2455
      %v2606 = vunpack.c.l.b16 %v2456
      %v2607 = vunpack.c.l.b16 %v2457
      %v2608 = vunpack.c.l.b16 %v2458
      %v2609 = vunpack.c.l.b16 %v2459
      %v2610 = vunpack.c.l.b16 %v2460
      %v2611 = vunpack.c.l.b16 %v2461
      %v2612 = vunpack.c.l.b16 %v2462
      %v2613 = vunpack.c.l.b16 %v2463
      %v2614 = vunpack.c.l.b16 %v2464
      %v2615 = vunpack.c.l.b16 %v2465
      %v2616 = vunpack.c.l.b16 %v2466
      %v2617 = vunpack.c.l.b16 %v2467
      %v2618 = vunpack.c.l.b16 %v2468
      %v2619 = vunpack.c.l.b16 %v2469
      %v2620 = vunpack.c.l.b16 %v2470
      %v2621 = vunpack.c.l.b16 %v2471
      %v2622 = vunpack.c.l.b16 %v2472
      %v2623 = vunpack.c.l.b16 %v2473
      %v2624 = vpack.c.b16 %v2561, %v2560
      %v2625 = vpack.c.b16 %v2563, %v2562
      %v2626 = vpack.c.b16 %v2565, %v2564
      %v2627 = vpack.c.b16 %v2567, %v2566
      %v2628 = vpack.c.b16 %v2569, %v2568
      %v2629 = vpack.c.b16 %v2571, %v2570
      %v2630 = vpack.c.b16 %v2573, %v2572
      %v2631 = vpack.c.b16 %v2575, %v2574
      %v2632 = vpack.c.b16 %v2577, %v2576
      %v2633 = vpack.c.b16 %v2579, %v2578
      %v2634 = vpack.c.b16 %v2581, %v2580
      %v2635 = vpack.c.b16 %v2583, %v2582
      %v2636 = vpack.c.b16 %v2585, %v2584
      %v2637 = vpack.c.b16 %v2587, %v2586
      %v2638 = vpack.c.b16 %v2589, %v2588
      %v2639 = vpack.c.b16 %v2591, %v2590
      %v2640 = vpack.c.b16 %v2593, %v2592
      %v2641 = vpack.c.b16 %v2595, %v2594
      %v2642 = vpack.c.b16 %v2597, %v2596
      %v2643 = vpack.c.b16 %v2599, %v2598
      %v2644 = vpack.c.b16 %v2601, %v2600
      %v2645 = vpack.c.b16 %v2603, %v2602
      %v2646 = vpack.c.b16 %v2605, %v2604
      %v2647 = vpack.c.b16 %v2607, %v2606
      %v2648 = vpack.c.b16 %v2609, %v2608
      %v2649 = vpack.c.b16 %v2611, %v2610
      %v2650 = vpack.c.b16 %v2613, %v2612
      %v2651 = vpack.c.b16 %v2615, %v2614
      %v2652 = vpack.c.b16 %v2617, %v2616
      %v2653 = vpack.c.b16 %v2619, %v2618
      %v2654 = vpack.c.b16 %v2621, %v2620
      %v2655 = vpack.c.b16 %v2623, %v2622
      %2688 = vmatprep.subr.bf16.mxu0 0
      %2689 = vmatpush1.bf16.msra.mxu0 %v2631
      %2690 = vmatprep.subr.bf16.mxu0 0
      %2691 = vmatpush1.bf16.msra.mxu0 %v2630
      %2692 = vmatprep.subr.bf16.mxu0 0
      %2693 = vmatpush1.bf16.msra.mxu0 %v2629
      %2694 = vmatprep.subr.bf16.mxu0 0
      %2695 = vmatpush1.bf16.msra.mxu0 %v2628
      %2696 = vmatprep.subr.bf16.mxu0 0
      %2697 = vmatpush1.bf16.msra.mxu0 %v2627
      %2698 = vmatprep.subr.bf16.mxu0 0
      %2699 = vmatpush1.bf16.msra.mxu0 %v2626
      %2700 = vmatprep.subr.bf16.mxu0 0
      %2701 = vmatpush1.bf16.msra.mxu0 %v2625
      %2702 = vmatprep.subr.bf16.mxu0 0
      %2703 = vmatpush1.bf16.msra.mxu0 %v2624
      %2704 = vmatprep.subr.bf16.mxu0 0
      %2705 = vmatpush2.bf16.msra.mxu0 %v2639
      %2706 = vmatprep.subr.bf16.mxu0 0
      %2707 = vmatpush2.bf16.msra.mxu0 %v2638
      %2708 = vmatprep.subr.bf16.mxu0 0
      %2709 = vmatpush2.bf16.msra.mxu0 %v2637
      %2710 = vmatprep.subr.bf16.mxu0 0
      %2711 = vmatpush2.bf16.msra.mxu0 %v2636
      %2712 = vmatprep.subr.bf16.mxu0 0
      %2713 = vmatpush2.bf16.msra.mxu0 %v2635
      %2714 = vmatprep.subr.bf16.mxu0 0
      %2715 = vmatpush2.bf16.msra.mxu0 %v2634
      %2716 = vmatprep.subr.bf16.mxu0 0
      %2717 = vmatpush2.bf16.msra.mxu0 %v2633
      %2718 = vmatprep.subr.bf16.mxu0 0
      %2719 = vmatpush2.bf16.msra.mxu0 %v2632
      %2720 = vmatprep.mubr.bf16.mxu0 %v2490
      %2721 = vmatmul.mubr.bf16.gmra.mxu0 %v2482
      %v2722 = vpop.f32.mrf.mxu0
      %v2723 = vadd.f32 0.0, %v2722
      %v2724 = vpop.f32.mrf.mxu0
      %v2725 = vpop.f32.mrf.mxu0
      %v2726 = vpop.f32.mrf.mxu0
      %2727 = vdwg.mxu0
      %2728 = vmatprep.subr.bf16.mxu0 0
      %2729 = vmatpush1.bf16.msra.mxu0 %v2647
      %2730 = vmatprep.subr.bf16.mxu0 0
      %2731 = vmatpush1.bf16.msra.mxu0 %v2646
      %2732 = vmatprep.subr.bf16.mxu0 0
      %2733 = vmatpush1.bf16.msra.mxu0 %v2645
      %2734 = vmatprep.subr.bf16.mxu0 0
      %2735 = vmatpush1.bf16.msra.mxu0 %v2644
      %2736 = vmatprep.subr.bf16.mxu0 0
      %2737 = vmatpush1.bf16.msra.mxu0 %v2643
      %2738 = vmatprep.subr.bf16.mxu0 0
      %2739 = vmatpush1.bf16.msra.mxu0 %v2642
      %2740 = vmatprep.subr.bf16.mxu0 0
      %2741 = vmatpush1.bf16.msra.mxu0 %v2641
      %2742 = vmatprep.subr.bf16.mxu0 0
      %2743 = vmatpush1.bf16.msra.mxu0 %v2640
      %2744 = vmatprep.subr.bf16.mxu0 0
      %2745 = vmatpush2.bf16.msra.mxu0 %v2655
      %2746 = vmatprep.subr.bf16.mxu0 0
      %2747 = vmatpush2.bf16.msra.mxu0 %v2654
      %2748 = vmatprep.subr.bf16.mxu0 0
      %2749 = vmatpush2.bf16.msra.mxu0 %v2653
      %2750 = vmatprep.subr.bf16.mxu0 0
      %2751 = vmatpush2.bf16.msra.mxu0 %v2652
      %2752 = vmatprep.subr.bf16.mxu0 0
      %2753 = vmatpush2.bf16.msra.mxu0 %v2651
      %2754 = vmatprep.subr.bf16.mxu0 0
      %2755 = vmatpush2.bf16.msra.mxu0 %v2650
      %2756 = vmatprep.subr.bf16.mxu0 0
      %2757 = vmatpush2.bf16.msra.mxu0 %v2649
      %2758 = vmatprep.subr.bf16.mxu0 0
      %2759 = vmatpush2.bf16.msra.mxu0 %v2648
      %2760 = vmatprep.mubr.bf16.mxu0 %v2491
      %2761 = vmatmul.mubr.bf16.gmra.mxu0 %v2489
      %v2762 = vpop.f32.mrf.mxu0
      %v2763 = vadd.f32 %v2723, %v2762
      %v2764 = vpop.f32.mrf.mxu0
      %v2765 = vpop.f32.mrf.mxu0
      %v2766 = vpop.f32.mrf.mxu0
      %2767 = vdwg.mxu0
      %v2768 = vadd.f32 %v2403, %v2763
      %s2769 = scalar_lea.vmem %s1, 1792
      %v2770 = vld [vmem:[%s2769] sm:$0xf]
      %v2771 = vld [vmem:[%s2769 + $0x4] sm:$0xf]
      %v2772 = vld [vmem:[%s2769 + $0x8] sm:$0xf]
      %v2773 = vld [vmem:[%s2769 + $0xc] sm:$0xf]
      %v2774 = vld [vmem:[%s2769 + $0x10] sm:$0xf]
      %v2775 = vld [vmem:[%s2769 + $0x14] sm:$0xf]
      %v2776 = vld [vmem:[%s2769 + $0x18] sm:$0xf]
      %v2777 = vld [vmem:[%s2769 + $0x1c] sm:$0xf]
      %v2778 = vld [vmem:[%s2769 + $0x20] sm:$0xf]
      %v2779 = vld [vmem:[%s2769 + $0x24] sm:$0xf]
      %v2780 = vld [vmem:[%s2769 + $0x28] sm:$0xf]
      %v2781 = vld [vmem:[%s2769 + $0x2c] sm:$0xf]
      %v2782 = vld [vmem:[%s2769 + $0x30] sm:$0xf]
      %v2783 = vld [vmem:[%s2769 + $0x34] sm:$0xf]
      %v2784 = vld [vmem:[%s2769 + $0x38] sm:$0xf]
      %v2785 = vld [vmem:[%s2769 + $0x3c] sm:$0xf]
      %v2786 = vld [vmem:[%s2769 + $0x40] sm:$0xf]
      %v2787 = vld [vmem:[%s2769 + $0x44] sm:$0xf]
      %v2788 = vld [vmem:[%s2769 + $0x48] sm:$0xf]
      %v2789 = vld [vmem:[%s2769 + $0x4c] sm:$0xf]
      %v2790 = vld [vmem:[%s2769 + $0x50] sm:$0xf]
      %v2791 = vld [vmem:[%s2769 + $0x54] sm:$0xf]
      %v2792 = vld [vmem:[%s2769 + $0x58] sm:$0xf]
      %v2793 = vld [vmem:[%s2769 + $0x5c] sm:$0xf]
      %v2794 = vld [vmem:[%s2769 + $0x60] sm:$0xf]
      %v2795 = vld [vmem:[%s2769 + $0x64] sm:$0xf]
      %v2796 = vld [vmem:[%s2769 + $0x68] sm:$0xf]
      %v2797 = vld [vmem:[%s2769 + $0x6c] sm:$0xf]
      %v2798 = vld [vmem:[%s2769 + $0x70] sm:$0xf]
      %v2799 = vld [vmem:[%s2769 + $0x74] sm:$0xf]
      %v2800 = vld [vmem:[%s2769 + $0x78] sm:$0xf]
      %v2801 = vld [vmem:[%s2769 + $0x7c] sm:$0xf]
      %v2802 = vld [vmem:[%s2769 + $0x80] sm:$0xf]
      %v2803 = vld [vmem:[%s2769 + $0x84] sm:$0xf]
      %v2804 = vld [vmem:[%s2769 + $0x88] sm:$0xf]
      %v2805 = vld [vmem:[%s2769 + $0x8c] sm:$0xf]
      %v2806 = vld [vmem:[%s2769 + $0x90] sm:$0xf]
      %v2807 = vld [vmem:[%s2769 + $0x94] sm:$0xf]
      %v2808 = vld [vmem:[%s2769 + $0x98] sm:$0xf]
      %v2809 = vld [vmem:[%s2769 + $0x9c] sm:$0xf]
      %v2810 = vld [vmem:[%s2769 + $0xa0] sm:$0xf]
      %v2811 = vld [vmem:[%s2769 + $0xa4] sm:$0xf]
      %v2812 = vld [vmem:[%s2769 + $0xa8] sm:$0xf]
      %v2813 = vld [vmem:[%s2769 + $0xac] sm:$0xf]
      %v2814 = vld [vmem:[%s2769 + $0xb0] sm:$0xf]
      %v2815 = vld [vmem:[%s2769 + $0xb4] sm:$0xf]
      %v2816 = vld [vmem:[%s2769 + $0xb8] sm:$0xf]
      %v2817 = vld [vmem:[%s2769 + $0xbc] sm:$0xf]
      %v2818 = vld [vmem:[%s2769 + $0xc0] sm:$0xf]
      %v2819 = vld [vmem:[%s2769 + $0xc4] sm:$0xf]
      %v2820 = vld [vmem:[%s2769 + $0xc8] sm:$0xf]
      %v2821 = vld [vmem:[%s2769 + $0xcc] sm:$0xf]
      %v2822 = vld [vmem:[%s2769 + $0xd0] sm:$0xf]
      %v2823 = vld [vmem:[%s2769 + $0xd4] sm:$0xf]
      %v2824 = vld [vmem:[%s2769 + $0xd8] sm:$0xf]
      %v2825 = vld [vmem:[%s2769 + $0xdc] sm:$0xf]
      %v2826 = vld [vmem:[%s2769 + $0xe0] sm:$0xf]
      %v2827 = vld [vmem:[%s2769 + $0xe4] sm:$0xf]
      %v2828 = vld [vmem:[%s2769 + $0xe8] sm:$0xf]
      %v2829 = vld [vmem:[%s2769 + $0xec] sm:$0xf]
      %v2830 = vld [vmem:[%s2769 + $0xf0] sm:$0xf]
      %v2831 = vld [vmem:[%s2769 + $0xf4] sm:$0xf]
      %v2832 = vld [vmem:[%s2769 + $0xf8] sm:$0xf]
      %v2833 = vld [vmem:[%s2769 + $0xfc] sm:$0xf]
      %v2835 = vshrl.u32 %v2482, 16
      %v2837 = vshll.u32 %v2482, 16
      %v2839 = vrot.slane %v2837, 1
      %v2840 = vor.u32 %v2835, %v2839
      %v2842 = vshrl.u32 %v2490, 16
      %v2844 = vshll.u32 %v2490, 16
      %v2846 = vrot.slane %v2844, 1
      %v2847 = vor.u32 %v2842, %v2846
      %v2849 = vshrl.u32 %v2489, 16
      %v2851 = vshll.u32 %v2489, 16
      %v2853 = vrot.slane %v2851, 1
      %v2854 = vor.u32 %v2849, %v2853
      %v2856 = vshrl.u32 %v2491, 16
      %v2858 = vshll.u32 %v2491, 16
      %v2860 = vrot.slane %v2858, 1
      %v2861 = vor.u32 %v2856, %v2860
      %v2930 = vunpack.c.l.b16 %v2770
      %v2931 = vunpack.c.l.b16 %v2771
      %v2932 = vunpack.c.l.b16 %v2772
      %v2933 = vunpack.c.l.b16 %v2773
      %v2934 = vunpack.c.l.b16 %v2774
      %v2935 = vunpack.c.l.b16 %v2775
      %v2936 = vunpack.c.l.b16 %v2776
      %v2937 = vunpack.c.l.b16 %v2777
      %v2938 = vunpack.c.l.b16 %v2778
      %v2939 = vunpack.c.l.b16 %v2779
      %v2940 = vunpack.c.l.b16 %v2780
      %v2941 = vunpack.c.l.b16 %v2781
      %v2942 = vunpack.c.l.b16 %v2782
      %v2943 = vunpack.c.l.b16 %v2783
      %v2944 = vunpack.c.l.b16 %v2784
      %v2945 = vunpack.c.l.b16 %v2785
      %v2946 = vunpack.c.l.b16 %v2786
      %v2947 = vunpack.c.l.b16 %v2787
      %v2948 = vunpack.c.l.b16 %v2788
      %v2949 = vunpack.c.l.b16 %v2789
      %v2950 = vunpack.c.l.b16 %v2790
      %v2951 = vunpack.c.l.b16 %v2791
      %v2952 = vunpack.c.l.b16 %v2792
      %v2953 = vunpack.c.l.b16 %v2793
      %v2954 = vunpack.c.l.b16 %v2794
      %v2955 = vunpack.c.l.b16 %v2795
      %v2956 = vunpack.c.l.b16 %v2796
      %v2957 = vunpack.c.l.b16 %v2797
      %v2958 = vunpack.c.l.b16 %v2798
      %v2959 = vunpack.c.l.b16 %v2799
      %v2960 = vunpack.c.l.b16 %v2800
      %v2961 = vunpack.c.l.b16 %v2801
      %v2962 = vunpack.c.l.b16 %v2802
      %v2963 = vunpack.c.l.b16 %v2803
      %v2964 = vunpack.c.l.b16 %v2804
      %v2965 = vunpack.c.l.b16 %v2805
      %v2966 = vunpack.c.l.b16 %v2806
      %v2967 = vunpack.c.l.b16 %v2807
      %v2968 = vunpack.c.l.b16 %v2808
      %v2969 = vunpack.c.l.b16 %v2809
      %v2970 = vunpack.c.l.b16 %v2810
      %v2971 = vunpack.c.l.b16 %v2811
      %v2972 = vunpack.c.l.b16 %v2812
      %v2973 = vunpack.c.l.b16 %v2813
      %v2974 = vunpack.c.l.b16 %v2814
      %v2975 = vunpack.c.l.b16 %v2815
      %v2976 = vunpack.c.l.b16 %v2816
      %v2977 = vunpack.c.l.b16 %v2817
      %v2978 = vunpack.c.l.b16 %v2818
      %v2979 = vunpack.c.l.b16 %v2819
      %v2980 = vunpack.c.l.b16 %v2820
      %v2981 = vunpack.c.l.b16 %v2821
      %v2982 = vunpack.c.l.b16 %v2822
      %v2983 = vunpack.c.l.b16 %v2823
      %v2984 = vunpack.c.l.b16 %v2824
      %v2985 = vunpack.c.l.b16 %v2825
      %v2986 = vunpack.c.l.b16 %v2826
      %v2987 = vunpack.c.l.b16 %v2827
      %v2988 = vunpack.c.l.b16 %v2828
      %v2989 = vunpack.c.l.b16 %v2829
      %v2990 = vunpack.c.l.b16 %v2830
      %v2991 = vunpack.c.l.b16 %v2831
      %v2992 = vunpack.c.l.b16 %v2832
      %v2993 = vunpack.c.l.b16 %v2833
      %v2994 = vpack.c.b16 %v2931, %v2930
      %v2995 = vpack.c.b16 %v2933, %v2932
      %v2996 = vpack.c.b16 %v2935, %v2934
      %v2997 = vpack.c.b16 %v2937, %v2936
      %v2998 = vpack.c.b16 %v2939, %v2938
      %v2999 = vpack.c.b16 %v2941, %v2940
      %v3000 = vpack.c.b16 %v2943, %v2942
      %v3001 = vpack.c.b16 %v2945, %v2944
      %v3002 = vpack.c.b16 %v2947, %v2946
      %v3003 = vpack.c.b16 %v2949, %v2948
      %v3004 = vpack.c.b16 %v2951, %v2950
      %v3005 = vpack.c.b16 %v2953, %v2952
      %v3006 = vpack.c.b16 %v2955, %v2954
      %v3007 = vpack.c.b16 %v2957, %v2956
      %v3008 = vpack.c.b16 %v2959, %v2958
      %v3009 = vpack.c.b16 %v2961, %v2960
      %v3010 = vpack.c.b16 %v2963, %v2962
      %v3011 = vpack.c.b16 %v2965, %v2964
      %v3012 = vpack.c.b16 %v2967, %v2966
      %v3013 = vpack.c.b16 %v2969, %v2968
      %v3014 = vpack.c.b16 %v2971, %v2970
      %v3015 = vpack.c.b16 %v2973, %v2972
      %v3016 = vpack.c.b16 %v2975, %v2974
      %v3017 = vpack.c.b16 %v2977, %v2976
      %v3018 = vpack.c.b16 %v2979, %v2978
      %v3019 = vpack.c.b16 %v2981, %v2980
      %v3020 = vpack.c.b16 %v2983, %v2982
      %v3021 = vpack.c.b16 %v2985, %v2984
      %v3022 = vpack.c.b16 %v2987, %v2986
      %v3023 = vpack.c.b16 %v2989, %v2988
      %v3024 = vpack.c.b16 %v2991, %v2990
      %v3025 = vpack.c.b16 %v2993, %v2992
      %3058 = vmatprep.subr.bf16.mxu0 0
      %3059 = vmatpush1.bf16.msra.mxu0 %v3001
      %3060 = vmatprep.subr.bf16.mxu0 0
      %3061 = vmatpush1.bf16.msra.mxu0 %v3000
      %3062 = vmatprep.subr.bf16.mxu0 0
      %3063 = vmatpush1.bf16.msra.mxu0 %v2999
      %3064 = vmatprep.subr.bf16.mxu0 0
      %3065 = vmatpush1.bf16.msra.mxu0 %v2998
      %3066 = vmatprep.subr.bf16.mxu0 0
      %3067 = vmatpush1.bf16.msra.mxu0 %v2997
      %3068 = vmatprep.subr.bf16.mxu0 0
      %3069 = vmatpush1.bf16.msra.mxu0 %v2996
      %3070 = vmatprep.subr.bf16.mxu0 0
      %3071 = vmatpush1.bf16.msra.mxu0 %v2995
      %3072 = vmatprep.subr.bf16.mxu0 0
      %3073 = vmatpush1.bf16.msra.mxu0 %v2994
      %3074 = vmatprep.subr.bf16.mxu0 0
      %3075 = vmatpush2.bf16.msra.mxu0 %v3009
      %3076 = vmatprep.subr.bf16.mxu0 0
      %3077 = vmatpush2.bf16.msra.mxu0 %v3008
      %3078 = vmatprep.subr.bf16.mxu0 0
      %3079 = vmatpush2.bf16.msra.mxu0 %v3007
      %3080 = vmatprep.subr.bf16.mxu0 0
      %3081 = vmatpush2.bf16.msra.mxu0 %v3006
      %3082 = vmatprep.subr.bf16.mxu0 0
      %3083 = vmatpush2.bf16.msra.mxu0 %v3005
      %3084 = vmatprep.subr.bf16.mxu0 0
      %3085 = vmatpush2.bf16.msra.mxu0 %v3004
      %3086 = vmatprep.subr.bf16.mxu0 0
      %3087 = vmatpush2.bf16.msra.mxu0 %v3003
      %3088 = vmatprep.subr.bf16.mxu0 0
      %3089 = vmatpush2.bf16.msra.mxu0 %v3002
      %3090 = vmatprep.mubr.bf16.mxu0 %v2847
      %3091 = vmatmul.mubr.bf16.gmra.mxu0 %v2840
      %v3092 = vpop.f32.mrf.mxu0
      %v3093 = vadd.f32 0.0, %v3092
      %v3094 = vpop.f32.mrf.mxu0
      %v3095 = vpop.f32.mrf.mxu0
      %v3096 = vpop.f32.mrf.mxu0
      %3097 = vdwg.mxu0
      %3098 = vmatprep.subr.bf16.mxu0 0
      %3099 = vmatpush1.bf16.msra.mxu0 %v3017
      %3100 = vmatprep.subr.bf16.mxu0 0
      %3101 = vmatpush1.bf16.msra.mxu0 %v3016
      %3102 = vmatprep.subr.bf16.mxu0 0
      %3103 = vmatpush1.bf16.msra.mxu0 %v3015
      %3104 = vmatprep.subr.bf16.mxu0 0
      %3105 = vmatpush1.bf16.msra.mxu0 %v3014
      %3106 = vmatprep.subr.bf16.mxu0 0
      %3107 = vmatpush1.bf16.msra.mxu0 %v3013
      %3108 = vmatprep.subr.bf16.mxu0 0
      %3109 = vmatpush1.bf16.msra.mxu0 %v3012
      %3110 = vmatprep.subr.bf16.mxu0 0
      %3111 = vmatpush1.bf16.msra.mxu0 %v3011
      %3112 = vmatprep.subr.bf16.mxu0 0
      %3113 = vmatpush1.bf16.msra.mxu0 %v3010
      %3114 = vmatprep.subr.bf16.mxu0 0
      %3115 = vmatpush2.bf16.msra.mxu0 %v3025
      %3116 = vmatprep.subr.bf16.mxu0 0
      %3117 = vmatpush2.bf16.msra.mxu0 %v3024
      %3118 = vmatprep.subr.bf16.mxu0 0
      %3119 = vmatpush2.bf16.msra.mxu0 %v3023
      %3120 = vmatprep.subr.bf16.mxu0 0
      %3121 = vmatpush2.bf16.msra.mxu0 %v3022
      %3122 = vmatprep.subr.bf16.mxu0 0
      %3123 = vmatpush2.bf16.msra.mxu0 %v3021
      %3124 = vmatprep.subr.bf16.mxu0 0
      %3125 = vmatpush2.bf16.msra.mxu0 %v3020
      %3126 = vmatprep.subr.bf16.mxu0 0
      %3127 = vmatpush2.bf16.msra.mxu0 %v3019
      %3128 = vmatprep.subr.bf16.mxu0 0
      %3129 = vmatpush2.bf16.msra.mxu0 %v3018
      %3130 = vmatprep.mubr.bf16.mxu0 %v2861
      %3131 = vmatmul.mubr.bf16.gmra.mxu0 %v2854
      %v3132 = vpop.f32.mrf.mxu0
      %v3133 = vadd.f32 %v3093, %v3132
      %v3134 = vpop.f32.mrf.mxu0
      %v3135 = vpop.f32.mrf.mxu0
      %v3136 = vpop.f32.mrf.mxu0
      %3137 = vdwg.mxu0
      %v3138 = vadd.f32 %v2768, %v3133
      %s3139 = scalar_lea.vmem %s1, 2048
      %v3140 = vld [vmem:[%s3139] sm:$0xf]
      %v3141 = vld [vmem:[%s3139 + $0x4] sm:$0xf]
      %v3142 = vld [vmem:[%s3139 + $0x8] sm:$0xf]
      %v3143 = vld [vmem:[%s3139 + $0xc] sm:$0xf]
      %v3144 = vld [vmem:[%s3139 + $0x10] sm:$0xf]
      %v3145 = vld [vmem:[%s3139 + $0x14] sm:$0xf]
      %v3146 = vld [vmem:[%s3139 + $0x18] sm:$0xf]
      %v3147 = vld [vmem:[%s3139 + $0x1c] sm:$0xf]
      %v3148 = vld [vmem:[%s3139 + $0x20] sm:$0xf]
      %v3149 = vld [vmem:[%s3139 + $0x24] sm:$0xf]
      %v3150 = vld [vmem:[%s3139 + $0x28] sm:$0xf]
      %v3151 = vld [vmem:[%s3139 + $0x2c] sm:$0xf]
      %v3152 = vld [vmem:[%s3139 + $0x30] sm:$0xf]
      %v3153 = vld [vmem:[%s3139 + $0x34] sm:$0xf]
      %v3154 = vld [vmem:[%s3139 + $0x38] sm:$0xf]
      %v3155 = vld [vmem:[%s3139 + $0x3c] sm:$0xf]
      %v3156 = vld [vmem:[%s3139 + $0x40] sm:$0xf]
      %v3157 = vld [vmem:[%s3139 + $0x44] sm:$0xf]
      %v3158 = vld [vmem:[%s3139 + $0x48] sm:$0xf]
      %v3159 = vld [vmem:[%s3139 + $0x4c] sm:$0xf]
      %v3160 = vld [vmem:[%s3139 + $0x50] sm:$0xf]
      %v3161 = vld [vmem:[%s3139 + $0x54] sm:$0xf]
      %v3162 = vld [vmem:[%s3139 + $0x58] sm:$0xf]
      %v3163 = vld [vmem:[%s3139 + $0x5c] sm:$0xf]
      %v3164 = vld [vmem:[%s3139 + $0x60] sm:$0xf]
      %v3165 = vld [vmem:[%s3139 + $0x64] sm:$0xf]
      %v3166 = vld [vmem:[%s3139 + $0x68] sm:$0xf]
      %v3167 = vld [vmem:[%s3139 + $0x6c] sm:$0xf]
      %v3168 = vld [vmem:[%s3139 + $0x70] sm:$0xf]
      %v3169 = vld [vmem:[%s3139 + $0x74] sm:$0xf]
      %v3170 = vld [vmem:[%s3139 + $0x78] sm:$0xf]
      %v3171 = vld [vmem:[%s3139 + $0x7c] sm:$0xf]
      %v3172 = vld [vmem:[%s3139 + $0x80] sm:$0xf]
      %v3173 = vld [vmem:[%s3139 + $0x84] sm:$0xf]
      %v3174 = vld [vmem:[%s3139 + $0x88] sm:$0xf]
      %v3175 = vld [vmem:[%s3139 + $0x8c] sm:$0xf]
      %v3176 = vld [vmem:[%s3139 + $0x90] sm:$0xf]
      %v3177 = vld [vmem:[%s3139 + $0x94] sm:$0xf]
      %v3178 = vld [vmem:[%s3139 + $0x98] sm:$0xf]
      %v3179 = vld [vmem:[%s3139 + $0x9c] sm:$0xf]
      %v3180 = vld [vmem:[%s3139 + $0xa0] sm:$0xf]
      %v3181 = vld [vmem:[%s3139 + $0xa4] sm:$0xf]
      %v3182 = vld [vmem:[%s3139 + $0xa8] sm:$0xf]
      %v3183 = vld [vmem:[%s3139 + $0xac] sm:$0xf]
      %v3184 = vld [vmem:[%s3139 + $0xb0] sm:$0xf]
      %v3185 = vld [vmem:[%s3139 + $0xb4] sm:$0xf]
      %v3186 = vld [vmem:[%s3139 + $0xb8] sm:$0xf]
      %v3187 = vld [vmem:[%s3139 + $0xbc] sm:$0xf]
      %v3188 = vld [vmem:[%s3139 + $0xc0] sm:$0xf]
      %v3189 = vld [vmem:[%s3139 + $0xc4] sm:$0xf]
      %v3190 = vld [vmem:[%s3139 + $0xc8] sm:$0xf]
      %v3191 = vld [vmem:[%s3139 + $0xcc] sm:$0xf]
      %v3192 = vld [vmem:[%s3139 + $0xd0] sm:$0xf]
      %v3193 = vld [vmem:[%s3139 + $0xd4] sm:$0xf]
      %v3194 = vld [vmem:[%s3139 + $0xd8] sm:$0xf]
      %v3195 = vld [vmem:[%s3139 + $0xdc] sm:$0xf]
      %v3196 = vld [vmem:[%s3139 + $0xe0] sm:$0xf]
      %v3197 = vld [vmem:[%s3139 + $0xe4] sm:$0xf]
      %v3198 = vld [vmem:[%s3139 + $0xe8] sm:$0xf]
      %v3199 = vld [vmem:[%s3139 + $0xec] sm:$0xf]
      %v3200 = vld [vmem:[%s3139 + $0xf0] sm:$0xf]
      %v3201 = vld [vmem:[%s3139 + $0xf4] sm:$0xf]
      %v3202 = vld [vmem:[%s3139 + $0xf8] sm:$0xf]
      %v3203 = vld [vmem:[%s3139 + $0xfc] sm:$0xf]
      %v3204 = vrot.slane %v2482, 1
      %v3205 = vrot.slane %v2490, 1
      %v3206 = vrot.slane %v2489, 1
      %v3207 = vrot.slane %v2491, 1
      %v3276 = vunpack.c.l.b16 %v3140
      %v3277 = vunpack.c.l.b16 %v3141
      %v3278 = vunpack.c.l.b16 %v3142
      %v3279 = vunpack.c.l.b16 %v3143
      %v3280 = vunpack.c.l.b16 %v3144
      %v3281 = vunpack.c.l.b16 %v3145
      %v3282 = vunpack.c.l.b16 %v3146
      %v3283 = vunpack.c.l.b16 %v3147
      %v3284 = vunpack.c.l.b16 %v3148
      %v3285 = vunpack.c.l.b16 %v3149
      %v3286 = vunpack.c.l.b16 %v3150
      %v3287 = vunpack.c.l.b16 %v3151
      %v3288 = vunpack.c.l.b16 %v3152
      %v3289 = vunpack.c.l.b16 %v3153
      %v3290 = vunpack.c.l.b16 %v3154
      %v3291 = vunpack.c.l.b16 %v3155
      %v3292 = vunpack.c.l.b16 %v3156
      %v3293 = vunpack.c.l.b16 %v3157
      %v3294 = vunpack.c.l.b16 %v3158
      %v3295 = vunpack.c.l.b16 %v3159
      %v3296 = vunpack.c.l.b16 %v3160
      %v3297 = vunpack.c.l.b16 %v3161
      %v3298 = vunpack.c.l.b16 %v3162
      %v3299 = vunpack.c.l.b16 %v3163
      %v3300 = vunpack.c.l.b16 %v3164
      %v3301 = vunpack.c.l.b16 %v3165
      %v3302 = vunpack.c.l.b16 %v3166
      %v3303 = vunpack.c.l.b16 %v3167
      %v3304 = vunpack.c.l.b16 %v3168
      %v3305 = vunpack.c.l.b16 %v3169
      %v3306 = vunpack.c.l.b16 %v3170
      %v3307 = vunpack.c.l.b16 %v3171
      %v3308 = vunpack.c.l.b16 %v3172
      %v3309 = vunpack.c.l.b16 %v3173
      %v3310 = vunpack.c.l.b16 %v3174
      %v3311 = vunpack.c.l.b16 %v3175
      %v3312 = vunpack.c.l.b16 %v3176
      %v3313 = vunpack.c.l.b16 %v3177
      %v3314 = vunpack.c.l.b16 %v3178
      %v3315 = vunpack.c.l.b16 %v3179
      %v3316 = vunpack.c.l.b16 %v3180
      %v3317 = vunpack.c.l.b16 %v3181
      %v3318 = vunpack.c.l.b16 %v3182
      %v3319 = vunpack.c.l.b16 %v3183
      %v3320 = vunpack.c.l.b16 %v3184
      %v3321 = vunpack.c.l.b16 %v3185
      %v3322 = vunpack.c.l.b16 %v3186
      %v3323 = vunpack.c.l.b16 %v3187
      %v3324 = vunpack.c.l.b16 %v3188
      %v3325 = vunpack.c.l.b16 %v3189
      %v3326 = vunpack.c.l.b16 %v3190
      %v3327 = vunpack.c.l.b16 %v3191
      %v3328 = vunpack.c.l.b16 %v3192
      %v3329 = vunpack.c.l.b16 %v3193
      %v3330 = vunpack.c.l.b16 %v3194
      %v3331 = vunpack.c.l.b16 %v3195
      %v3332 = vunpack.c.l.b16 %v3196
      %v3333 = vunpack.c.l.b16 %v3197
      %v3334 = vunpack.c.l.b16 %v3198
      %v3335 = vunpack.c.l.b16 %v3199
      %v3336 = vunpack.c.l.b16 %v3200
      %v3337 = vunpack.c.l.b16 %v3201
      %v3338 = vunpack.c.l.b16 %v3202
      %v3339 = vunpack.c.l.b16 %v3203
      %v3340 = vpack.c.b16 %v3277, %v3276
      %v3341 = vpack.c.b16 %v3279, %v3278
      %v3342 = vpack.c.b16 %v3281, %v3280
      %v3343 = vpack.c.b16 %v3283, %v3282
      %v3344 = vpack.c.b16 %v3285, %v3284
      %v3345 = vpack.c.b16 %v3287, %v3286
      %v3346 = vpack.c.b16 %v3289, %v3288
      %v3347 = vpack.c.b16 %v3291, %v3290
      %v3348 = vpack.c.b16 %v3293, %v3292
      %v3349 = vpack.c.b16 %v3295, %v3294
      %v3350 = vpack.c.b16 %v3297, %v3296
      %v3351 = vpack.c.b16 %v3299, %v3298
      %v3352 = vpack.c.b16 %v3301, %v3300
      %v3353 = vpack.c.b16 %v3303, %v3302
      %v3354 = vpack.c.b16 %v3305, %v3304
      %v3355 = vpack.c.b16 %v3307, %v3306
      %v3356 = vpack.c.b16 %v3309, %v3308
      %v3357 = vpack.c.b16 %v3311, %v3310
      %v3358 = vpack.c.b16 %v3313, %v3312
      %v3359 = vpack.c.b16 %v3315, %v3314
      %v3360 = vpack.c.b16 %v3317, %v3316
      %v3361 = vpack.c.b16 %v3319, %v3318
      %v3362 = vpack.c.b16 %v3321, %v3320
      %v3363 = vpack.c.b16 %v3323, %v3322
      %v3364 = vpack.c.b16 %v3325, %v3324
      %v3365 = vpack.c.b16 %v3327, %v3326
      %v3366 = vpack.c.b16 %v3329, %v3328
      %v3367 = vpack.c.b16 %v3331, %v3330
      %v3368 = vpack.c.b16 %v3333, %v3332
      %v3369 = vpack.c.b16 %v3335, %v3334
      %v3370 = vpack.c.b16 %v3337, %v3336
      %v3371 = vpack.c.b16 %v3339, %v3338
      %3404 = vmatprep.subr.bf16.mxu0 0
      %3405 = vmatpush1.bf16.msra.mxu0 %v3347
      %3406 = vmatprep.subr.bf16.mxu0 0
      %3407 = vmatpush1.bf16.msra.mxu0 %v3346
      %3408 = vmatprep.subr.bf16.mxu0 0
      %3409 = vmatpush1.bf16.msra.mxu0 %v3345
      %3410 = vmatprep.subr.bf16.mxu0 0
      %3411 = vmatpush1.bf16.msra.mxu0 %v3344
      %3412 = vmatprep.subr.bf16.mxu0 0
      %3413 = vmatpush1.bf16.msra.mxu0 %v3343
      %3414 = vmatprep.subr.bf16.mxu0 0
      %3415 = vmatpush1.bf16.msra.mxu0 %v3342
      %3416 = vmatprep.subr.bf16.mxu0 0
      %3417 = vmatpush1.bf16.msra.mxu0 %v3341
      %3418 = vmatprep.subr.bf16.mxu0 0
      %3419 = vmatpush1.bf16.msra.mxu0 %v3340
      %3420 = vmatprep.subr.bf16.mxu0 0
      %3421 = vmatpush2.bf16.msra.mxu0 %v3355
      %3422 = vmatprep.subr.bf16.mxu0 0
      %3423 = vmatpush2.bf16.msra.mxu0 %v3354
      %3424 = vmatprep.subr.bf16.mxu0 0
      %3425 = vmatpush2.bf16.msra.mxu0 %v3353
      %3426 = vmatprep.subr.bf16.mxu0 0
      %3427 = vmatpush2.bf16.msra.mxu0 %v3352
      %3428 = vmatprep.subr.bf16.mxu0 0
      %3429 = vmatpush2.bf16.msra.mxu0 %v3351
      %3430 = vmatprep.subr.bf16.mxu0 0
      %3431 = vmatpush2.bf16.msra.mxu0 %v3350
      %3432 = vmatprep.subr.bf16.mxu0 0
      %3433 = vmatpush2.bf16.msra.mxu0 %v3349
      %3434 = vmatprep.subr.bf16.mxu0 0
      %3435 = vmatpush2.bf16.msra.mxu0 %v3348
      %3436 = vmatprep.mubr.bf16.mxu0 %v3205
      %3437 = vmatmul.mubr.bf16.gmra.mxu0 %v3204
      %v3438 = vpop.f32.mrf.mxu0
      %v3439 = vadd.f32 0.0, %v3438
      %v3440 = vpop.f32.mrf.mxu0
      %v3441 = vpop.f32.mrf.mxu0
      %v3442 = vpop.f32.mrf.mxu0
      %3443 = vdwg.mxu0
      %3444 = vmatprep.subr.bf16.mxu0 0
      %3445 = vmatpush1.bf16.msra.mxu0 %v3363
      %3446 = vmatprep.subr.bf16.mxu0 0
      %3447 = vmatpush1.bf16.msra.mxu0 %v3362
      %3448 = vmatprep.subr.bf16.mxu0 0
      %3449 = vmatpush1.bf16.msra.mxu0 %v3361
      %3450 = vmatprep.subr.bf16.mxu0 0
      %3451 = vmatpush1.bf16.msra.mxu0 %v3360
      %3452 = vmatprep.subr.bf16.mxu0 0
      %3453 = vmatpush1.bf16.msra.mxu0 %v3359
      %3454 = vmatprep.subr.bf16.mxu0 0
      %3455 = vmatpush1.bf16.msra.mxu0 %v3358
      %3456 = vmatprep.subr.bf16.mxu0 0
      %3457 = vmatpush1.bf16.msra.mxu0 %v3357
      %3458 = vmatprep.subr.bf16.mxu0 0
      %3459 = vmatpush1.bf16.msra.mxu0 %v3356
      %3460 = vmatprep.subr.bf16.mxu0 0
      %3461 = vmatpush2.bf16.msra.mxu0 %v3371
      %3462 = vmatprep.subr.bf16.mxu0 0
      %3463 = vmatpush2.bf16.msra.mxu0 %v3370
      %3464 = vmatprep.subr.bf16.mxu0 0
      %3465 = vmatpush2.bf16.msra.mxu0 %v3369
      %3466 = vmatprep.subr.bf16.mxu0 0
      %3467 = vmatpush2.bf16.msra.mxu0 %v3368
      %3468 = vmatprep.subr.bf16.mxu0 0
      %3469 = vmatpush2.bf16.msra.mxu0 %v3367
      %3470 = vmatprep.subr.bf16.mxu0 0
      %3471 = vmatpush2.bf16.msra.mxu0 %v3366
      %3472 = vmatprep.subr.bf16.mxu0 0
      %3473 = vmatpush2.bf16.msra.mxu0 %v3365
      %3474 = vmatprep.subr.bf16.mxu0 0
      %3475 = vmatpush2.bf16.msra.mxu0 %v3364
      %3476 = vmatprep.mubr.bf16.mxu0 %v3207
      %3477 = vmatmul.mubr.bf16.gmra.mxu0 %v3206
      %v3478 = vpop.f32.mrf.mxu0
      %v3479 = vadd.f32 %v3439, %v3478
      %v3480 = vpop.f32.mrf.mxu0
      %v3481 = vpop.f32.mrf.mxu0
      %v3482 = vpop.f32.mrf.mxu0
      %3483 = vdwg.mxu0
      %v3484 = vadd.f32 %v3138, %v3479
      %v3485 = vld [vmem:[%s2] sm:$0x1]
      %v3487 = vlaneseq
      %v3488 = vshrl.u32 %v3487, 7
      %v3489 = vsub.s32 0, %v3488
      %v3490 = vrot.slane %v3485, %v3489
      %v3492 = vadd.f32 %v3484, %v3490
      %v3493 = vmax.f32 %v3492, 0.0
      %v3494 = vpack.c.bf16 %v3493, %v3493
      %v3495 = vld [vmem:[%s3] sm:$0xf]
      %v3496 = vld [vmem:[%s3 + $0x4] sm:$0xf]
      %v3497 = vld [vmem:[%s3 + $0x8] sm:$0xf]
      %v3498 = vld [vmem:[%s3 + $0xc] sm:$0xf]
      %v3499 = vld [vmem:[%s3 + $0x10] sm:$0xf]
      %v3500 = vld [vmem:[%s3 + $0x14] sm:$0xf]
      %v3501 = vld [vmem:[%s3 + $0x18] sm:$0xf]
      %v3502 = vld [vmem:[%s3 + $0x1c] sm:$0xf]
      %v3503 = vld [vmem:[%s3 + $0x20] sm:$0xf]
      %v3504 = vld [vmem:[%s3 + $0x24] sm:$0xf]
      %v3505 = vld [vmem:[%s3 + $0x28] sm:$0xf]
      %v3506 = vld [vmem:[%s3 + $0x2c] sm:$0xf]
      %v3507 = vld [vmem:[%s3 + $0x30] sm:$0xf]
      %v3508 = vld [vmem:[%s3 + $0x34] sm:$0xf]
      %v3509 = vld [vmem:[%s3 + $0x38] sm:$0xf]
      %v3510 = vld [vmem:[%s3 + $0x3c] sm:$0xf]
      %v3511 = vld [vmem:[%s4] sm:$0x1]
      %v3513 = vlaneseq
      %v3514 = vshrl.u32 %v3513, 7
      %v3515 = vsub.s32 0, %v3514
      %v3516 = vrot.slane %v3511, %v3515
      %v3534 = vunpack.c.l.b16 %v3495
      %v3535 = vunpack.c.l.b16 %v3496
      %v3536 = vunpack.c.l.b16 %v3497
      %v3537 = vunpack.c.l.b16 %v3498
      %v3538 = vunpack.c.l.b16 %v3499
      %v3539 = vunpack.c.l.b16 %v3500
      %v3540 = vunpack.c.l.b16 %v3501
      %v3541 = vunpack.c.l.b16 %v3502
      %v3542 = vunpack.c.l.b16 %v3503
      %v3543 = vunpack.c.l.b16 %v3504
      %v3544 = vunpack.c.l.b16 %v3505
      %v3545 = vunpack.c.l.b16 %v3506
      %v3546 = vunpack.c.l.b16 %v3507
      %v3547 = vunpack.c.l.b16 %v3508
      %v3548 = vunpack.c.l.b16 %v3509
      %v3549 = vunpack.c.l.b16 %v3510
      %v3550 = vpack.c.b16 %v3535, %v3534
      %v3551 = vpack.c.b16 %v3537, %v3536
      %v3552 = vpack.c.b16 %v3539, %v3538
      %v3553 = vpack.c.b16 %v3541, %v3540
      %v3554 = vpack.c.b16 %v3543, %v3542
      %v3555 = vpack.c.b16 %v3545, %v3544
      %v3556 = vpack.c.b16 %v3547, %v3546
      %v3557 = vpack.c.b16 %v3549, %v3548
      %3566 = vmatprep.subr.bf16.mxu0 0
      %3567 = vmatpush1.bf16.msra.mxu0 %v3557
      %3568 = vmatprep.subr.bf16.mxu0 0
      %3569 = vmatpush1.bf16.msra.mxu0 %v3556
      %3570 = vmatprep.subr.bf16.mxu0 0
      %3571 = vmatpush1.bf16.msra.mxu0 %v3555
      %3572 = vmatprep.subr.bf16.mxu0 0
      %3573 = vmatpush1.bf16.msra.mxu0 %v3554
      %3574 = vmatprep.subr.bf16.mxu0 0
      %3575 = vmatpush1.bf16.msra.mxu0 %v3553
      %3576 = vmatprep.subr.bf16.mxu0 0
      %3577 = vmatpush1.bf16.msra.mxu0 %v3552
      %3578 = vmatprep.subr.bf16.mxu0 0
      %3579 = vmatpush1.bf16.msra.mxu0 %v3551
      %3580 = vmatprep.subr.bf16.mxu0 0
      %3581 = vmatpush1.bf16.msra.mxu0 %v3550
      %3582 = vmatprep.subr.bf16.mxu0 0
      %3583 = vmatpush2.bf16.msra.mxu0 0
      %3584 = vmatprep.subr.bf16.mxu0 0
      %3585 = vmatpush2.bf16.msra.mxu0 0
      %3586 = vmatprep.subr.bf16.mxu0 0
      %3587 = vmatpush2.bf16.msra.mxu0 0
      %3588 = vmatprep.subr.bf16.mxu0 0
      %3589 = vmatpush2.bf16.msra.mxu0 0
      %3590 = vmatprep.subr.bf16.mxu0 0
      %3591 = vmatpush2.bf16.msra.mxu0 0
      %3592 = vmatprep.subr.bf16.mxu0 0
      %3593 = vmatpush2.bf16.msra.mxu0 0
      %3594 = vmatprep.subr.bf16.mxu0 0
      %3595 = vmatpush2.bf16.msra.mxu0 0
      %3596 = vmatprep.subr.bf16.mxu0 0
      %3597 = vmatpush2.bf16.msra.mxu0 0
      %3598 = vmatprep.mubr.bf16.mxu0 0
      %3599 = vmatmul.mubr.bf16.gmra.mxu0 %v3494
      %v3600 = vpop.f32.mrf.mxu0
      %v3601 = vadd.f32 %v3516, %v3600
      %v3602 = vpop.f32.mrf.mxu0
      %v3603 = vpop.f32.mrf.mxu0
      %v3604 = vpop.f32.mrf.mxu0
      %3605 = vdwg.mxu0
      %3606 = vst [vmem:[%s244] sm:$0x3] %v3601
      %p3607 = scmp.lt.s32.totalorder %s20, 1
      %s3608 = scalar_select %p3607, %s20, 1
      %p3609 = scmp.lt.s32.totalorder %s21, 1
      %s3610 = scalar_select %p3609, %s21, 1
      %s3611 = smul.addr %s3608, 2
      %s3612 = sadd.s32 %s3610, %s3611
      %s3613 = smul.addr %s3612, 2
      %s3614 = scalar_lea.vmem %s5, %s3613
      // Predicated region
      $region41: #{encoder_decoder2_forward.10} parent=39 // pred_check
        %p3615 = pneg %p158
      $region42: #{encoder_decoder2_forward.10} parent=39 // pred_check_branch
        %3617 = sbr.rel (%p3615) target = $region44
      $region43: #{encoder_decoder2_forward.10} parent=39 // pred_region
        _
      $region44: #{encoder_decoder2_forward.10} parent=39 // pred_fallthru
        _
    $region40: #{encoder_decoder2_forward.10} parent=5 // pred_fallthru
      _
    %p3618 = scmp.le.s32.totalorder 2, %s11
    // Predicated region
    $region45: #{encoder_decoder2_forward.10} parent=5 // pred_check
      %p3619 = pneg %p3618
    $region46: #{encoder_decoder2_forward.10} parent=5 // pred_check_branch
      %3621 = sbr.rel (%p3619) target = $region48
    $region47: #{encoder_decoder2_forward.10} parent=5 // pred_region
      %s3622 = ssub.s32 %s11, 2
      // Predicated region
      $region49: #{encoder_decoder2_forward.10} parent=47 // pred_check
        %p3623 = pneg %p164
      $region50: #{encoder_decoder2_forward.10} parent=47 // pred_check_branch
        %3625 = sbr.rel (%p3623) target = $region52
      $region51: #{encoder_decoder2_forward.10} parent=47 // pred_region
        %p3626 = scmp.lt.s32.totalorder %s22, 1
        %s3627 = scalar_select %p3626, %s22, 1
        %p3628 = scmp.lt.s32.totalorder %s23, 1
        %s3629 = scalar_select %p3628, %s23, 1
        %s3630 = smul.addr %s3627, 2
        %s3631 = sadd.s32 %s3629, %s3630
        %s3632 = smul.addr %s3631, 2
        %s3633 = scalar_lea.vmem %s5, %s3632
      $region52: #{encoder_decoder2_forward.10} parent=47 // pred_fallthru
        _
    $region48: #{encoder_decoder2_forward.10} parent=5 // pred_fallthru
      _
  $region6: #{encoder_decoder2_forward.10} parent=0 // loop_footer
    %s15 = sadd.s32 1, %s11
  $region7: #{encoder_decoder2_forward.10} parent=0 // loop_footer_branch
    %10 = sbr.rel target = $region3
  $region8: #{encoder_decoder2_forward.10} parent=0 // loop_exit
    _

</llo_original>
